<compile_context>
chip_gen: v7x
topology: tpu7x:2x2x1
jax: 0.10.0
libtpu: 0.0.40
codegen_flags: <defaults>
</compile_context>

<pallas_src>
import functools

import jax
import jax.numpy as jnp
from jax import lax
from jax.experimental import pallas as pl
from jax.experimental.pallas import tpu as pltpu

PAD_R = 8  # sublane-aligned interior row offset inside the conv scratch


def _round_up(x, m):
    return ((x + m - 1) // m) * m


def _padded_width(W):
    # >= W+1 zero lanes on the right: lane W supplies the right halo, and the
    # wrap-around lane (WP-1) supplies the left halo after the +1 roll.
    return _round_up(W + 1, 128)


# ------------------------------ conv helpers ---------------------------------

def _zero_halo(pad_ref, cin, H, W):
    """Zero only the halo regions (top/bottom 8-row bands + right lane pad).

    The interiors are fully rewritten (or never read) every grid step and the
    halo regions are never written by the interior stores, so re-zeroing only
    the halo each step is cheap AND stays correct under "parallel" (megacore)
    grid sharding, unlike a pl.when(program_id == 0) guard.
    """
    WP = _padded_width(W)
    zband = jnp.zeros((cin, PAD_R, WP), jnp.float32)
    pad_ref[:, 0:PAD_R, :] = zband
    pad_ref[:, PAD_R + H:PAD_R + H + PAD_R, :] = zband
    pad_ref[:, PAD_R:PAD_R + H, W:WP] = jnp.zeros((cin, H, WP - W), jnp.float32)


def _store_planes(pad_ref, planes):
    """Copy (H, W) planes into the interior (rows PAD_R.., lanes 0..W)."""
    H, W = planes[0].shape
    for ci, plane in enumerate(planes):
        pad_ref[ci, PAD_R:PAD_R + H, 0:W] = plane


def _conv3x3_planes(pad_ref, w_ref, cin, cout, H, W):
    """3x3 'same' conv over zero-halo planes held in `pad_ref`.

    Weights are a flat f32 SMEM ref in PyTorch (cout, cin, 3, 3) order.
    Per (ci, ki) one lane-aligned row band is loaded; kj=0/2 taps come from
    pltpu.roll (XLU) + an aligned [0:W] slice.  Loop order (ci, ki, kj) outer
    / cout inner: every window is built once and accumulated into all cout
    accumulators.  Accumulators are seeded from the first tap; bias is NOT
    added here (callers fold it into their epilogue).
    Returns `cout` float32 (H, W) planes.
    """
    WP = _padded_width(W)
    accs = [None] * cout
    for ci in range(cin):
        for ki in range(3):
            band = pad_ref[ci, PAD_R + ki - 1:PAD_R + ki - 1 + H, :]
            for kj in range(3):
                if kj == 1:
                    win = band[:, 0:W]
                else:
                    # kj=0 -> left neighbour (roll +1); kj=2 -> right (roll -1).
                    win = pltpu.roll(band, (1 - kj) % WP, 1)[:, 0:W]
                for co in range(cout):
                    widx = ((co * cin + ci) * 3 + ki) * 3 + kj
                    tap = w_ref[widx] * win
                    accs[co] = tap if accs[co] is None else accs[co] + tap
    return accs


# ------------------------- kernel 1: conv1 (dim -> 1) ------------------------

def _conv1_kernel(w_ref, b_ref, x_ref, o_ref, pad_ref, *, cin, H, W):
    _zero_halo(pad_ref, cin, H, W)
    _store_planes(pad_ref, [x_ref[0, ci] for ci in range(cin)])
    (acc,) = _conv3x3_planes(pad_ref, w_ref, cin, 1, H, W)
    o_ref[0, 0] = (acc + b_ref[0]).astype(o_ref.dtype)   # bias in the epilogue


def conv1_call(x, w1, b1):
    N, cin, H, W = x.shape
    WP = _padded_width(W)
    kernel = functools.partial(_conv1_kernel, cin=cin, H=H, W=W)
    return pl.pallas_call(
        kernel,
        # bf16 output: x_pixel only feeds the bf16 measurement matmul, so this
        # halves its HBM writeback/re-read at no extra error vs the previous
        # (cast-before-dot) version.
        out_shape=jax.ShapeDtypeStruct((N, 1, H, W), jnp.bfloat16),
        grid=(N,),
        in_specs=[
            pl.BlockSpec(memory_space=pltpu.MemorySpace.SMEM),   # weights
            pl.BlockSpec(memory_space=pltpu.MemorySpace.SMEM),   # bias
            pl.BlockSpec((1, cin, H, W), lambda n: (n, 0, 0, 0)),
        ],
        out_specs=pl.BlockSpec((1, 1, H, W), lambda n: (n, 0, 0, 0)),
        scratch_shapes=[pltpu.VMEM((cin, H + 2 * PAD_R, WP), jnp.float32)],
        compiler_params=pltpu.CompilerParams(
            dimension_semantics=("parallel",),
            vmem_limit_bytes=64 * 1024 * 1024),
    )(w1.reshape(-1).astype(jnp.float32),
      b1.reshape(-1).astype(jnp.float32),
      x.astype(jnp.float32))


# ----------------- kernel 2: measurement / gradient step (MXU) ---------------

def _meas_kernel(x_ref, phi_ref, y_ref, phit_ref, o_ref):
    # Phix = x_vec @ Phi^T (bf16 in, f32 acc); delta = y - Phix;
    # recon = delta @ PhiT^T (bf16 in, f32 acc), stored as bf16.
    phix = jnp.dot(x_ref[...], phi_ref[...], preferred_element_type=jnp.float32)
    delta = y_ref[...] - phix
    recon = jnp.dot(delta.astype(jnp.bfloat16), phit_ref[...],
                    preferred_element_type=jnp.float32)
    o_ref[...] = recon.astype(o_ref.dtype)


def measurement_call(x_vec, phi_t, y_vec, phit_t):
    B, K = x_vec.shape                       # K = 1024
    M = phi_t.shape[1]
    # HBM-bandwidth bound: big lane-dense row tiles, no host-side padding
    # copies.  A ragged last tile (B % tb != 0) is handled by Pallas block
    # masking: out-of-range rows read garbage, but every row is independent
    # and out-of-range writes are dropped.
    tb = B if B <= 512 else 512
    # TODO(synk): if M grows to >~128, algebraically fuse the two dots via
    # G = Phi^T @ PhiT^T (1024x1024) computed once outside the kernel.
    return pl.pallas_call(
        _meas_kernel,
        out_shape=jax.ShapeDtypeStruct((B, K), jnp.bfloat16),
        grid=(pl.cdiv(B, tb),),
        in_specs=[
            pl.BlockSpec((tb, K), lambda i: (i, 0)),
            pl.BlockSpec((K, M), lambda i: (0, 0)),    # Phi^T resident
            pl.BlockSpec((tb, M), lambda i: (i, 0)),
            pl.BlockSpec((M, K), lambda i: (0, 0)),    # PhiT^T resident
        ],
        out_specs=pl.BlockSpec((tb, K), lambda i: (i, 0)),
        compiler_params=pltpu.CompilerParams(
            dimension_semantics=("parallel",)),
    )(x_vec.astype(jnp.bfloat16), phi_t.astype(jnp.bfloat16),
      y_vec.astype(jnp.float32), phit_t.astype(jnp.bfloat16))


# ---------------- kernel 3: conv2 + ResBlock + residuals (fused) -------------

def _tail_kernel(w2_ref, b2_ref, rw1_ref, rb1_ref, rw2_ref, rb2_ref,
                 xps_ref, x_ref, o_ref, pad_ref, *, dim, H, W):
    _zero_halo(pad_ref, dim, H, W)

    # conv2: 1 -> dim.  Only plane 0's interior is written here; planes
    # 1..dim-1 may hold stale interiors from an earlier grid step, but conv2
    # never reads them (cin=1) and the ResBlock rewrites every interior
    # before reading it.  (Invariant relied on by the halo-only zeroing.)
    _store_planes(pad_ref, [xps_ref[0, 0].astype(jnp.float32)])
    x_delta = [acc + b2_ref[co] for co, acc in
               enumerate(_conv3x3_planes(pad_ref, w2_ref, 1, dim, H, W))]

    # ResBlock conv1; bias folded into the ReLU epilogue.
    _store_planes(pad_ref, x_delta)
    h = [jnp.maximum(acc + rb1_ref[co], 0.0) for co, acc in
         enumerate(_conv3x3_planes(pad_ref, rw1_ref, dim, dim, H, W))]

    # ResBlock conv2; bias + both residual adds fused, written one plane at a
    # time (no stacked (dim,H,W) temporaries).
    _store_planes(pad_ref, h)
    out = _conv3x3_planes(pad_ref, rw2_ref, dim, dim, H, W)
    for co in range(dim):
        o_ref[0, co] = out[co] + x_delta[co] + (x_ref[0, co] + rb2_ref[co])


def tail_call(x_ps, x, p):
    N, dim, H, W = x.shape
    WP = _padded_width(W)
    kernel = functools.partial(_tail_kernel, dim=dim, H=H, W=W)
    flat = lambda a: a.reshape(-1).astype(jnp.float32)
    smem = pl.BlockSpec(memory_space=pltpu.MemorySpace.SMEM)
    return pl.pallas_call(
        kernel,
        out_shape=jax.ShapeDtypeStruct((N, dim, H, W), jnp.float32),
        grid=(N,),
        in_specs=[smem] * 6 + [
            pl.BlockSpec((1, 1, H, W), lambda n: (n, 0, 0, 0)),      # x_ps (bf16)
            pl.BlockSpec((1, dim, H, W), lambda n: (n, 0, 0, 0)),    # x (f32)
        ],
        out_specs=pl.BlockSpec((1, dim, H, W), lambda n: (n, 0, 0, 0)),
        scratch_shapes=[pltpu.VMEM((dim, H + 2 * PAD_R, WP), jnp.float32)],
        compiler_params=pltpu.CompilerParams(
            dimension_semantics=("parallel",),
            vmem_limit_bytes=64 * 1024 * 1024),
    )(flat(p["w2"]), flat(p["b2"]), flat(p["rw1"]), flat(p["rb1"]),
      flat(p["rw2"]), flat(p["rb2"]),
      x_ps, x.astype(jnp.float32))


# ----------------------------- GradBlock forward -----------------------------

def grad_block_forward(x, y, Phi, PhiT, p):
    N, dim, H, W = x.shape
    M = Phi.shape[0]
    Hb, Wb = H // 32, W // 32

    # conv1: dim -> 1   (Pallas kernel 1, bf16 out)
    x_pixel = conv1_call(x, p["w1"], p["b1"])                        # (N,1,H,W)

    # Block-vectorize to (N*Hb*Wb, 1024) rows (the stride-32 conv as a matmul).
    # TODO(synk): the 32x32-block <-> 1024-vector relayout stays in XLA glue;
    # doing it in-kernel needs a sublane<->lane reshape Mosaic may reject.
    x_vec = (x_pixel[:, 0]
             .reshape(N, Hb, 32, Wb, 32)
             .transpose(0, 1, 3, 2, 4)
             .reshape(N * Hb * Wb, 32 * 32))
    y_vec = y.astype(jnp.float32).transpose(0, 2, 3, 1).reshape(N * Hb * Wb, M)
    phi_t = Phi.reshape(M, 32 * 32).T                                # (1024, M)
    phit_t = PhiT.reshape(32 * 32, M).T                              # (M, 1024)

    # Phix / delta / PhiT reconstruction   (Pallas kernel 2, MXU, bf16 out)
    recon = measurement_call(x_vec, phi_t, y_vec, phit_t)            # (B, 1024)

    # PixelShuffle(32) back to image space (tiny XLA glue, bf16)
    x_ps = (recon.reshape(N, Hb, Wb, 32, 32)
            .transpose(0, 1, 3, 2, 4)
            .reshape(N, 1, H, W))

    # conv2 + ResBlock + residual adds, fully fused (Pallas kernel 3)
    return tail_call(x_ps, x, p)


# ----------------------------- pure-JAX reference ----------------------------

def _ref_conv(x, w, b, stride=1, padding=0):
    out = lax.conv_general_dilated(
        x, w, window_strides=(stride, stride),
        padding=[(padding, padding), (padding, padding)],
        dimension_numbers=("NCHW", "OIHW", "NCHW"),
        precision=lax.Precision.HIGHEST)
    if b is not None:
        out = out + b.reshape(1, -1, 1, 1)
    return out


def ref_grad_block(x, y, Phi, PhiT, p):
    x_pixel = _ref_conv(x, p["w1"], p["b1"], padding=1)
    Phix = _ref_conv(x_pixel, Phi, None, stride=32, padding=0)
    delta = y - Phix
    t = _ref_conv(delta, PhiT, None, padding=0)
    N, C, Hb, Wb = t.shape
    r = 32
    xp2 = (t.reshape(N, 1, r, r, Hb, Wb)
           .transpose(0, 1, 4, 2, 5, 3)
           .reshape(N, 1, Hb * r, Wb * r))                 # PixelShuffle(32)
    x_delta = _ref_conv(xp2, p["w2"], p["b2"], padding=1)
    h = jnp.maximum(_ref_conv(x_delta, p["rw1"], p["rb1"], padding=1), 0.0)
    return x_delta + _ref_conv(h, p["rw2"], p["rb2"], padding=1) + x


# ------------------------------------ main ------------------------------------

if __name__ == "__main__":
    key = jax.random.PRNGKey(0)
    dim, N, H, W, M = 4, 2, 32, 32, 32
    ks = jax.random.split(key, 12)

    params = {
        "w1": 0.1 * jax.random.normal(ks[0], (1, dim, 3, 3), jnp.float32),
        "b1": 0.1 * jax.random.normal(ks[1], (1,), jnp.float32),
        "w2": 0.1 * jax.random.normal(ks[2], (dim, 1, 3, 3), jnp.float32),
        "b2": 0.1 * jax.random.normal(ks[3], (dim,), jnp.float32),
        "rw1": 0.1 * jax.random.normal(ks[4], (dim, dim, 3, 3), jnp.float32),
        "rb1": 0.1 * jax.random.normal(ks[5], (dim,), jnp.float32),
        "rw2": 0.1 * jax.random.normal(ks[6], (dim, dim, 3, 3), jnp.float32),
        "rb2": 0.1 * jax.random.normal(ks[7], (dim,), jnp.float32),
    }
    x = jax.random.normal(ks[8], (N, dim, H, W), jnp.float32)
    y = jax.random.normal(ks[9], (N, M, H // 32, W // 32), jnp.float32)
    Phi = jax.random.normal(ks[10], (M, 1, 32, 32), jnp.float32) / 32.0
    PhiT = jax.random.normal(ks[11], (32 * 32, M, 1, 1), jnp.float32) / 32.0

    fwd = jax.jit(grad_block_forward)
    out = jax.block_until_ready(fwd(x, y, Phi, PhiT, params))

    ref = jax.block_until_ready(ref_grad_block(x, y, Phi, PhiT, params))
    assert out.shape == ref.shape == (N, dim, H, W)
    err = float(jnp.max(jnp.abs(out - ref)))
    if err > 1e-2:
        raise AssertionError(f"Pallas output mismatch, max abs err = {err}")
    print("KERNEL_OK")
</pallas_src>

<mosaic_0001>
module attributes {stable_mosaic.version = 11 : i64} {
  func.func @_meas_kernel(%arg0: i32, %arg1: memref<2x1024xbf16, #tpu.memory_space<vmem>>, %arg2: memref<1024x32xbf16, #tpu.memory_space<vmem>>, %arg3: memref<2x32xf32, #tpu.memory_space<vmem>>, %arg4: memref<32x1024xbf16, #tpu.memory_space<vmem>>, %arg5: memref<2x1024xbf16, #tpu.memory_space<vmem>>) attributes {dimension_semantics = [#tpu.dimension_semantics<parallel>], iteration_bounds = array<i64: 1>, scalar_prefetch = 0 : i64, scratch_operands = 0 : i64, tpu.core_type = #tpu.core_type<tc>, window_params = [{transform_indices = @transform_0, window_bounds = array<i64: 2, 1024>}, {pipeline_mode = #tpu.pipeline_mode<synchronous>, transform_indices = @transform_1, window_bounds = array<i64: 1024, 32>}, {transform_indices = @transform_2, window_bounds = array<i64: 2, 32>}, {pipeline_mode = #tpu.pipeline_mode<synchronous>, transform_indices = @transform_3, window_bounds = array<i64: 32, 1024>}, {transform_indices = @transform_4, window_bounds = array<i64: 2, 1024>}]} {
    %c0 = arith.constant 0 : index
    %c0_0 = arith.constant 0 : index
    %0 = vector.load %arg1[%c0, %c0_0] : memref<2x1024xbf16, #tpu.memory_space<vmem>>, vector<2x1024xbf16>
    %c0_1 = arith.constant 0 : index
    %c0_2 = arith.constant 0 : index
    %1 = vector.load %arg2[%c0_1, %c0_2] : memref<1024x32xbf16, #tpu.memory_space<vmem>>, vector<1024x32xbf16>
    %cst = arith.constant dense<0.000000e+00> : vector<2x32xf32>
    %2 = tpu.matmul %0, %1, %cst {dimension_numbers = #tpu.dot_dimension_numbers<[1], [0], [0], [1], [0, 0, 1, 1], [], []>} : vector<2x1024xbf16>, vector<1024x32xbf16>, vector<2x32xf32> -> vector<2x32xf32>
    %c0_3 = arith.constant 0 : index
    %c0_4 = arith.constant 0 : index
    %3 = vector.load %arg3[%c0_3, %c0_4] : memref<2x32xf32, #tpu.memory_space<vmem>>, vector<2x32xf32>
    %4 = arith.subf %3, %2 : vector<2x32xf32>
    %5 = arith.truncf %4 : vector<2x32xf32> to vector<2x32xbf16>
    %c0_5 = arith.constant 0 : index
    %c0_6 = arith.constant 0 : index
    %6 = vector.load %arg4[%c0_5, %c0_6] : memref<32x1024xbf16, #tpu.memory_space<vmem>>, vector<32x1024xbf16>
    %cst_7 = arith.constant dense<0.000000e+00> : vector<2x1024xf32>
    %7 = tpu.matmul %5, %6, %cst_7 {dimension_numbers = #tpu.dot_dimension_numbers<[1], [0], [0], [1], [0, 0, 1, 1], [], []>} : vector<2x32xbf16>, vector<32x1024xbf16>, vector<2x1024xf32> -> vector<2x1024xf32>
    %8 = arith.truncf %7 : vector<2x1024xf32> to vector<2x1024xbf16>
    %c0_8 = arith.constant 0 : index
    %c0_9 = arith.constant 0 : index
    %9 = vector.load %arg5[%c0_8, %c0_9] : memref<2x1024xbf16, #tpu.memory_space<vmem>>, vector<2x1024xbf16>
    tpu.vector_store %arg5[%c0_8, %c0_9], %8 {strides = array<i32>} : memref<2x1024xbf16, #tpu.memory_space<vmem>>, vector<2x1024xbf16>,
    return
  }
  func.func @transform_0(%arg0: i32) -> (i32, i32) {
    %c0_i32 = arith.constant 0 : i32
    %c0_i32_0 = arith.constant 0 : i32
    return %arg0, %c0_i32 : i32, i32
  }
  func.func @transform_1(%arg0: i32) -> (i32, i32) {
    %c0_i32 = arith.constant 0 : i32
    %c0_i32_0 = arith.constant 0 : i32
    %c0_i32_1 = arith.constant 0 : i32
    return %c0_i32, %c0_i32_0 : i32, i32
  }
  func.func @transform_2(%arg0: i32) -> (i32, i32) {
    %c0_i32 = arith.constant 0 : i32
    %c0_i32_0 = arith.constant 0 : i32
    return %arg0, %c0_i32 : i32, i32
  }
  func.func @transform_3(%arg0: i32) -> (i32, i32) {
    %c0_i32 = arith.constant 0 : i32
    %c0_i32_0 = arith.constant 0 : i32
    %c0_i32_1 = arith.constant 0 : i32
    return %c0_i32, %c0_i32_0 : i32, i32
  }
  func.func @transform_4(%arg0: i32) -> (i32, i32) {
    %c0_i32 = arith.constant 0 : i32
    %c0_i32_0 = arith.constant 0 : i32
    return %arg0, %c0_i32 : i32, i32
  }
}

module attributes {stable_mosaic.version = 11 : i64} {
  func.func @_conv1_kernel(%arg0: i32, %arg1: memref<36xf32, #tpu.memory_space<smem>>, %arg2: memref<1xf32, #tpu.memory_space<smem>>, %arg3: memref<1x4x32x32xf32, #tpu.memory_space<vmem>>, %arg4: memref<1x1x32x32xbf16, #tpu.memory_space<vmem>>, %arg5: memref<4x48x128xf32, #tpu.memory_space<vmem>>) attributes {dimension_semantics = [#tpu.dimension_semantics<parallel>], iteration_bounds = array<i64: 2>, scalar_prefetch = 0 : i64, scratch_operands = 1 : i64, tpu.core_type = #tpu.core_type<tc>, window_params = [{transform_indices = @transform_0, window_bounds = array<i64: 36>}, {transform_indices = @transform_1, window_bounds = array<i64: 1>}, {transform_indices = @transform_2, window_bounds = array<i64: 1, 4, 32, 32>}, {transform_indices = @transform_3, window_bounds = array<i64: 1, 1, 32, 32>}]} {
    %cst = arith.constant 0.000000e+00 : f32
    %0 = vector.broadcast %cst : f32 to vector<4x8x128xf32>
    %c0 = arith.constant 0 : index
    %c0_0 = arith.constant 0 : index
    %c0_1 = arith.constant 0 : index
    %1 = vector.load %arg5[%c0, %c0_0, %c0_1] : memref<4x48x128xf32, #tpu.memory_space<vmem>>, vector<4x8x128xf32>
    tpu.vector_store %arg5[%c0, %c0_0, %c0_1], %0 {strides = array<i32>} : memref<4x48x128xf32, #tpu.memory_space<vmem>>, vector<4x8x128xf32>,
    %c0_2 = arith.constant 0 : index
    %c40 = arith.constant 40 : index
    %c0_3 = arith.constant 0 : index
    %2 = vector.load %arg5[%c0_2, %c40, %c0_3] : memref<4x48x128xf32, #tpu.memory_space<vmem>>, vector<4x8x128xf32>
    tpu.vector_store %arg5[%c0_2, %c40, %c0_3], %0 {strides = array<i32>} : memref<4x48x128xf32, #tpu.memory_space<vmem>>, vector<4x8x128xf32>,
    %cst_4 = arith.constant 0.000000e+00 : f32
    %3 = vector.broadcast %cst_4 : f32 to vector<4x32x96xf32>
    %c0_5 = arith.constant 0 : index
    %c8 = arith.constant 8 : index
    %c32 = arith.constant 32 : index
    %4 = vector.load %arg5[%c0_5, %c8, %c32] : memref<4x48x128xf32, #tpu.memory_space<vmem>>, vector<4x32x96xf32>
    tpu.vector_store %arg5[%c0_5, %c8, %c32], %3 {strides = array<i32>} : memref<4x48x128xf32, #tpu.memory_space<vmem>>, vector<4x32x96xf32>,
    %c0_6 = arith.constant 0 : index
    %c0_7 = arith.constant 0 : index
    %c0_8 = arith.constant 0 : index
    %c0_9 = arith.constant 0 : index
    %5 = vector.load %arg3[%c0_6, %c0_7, %c0_8, %c0_9] : memref<1x4x32x32xf32, #tpu.memory_space<vmem>>, vector<1x1x32x32xf32>
    %6 = vector.shape_cast %5 : vector<1x1x32x32xf32> to vector<32x32xf32>
    %c0_10 = arith.constant 0 : index
    %c1 = arith.constant 1 : index
    %c0_11 = arith.constant 0 : index
    %c0_12 = arith.constant 0 : index
    %7 = vector.load %arg3[%c0_10, %c1, %c0_11, %c0_12] : memref<1x4x32x32xf32, #tpu.memory_space<vmem>>, vector<1x1x32x32xf32>
    %8 = vector.shape_cast %7 : vector<1x1x32x32xf32> to vector<32x32xf32>
    %c0_13 = arith.constant 0 : index
    %c2 = arith.constant 2 : index
    %c0_14 = arith.constant 0 : index
    %c0_15 = arith.constant 0 : index
    %9 = vector.load %arg3[%c0_13, %c2, %c0_14, %c0_15] : memref<1x4x32x32xf32, #tpu.memory_space<vmem>>, vector<1x1x32x32xf32>
    %10 = vector.shape_cast %9 : vector<1x1x32x32xf32> to vector<32x32xf32>
    %c0_16 = arith.constant 0 : index
    %c3 = arith.constant 3 : index
    %c0_17 = arith.constant 0 : index
    %c0_18 = arith.constant 0 : index
    %11 = vector.load %arg3[%c0_16, %c3, %c0_17, %c0_18] : memref<1x4x32x32xf32, #tpu.memory_space<vmem>>, vector<1x1x32x32xf32>
    %12 = vector.shape_cast %11 : vector<1x1x32x32xf32> to vector<32x32xf32>
    %c0_19 = arith.constant 0 : index
    %c8_20 = arith.constant 8 : index
    %c0_21 = arith.constant 0 : index
    %13 = vector.load %arg5[%c0_19, %c8_20, %c0_21] : memref<4x48x128xf32, #tpu.memory_space<vmem>>, vector<1x32x32xf32>
    %14 = vector.shape_cast %13 : vector<1x32x32xf32> to vector<32x32xf32>
    %15 = vector.shape_cast %6 : vector<32x32xf32> to vector<1x32x32xf32>
    tpu.vector_store %arg5[%c0_19, %c8_20, %c0_21], %15 {strides = array<i32>} : memref<4x48x128xf32, #tpu.memory_space<vmem>>, vector<1x32x32xf32>,
    %c1_22 = arith.constant 1 : index
    %c8_23 = arith.constant 8 : index
    %c0_24 = arith.constant 0 : index
    %16 = vector.load %arg5[%c1_22, %c8_23, %c0_24] : memref<4x48x128xf32, #tpu.memory_space<vmem>>, vector<1x32x32xf32>
    %17 = vector.shape_cast %16 : vector<1x32x32xf32> to vector<32x32xf32>
    %18 = vector.shape_cast %8 : vector<32x32xf32> to vector<1x32x32xf32>
    tpu.vector_store %arg5[%c1_22, %c8_23, %c0_24], %18 {strides = array<i32>} : memref<4x48x128xf32, #tpu.memory_space<vmem>>, vector<1x32x32xf32>,
    %c2_25 = arith.constant 2 : index
    %c8_26 = arith.constant 8 : index
    %c0_27 = arith.constant 0 : index
    %19 = vector.load %arg5[%c2_25, %c8_26, %c0_27] : memref<4x48x128xf32, #tpu.memory_space<vmem>>, vector<1x32x32xf32>
    %20 = vector.shape_cast %19 : vector<1x32x32xf32> to vector<32x32xf32>
    %21 = vector.shape_cast %10 : vector<32x32xf32> to vector<1x32x32xf32>
    tpu.vector_store %arg5[%c2_25, %c8_26, %c0_27], %21 {strides = array<i32>} : memref<4x48x128xf32, #tpu.memory_space<vmem>>, vector<1x32x32xf32>,
    %c3_28 = arith.constant 3 : index
    %c8_29 = arith.constant 8 : index
    %c0_30 = arith.constant 0 : index
    %22 = vector.load %arg5[%c3_28, %c8_29, %c0_30] : memref<4x48x128xf32, #tpu.memory_space<vmem>>, vector<1x32x32xf32>
    %23 = vector.shape_cast %22 : vector<1x32x32xf32> to vector<32x32xf32>
    %24 = vector.shape_cast %12 : vector<32x32xf32> to vector<1x32x32xf32>
    tpu.vector_store %arg5[%c3_28, %c8_29, %c0_30], %24 {strides = array<i32>} : memref<4x48x128xf32, #tpu.memory_space<vmem>>, vector<1x32x32xf32>,
    %c0_31 = arith.constant 0 : index
    %c7 = arith.constant 7 : index
    %c0_32 = arith.constant 0 : index
    %25 = vector.load %arg5[%c0_31, %c7, %c0_32] : memref<4x48x128xf32, #tpu.memory_space<vmem>>, vector<1x32x128xf32>
    %26 = vector.shape_cast %25 : vector<1x32x128xf32> to vector<32x128xf32>
    %c1_i32 = arith.constant 1 : i32
    %27 = tpu.dynamic_rotate %26 by %c1_i32 dim 1 : vector<32x128xf32>, i32 -> vector<32x128xf32>
    %28 = vector.extract_strided_slice %27 {offsets = [0, 0], sizes = [32, 32], strides = [1, 1]} : vector<32x128xf32> to vector<32x32xf32>
    %c0_33 = arith.constant 0 : index
    %29 = memref.load %arg1[%c0_33] : memref<36xf32, #tpu.memory_space<smem>>
    %30 = vector.broadcast %29 : f32 to vector<32x32xf32>
    %31 = arith.mulf %30, %28 : vector<32x32xf32>
    %32 = vector.extract_strided_slice %26 {offsets = [0, 0], sizes = [32, 32], strides = [1, 1]} : vector<32x128xf32> to vector<32x32xf32>
    %c1_34 = arith.constant 1 : index
    %33 = memref.load %arg1[%c1_34] : memref<36xf32, #tpu.memory_space<smem>>
    %34 = vector.broadcast %33 : f32 to vector<32x32xf32>
    %35 = arith.mulf %34, %32 : vector<32x32xf32>
    %36 = arith.addf %31, %35 : vector<32x32xf32>
    %c127_i32 = arith.constant 127 : i32
    %37 = tpu.dynamic_rotate %26 by %c127_i32 dim 1 : vector<32x128xf32>, i32 -> vector<32x128xf32>
    %38 = vector.extract_strided_slice %37 {offsets = [0, 0], sizes = [32, 32], strides = [1, 1]} : vector<32x128xf32> to vector<32x32xf32>
    %c2_35 = arith.constant 2 : index
    %39 = memref.load %arg1[%c2_35] : memref<36xf32, #tpu.memory_space<smem>>
    %40 = vector.broadcast %39 : f32 to vector<32x32xf32>
    %41 = arith.mulf %40, %38 : vector<32x32xf32>
    %42 = arith.addf %36, %41 : vector<32x32xf32>
    %c0_36 = arith.constant 0 : index
    %c8_37 = arith.constant 8 : index
    %c0_38 = arith.constant 0 : index
    %43 = vector.load %arg5[%c0_36, %c8_37, %c0_38] : memref<4x48x128xf32, #tpu.memory_space<vmem>>, vector<1x32x128xf32>
    %44 = vector.shape_cast %43 : vector<1x32x128xf32> to vector<32x128xf32>
    %c1_i32_39 = arith.constant 1 : i32
    %45 = tpu.dynamic_rotate %44 by %c1_i32_39 dim 1 : vector<32x128xf32>, i32 -> vector<32x128xf32>
    %46 = vector.extract_strided_slice %45 {offsets = [0, 0], sizes = [32, 32], strides = [1, 1]} : vector<32x128xf32> to vector<32x32xf32>
    %c3_40 = arith.constant 3 : index
    %47 = memref.load %arg1[%c3_40] : memref<36xf32, #tpu.memory_space<smem>>
    %48 = vector.broadcast %47 : f32 to vector<32x32xf32>
    %49 = arith.mulf %48, %46 : vector<32x32xf32>
    %50 = arith.addf %42, %49 : vector<32x32xf32>
    %51 = vector.extract_strided_slice %44 {offsets = [0, 0], sizes = [32, 32], strides = [1, 1]} : vector<32x128xf32> to vector<32x32xf32>
    %c4 = arith.constant 4 : index
    %52 = memref.load %arg1[%c4] : memref<36xf32, #tpu.memory_space<smem>>
    %53 = vector.broadcast %52 : f32 to vector<32x32xf32>
    %54 = arith.mulf %53, %51 : vector<32x32xf32>
    %55 = arith.addf %50, %54 : vector<32x32xf32>
    %c127_i32_41 = arith.constant 127 : i32
    %56 = tpu.dynamic_rotate %44 by %c127_i32_41 dim 1 : vector<32x128xf32>, i32 -> vector<32x128xf32>
    %57 = vector.extract_strided_slice %56 {offsets = [0, 0], sizes = [32, 32], strides = [1, 1]} : vector<32x128xf32> to vector<32x32xf32>
    %c5 = arith.constant 5 : index
    %58 = memref.load %arg1[%c5] : memref<36xf32, #tpu.memory_space<smem>>
    %59 = vector.broadcast %58 : f32 to vector<32x32xf32>
    %60 = arith.mulf %59, %57 : vector<32x32xf32>
    %61 = arith.addf %55, %60 : vector<32x32xf32>
    %c0_42 = arith.constant 0 : index
    %c9 = arith.constant 9 : index
    %c0_43 = arith.constant 0 : index
    %62 = vector.load %arg5[%c0_42, %c9, %c0_43] : memref<4x48x128xf32, #tpu.memory_space<vmem>>, vector<1x32x128xf32>
    %63 = vector.shape_cast %62 : vector<1x32x128xf32> to vector<32x128xf32>
    %c1_i32_44 = arith.constant 1 : i32
    %64 = tpu.dynamic_rotate %63 by %c1_i32_44 dim 1 : vector<32x128xf32>, i32 -> vector<32x128xf32>
    %65 = vector.extract_strided_slice %64 {offsets = [0, 0], sizes = [32, 32], strides = [1, 1]} : vector<32x128xf32> to vector<32x32xf32>
    %c6 = arith.constant 6 : index
    %66 = memref.load %arg1[%c6] : memref<36xf32, #tpu.memory_space<smem>>
    %67 = vector.broadcast %66 : f32 to vector<32x32xf32>
    %68 = arith.mulf %67, %65 : vector<32x32xf32>
    %69 = arith.addf %61, %68 : vector<32x32xf32>
    %70 = vector.extract_strided_slice %63 {offsets = [0, 0], sizes = [32, 32], strides = [1, 1]} : vector<32x128xf32> to vector<32x32xf32>
    %c7_45 = arith.constant 7 : index
    %71 = memref.load %arg1[%c7_45] : memref<36xf32, #tpu.memory_space<smem>>
    %72 = vector.broadcast %71 : f32 to vector<32x32xf32>
    %73 = arith.mulf %72, %70 : vector<32x32xf32>
    %74 = arith.addf %69, %73 : vector<32x32xf32>
    %c127_i32_46 = arith.constant 127 : i32
    %75 = tpu.dynamic_rotate %63 by %c127_i32_46 dim 1 : vector<32x128xf32>, i32 -> vector<32x128xf32>
    %76 = vector.extract_strided_slice %75 {offsets = [0, 0], sizes = [32, 32], strides = [1, 1]} : vector<32x128xf32> to vector<32x32xf32>
    %c8_47 = arith.constant 8 : index
    %77 = memref.load %arg1[%c8_47] : memref<36xf32, #tpu.memory_space<smem>>
    %78 = vector.broadcast %77 : f32 to vector<32x32xf32>
    %79 = arith.mulf %78, %76 : vector<32x32xf32>
    %80 = arith.addf %74, %79 : vector<32x32xf32>
    %c1_48 = arith.constant 1 : index
    %c7_49 = arith.constant 7 : index
    %c0_50 = arith.constant 0 : index
    %81 = vector.load %arg5[%c1_48, %c7_49, %c0_50] : memref<4x48x128xf32, #tpu.memory_space<vmem>>, vector<1x32x128xf32>
    %82 = vector.shape_cast %81 : vector<1x32x128xf32> to vector<32x128xf32>
    %c1_i32_51 = arith.constant 1 : i32
    %83 = tpu.dynamic_rotate %82 by %c1_i32_51 dim 1 : vector<32x128xf32>, i32 -> vector<32x128xf32>
    %84 = vector.extract_strided_slice %83 {offsets = [0, 0], sizes = [32, 32], strides = [1, 1]} : vector<32x128xf32> to vector<32x32xf32>
    %c9_52 = arith.constant 9 : index
    %85 = memref.load %arg1[%c9_52] : memref<36xf32, #tpu.memory_space<smem>>
    %86 = vector.broadcast %85 : f32 to vector<32x32xf32>
    %87 = arith.mulf %86, %84 : vector<32x32xf32>
    %88 = arith.addf %80, %87 : vector<32x32xf32>
    %89 = vector.extract_strided_slice %82 {offsets = [0, 0], sizes = [32, 32], strides = [1, 1]} : vector<32x128xf32> to vector<32x32xf32>
    %c10 = arith.constant 10 : index
    %90 = memref.load %arg1[%c10] : memref<36xf32, #tpu.memory_space<smem>>
    %91 = vector.broadcast %90 : f32 to vector<32x32xf32>
    %92 = arith.mulf %91, %89 : vector<32x32xf32>
    %93 = arith.addf %88, %92 : vector<32x32xf32>
    %c127_i32_53 = arith.constant 127 : i32
    %94 = tpu.dynamic_rotate %82 by %c127_i32_53 dim 1 : vector<32x128xf32>, i32 -> vector<32x128xf32>
    %95 = vector.extract_strided_slice %94 {offsets = [0, 0], sizes = [32, 32], strides = [1, 1]} : vector<32x128xf32> to vector<32x32xf32>
    %c11 = arith.constant 11 : index
    %96 = memref.load %arg1[%c11] : memref<36xf32, #tpu.memory_space<smem>>
    %97 = vector.broadcast %96 : f32 to vector<32x32xf32>
    %98 = arith.mulf %97, %95 : vector<32x32xf32>
    %99 = arith.addf %93, %98 : vector<32x32xf32>
    %c1_54 = arith.constant 1 : index
    %c8_55 = arith.constant 8 : index
    %c0_56 = arith.constant 0 : index
    %100 = vector.load %arg5[%c1_54, %c8_55, %c0_56] : memref<4x48x128xf32, #tpu.memory_space<vmem>>, vector<1x32x128xf32>
    %101 = vector.shape_cast %100 : vector<1x32x128xf32> to vector<32x128xf32>
    %c1_i32_57 = arith.constant 1 : i32
    %102 = tpu.dynamic_rotate %101 by %c1_i32_57 dim 1 : vector<32x128xf32>, i32 -> vector<32x128xf32>
    %103 = vector.extract_strided_slice %102 {offsets = [0, 0], sizes = [32, 32], strides = [1, 1]} : vector<32x128xf32> to vector<32x32xf32>
    %c12 = arith.constant 12 : index
    %104 = memref.load %arg1[%c12] : memref<36xf32, #tpu.memory_space<smem>>
    %105 = vector.broadcast %104 : f32 to vector<32x32xf32>
    %106 = arith.mulf %105, %103 : vector<32x32xf32>
    %107 = arith.addf %99, %106 : vector<32x32xf32>
    %108 = vector.extract_strided_slice %101 {offsets = [0, 0], sizes = [32, 32], strides = [1, 1]} : vector<32x128xf32> to vector<32x32xf32>
    %c13 = arith.constant 13 : index
    %109 = memref.load %arg1[%c13] : memref<36xf32, #tpu.memory_space<smem>>
    %110 = vector.broadcast %109 : f32 to vector<32x32xf32>
    %111 = arith.mulf %110, %108 : vector<32x32xf32>
    %112 = arith.addf %107, %111 : vector<32x32xf32>
    %c127_i32_58 = arith.constant 127 : i32
    %113 = tpu.dynamic_rotate %101 by %c127_i32_58 dim 1 : vector<32x128xf32>, i32 -> vector<32x128xf32>
    %114 = vector.extract_strided_slice %113 {offsets = [0, 0], sizes = [32, 32], strides = [1, 1]} : vector<32x128xf32> to vector<32x32xf32>
    %c14 = arith.constant 14 : index
    %115 = memref.load %arg1[%c14] : memref<36xf32, #tpu.memory_space<smem>>
    %116 = vector.broadcast %115 : f32 to vector<32x32xf32>
    %117 = arith.mulf %116, %114 : vector<32x32xf32>
    %118 = arith.addf %112, %117 : vector<32x32xf32>
    %c1_59 = arith.constant 1 : index
    %c9_60 = arith.constant 9 : index
    %c0_61 = arith.constant 0 : index
    %119 = vector.load %arg5[%c1_59, %c9_60, %c0_61] : memref<4x48x128xf32, #tpu.memory_space<vmem>>, vector<1x32x128xf32>
    %120 = vector.shape_cast %119 : vector<1x32x128xf32> to vector<32x128xf32>
    %c1_i32_62 = arith.constant 1 : i32
    %121 = tpu.dynamic_rotate %120 by %c1_i32_62 dim 1 : vector<32x128xf32>, i32 -> vector<32x128xf32>
    %122 = vector.extract_strided_slice %121 {offsets = [0, 0], sizes = [32, 32], strides = [1, 1]} : vector<32x128xf32> to vector<32x32xf32>
    %c15 = arith.constant 15 : index
    %123 = memref.load %arg1[%c15] : memref<36xf32, #tpu.memory_space<smem>>
    %124 = vector.broadcast %123 : f32 to vector<32x32xf32>
    %125 = arith.mulf %124, %122 : vector<32x32xf32>
    %126 = arith.addf %118, %125 : vector<32x32xf32>
    %127 = vector.extract_strided_slice %120 {offsets = [0, 0], sizes = [32, 32], strides = [1, 1]} : vector<32x128xf32> to vector<32x32xf32>
    %c16 = arith.constant 16 : index
    %128 = memref.load %arg1[%c16] : memref<36xf32, #tpu.memory_space<smem>>
    %129 = vector.broadcast %128 : f32 to vector<32x32xf32>
    %130 = arith.mulf %129, %127 : vector<32x32xf32>
    %131 = arith.addf %126, %130 : vector<32x32xf32>
    %c127_i32_63 = arith.constant 127 : i32
    %132 = tpu.dynamic_rotate %120 by %c127_i32_63 dim 1 : vector<32x128xf32>, i32 -> vector<32x128xf32>
    %133 = vector.extract_strided_slice %132 {offsets = [0, 0], sizes = [32, 32], strides = [1, 1]} : vector<32x128xf32> to vector<32x32xf32>
    %c17 = arith.constant 17 : index
    %134 = memref.load %arg1[%c17] : memref<36xf32, #tpu.memory_space<smem>>
    %135 = vector.broadcast %134 : f32 to vector<32x32xf32>
    %136 = arith.mulf %135, %133 : vector<32x32xf32>
    %137 = arith.addf %131, %136 : vector<32x32xf32>
    %c2_64 = arith.constant 2 : index
    %c7_65 = arith.constant 7 : index
    %c0_66 = arith.constant 0 : index
    %138 = vector.load %arg5[%c2_64, %c7_65, %c0_66] : memref<4x48x128xf32, #tpu.memory_space<vmem>>, vector<1x32x128xf32>
    %139 = vector.shape_cast %138 : vector<1x32x128xf32> to vector<32x128xf32>
    %c1_i32_67 = arith.constant 1 : i32
    %140 = tpu.dynamic_rotate %139 by %c1_i32_67 dim 1 : vector<32x128xf32>, i32 -> vector<32x128xf32>
    %141 = vector.extract_strided_slice %140 {offsets = [0, 0], sizes = [32, 32], strides = [1, 1]} : vector<32x128xf32> to vector<32x32xf32>
    %c18 = arith.constant 18 : index
    %142 = memref.load %arg1[%c18] : memref<36xf32, #tpu.memory_space<smem>>
    %143 = vector.broadcast %142 : f32 to vector<32x32xf32>
    %144 = arith.mulf %143, %141 : vector<32x32xf32>
    %145 = arith.addf %137, %144 : vector<32x32xf32>
    %146 = vector.extract_strided_slice %139 {offsets = [0, 0], sizes = [32, 32], strides = [1, 1]} : vector<32x128xf32> to vector<32x32xf32>
    %c19 = arith.constant 19 : index
    %147 = memref.load %arg1[%c19] : memref<36xf32, #tpu.memory_space<smem>>
    %148 = vector.broadcast %147 : f32 to vector<32x32xf32>
    %149 = arith.mulf %148, %146 : vector<32x32xf32>
    %150 = arith.addf %145, %149 : vector<32x32xf32>
    %c127_i32_68 = arith.constant 127 : i32
    %151 = tpu.dynamic_rotate %139 by %c127_i32_68 dim 1 : vector<32x128xf32>, i32 -> vector<32x128xf32>
    %152 = vector.extract_strided_slice %151 {offsets = [0, 0], sizes = [32, 32], strides = [1, 1]} : vector<32x128xf32> to vector<32x32xf32>
    %c20 = arith.constant 20 : index
    %153 = memref.load %arg1[%c20] : memref<36xf32, #tpu.memory_space<smem>>
    %154 = vector.broadcast %153 : f32 to vector<32x32xf32>
    %155 = arith.mulf %154, %152 : vector<32x32xf32>
    %156 = arith.addf %150, %155 : vector<32x32xf32>
    %c2_69 = arith.constant 2 : index
    %c8_70 = arith.constant 8 : index
    %c0_71 = arith.constant 0 : index
    %157 = vector.load %arg5[%c2_69, %c8_70, %c0_71] : memref<4x48x128xf32, #tpu.memory_space<vmem>>, vector<1x32x128xf32>
    %158 = vector.shape_cast %157 : vector<1x32x128xf32> to vector<32x128xf32>
    %c1_i32_72 = arith.constant 1 : i32
    %159 = tpu.dynamic_rotate %158 by %c1_i32_72 dim 1 : vector<32x128xf32>, i32 -> vector<32x128xf32>
    %160 = vector.extract_strided_slice %159 {offsets = [0, 0], sizes = [32, 32], strides = [1, 1]} : vector<32x128xf32> to vector<32x32xf32>
    %c21 = arith.constant 21 : index
    %161 = memref.load %arg1[%c21] : memref<36xf32, #tpu.memory_space<smem>>
    %162 = vector.broadcast %161 : f32 to vector<32x32xf32>
    %163 = arith.mulf %162, %160 : vector<32x32xf32>
    %164 = arith.addf %156, %163 : vector<32x32xf32>
    %165 = vector.extract_strided_slice %158 {offsets = [0, 0], sizes = [32, 32], strides = [1, 1]} : vector<32x128xf32> to vector<32x32xf32>
    %c22 = arith.constant 22 : index
    %166 = memref.load %arg1[%c22] : memref<36xf32, #tpu.memory_space<smem>>
    %167 = vector.broadcast %166 : f32 to vector<32x32xf32>
    %168 = arith.mulf %167, %165 : vector<32x32xf32>
    %169 = arith.addf %164, %168 : vector<32x32xf32>
    %c127_i32_73 = arith.constant 127 : i32
    %170 = tpu.dynamic_rotate %158 by %c127_i32_73 dim 1 : vector<32x128xf32>, i32 -> vector<32x128xf32>
    %171 = vector.extract_strided_slice %170 {offsets = [0, 0], sizes = [32, 32], strides = [1, 1]} : vector<32x128xf32> to vector<32x32xf32>
    %c23 = arith.constant 23 : index
    %172 = memref.load %arg1[%c23] : memref<36xf32, #tpu.memory_space<smem>>
    %173 = vector.broadcast %172 : f32 to vector<32x32xf32>
    %174 = arith.mulf %173, %171 : vector<32x32xf32>
    %175 = arith.addf %169, %174 : vector<32x32xf32>
    %c2_74 = arith.constant 2 : index
    %c9_75 = arith.constant 9 : index
    %c0_76 = arith.constant 0 : index
    %176 = vector.load %arg5[%c2_74, %c9_75, %c0_76] : memref<4x48x128xf32, #tpu.memory_space<vmem>>, vector<1x32x128xf32>
    %177 = vector.shape_cast %176 : vector<1x32x128xf32> to vector<32x128xf32>
    %c1_i32_77 = arith.constant 1 : i32
    %178 = tpu.dynamic_rotate %177 by %c1_i32_77 dim 1 : vector<32x128xf32>, i32 -> vector<32x128xf32>
    %179 = vector.extract_strided_slice %178 {offsets = [0, 0], sizes = [32, 32], strides = [1, 1]} : vector<32x128xf32> to vector<32x32xf32>
    %c24 = arith.constant 24 : index
    %180 = memref.load %arg1[%c24] : memref<36xf32, #tpu.memory_space<smem>>
    %181 = vector.broadcast %180 : f32 to vector<32x32xf32>
    %182 = arith.mulf %181, %179 : vector<32x32xf32>
    %183 = arith.addf %175, %182 : vector<32x32xf32>
    %184 = vector.extract_strided_slice %177 {offsets = [0, 0], sizes = [32, 32], strides = [1, 1]} : vector<32x128xf32> to vector<32x32xf32>
    %c25 = arith.constant 25 : index
    %185 = memref.load %arg1[%c25] : memref<36xf32, #tpu.memory_space<smem>>
    %186 = vector.broadcast %185 : f32 to vector<32x32xf32>
    %187 = arith.mulf %186, %184 : vector<32x32xf32>
    %188 = arith.addf %183, %187 : vector<32x32xf32>
    %c127_i32_78 = arith.constant 127 : i32
    %189 = tpu.dynamic_rotate %177 by %c127_i32_78 dim 1 : vector<32x128xf32>, i32 -> vector<32x128xf32>
    %190 = vector.extract_strided_slice %189 {offsets = [0, 0], sizes = [32, 32], strides = [1, 1]} : vector<32x128xf32> to vector<32x32xf32>
    %c26 = arith.constant 26 : index
    %191 = memref.load %arg1[%c26] : memref<36xf32, #tpu.memory_space<smem>>
    %192 = vector.broadcast %191 : f32 to vector<32x32xf32>
    %193 = arith.mulf %192, %190 : vector<32x32xf32>
    %194 = arith.addf %188, %193 : vector<32x32xf32>
    %c3_79 = arith.constant 3 : index
    %c7_80 = arith.constant 7 : index
    %c0_81 = arith.constant 0 : index
    %195 = vector.load %arg5[%c3_79, %c7_80, %c0_81] : memref<4x48x128xf32, #tpu.memory_space<vmem>>, vector<1x32x128xf32>
    %196 = vector.shape_cast %195 : vector<1x32x128xf32> to vector<32x128xf32>
    %c1_i32_82 = arith.constant 1 : i32
    %197 = tpu.dynamic_rotate %196 by %c1_i32_82 dim 1 : vector<32x128xf32>, i32 -> vector<32x128xf32>
    %198 = vector.extract_strided_slice %197 {offsets = [0, 0], sizes = [32, 32], strides = [1, 1]} : vector<32x128xf32> to vector<32x32xf32>
    %c27 = arith.constant 27 : index
    %199 = memref.load %arg1[%c27] : memref<36xf32, #tpu.memory_space<smem>>
    %200 = vector.broadcast %199 : f32 to vector<32x32xf32>
    %201 = arith.mulf %200, %198 : vector<32x32xf32>
    %202 = arith.addf %194, %201 : vector<32x32xf32>
    %203 = vector.extract_strided_slice %196 {offsets = [0, 0], sizes = [32, 32], strides = [1, 1]} : vector<32x128xf32> to vector<32x32xf32>
    %c28 = arith.constant 28 : index
    %204 = memref.load %arg1[%c28] : memref<36xf32, #tpu.memory_space<smem>>
    %205 = vector.broadcast %204 : f32 to vector<32x32xf32>
    %206 = arith.mulf %205, %203 : vector<32x32xf32>
    %207 = arith.addf %202, %206 : vector<32x32xf32>
    %c127_i32_83 = arith.constant 127 : i32
    %208 = tpu.dynamic_rotate %196 by %c127_i32_83 dim 1 : vector<32x128xf32>, i32 -> vector<32x128xf32>
    %209 = vector.extract_strided_slice %208 {offsets = [0, 0], sizes = [32, 32], strides = [1, 1]} : vector<32x128xf32> to vector<32x32xf32>
    %c29 = arith.constant 29 : index
    %210 = memref.load %arg1[%c29] : memref<36xf32, #tpu.memory_space<smem>>
    %211 = vector.broadcast %210 : f32 to vector<32x32xf32>
    %212 = arith.mulf %211, %209 : vector<32x32xf32>
    %213 = arith.addf %207, %212 : vector<32x32xf32>
    %c3_84 = arith.constant 3 : index
    %c8_85 = arith.constant 8 : index
    %c0_86 = arith.constant 0 : index
    %214 = vector.load %arg5[%c3_84, %c8_85, %c0_86] : memref<4x48x128xf32, #tpu.memory_space<vmem>>, vector<1x32x128xf32>
    %215 = vector.shape_cast %214 : vector<1x32x128xf32> to vector<32x128xf32>
    %c1_i32_87 = arith.constant 1 : i32
    %216 = tpu.dynamic_rotate %215 by %c1_i32_87 dim 1 : vector<32x128xf32>, i32 -> vector<32x128xf32>
    %217 = vector.extract_strided_slice %216 {offsets = [0, 0], sizes = [32, 32], strides = [1, 1]} : vector<32x128xf32> to vector<32x32xf32>
    %c30 = arith.constant 30 : index
    %218 = memref.load %arg1[%c30] : memref<36xf32, #tpu.memory_space<smem>>
    %219 = vector.broadcast %218 : f32 to vector<32x32xf32>
    %220 = arith.mulf %219, %217 : vector<32x32xf32>
    %221 = arith.addf %213, %220 : vector<32x32xf32>
    %222 = vector.extract_strided_slice %215 {offsets = [0, 0], sizes = [32, 32], strides = [1, 1]} : vector<32x128xf32> to vector<32x32xf32>
    %c31 = arith.constant 31 : index
    %223 = memref.load %arg1[%c31] : memref<36xf32, #tpu.memory_space<smem>>
    %224 = vector.broadcast %223 : f32 to vector<32x32xf32>
    %225 = arith.mulf %224, %222 : vector<32x32xf32>
    %226 = arith.addf %221, %225 : vector<32x32xf32>
    %c127_i32_88 = arith.constant 127 : i32
    %227 = tpu.dynamic_rotate %215 by %c127_i32_88 dim 1 : vector<32x128xf32>, i32 -> vector<32x128xf32>
    %228 = vector.extract_strided_slice %227 {offsets = [0, 0], sizes = [32, 32], strides = [1, 1]} : vector<32x128xf32> to vector<32x32xf32>
    %c32_89 = arith.constant 32 : index
    %229 = memref.load %arg1[%c32_89] : memref<36xf32, #tpu.memory_space<smem>>
    %230 = vector.broadcast %229 : f32 to vector<32x32xf32>
    %231 = arith.mulf %230, %228 : vector<32x32xf32>
    %232 = arith.addf %226, %231 : vector<32x32xf32>
    %c3_90 = arith.constant 3 : index
    %c9_91 = arith.constant 9 : index
    %c0_92 = arith.constant 0 : index
    %233 = vector.load %arg5[%c3_90, %c9_91, %c0_92] : memref<4x48x128xf32, #tpu.memory_space<vmem>>, vector<1x32x128xf32>
    %234 = vector.shape_cast %233 : vector<1x32x128xf32> to vector<32x128xf32>
    %c1_i32_93 = arith.constant 1 : i32
    %235 = tpu.dynamic_rotate %234 by %c1_i32_93 dim 1 : vector<32x128xf32>, i32 -> vector<32x128xf32>
    %236 = vector.extract_strided_slice %235 {offsets = [0, 0], sizes = [32, 32], strides = [1, 1]} : vector<32x128xf32> to vector<32x32xf32>
    %c33 = arith.constant 33 : index
    %237 = memref.load %arg1[%c33] : memref<36xf32, #tpu.memory_space<smem>>
    %238 = vector.broadcast %237 : f32 to vector<32x32xf32>
    %239 = arith.mulf %238, %236 : vector<32x32xf32>
    %240 = arith.addf %232, %239 : vector<32x32xf32>
    %241 = vector.extract_strided_slice %234 {offsets = [0, 0], sizes = [32, 32], strides = [1, 1]} : vector<32x128xf32> to vector<32x32xf32>
    %c34 = arith.constant 34 : index
    %242 = memref.load %arg1[%c34] : memref<36xf32, #tpu.memory_space<smem>>
    %243 = vector.broadcast %242 : f32 to vector<32x32xf32>
    %244 = arith.mulf %243, %241 : vector<32x32xf32>
    %245 = arith.addf %240, %244 : vector<32x32xf32>
    %c127_i32_94 = arith.constant 127 : i32
    %246 = tpu.dynamic_rotate %234 by %c127_i32_94 dim 1 : vector<32x128xf32>, i32 -> vector<32x128xf32>
    %247 = vector.extract_strided_slice %246 {offsets = [0, 0], sizes = [32, 32], strides = [1, 1]} : vector<32x128xf32> to vector<32x32xf32>
    %c35 = arith.constant 35 : index
    %248 = memref.load %arg1[%c35] : memref<36xf32, #tpu.memory_space<smem>>
    %249 = vector.broadcast %248 : f32 to vector<32x32xf32>
    %250 = arith.mulf %249, %247 : vector<32x32xf32>
    %251 = arith.addf %245, %250 : vector<32x32xf32>
    %c0_95 = arith.constant 0 : index
    %252 = memref.load %arg2[%c0_95] : memref<1xf32, #tpu.memory_space<smem>>
    %253 = vector.broadcast %252 : f32 to vector<32x32xf32>
    %254 = arith.addf %251, %253 : vector<32x32xf32>
    %255 = arith.truncf %254 : vector<32x32xf32> to vector<32x32xbf16>
    %c0_96 = arith.constant 0 : index
    %c0_97 = arith.constant 0 : index
    %c0_98 = arith.constant 0 : index
    %c0_99 = arith.constant 0 : index
    %256 = vector.load %arg4[%c0_96, %c0_97, %c0_98, %c0_99] : memref<1x1x32x32xbf16, #tpu.memory_space<vmem>>, vector<1x1x32x32xbf16>
    %257 = vector.shape_cast %256 : vector<1x1x32x32xbf16> to vector<32x32xbf16>
    %258 = vector.shape_cast %255 : vector<32x32xbf16> to vector<1x1x32x32xbf16>
    tpu.vector_store %arg4[%c0_96, %c0_97, %c0_98, %c0_99], %258 {strides = array<i32>} : memref<1x1x32x32xbf16, #tpu.memory_space<vmem>>, vector<1x1x32x32xbf16>,
    return
  }
  func.func @transform_0(%arg0: i32) -> i32 {
    %c0_i32 = arith.constant 0 : i32
    %c0_i32_0 = arith.constant 0 : i32
    return %c0_i32 : i32
  }
  func.func @transform_1(%arg0: i32) -> i32 {
    %c0_i32 = arith.constant 0 : i32
    %c0_i32_0 = arith.constant 0 : i32
    return %c0_i32 : i32
  }
  func.func @transform_2(%arg0: i32) -> (i32, i32, i32, i32) {
    %c0_i32 = arith.constant 0 : i32
    %c0_i32_0 = arith.constant 0 : i32
    %c0_i32_1 = arith.constant 0 : i32
    %c0_i32_2 = arith.constant 0 : i32
    return %arg0, %c0_i32, %c0_i32_0, %c0_i32_1 : i32, i32, i32, i32
  }
  func.func @transform_3(%arg0: i32) -> (i32, i32, i32, i32) {
    %c0_i32 = arith.constant 0 : i32
    %c0_i32_0 = arith.constant 0 : i32
    %c0_i32_1 = arith.constant 0 : i32
    %c0_i32_2 = arith.constant 0 : i32
    return %arg0, %c0_i32, %c0_i32_0, %c0_i32_1 : i32, i32, i32, i32
  }
}

module attributes {stable_mosaic.version = 11 : i64} {
  func.func @_tail_kernel(%arg0: i32, %arg1: memref<36xf32, #tpu.memory_space<smem>>, %arg2: memref<4xf32, #tpu.memory_space<smem>>, %arg3: memref<144xf32, #tpu.memory_space<smem>>, %arg4: memref<4xf32, #tpu.memory_space<smem>>, %arg5: memref<144xf32, #tpu.memory_space<smem>>, %arg6: memref<4xf32, #tpu.memory_space<smem>>, %arg7: memref<1x1x32x32xbf16, #tpu.memory_space<vmem>>, %arg8: memref<1x4x32x32xf32, #tpu.memory_space<vmem>>, %arg9: memref<1x4x32x32xf32, #tpu.memory_space<vmem>>, %arg10: memref<4x48x128xf32, #tpu.memory_space<vmem>>) attributes {dimension_semantics = [#tpu.dimension_semantics<parallel>], iteration_bounds = array<i64: 2>, scalar_prefetch = 0 : i64, scratch_operands = 1 : i64, tpu.core_type = #tpu.core_type<tc>, window_params = [{transform_indices = @transform_0, window_bounds = array<i64: 36>}, {transform_indices = @transform_1, window_bounds = array<i64: 4>}, {transform_indices = @transform_2, window_bounds = array<i64: 144>}, {transform_indices = @transform_3, window_bounds = array<i64: 4>}, {transform_indices = @transform_4, window_bounds = array<i64: 144>}, {transform_indices = @transform_5, window_bounds = array<i64: 4>}, {transform_indices = @transform_6, window_bounds = array<i64: 1, 1, 32, 32>}, {transform_indices = @transform_7, window_bounds = array<i64: 1, 4, 32, 32>}, {transform_indices = @transform_8, window_bounds = array<i64: 1, 4, 32, 32>}]} {
    %cst = arith.constant 0.000000e+00 : f32
    %0 = vector.broadcast %cst : f32 to vector<4x8x128xf32>
    %c0 = arith.constant 0 : index
    %c0_0 = arith.constant 0 : index
    %c0_1 = arith.constant 0 : index
    %1 = vector.load %arg10[%c0, %c0_0, %c0_1] : memref<4x48x128xf32, #tpu.memory_space<vmem>>, vector<4x8x128xf32>
    tpu.vector_store %arg10[%c0, %c0_0, %c0_1], %0 {strides = array<i32>} : memref<4x48x128xf32, #tpu.memory_space<vmem>>, vector<4x8x128xf32>,
    %c0_2 = arith.constant 0 : index
    %c40 = arith.constant 40 : index
    %c0_3 = arith.constant 0 : index
    %2 = vector.load %arg10[%c0_2, %c40, %c0_3] : memref<4x48x128xf32, #tpu.memory_space<vmem>>, vector<4x8x128xf32>
    tpu.vector_store %arg10[%c0_2, %c40, %c0_3], %0 {strides = array<i32>} : memref<4x48x128xf32, #tpu.memory_space<vmem>>, vector<4x8x128xf32>,
    %cst_4 = arith.constant 0.000000e+00 : f32
    %3 = vector.broadcast %cst_4 : f32 to vector<4x32x96xf32>
    %c0_5 = arith.constant 0 : index
    %c8 = arith.constant 8 : index
    %c32 = arith.constant 32 : index
    %4 = vector.load %arg10[%c0_5, %c8, %c32] : memref<4x48x128xf32, #tpu.memory_space<vmem>>, vector<4x32x96xf32>
    tpu.vector_store %arg10[%c0_5, %c8, %c32], %3 {strides = array<i32>} : memref<4x48x128xf32, #tpu.memory_space<vmem>>, vector<4x32x96xf32>,
    %c0_6 = arith.constant 0 : index
    %c0_7 = arith.constant 0 : index
    %c0_8 = arith.constant 0 : index
    %c0_9 = arith.constant 0 : index
    %5 = vector.load %arg7[%c0_6, %c0_7, %c0_8, %c0_9] : memref<1x1x32x32xbf16, #tpu.memory_space<vmem>>, vector<1x1x32x32xbf16>
    %6 = vector.shape_cast %5 : vector<1x1x32x32xbf16> to vector<32x32xbf16>
    %7 = arith.extf %6 : vector<32x32xbf16> to vector<32x32xf32>
    %c0_10 = arith.constant 0 : index
    %c8_11 = arith.constant 8 : index
    %c0_12 = arith.constant 0 : index
    %8 = vector.load %arg10[%c0_10, %c8_11, %c0_12] : memref<4x48x128xf32, #tpu.memory_space<vmem>>, vector<1x32x32xf32>
    %9 = vector.shape_cast %8 : vector<1x32x32xf32> to vector<32x32xf32>
    %10 = vector.shape_cast %7 : vector<32x32xf32> to vector<1x32x32xf32>
    tpu.vector_store %arg10[%c0_10, %c8_11, %c0_12], %10 {strides = array<i32>} : memref<4x48x128xf32, #tpu.memory_space<vmem>>, vector<1x32x32xf32>,
    %c0_13 = arith.constant 0 : index
    %c7 = arith.constant 7 : index
    %c0_14 = arith.constant 0 : index
    %11 = vector.load %arg10[%c0_13, %c7, %c0_14] : memref<4x48x128xf32, #tpu.memory_space<vmem>>, vector<1x32x128xf32>
    %12 = vector.shape_cast %11 : vector<1x32x128xf32> to vector<32x128xf32>
    %c1_i32 = arith.constant 1 : i32
    %13 = tpu.dynamic_rotate %12 by %c1_i32 dim 1 : vector<32x128xf32>, i32 -> vector<32x128xf32>
    %14 = vector.extract_strided_slice %13 {offsets = [0, 0], sizes = [32, 32], strides = [1, 1]} : vector<32x128xf32> to vector<32x32xf32>
    %c0_15 = arith.constant 0 : index
    %15 = memref.load %arg1[%c0_15] : memref<36xf32, #tpu.memory_space<smem>>
    %16 = vector.broadcast %15 : f32 to vector<32x32xf32>
    %17 = arith.mulf %16, %14 : vector<32x32xf32>
    %c9 = arith.constant 9 : index
    %18 = memref.load %arg1[%c9] : memref<36xf32, #tpu.memory_space<smem>>
    %19 = vector.broadcast %18 : f32 to vector<32x32xf32>
    %20 = arith.mulf %19, %14 : vector<32x32xf32>
    %c18 = arith.constant 18 : index
    %21 = memref.load %arg1[%c18] : memref<36xf32, #tpu.memory_space<smem>>
    %22 = vector.broadcast %21 : f32 to vector<32x32xf32>
    %23 = arith.mulf %22, %14 : vector<32x32xf32>
    %c27 = arith.constant 27 : index
    %24 = memref.load %arg1[%c27] : memref<36xf32, #tpu.memory_space<smem>>
    %25 = vector.broadcast %24 : f32 to vector<32x32xf32>
    %26 = arith.mulf %25, %14 : vector<32x32xf32>
    %27 = vector.extract_strided_slice %12 {offsets = [0, 0], sizes = [32, 32], strides = [1, 1]} : vector<32x128xf32> to vector<32x32xf32>
    %c1 = arith.constant 1 : index
    %28 = memref.load %arg1[%c1] : memref<36xf32, #tpu.memory_space<smem>>
    %29 = vector.broadcast %28 : f32 to vector<32x32xf32>
    %30 = arith.mulf %29, %27 : vector<32x32xf32>
    %31 = arith.addf %17, %30 : vector<32x32xf32>
    %c10 = arith.constant 10 : index
    %32 = memref.load %arg1[%c10] : memref<36xf32, #tpu.memory_space<smem>>
    %33 = vector.broadcast %32 : f32 to vector<32x32xf32>
    %34 = arith.mulf %33, %27 : vector<32x32xf32>
    %35 = arith.addf %20, %34 : vector<32x32xf32>
    %c19 = arith.constant 19 : index
    %36 = memref.load %arg1[%c19] : memref<36xf32, #tpu.memory_space<smem>>
    %37 = vector.broadcast %36 : f32 to vector<32x32xf32>
    %38 = arith.mulf %37, %27 : vector<32x32xf32>
    %39 = arith.addf %23, %38 : vector<32x32xf32>
    %c28 = arith.constant 28 : index
    %40 = memref.load %arg1[%c28] : memref<36xf32, #tpu.memory_space<smem>>
    %41 = vector.broadcast %40 : f32 to vector<32x32xf32>
    %42 = arith.mulf %41, %27 : vector<32x32xf32>
    %43 = arith.addf %26, %42 : vector<32x32xf32>
    %c127_i32 = arith.constant 127 : i32
    %44 = tpu.dynamic_rotate %12 by %c127_i32 dim 1 : vector<32x128xf32>, i32 -> vector<32x128xf32>
    %45 = vector.extract_strided_slice %44 {offsets = [0, 0], sizes = [32, 32], strides = [1, 1]} : vector<32x128xf32> to vector<32x32xf32>
    %c2 = arith.constant 2 : index
    %46 = memref.load %arg1[%c2] : memref<36xf32, #tpu.memory_space<smem>>
    %47 = vector.broadcast %46 : f32 to vector<32x32xf32>
    %48 = arith.mulf %47, %45 : vector<32x32xf32>
    %49 = arith.addf %31, %48 : vector<32x32xf32>
    %c11 = arith.constant 11 : index
    %50 = memref.load %arg1[%c11] : memref<36xf32, #tpu.memory_space<smem>>
    %51 = vector.broadcast %50 : f32 to vector<32x32xf32>
    %52 = arith.mulf %51, %45 : vector<32x32xf32>
    %53 = arith.addf %35, %52 : vector<32x32xf32>
    %c20 = arith.constant 20 : index
    %54 = memref.load %arg1[%c20] : memref<36xf32, #tpu.memory_space<smem>>
    %55 = vector.broadcast %54 : f32 to vector<32x32xf32>
    %56 = arith.mulf %55, %45 : vector<32x32xf32>
    %57 = arith.addf %39, %56 : vector<32x32xf32>
    %c29 = arith.constant 29 : index
    %58 = memref.load %arg1[%c29] : memref<36xf32, #tpu.memory_space<smem>>
    %59 = vector.broadcast %58 : f32 to vector<32x32xf32>
    %60 = arith.mulf %59, %45 : vector<32x32xf32>
    %61 = arith.addf %43, %60 : vector<32x32xf32>
    %c0_16 = arith.constant 0 : index
    %c8_17 = arith.constant 8 : index
    %c0_18 = arith.constant 0 : index
    %62 = vector.load %arg10[%c0_16, %c8_17, %c0_18] : memref<4x48x128xf32, #tpu.memory_space<vmem>>, vector<1x32x128xf32>
    %63 = vector.shape_cast %62 : vector<1x32x128xf32> to vector<32x128xf32>
    %c1_i32_19 = arith.constant 1 : i32
    %64 = tpu.dynamic_rotate %63 by %c1_i32_19 dim 1 : vector<32x128xf32>, i32 -> vector<32x128xf32>
    %65 = vector.extract_strided_slice %64 {offsets = [0, 0], sizes = [32, 32], strides = [1, 1]} : vector<32x128xf32> to vector<32x32xf32>
    %c3 = arith.constant 3 : index
    %66 = memref.load %arg1[%c3] : memref<36xf32, #tpu.memory_space<smem>>
    %67 = vector.broadcast %66 : f32 to vector<32x32xf32>
    %68 = arith.mulf %67, %65 : vector<32x32xf32>
    %69 = arith.addf %49, %68 : vector<32x32xf32>
    %c12 = arith.constant 12 : index
    %70 = memref.load %arg1[%c12] : memref<36xf32, #tpu.memory_space<smem>>
    %71 = vector.broadcast %70 : f32 to vector<32x32xf32>
    %72 = arith.mulf %71, %65 : vector<32x32xf32>
    %73 = arith.addf %53, %72 : vector<32x32xf32>
    %c21 = arith.constant 21 : index
    %74 = memref.load %arg1[%c21] : memref<36xf32, #tpu.memory_space<smem>>
    %75 = vector.broadcast %74 : f32 to vector<32x32xf32>
    %76 = arith.mulf %75, %65 : vector<32x32xf32>
    %77 = arith.addf %57, %76 : vector<32x32xf32>
    %c30 = arith.constant 30 : index
    %78 = memref.load %arg1[%c30] : memref<36xf32, #tpu.memory_space<smem>>
    %79 = vector.broadcast %78 : f32 to vector<32x32xf32>
    %80 = arith.mulf %79, %65 : vector<32x32xf32>
    %81 = arith.addf %61, %80 : vector<32x32xf32>
    %82 = vector.extract_strided_slice %63 {offsets = [0, 0], sizes = [32, 32], strides = [1, 1]} : vector<32x128xf32> to vector<32x32xf32>
    %c4 = arith.constant 4 : index
    %83 = memref.load %arg1[%c4] : memref<36xf32, #tpu.memory_space<smem>>
    %84 = vector.broadcast %83 : f32 to vector<32x32xf32>
    %85 = arith.mulf %84, %82 : vector<32x32xf32>
    %86 = arith.addf %69, %85 : vector<32x32xf32>
    %c13 = arith.constant 13 : index
    %87 = memref.load %arg1[%c13] : memref<36xf32, #tpu.memory_space<smem>>
    %88 = vector.broadcast %87 : f32 to vector<32x32xf32>
    %89 = arith.mulf %88, %82 : vector<32x32xf32>
    %90 = arith.addf %73, %89 : vector<32x32xf32>
    %c22 = arith.constant 22 : index
    %91 = memref.load %arg1[%c22] : memref<36xf32, #tpu.memory_space<smem>>
    %92 = vector.broadcast %91 : f32 to vector<32x32xf32>
    %93 = arith.mulf %92, %82 : vector<32x32xf32>
    %94 = arith.addf %77, %93 : vector<32x32xf32>
    %c31 = arith.constant 31 : index
    %95 = memref.load %arg1[%c31] : memref<36xf32, #tpu.memory_space<smem>>
    %96 = vector.broadcast %95 : f32 to vector<32x32xf32>
    %97 = arith.mulf %96, %82 : vector<32x32xf32>
    %98 = arith.addf %81, %97 : vector<32x32xf32>
    %c127_i32_20 = arith.constant 127 : i32
    %99 = tpu.dynamic_rotate %63 by %c127_i32_20 dim 1 : vector<32x128xf32>, i32 -> vector<32x128xf32>
    %100 = vector.extract_strided_slice %99 {offsets = [0, 0], sizes = [32, 32], strides = [1, 1]} : vector<32x128xf32> to vector<32x32xf32>
    %c5 = arith.constant 5 : index
    %101 = memref.load %arg1[%c5] : memref<36xf32, #tpu.memory_space<smem>>
    %102 = vector.broadcast %101 : f32 to vector<32x32xf32>
    %103 = arith.mulf %102, %100 : vector<32x32xf32>
    %104 = arith.addf %86, %103 : vector<32x32xf32>
    %c14 = arith.constant 14 : index
    %105 = memref.load %arg1[%c14] : memref<36xf32, #tpu.memory_space<smem>>
    %106 = vector.broadcast %105 : f32 to vector<32x32xf32>
    %107 = arith.mulf %106, %100 : vector<32x32xf32>
    %108 = arith.addf %90, %107 : vector<32x32xf32>
    %c23 = arith.constant 23 : index
    %109 = memref.load %arg1[%c23] : memref<36xf32, #tpu.memory_space<smem>>
    %110 = vector.broadcast %109 : f32 to vector<32x32xf32>
    %111 = arith.mulf %110, %100 : vector<32x32xf32>
    %112 = arith.addf %94, %111 : vector<32x32xf32>
    %c32_21 = arith.constant 32 : index
    %113 = memref.load %arg1[%c32_21] : memref<36xf32, #tpu.memory_space<smem>>
    %114 = vector.broadcast %113 : f32 to vector<32x32xf32>
    %115 = arith.mulf %114, %100 : vector<32x32xf32>
    %116 = arith.addf %98, %115 : vector<32x32xf32>
    %c0_22 = arith.constant 0 : index
    %c9_23 = arith.constant 9 : index
    %c0_24 = arith.constant 0 : index
    %117 = vector.load %arg10[%c0_22, %c9_23, %c0_24] : memref<4x48x128xf32, #tpu.memory_space<vmem>>, vector<1x32x128xf32>
    %118 = vector.shape_cast %117 : vector<1x32x128xf32> to vector<32x128xf32>
    %c1_i32_25 = arith.constant 1 : i32
    %119 = tpu.dynamic_rotate %118 by %c1_i32_25 dim 1 : vector<32x128xf32>, i32 -> vector<32x128xf32>
    %120 = vector.extract_strided_slice %119 {offsets = [0, 0], sizes = [32, 32], strides = [1, 1]} : vector<32x128xf32> to vector<32x32xf32>
    %c6 = arith.constant 6 : index
    %121 = memref.load %arg1[%c6] : memref<36xf32, #tpu.memory_space<smem>>
    %122 = vector.broadcast %121 : f32 to vector<32x32xf32>
    %123 = arith.mulf %122, %120 : vector<32x32xf32>
    %124 = arith.addf %104, %123 : vector<32x32xf32>
    %c15 = arith.constant 15 : index
    %125 = memref.load %arg1[%c15] : memref<36xf32, #tpu.memory_space<smem>>
    %126 = vector.broadcast %125 : f32 to vector<32x32xf32>
    %127 = arith.mulf %126, %120 : vector<32x32xf32>
    %128 = arith.addf %108, %127 : vector<32x32xf32>
    %c24 = arith.constant 24 : index
    %129 = memref.load %arg1[%c24] : memref<36xf32, #tpu.memory_space<smem>>
    %130 = vector.broadcast %129 : f32 to vector<32x32xf32>
    %131 = arith.mulf %130, %120 : vector<32x32xf32>
    %132 = arith.addf %112, %131 : vector<32x32xf32>
    %c33 = arith.constant 33 : index
    %133 = memref.load %arg1[%c33] : memref<36xf32, #tpu.memory_space<smem>>
    %134 = vector.broadcast %133 : f32 to vector<32x32xf32>
    %135 = arith.mulf %134, %120 : vector<32x32xf32>
    %136 = arith.addf %116, %135 : vector<32x32xf32>
    %137 = vector.extract_strided_slice %118 {offsets = [0, 0], sizes = [32, 32], strides = [1, 1]} : vector<32x128xf32> to vector<32x32xf32>
    %c7_26 = arith.constant 7 : index
    %138 = memref.load %arg1[%c7_26] : memref<36xf32, #tpu.memory_space<smem>>
    %139 = vector.broadcast %138 : f32 to vector<32x32xf32>
    %140 = arith.mulf %139, %137 : vector<32x32xf32>
    %141 = arith.addf %124, %140 : vector<32x32xf32>
    %c16 = arith.constant 16 : index
    %142 = memref.load %arg1[%c16] : memref<36xf32, #tpu.memory_space<smem>>
    %143 = vector.broadcast %142 : f32 to vector<32x32xf32>
    %144 = arith.mulf %143, %137 : vector<32x32xf32>
    %145 = arith.addf %128, %144 : vector<32x32xf32>
    %c25 = arith.constant 25 : index
    %146 = memref.load %arg1[%c25] : memref<36xf32, #tpu.memory_space<smem>>
    %147 = vector.broadcast %146 : f32 to vector<32x32xf32>
    %148 = arith.mulf %147, %137 : vector<32x32xf32>
    %149 = arith.addf %132, %148 : vector<32x32xf32>
    %c34 = arith.constant 34 : index
    %150 = memref.load %arg1[%c34] : memref<36xf32, #tpu.memory_space<smem>>
    %151 = vector.broadcast %150 : f32 to vector<32x32xf32>
    %152 = arith.mulf %151, %137 : vector<32x32xf32>
    %153 = arith.addf %136, %152 : vector<32x32xf32>
    %c127_i32_27 = arith.constant 127 : i32
    %154 = tpu.dynamic_rotate %118 by %c127_i32_27 dim 1 : vector<32x128xf32>, i32 -> vector<32x128xf32>
    %155 = vector.extract_strided_slice %154 {offsets = [0, 0], sizes = [32, 32], strides = [1, 1]} : vector<32x128xf32> to vector<32x32xf32>
    %c8_28 = arith.constant 8 : index
    %156 = memref.load %arg1[%c8_28] : memref<36xf32, #tpu.memory_space<smem>>
    %157 = vector.broadcast %156 : f32 to vector<32x32xf32>
    %158 = arith.mulf %157, %155 : vector<32x32xf32>
    %159 = arith.addf %141, %158 : vector<32x32xf32>
    %c17 = arith.constant 17 : index
    %160 = memref.load %arg1[%c17] : memref<36xf32, #tpu.memory_space<smem>>
    %161 = vector.broadcast %160 : f32 to vector<32x32xf32>
    %162 = arith.mulf %161, %155 : vector<32x32xf32>
    %163 = arith.addf %145, %162 : vector<32x32xf32>
    %c26 = arith.constant 26 : index
    %164 = memref.load %arg1[%c26] : memref<36xf32, #tpu.memory_space<smem>>
    %165 = vector.broadcast %164 : f32 to vector<32x32xf32>
    %166 = arith.mulf %165, %155 : vector<32x32xf32>
    %167 = arith.addf %149, %166 : vector<32x32xf32>
    %c35 = arith.constant 35 : index
    %168 = memref.load %arg1[%c35] : memref<36xf32, #tpu.memory_space<smem>>
    %169 = vector.broadcast %168 : f32 to vector<32x32xf32>
    %170 = arith.mulf %169, %155 : vector<32x32xf32>
    %171 = arith.addf %153, %170 : vector<32x32xf32>
    %c0_29 = arith.constant 0 : index
    %172 = memref.load %arg2[%c0_29] : memref<4xf32, #tpu.memory_space<smem>>
    %173 = vector.broadcast %172 : f32 to vector<32x32xf32>
    %174 = arith.addf %159, %173 : vector<32x32xf32>
    %c1_30 = arith.constant 1 : index
    %175 = memref.load %arg2[%c1_30] : memref<4xf32, #tpu.memory_space<smem>>
    %176 = vector.broadcast %175 : f32 to vector<32x32xf32>
    %177 = arith.addf %163, %176 : vector<32x32xf32>
    %c2_31 = arith.constant 2 : index
    %178 = memref.load %arg2[%c2_31] : memref<4xf32, #tpu.memory_space<smem>>
    %179 = vector.broadcast %178 : f32 to vector<32x32xf32>
    %180 = arith.addf %167, %179 : vector<32x32xf32>
    %c3_32 = arith.constant 3 : index
    %181 = memref.load %arg2[%c3_32] : memref<4xf32, #tpu.memory_space<smem>>
    %182 = vector.broadcast %181 : f32 to vector<32x32xf32>
    %183 = arith.addf %171, %182 : vector<32x32xf32>
    %c0_33 = arith.constant 0 : index
    %c8_34 = arith.constant 8 : index
    %c0_35 = arith.constant 0 : index
    %184 = vector.load %arg10[%c0_33, %c8_34, %c0_35] : memref<4x48x128xf32, #tpu.memory_space<vmem>>, vector<1x32x32xf32>
    %185 = vector.shape_cast %184 : vector<1x32x32xf32> to vector<32x32xf32>
    %186 = vector.shape_cast %174 : vector<32x32xf32> to vector<1x32x32xf32>
    tpu.vector_store %arg10[%c0_33, %c8_34, %c0_35], %186 {strides = array<i32>} : memref<4x48x128xf32, #tpu.memory_space<vmem>>, vector<1x32x32xf32>,
    %c1_36 = arith.constant 1 : index
    %c8_37 = arith.constant 8 : index
    %c0_38 = arith.constant 0 : index
    %187 = vector.load %arg10[%c1_36, %c8_37, %c0_38] : memref<4x48x128xf32, #tpu.memory_space<vmem>>, vector<1x32x32xf32>
    %188 = vector.shape_cast %187 : vector<1x32x32xf32> to vector<32x32xf32>
    %189 = vector.shape_cast %177 : vector<32x32xf32> to vector<1x32x32xf32>
    tpu.vector_store %arg10[%c1_36, %c8_37, %c0_38], %189 {strides = array<i32>} : memref<4x48x128xf32, #tpu.memory_space<vmem>>, vector<1x32x32xf32>,
    %c2_39 = arith.constant 2 : index
    %c8_40 = arith.constant 8 : index
    %c0_41 = arith.constant 0 : index
    %190 = vector.load %arg10[%c2_39, %c8_40, %c0_41] : memref<4x48x128xf32, #tpu.memory_space<vmem>>, vector<1x32x32xf32>
    %191 = vector.shape_cast %190 : vector<1x32x32xf32> to vector<32x32xf32>
    %192 = vector.shape_cast %180 : vector<32x32xf32> to vector<1x32x32xf32>
    tpu.vector_store %arg10[%c2_39, %c8_40, %c0_41], %192 {strides = array<i32>} : memref<4x48x128xf32, #tpu.memory_space<vmem>>, vector<1x32x32xf32>,
    %c3_42 = arith.constant 3 : index
    %c8_43 = arith.constant 8 : index
    %c0_44 = arith.constant 0 : index
    %193 = vector.load %arg10[%c3_42, %c8_43, %c0_44] : memref<4x48x128xf32, #tpu.memory_space<vmem>>, vector<1x32x32xf32>
    %194 = vector.shape_cast %193 : vector<1x32x32xf32> to vector<32x32xf32>
    %195 = vector.shape_cast %183 : vector<32x32xf32> to vector<1x32x32xf32>
    tpu.vector_store %arg10[%c3_42, %c8_43, %c0_44], %195 {strides = array<i32>} : memref<4x48x128xf32, #tpu.memory_space<vmem>>, vector<1x32x32xf32>,
    %c0_45 = arith.constant 0 : index
    %c7_46 = arith.constant 7 : index
    %c0_47 = arith.constant 0 : index
    %196 = vector.load %arg10[%c0_45, %c7_46, %c0_47] : memref<4x48x128xf32, #tpu.memory_space<vmem>>, vector<1x32x128xf32>
    %197 = vector.shape_cast %196 : vector<1x32x128xf32> to vector<32x128xf32>
    %c1_i32_48 = arith.constant 1 : i32
    %198 = tpu.dynamic_rotate %197 by %c1_i32_48 dim 1 : vector<32x128xf32>, i32 -> vector<32x128xf32>
    %199 = vector.extract_strided_slice %198 {offsets = [0, 0], sizes = [32, 32], strides = [1, 1]} : vector<32x128xf32> to vector<32x32xf32>
    %c0_49 = arith.constant 0 : index
    %200 = memref.load %arg3[%c0_49] : memref<144xf32, #tpu.memory_space<smem>>
    %201 = vector.broadcast %200 : f32 to vector<32x32xf32>
    %202 = arith.mulf %201, %199 : vector<32x32xf32>
    %c36 = arith.constant 36 : index
    %203 = memref.load %arg3[%c36] : memref<144xf32, #tpu.memory_space<smem>>
    %204 = vector.broadcast %203 : f32 to vector<32x32xf32>
    %205 = arith.mulf %204, %199 : vector<32x32xf32>
    %c72 = arith.constant 72 : index
    %206 = memref.load %arg3[%c72] : memref<144xf32, #tpu.memory_space<smem>>
    %207 = vector.broadcast %206 : f32 to vector<32x32xf32>
    %208 = arith.mulf %207, %199 : vector<32x32xf32>
    %c108 = arith.constant 108 : index
    %209 = memref.load %arg3[%c108] : memref<144xf32, #tpu.memory_space<smem>>
    %210 = vector.broadcast %209 : f32 to vector<32x32xf32>
    %211 = arith.mulf %210, %199 : vector<32x32xf32>
    %212 = vector.extract_strided_slice %197 {offsets = [0, 0], sizes = [32, 32], strides = [1, 1]} : vector<32x128xf32> to vector<32x32xf32>
    %c1_50 = arith.constant 1 : index
    %213 = memref.load %arg3[%c1_50] : memref<144xf32, #tpu.memory_space<smem>>
    %214 = vector.broadcast %213 : f32 to vector<32x32xf32>
    %215 = arith.mulf %214, %212 : vector<32x32xf32>
    %216 = arith.addf %202, %215 : vector<32x32xf32>
    %c37 = arith.constant 37 : index
    %217 = memref.load %arg3[%c37] : memref<144xf32, #tpu.memory_space<smem>>
    %218 = vector.broadcast %217 : f32 to vector<32x32xf32>
    %219 = arith.mulf %218, %212 : vector<32x32xf32>
    %220 = arith.addf %205, %219 : vector<32x32xf32>
    %c73 = arith.constant 73 : index
    %221 = memref.load %arg3[%c73] : memref<144xf32, #tpu.memory_space<smem>>
    %222 = vector.broadcast %221 : f32 to vector<32x32xf32>
    %223 = arith.mulf %222, %212 : vector<32x32xf32>
    %224 = arith.addf %208, %223 : vector<32x32xf32>
    %c109 = arith.constant 109 : index
    %225 = memref.load %arg3[%c109] : memref<144xf32, #tpu.memory_space<smem>>
    %226 = vector.broadcast %225 : f32 to vector<32x32xf32>
    %227 = arith.mulf %226, %212 : vector<32x32xf32>
    %228 = arith.addf %211, %227 : vector<32x32xf32>
    %c127_i32_51 = arith.constant 127 : i32
    %229 = tpu.dynamic_rotate %197 by %c127_i32_51 dim 1 : vector<32x128xf32>, i32 -> vector<32x128xf32>
    %230 = vector.extract_strided_slice %229 {offsets = [0, 0], sizes = [32, 32], strides = [1, 1]} : vector<32x128xf32> to vector<32x32xf32>
    %c2_52 = arith.constant 2 : index
    %231 = memref.load %arg3[%c2_52] : memref<144xf32, #tpu.memory_space<smem>>
    %232 = vector.broadcast %231 : f32 to vector<32x32xf32>
    %233 = arith.mulf %232, %230 : vector<32x32xf32>
    %234 = arith.addf %216, %233 : vector<32x32xf32>
    %c38 = arith.constant 38 : index
    %235 = memref.load %arg3[%c38] : memref<144xf32, #tpu.memory_space<smem>>
    %236 = vector.broadcast %235 : f32 to vector<32x32xf32>
    %237 = arith.mulf %236, %230 : vector<32x32xf32>
    %238 = arith.addf %220, %237 : vector<32x32xf32>
    %c74 = arith.constant 74 : index
    %239 = memref.load %arg3[%c74] : memref<144xf32, #tpu.memory_space<smem>>
    %240 = vector.broadcast %239 : f32 to vector<32x32xf32>
    %241 = arith.mulf %240, %230 : vector<32x32xf32>
    %242 = arith.addf %224, %241 : vector<32x32xf32>
    %c110 = arith.constant 110 : index
    %243 = memref.load %arg3[%c110] : memref<144xf32, #tpu.memory_space<smem>>
    %244 = vector.broadcast %243 : f32 to vector<32x32xf32>
    %245 = arith.mulf %244, %230 : vector<32x32xf32>
    %246 = arith.addf %228, %245 : vector<32x32xf32>
    %c0_53 = arith.constant 0 : index
    %c8_54 = arith.constant 8 : index
    %c0_55 = arith.constant 0 : index
    %247 = vector.load %arg10[%c0_53, %c8_54, %c0_55] : memref<4x48x128xf32, #tpu.memory_space<vmem>>, vector<1x32x128xf32>
    %248 = vector.shape_cast %247 : vector<1x32x128xf32> to vector<32x128xf32>
    %c1_i32_56 = arith.constant 1 : i32
    %249 = tpu.dynamic_rotate %248 by %c1_i32_56 dim 1 : vector<32x128xf32>, i32 -> vector<32x128xf32>
    %250 = vector.extract_strided_slice %249 {offsets = [0, 0], sizes = [32, 32], strides = [1, 1]} : vector<32x128xf32> to vector<32x32xf32>
    %c3_57 = arith.constant 3 : index
    %251 = memref.load %arg3[%c3_57] : memref<144xf32, #tpu.memory_space<smem>>
    %252 = vector.broadcast %251 : f32 to vector<32x32xf32>
    %253 = arith.mulf %252, %250 : vector<32x32xf32>
    %254 = arith.addf %234, %253 : vector<32x32xf32>
    %c39 = arith.constant 39 : index
    %255 = memref.load %arg3[%c39] : memref<144xf32, #tpu.memory_space<smem>>
    %256 = vector.broadcast %255 : f32 to vector<32x32xf32>
    %257 = arith.mulf %256, %250 : vector<32x32xf32>
    %258 = arith.addf %238, %257 : vector<32x32xf32>
    %c75 = arith.constant 75 : index
    %259 = memref.load %arg3[%c75] : memref<144xf32, #tpu.memory_space<smem>>
    %260 = vector.broadcast %259 : f32 to vector<32x32xf32>
    %261 = arith.mulf %260, %250 : vector<32x32xf32>
    %262 = arith.addf %242, %261 : vector<32x32xf32>
    %c111 = arith.constant 111 : index
    %263 = memref.load %arg3[%c111] : memref<144xf32, #tpu.memory_space<smem>>
    %264 = vector.broadcast %263 : f32 to vector<32x32xf32>
    %265 = arith.mulf %264, %250 : vector<32x32xf32>
    %266 = arith.addf %246, %265 : vector<32x32xf32>
    %267 = vector.extract_strided_slice %248 {offsets = [0, 0], sizes = [32, 32], strides = [1, 1]} : vector<32x128xf32> to vector<32x32xf32>
    %c4_58 = arith.constant 4 : index
    %268 = memref.load %arg3[%c4_58] : memref<144xf32, #tpu.memory_space<smem>>
    %269 = vector.broadcast %268 : f32 to vector<32x32xf32>
    %270 = arith.mulf %269, %267 : vector<32x32xf32>
    %271 = arith.addf %254, %270 : vector<32x32xf32>
    %c40_59 = arith.constant 40 : index
    %272 = memref.load %arg3[%c40_59] : memref<144xf32, #tpu.memory_space<smem>>
    %273 = vector.broadcast %272 : f32 to vector<32x32xf32>
    %274 = arith.mulf %273, %267 : vector<32x32xf32>
    %275 = arith.addf %258, %274 : vector<32x32xf32>
    %c76 = arith.constant 76 : index
    %276 = memref.load %arg3[%c76] : memref<144xf32, #tpu.memory_space<smem>>
    %277 = vector.broadcast %276 : f32 to vector<32x32xf32>
    %278 = arith.mulf %277, %267 : vector<32x32xf32>
    %279 = arith.addf %262, %278 : vector<32x32xf32>
    %c112 = arith.constant 112 : index
    %280 = memref.load %arg3[%c112] : memref<144xf32, #tpu.memory_space<smem>>
    %281 = vector.broadcast %280 : f32 to vector<32x32xf32>
    %282 = arith.mulf %281, %267 : vector<32x32xf32>
    %283 = arith.addf %266, %282 : vector<32x32xf32>
    %c127_i32_60 = arith.constant 127 : i32
    %284 = tpu.dynamic_rotate %248 by %c127_i32_60 dim 1 : vector<32x128xf32>, i32 -> vector<32x128xf32>
    %285 = vector.extract_strided_slice %284 {offsets = [0, 0], sizes = [32, 32], strides = [1, 1]} : vector<32x128xf32> to vector<32x32xf32>
    %c5_61 = arith.constant 5 : index
    %286 = memref.load %arg3[%c5_61] : memref<144xf32, #tpu.memory_space<smem>>
    %287 = vector.broadcast %286 : f32 to vector<32x32xf32>
    %288 = arith.mulf %287, %285 : vector<32x32xf32>
    %289 = arith.addf %271, %288 : vector<32x32xf32>
    %c41 = arith.constant 41 : index
    %290 = memref.load %arg3[%c41] : memref<144xf32, #tpu.memory_space<smem>>
    %291 = vector.broadcast %290 : f32 to vector<32x32xf32>
    %292 = arith.mulf %291, %285 : vector<32x32xf32>
    %293 = arith.addf %275, %292 : vector<32x32xf32>
    %c77 = arith.constant 77 : index
    %294 = memref.load %arg3[%c77] : memref<144xf32, #tpu.memory_space<smem>>
    %295 = vector.broadcast %294 : f32 to vector<32x32xf32>
    %296 = arith.mulf %295, %285 : vector<32x32xf32>
    %297 = arith.addf %279, %296 : vector<32x32xf32>
    %c113 = arith.constant 113 : index
    %298 = memref.load %arg3[%c113] : memref<144xf32, #tpu.memory_space<smem>>
    %299 = vector.broadcast %298 : f32 to vector<32x32xf32>
    %300 = arith.mulf %299, %285 : vector<32x32xf32>
    %301 = arith.addf %283, %300 : vector<32x32xf32>
    %c0_62 = arith.constant 0 : index
    %c9_63 = arith.constant 9 : index
    %c0_64 = arith.constant 0 : index
    %302 = vector.load %arg10[%c0_62, %c9_63, %c0_64] : memref<4x48x128xf32, #tpu.memory_space<vmem>>, vector<1x32x128xf32>
    %303 = vector.shape_cast %302 : vector<1x32x128xf32> to vector<32x128xf32>
    %c1_i32_65 = arith.constant 1 : i32
    %304 = tpu.dynamic_rotate %303 by %c1_i32_65 dim 1 : vector<32x128xf32>, i32 -> vector<32x128xf32>
    %305 = vector.extract_strided_slice %304 {offsets = [0, 0], sizes = [32, 32], strides = [1, 1]} : vector<32x128xf32> to vector<32x32xf32>
    %c6_66 = arith.constant 6 : index
    %306 = memref.load %arg3[%c6_66] : memref<144xf32, #tpu.memory_space<smem>>
    %307 = vector.broadcast %306 : f32 to vector<32x32xf32>
    %308 = arith.mulf %307, %305 : vector<32x32xf32>
    %309 = arith.addf %289, %308 : vector<32x32xf32>
    %c42 = arith.constant 42 : index
    %310 = memref.load %arg3[%c42] : memref<144xf32, #tpu.memory_space<smem>>
    %311 = vector.broadcast %310 : f32 to vector<32x32xf32>
    %312 = arith.mulf %311, %305 : vector<32x32xf32>
    %313 = arith.addf %293, %312 : vector<32x32xf32>
    %c78 = arith.constant 78 : index
    %314 = memref.load %arg3[%c78] : memref<144xf32, #tpu.memory_space<smem>>
    %315 = vector.broadcast %314 : f32 to vector<32x32xf32>
    %316 = arith.mulf %315, %305 : vector<32x32xf32>
    %317 = arith.addf %297, %316 : vector<32x32xf32>
    %c114 = arith.constant 114 : index
    %318 = memref.load %arg3[%c114] : memref<144xf32, #tpu.memory_space<smem>>
    %319 = vector.broadcast %318 : f32 to vector<32x32xf32>
    %320 = arith.mulf %319, %305 : vector<32x32xf32>
    %321 = arith.addf %301, %320 : vector<32x32xf32>
    %322 = vector.extract_strided_slice %303 {offsets = [0, 0], sizes = [32, 32], strides = [1, 1]} : vector<32x128xf32> to vector<32x32xf32>
    %c7_67 = arith.constant 7 : index
    %323 = memref.load %arg3[%c7_67] : memref<144xf32, #tpu.memory_space<smem>>
    %324 = vector.broadcast %323 : f32 to vector<32x32xf32>
    %325 = arith.mulf %324, %322 : vector<32x32xf32>
    %326 = arith.addf %309, %325 : vector<32x32xf32>
    %c43 = arith.constant 43 : index
    %327 = memref.load %arg3[%c43] : memref<144xf32, #tpu.memory_space<smem>>
    %328 = vector.broadcast %327 : f32 to vector<32x32xf32>
    %329 = arith.mulf %328, %322 : vector<32x32xf32>
    %330 = arith.addf %313, %329 : vector<32x32xf32>
    %c79 = arith.constant 79 : index
    %331 = memref.load %arg3[%c79] : memref<144xf32, #tpu.memory_space<smem>>
    %332 = vector.broadcast %331 : f32 to vector<32x32xf32>
    %333 = arith.mulf %332, %322 : vector<32x32xf32>
    %334 = arith.addf %317, %333 : vector<32x32xf32>
    %c115 = arith.constant 115 : index
    %335 = memref.load %arg3[%c115] : memref<144xf32, #tpu.memory_space<smem>>
    %336 = vector.broadcast %335 : f32 to vector<32x32xf32>
    %337 = arith.mulf %336, %322 : vector<32x32xf32>
    %338 = arith.addf %321, %337 : vector<32x32xf32>
    %c127_i32_68 = arith.constant 127 : i32
    %339 = tpu.dynamic_rotate %303 by %c127_i32_68 dim 1 : vector<32x128xf32>, i32 -> vector<32x128xf32>
    %340 = vector.extract_strided_slice %339 {offsets = [0, 0], sizes = [32, 32], strides = [1, 1]} : vector<32x128xf32> to vector<32x32xf32>
    %c8_69 = arith.constant 8 : index
    %341 = memref.load %arg3[%c8_69] : memref<144xf32, #tpu.memory_space<smem>>
    %342 = vector.broadcast %341 : f32 to vector<32x32xf32>
    %343 = arith.mulf %342, %340 : vector<32x32xf32>
    %344 = arith.addf %326, %343 : vector<32x32xf32>
    %c44 = arith.constant 44 : index
    %345 = memref.load %arg3[%c44] : memref<144xf32, #tpu.memory_space<smem>>
    %346 = vector.broadcast %345 : f32 to vector<32x32xf32>
    %347 = arith.mulf %346, %340 : vector<32x32xf32>
    %348 = arith.addf %330, %347 : vector<32x32xf32>
    %c80 = arith.constant 80 : index
    %349 = memref.load %arg3[%c80] : memref<144xf32, #tpu.memory_space<smem>>
    %350 = vector.broadcast %349 : f32 to vector<32x32xf32>
    %351 = arith.mulf %350, %340 : vector<32x32xf32>
    %352 = arith.addf %334, %351 : vector<32x32xf32>
    %c116 = arith.constant 116 : index
    %353 = memref.load %arg3[%c116] : memref<144xf32, #tpu.memory_space<smem>>
    %354 = vector.broadcast %353 : f32 to vector<32x32xf32>
    %355 = arith.mulf %354, %340 : vector<32x32xf32>
    %356 = arith.addf %338, %355 : vector<32x32xf32>
    %c1_70 = arith.constant 1 : index
    %c7_71 = arith.constant 7 : index
    %c0_72 = arith.constant 0 : index
    %357 = vector.load %arg10[%c1_70, %c7_71, %c0_72] : memref<4x48x128xf32, #tpu.memory_space<vmem>>, vector<1x32x128xf32>
    %358 = vector.shape_cast %357 : vector<1x32x128xf32> to vector<32x128xf32>
    %c1_i32_73 = arith.constant 1 : i32
    %359 = tpu.dynamic_rotate %358 by %c1_i32_73 dim 1 : vector<32x128xf32>, i32 -> vector<32x128xf32>
    %360 = vector.extract_strided_slice %359 {offsets = [0, 0], sizes = [32, 32], strides = [1, 1]} : vector<32x128xf32> to vector<32x32xf32>
    %c9_74 = arith.constant 9 : index
    %361 = memref.load %arg3[%c9_74] : memref<144xf32, #tpu.memory_space<smem>>
    %362 = vector.broadcast %361 : f32 to vector<32x32xf32>
    %363 = arith.mulf %362, %360 : vector<32x32xf32>
    %364 = arith.addf %344, %363 : vector<32x32xf32>
    %c45 = arith.constant 45 : index
    %365 = memref.load %arg3[%c45] : memref<144xf32, #tpu.memory_space<smem>>
    %366 = vector.broadcast %365 : f32 to vector<32x32xf32>
    %367 = arith.mulf %366, %360 : vector<32x32xf32>
    %368 = arith.addf %348, %367 : vector<32x32xf32>
    %c81 = arith.constant 81 : index
    %369 = memref.load %arg3[%c81] : memref<144xf32, #tpu.memory_space<smem>>
    %370 = vector.broadcast %369 : f32 to vector<32x32xf32>
    %371 = arith.mulf %370, %360 : vector<32x32xf32>
    %372 = arith.addf %352, %371 : vector<32x32xf32>
    %c117 = arith.constant 117 : index
    %373 = memref.load %arg3[%c117] : memref<144xf32, #tpu.memory_space<smem>>
    %374 = vector.broadcast %373 : f32 to vector<32x32xf32>
    %375 = arith.mulf %374, %360 : vector<32x32xf32>
    %376 = arith.addf %356, %375 : vector<32x32xf32>
    %377 = vector.extract_strided_slice %358 {offsets = [0, 0], sizes = [32, 32], strides = [1, 1]} : vector<32x128xf32> to vector<32x32xf32>
    %c10_75 = arith.constant 10 : index
    %378 = memref.load %arg3[%c10_75] : memref<144xf32, #tpu.memory_space<smem>>
    %379 = vector.broadcast %378 : f32 to vector<32x32xf32>
    %380 = arith.mulf %379, %377 : vector<32x32xf32>
    %381 = arith.addf %364, %380 : vector<32x32xf32>
    %c46 = arith.constant 46 : index
    %382 = memref.load %arg3[%c46] : memref<144xf32, #tpu.memory_space<smem>>
    %383 = vector.broadcast %382 : f32 to vector<32x32xf32>
    %384 = arith.mulf %383, %377 : vector<32x32xf32>
    %385 = arith.addf %368, %384 : vector<32x32xf32>
    %c82 = arith.constant 82 : index
    %386 = memref.load %arg3[%c82] : memref<144xf32, #tpu.memory_space<smem>>
    %387 = vector.broadcast %386 : f32 to vector<32x32xf32>
    %388 = arith.mulf %387, %377 : vector<32x32xf32>
    %389 = arith.addf %372, %388 : vector<32x32xf32>
    %c118 = arith.constant 118 : index
    %390 = memref.load %arg3[%c118] : memref<144xf32, #tpu.memory_space<smem>>
    %391 = vector.broadcast %390 : f32 to vector<32x32xf32>
    %392 = arith.mulf %391, %377 : vector<32x32xf32>
    %393 = arith.addf %376, %392 : vector<32x32xf32>
    %c127_i32_76 = arith.constant 127 : i32
    %394 = tpu.dynamic_rotate %358 by %c127_i32_76 dim 1 : vector<32x128xf32>, i32 -> vector<32x128xf32>
    %395 = vector.extract_strided_slice %394 {offsets = [0, 0], sizes = [32, 32], strides = [1, 1]} : vector<32x128xf32> to vector<32x32xf32>
    %c11_77 = arith.constant 11 : index
    %396 = memref.load %arg3[%c11_77] : memref<144xf32, #tpu.memory_space<smem>>
    %397 = vector.broadcast %396 : f32 to vector<32x32xf32>
    %398 = arith.mulf %397, %395 : vector<32x32xf32>
    %399 = arith.addf %381, %398 : vector<32x32xf32>
    %c47 = arith.constant 47 : index
    %400 = memref.load %arg3[%c47] : memref<144xf32, #tpu.memory_space<smem>>
    %401 = vector.broadcast %400 : f32 to vector<32x32xf32>
    %402 = arith.mulf %401, %395 : vector<32x32xf32>
    %403 = arith.addf %385, %402 : vector<32x32xf32>
    %c83 = arith.constant 83 : index
    %404 = memref.load %arg3[%c83] : memref<144xf32, #tpu.memory_space<smem>>
    %405 = vector.broadcast %404 : f32 to vector<32x32xf32>
    %406 = arith.mulf %405, %395 : vector<32x32xf32>
    %407 = arith.addf %389, %406 : vector<32x32xf32>
    %c119 = arith.constant 119 : index
    %408 = memref.load %arg3[%c119] : memref<144xf32, #tpu.memory_space<smem>>
    %409 = vector.broadcast %408 : f32 to vector<32x32xf32>
    %410 = arith.mulf %409, %395 : vector<32x32xf32>
    %411 = arith.addf %393, %410 : vector<32x32xf32>
    %c1_78 = arith.constant 1 : index
    %c8_79 = arith.constant 8 : index
    %c0_80 = arith.constant 0 : index
    %412 = vector.load %arg10[%c1_78, %c8_79, %c0_80] : memref<4x48x128xf32, #tpu.memory_space<vmem>>, vector<1x32x128xf32>
    %413 = vector.shape_cast %412 : vector<1x32x128xf32> to vector<32x128xf32>
    %c1_i32_81 = arith.constant 1 : i32
    %414 = tpu.dynamic_rotate %413 by %c1_i32_81 dim 1 : vector<32x128xf32>, i32 -> vector<32x128xf32>
    %415 = vector.extract_strided_slice %414 {offsets = [0, 0], sizes = [32, 32], strides = [1, 1]} : vector<32x128xf32> to vector<32x32xf32>
    %c12_82 = arith.constant 12 : index
    %416 = memref.load %arg3[%c12_82] : memref<144xf32, #tpu.memory_space<smem>>
    %417 = vector.broadcast %416 : f32 to vector<32x32xf32>
    %418 = arith.mulf %417, %415 : vector<32x32xf32>
    %419 = arith.addf %399, %418 : vector<32x32xf32>
    %c48 = arith.constant 48 : index
    %420 = memref.load %arg3[%c48] : memref<144xf32, #tpu.memory_space<smem>>
    %421 = vector.broadcast %420 : f32 to vector<32x32xf32>
    %422 = arith.mulf %421, %415 : vector<32x32xf32>
    %423 = arith.addf %403, %422 : vector<32x32xf32>
    %c84 = arith.constant 84 : index
    %424 = memref.load %arg3[%c84] : memref<144xf32, #tpu.memory_space<smem>>
    %425 = vector.broadcast %424 : f32 to vector<32x32xf32>
    %426 = arith.mulf %425, %415 : vector<32x32xf32>
    %427 = arith.addf %407, %426 : vector<32x32xf32>
    %c120 = arith.constant 120 : index
    %428 = memref.load %arg3[%c120] : memref<144xf32, #tpu.memory_space<smem>>
    %429 = vector.broadcast %428 : f32 to vector<32x32xf32>
    %430 = arith.mulf %429, %415 : vector<32x32xf32>
    %431 = arith.addf %411, %430 : vector<32x32xf32>
    %432 = vector.extract_strided_slice %413 {offsets = [0, 0], sizes = [32, 32], strides = [1, 1]} : vector<32x128xf32> to vector<32x32xf32>
    %c13_83 = arith.constant 13 : index
    %433 = memref.load %arg3[%c13_83] : memref<144xf32, #tpu.memory_space<smem>>
    %434 = vector.broadcast %433 : f32 to vector<32x32xf32>
    %435 = arith.mulf %434, %432 : vector<32x32xf32>
    %436 = arith.addf %419, %435 : vector<32x32xf32>
    %c49 = arith.constant 49 : index
    %437 = memref.load %arg3[%c49] : memref<144xf32, #tpu.memory_space<smem>>
    %438 = vector.broadcast %437 : f32 to vector<32x32xf32>
    %439 = arith.mulf %438, %432 : vector<32x32xf32>
    %440 = arith.addf %423, %439 : vector<32x32xf32>
    %c85 = arith.constant 85 : index
    %441 = memref.load %arg3[%c85] : memref<144xf32, #tpu.memory_space<smem>>
    %442 = vector.broadcast %441 : f32 to vector<32x32xf32>
    %443 = arith.mulf %442, %432 : vector<32x32xf32>
    %444 = arith.addf %427, %443 : vector<32x32xf32>
    %c121 = arith.constant 121 : index
    %445 = memref.load %arg3[%c121] : memref<144xf32, #tpu.memory_space<smem>>
    %446 = vector.broadcast %445 : f32 to vector<32x32xf32>
    %447 = arith.mulf %446, %432 : vector<32x32xf32>
    %448 = arith.addf %431, %447 : vector<32x32xf32>
    %c127_i32_84 = arith.constant 127 : i32
    %449 = tpu.dynamic_rotate %413 by %c127_i32_84 dim 1 : vector<32x128xf32>, i32 -> vector<32x128xf32>
    %450 = vector.extract_strided_slice %449 {offsets = [0, 0], sizes = [32, 32], strides = [1, 1]} : vector<32x128xf32> to vector<32x32xf32>
    %c14_85 = arith.constant 14 : index
    %451 = memref.load %arg3[%c14_85] : memref<144xf32, #tpu.memory_space<smem>>
    %452 = vector.broadcast %451 : f32 to vector<32x32xf32>
    %453 = arith.mulf %452, %450 : vector<32x32xf32>
    %454 = arith.addf %436, %453 : vector<32x32xf32>
    %c50 = arith.constant 50 : index
    %455 = memref.load %arg3[%c50] : memref<144xf32, #tpu.memory_space<smem>>
    %456 = vector.broadcast %455 : f32 to vector<32x32xf32>
    %457 = arith.mulf %456, %450 : vector<32x32xf32>
    %458 = arith.addf %440, %457 : vector<32x32xf32>
    %c86 = arith.constant 86 : index
    %459 = memref.load %arg3[%c86] : memref<144xf32, #tpu.memory_space<smem>>
    %460 = vector.broadcast %459 : f32 to vector<32x32xf32>
    %461 = arith.mulf %460, %450 : vector<32x32xf32>
    %462 = arith.addf %444, %461 : vector<32x32xf32>
    %c122 = arith.constant 122 : index
    %463 = memref.load %arg3[%c122] : memref<144xf32, #tpu.memory_space<smem>>
    %464 = vector.broadcast %463 : f32 to vector<32x32xf32>
    %465 = arith.mulf %464, %450 : vector<32x32xf32>
    %466 = arith.addf %448, %465 : vector<32x32xf32>
    %c1_86 = arith.constant 1 : index
    %c9_87 = arith.constant 9 : index
    %c0_88 = arith.constant 0 : index
    %467 = vector.load %arg10[%c1_86, %c9_87, %c0_88] : memref<4x48x128xf32, #tpu.memory_space<vmem>>, vector<1x32x128xf32>
    %468 = vector.shape_cast %467 : vector<1x32x128xf32> to vector<32x128xf32>
    %c1_i32_89 = arith.constant 1 : i32
    %469 = tpu.dynamic_rotate %468 by %c1_i32_89 dim 1 : vector<32x128xf32>, i32 -> vector<32x128xf32>
    %470 = vector.extract_strided_slice %469 {offsets = [0, 0], sizes = [32, 32], strides = [1, 1]} : vector<32x128xf32> to vector<32x32xf32>
    %c15_90 = arith.constant 15 : index
    %471 = memref.load %arg3[%c15_90] : memref<144xf32, #tpu.memory_space<smem>>
    %472 = vector.broadcast %471 : f32 to vector<32x32xf32>
    %473 = arith.mulf %472, %470 : vector<32x32xf32>
    %474 = arith.addf %454, %473 : vector<32x32xf32>
    %c51 = arith.constant 51 : index
    %475 = memref.load %arg3[%c51] : memref<144xf32, #tpu.memory_space<smem>>
    %476 = vector.broadcast %475 : f32 to vector<32x32xf32>
    %477 = arith.mulf %476, %470 : vector<32x32xf32>
    %478 = arith.addf %458, %477 : vector<32x32xf32>
    %c87 = arith.constant 87 : index
    %479 = memref.load %arg3[%c87] : memref<144xf32, #tpu.memory_space<smem>>
    %480 = vector.broadcast %479 : f32 to vector<32x32xf32>
    %481 = arith.mulf %480, %470 : vector<32x32xf32>
    %482 = arith.addf %462, %481 : vector<32x32xf32>
    %c123 = arith.constant 123 : index
    %483 = memref.load %arg3[%c123] : memref<144xf32, #tpu.memory_space<smem>>
    %484 = vector.broadcast %483 : f32 to vector<32x32xf32>
    %485 = arith.mulf %484, %470 : vector<32x32xf32>
    %486 = arith.addf %466, %485 : vector<32x32xf32>
    %487 = vector.extract_strided_slice %468 {offsets = [0, 0], sizes = [32, 32], strides = [1, 1]} : vector<32x128xf32> to vector<32x32xf32>
    %c16_91 = arith.constant 16 : index
    %488 = memref.load %arg3[%c16_91] : memref<144xf32, #tpu.memory_space<smem>>
    %489 = vector.broadcast %488 : f32 to vector<32x32xf32>
    %490 = arith.mulf %489, %487 : vector<32x32xf32>
    %491 = arith.addf %474, %490 : vector<32x32xf32>
    %c52 = arith.constant 52 : index
    %492 = memref.load %arg3[%c52] : memref<144xf32, #tpu.memory_space<smem>>
    %493 = vector.broadcast %492 : f32 to vector<32x32xf32>
    %494 = arith.mulf %493, %487 : vector<32x32xf32>
    %495 = arith.addf %478, %494 : vector<32x32xf32>
    %c88 = arith.constant 88 : index
    %496 = memref.load %arg3[%c88] : memref<144xf32, #tpu.memory_space<smem>>
    %497 = vector.broadcast %496 : f32 to vector<32x32xf32>
    %498 = arith.mulf %497, %487 : vector<32x32xf32>
    %499 = arith.addf %482, %498 : vector<32x32xf32>
    %c124 = arith.constant 124 : index
    %500 = memref.load %arg3[%c124] : memref<144xf32, #tpu.memory_space<smem>>
    %501 = vector.broadcast %500 : f32 to vector<32x32xf32>
    %502 = arith.mulf %501, %487 : vector<32x32xf32>
    %503 = arith.addf %486, %502 : vector<32x32xf32>
    %c127_i32_92 = arith.constant 127 : i32
    %504 = tpu.dynamic_rotate %468 by %c127_i32_92 dim 1 : vector<32x128xf32>, i32 -> vector<32x128xf32>
    %505 = vector.extract_strided_slice %504 {offsets = [0, 0], sizes = [32, 32], strides = [1, 1]} : vector<32x128xf32> to vector<32x32xf32>
    %c17_93 = arith.constant 17 : index
    %506 = memref.load %arg3[%c17_93] : memref<144xf32, #tpu.memory_space<smem>>
    %507 = vector.broadcast %506 : f32 to vector<32x32xf32>
    %508 = arith.mulf %507, %505 : vector<32x32xf32>
    %509 = arith.addf %491, %508 : vector<32x32xf32>
    %c53 = arith.constant 53 : index
    %510 = memref.load %arg3[%c53] : memref<144xf32, #tpu.memory_space<smem>>
    %511 = vector.broadcast %510 : f32 to vector<32x32xf32>
    %512 = arith.mulf %511, %505 : vector<32x32xf32>
    %513 = arith.addf %495, %512 : vector<32x32xf32>
    %c89 = arith.constant 89 : index
    %514 = memref.load %arg3[%c89] : memref<144xf32, #tpu.memory_space<smem>>
    %515 = vector.broadcast %514 : f32 to vector<32x32xf32>
    %516 = arith.mulf %515, %505 : vector<32x32xf32>
    %517 = arith.addf %499, %516 : vector<32x32xf32>
    %c125 = arith.constant 125 : index
    %518 = memref.load %arg3[%c125] : memref<144xf32, #tpu.memory_space<smem>>
    %519 = vector.broadcast %518 : f32 to vector<32x32xf32>
    %520 = arith.mulf %519, %505 : vector<32x32xf32>
    %521 = arith.addf %503, %520 : vector<32x32xf32>
    %c2_94 = arith.constant 2 : index
    %c7_95 = arith.constant 7 : index
    %c0_96 = arith.constant 0 : index
    %522 = vector.load %arg10[%c2_94, %c7_95, %c0_96] : memref<4x48x128xf32, #tpu.memory_space<vmem>>, vector<1x32x128xf32>
    %523 = vector.shape_cast %522 : vector<1x32x128xf32> to vector<32x128xf32>
    %c1_i32_97 = arith.constant 1 : i32
    %524 = tpu.dynamic_rotate %523 by %c1_i32_97 dim 1 : vector<32x128xf32>, i32 -> vector<32x128xf32>
    %525 = vector.extract_strided_slice %524 {offsets = [0, 0], sizes = [32, 32], strides = [1, 1]} : vector<32x128xf32> to vector<32x32xf32>
    %c18_98 = arith.constant 18 : index
    %526 = memref.load %arg3[%c18_98] : memref<144xf32, #tpu.memory_space<smem>>
    %527 = vector.broadcast %526 : f32 to vector<32x32xf32>
    %528 = arith.mulf %527, %525 : vector<32x32xf32>
    %529 = arith.addf %509, %528 : vector<32x32xf32>
    %c54 = arith.constant 54 : index
    %530 = memref.load %arg3[%c54] : memref<144xf32, #tpu.memory_space<smem>>
    %531 = vector.broadcast %530 : f32 to vector<32x32xf32>
    %532 = arith.mulf %531, %525 : vector<32x32xf32>
    %533 = arith.addf %513, %532 : vector<32x32xf32>
    %c90 = arith.constant 90 : index
    %534 = memref.load %arg3[%c90] : memref<144xf32, #tpu.memory_space<smem>>
    %535 = vector.broadcast %534 : f32 to vector<32x32xf32>
    %536 = arith.mulf %535, %525 : vector<32x32xf32>
    %537 = arith.addf %517, %536 : vector<32x32xf32>
    %c126 = arith.constant 126 : index
    %538 = memref.load %arg3[%c126] : memref<144xf32, #tpu.memory_space<smem>>
    %539 = vector.broadcast %538 : f32 to vector<32x32xf32>
    %540 = arith.mulf %539, %525 : vector<32x32xf32>
    %541 = arith.addf %521, %540 : vector<32x32xf32>
    %542 = vector.extract_strided_slice %523 {offsets = [0, 0], sizes = [32, 32], strides = [1, 1]} : vector<32x128xf32> to vector<32x32xf32>
    %c19_99 = arith.constant 19 : index
    %543 = memref.load %arg3[%c19_99] : memref<144xf32, #tpu.memory_space<smem>>
    %544 = vector.broadcast %543 : f32 to vector<32x32xf32>
    %545 = arith.mulf %544, %542 : vector<32x32xf32>
    %546 = arith.addf %529, %545 : vector<32x32xf32>
    %c55 = arith.constant 55 : index
    %547 = memref.load %arg3[%c55] : memref<144xf32, #tpu.memory_space<smem>>
    %548 = vector.broadcast %547 : f32 to vector<32x32xf32>
    %549 = arith.mulf %548, %542 : vector<32x32xf32>
    %550 = arith.addf %533, %549 : vector<32x32xf32>
    %c91 = arith.constant 91 : index
    %551 = memref.load %arg3[%c91] : memref<144xf32, #tpu.memory_space<smem>>
    %552 = vector.broadcast %551 : f32 to vector<32x32xf32>
    %553 = arith.mulf %552, %542 : vector<32x32xf32>
    %554 = arith.addf %537, %553 : vector<32x32xf32>
    %c127 = arith.constant 127 : index
    %555 = memref.load %arg3[%c127] : memref<144xf32, #tpu.memory_space<smem>>
    %556 = vector.broadcast %555 : f32 to vector<32x32xf32>
    %557 = arith.mulf %556, %542 : vector<32x32xf32>
    %558 = arith.addf %541, %557 : vector<32x32xf32>
    %c127_i32_100 = arith.constant 127 : i32
    %559 = tpu.dynamic_rotate %523 by %c127_i32_100 dim 1 : vector<32x128xf32>, i32 -> vector<32x128xf32>
    %560 = vector.extract_strided_slice %559 {offsets = [0, 0], sizes = [32, 32], strides = [1, 1]} : vector<32x128xf32> to vector<32x32xf32>
    %c20_101 = arith.constant 20 : index
    %561 = memref.load %arg3[%c20_101] : memref<144xf32, #tpu.memory_space<smem>>
    %562 = vector.broadcast %561 : f32 to vector<32x32xf32>
    %563 = arith.mulf %562, %560 : vector<32x32xf32>
    %564 = arith.addf %546, %563 : vector<32x32xf32>
    %c56 = arith.constant 56 : index
    %565 = memref.load %arg3[%c56] : memref<144xf32, #tpu.memory_space<smem>>
    %566 = vector.broadcast %565 : f32 to vector<32x32xf32>
    %567 = arith.mulf %566, %560 : vector<32x32xf32>
    %568 = arith.addf %550, %567 : vector<32x32xf32>
    %c92 = arith.constant 92 : index
    %569 = memref.load %arg3[%c92] : memref<144xf32, #tpu.memory_space<smem>>
    %570 = vector.broadcast %569 : f32 to vector<32x32xf32>
    %571 = arith.mulf %570, %560 : vector<32x32xf32>
    %572 = arith.addf %554, %571 : vector<32x32xf32>
    %c128 = arith.constant 128 : index
    %573 = memref.load %arg3[%c128] : memref<144xf32, #tpu.memory_space<smem>>
    %574 = vector.broadcast %573 : f32 to vector<32x32xf32>
    %575 = arith.mulf %574, %560 : vector<32x32xf32>
    %576 = arith.addf %558, %575 : vector<32x32xf32>
    %c2_102 = arith.constant 2 : index
    %c8_103 = arith.constant 8 : index
    %c0_104 = arith.constant 0 : index
    %577 = vector.load %arg10[%c2_102, %c8_103, %c0_104] : memref<4x48x128xf32, #tpu.memory_space<vmem>>, vector<1x32x128xf32>
    %578 = vector.shape_cast %577 : vector<1x32x128xf32> to vector<32x128xf32>
    %c1_i32_105 = arith.constant 1 : i32
    %579 = tpu.dynamic_rotate %578 by %c1_i32_105 dim 1 : vector<32x128xf32>, i32 -> vector<32x128xf32>
    %580 = vector.extract_strided_slice %579 {offsets = [0, 0], sizes = [32, 32], strides = [1, 1]} : vector<32x128xf32> to vector<32x32xf32>
    %c21_106 = arith.constant 21 : index
    %581 = memref.load %arg3[%c21_106] : memref<144xf32, #tpu.memory_space<smem>>
    %582 = vector.broadcast %581 : f32 to vector<32x32xf32>
    %583 = arith.mulf %582, %580 : vector<32x32xf32>
    %584 = arith.addf %564, %583 : vector<32x32xf32>
    %c57 = arith.constant 57 : index
    %585 = memref.load %arg3[%c57] : memref<144xf32, #tpu.memory_space<smem>>
    %586 = vector.broadcast %585 : f32 to vector<32x32xf32>
    %587 = arith.mulf %586, %580 : vector<32x32xf32>
    %588 = arith.addf %568, %587 : vector<32x32xf32>
    %c93 = arith.constant 93 : index
    %589 = memref.load %arg3[%c93] : memref<144xf32, #tpu.memory_space<smem>>
    %590 = vector.broadcast %589 : f32 to vector<32x32xf32>
    %591 = arith.mulf %590, %580 : vector<32x32xf32>
    %592 = arith.addf %572, %591 : vector<32x32xf32>
    %c129 = arith.constant 129 : index
    %593 = memref.load %arg3[%c129] : memref<144xf32, #tpu.memory_space<smem>>
    %594 = vector.broadcast %593 : f32 to vector<32x32xf32>
    %595 = arith.mulf %594, %580 : vector<32x32xf32>
    %596 = arith.addf %576, %595 : vector<32x32xf32>
    %597 = vector.extract_strided_slice %578 {offsets = [0, 0], sizes = [32, 32], strides = [1, 1]} : vector<32x128xf32> to vector<32x32xf32>
    %c22_107 = arith.constant 22 : index
    %598 = memref.load %arg3[%c22_107] : memref<144xf32, #tpu.memory_space<smem>>
    %599 = vector.broadcast %598 : f32 to vector<32x32xf32>
    %600 = arith.mulf %599, %597 : vector<32x32xf32>
    %601 = arith.addf %584, %600 : vector<32x32xf32>
    %c58 = arith.constant 58 : index
    %602 = memref.load %arg3[%c58] : memref<144xf32, #tpu.memory_space<smem>>
    %603 = vector.broadcast %602 : f32 to vector<32x32xf32>
    %604 = arith.mulf %603, %597 : vector<32x32xf32>
    %605 = arith.addf %588, %604 : vector<32x32xf32>
    %c94 = arith.constant 94 : index
    %606 = memref.load %arg3[%c94] : memref<144xf32, #tpu.memory_space<smem>>
    %607 = vector.broadcast %606 : f32 to vector<32x32xf32>
    %608 = arith.mulf %607, %597 : vector<32x32xf32>
    %609 = arith.addf %592, %608 : vector<32x32xf32>
    %c130 = arith.constant 130 : index
    %610 = memref.load %arg3[%c130] : memref<144xf32, #tpu.memory_space<smem>>
    %611 = vector.broadcast %610 : f32 to vector<32x32xf32>
    %612 = arith.mulf %611, %597 : vector<32x32xf32>
    %613 = arith.addf %596, %612 : vector<32x32xf32>
    %c127_i32_108 = arith.constant 127 : i32
    %614 = tpu.dynamic_rotate %578 by %c127_i32_108 dim 1 : vector<32x128xf32>, i32 -> vector<32x128xf32>
    %615 = vector.extract_strided_slice %614 {offsets = [0, 0], sizes = [32, 32], strides = [1, 1]} : vector<32x128xf32> to vector<32x32xf32>
    %c23_109 = arith.constant 23 : index
    %616 = memref.load %arg3[%c23_109] : memref<144xf32, #tpu.memory_space<smem>>
    %617 = vector.broadcast %616 : f32 to vector<32x32xf32>
    %618 = arith.mulf %617, %615 : vector<32x32xf32>
    %619 = arith.addf %601, %618 : vector<32x32xf32>
    %c59 = arith.constant 59 : index
    %620 = memref.load %arg3[%c59] : memref<144xf32, #tpu.memory_space<smem>>
    %621 = vector.broadcast %620 : f32 to vector<32x32xf32>
    %622 = arith.mulf %621, %615 : vector<32x32xf32>
    %623 = arith.addf %605, %622 : vector<32x32xf32>
    %c95 = arith.constant 95 : index
    %624 = memref.load %arg3[%c95] : memref<144xf32, #tpu.memory_space<smem>>
    %625 = vector.broadcast %624 : f32 to vector<32x32xf32>
    %626 = arith.mulf %625, %615 : vector<32x32xf32>
    %627 = arith.addf %609, %626 : vector<32x32xf32>
    %c131 = arith.constant 131 : index
    %628 = memref.load %arg3[%c131] : memref<144xf32, #tpu.memory_space<smem>>
    %629 = vector.broadcast %628 : f32 to vector<32x32xf32>
    %630 = arith.mulf %629, %615 : vector<32x32xf32>
    %631 = arith.addf %613, %630 : vector<32x32xf32>
    %c2_110 = arith.constant 2 : index
    %c9_111 = arith.constant 9 : index
    %c0_112 = arith.constant 0 : index
    %632 = vector.load %arg10[%c2_110, %c9_111, %c0_112] : memref<4x48x128xf32, #tpu.memory_space<vmem>>, vector<1x32x128xf32>
    %633 = vector.shape_cast %632 : vector<1x32x128xf32> to vector<32x128xf32>
    %c1_i32_113 = arith.constant 1 : i32
    %634 = tpu.dynamic_rotate %633 by %c1_i32_113 dim 1 : vector<32x128xf32>, i32 -> vector<32x128xf32>
    %635 = vector.extract_strided_slice %634 {offsets = [0, 0], sizes = [32, 32], strides = [1, 1]} : vector<32x128xf32> to vector<32x32xf32>
    %c24_114 = arith.constant 24 : index
    %636 = memref.load %arg3[%c24_114] : memref<144xf32, #tpu.memory_space<smem>>
    %637 = vector.broadcast %636 : f32 to vector<32x32xf32>
    %638 = arith.mulf %637, %635 : vector<32x32xf32>
    %639 = arith.addf %619, %638 : vector<32x32xf32>
    %c60 = arith.constant 60 : index
    %640 = memref.load %arg3[%c60] : memref<144xf32, #tpu.memory_space<smem>>
    %641 = vector.broadcast %640 : f32 to vector<32x32xf32>
    %642 = arith.mulf %641, %635 : vector<32x32xf32>
    %643 = arith.addf %623, %642 : vector<32x32xf32>
    %c96 = arith.constant 96 : index
    %644 = memref.load %arg3[%c96] : memref<144xf32, #tpu.memory_space<smem>>
    %645 = vector.broadcast %644 : f32 to vector<32x32xf32>
    %646 = arith.mulf %645, %635 : vector<32x32xf32>
    %647 = arith.addf %627, %646 : vector<32x32xf32>
    %c132 = arith.constant 132 : index
    %648 = memref.load %arg3[%c132] : memref<144xf32, #tpu.memory_space<smem>>
    %649 = vector.broadcast %648 : f32 to vector<32x32xf32>
    %650 = arith.mulf %649, %635 : vector<32x32xf32>
    %651 = arith.addf %631, %650 : vector<32x32xf32>
    %652 = vector.extract_strided_slice %633 {offsets = [0, 0], sizes = [32, 32], strides = [1, 1]} : vector<32x128xf32> to vector<32x32xf32>
    %c25_115 = arith.constant 25 : index
    %653 = memref.load %arg3[%c25_115] : memref<144xf32, #tpu.memory_space<smem>>
    %654 = vector.broadcast %653 : f32 to vector<32x32xf32>
    %655 = arith.mulf %654, %652 : vector<32x32xf32>
    %656 = arith.addf %639, %655 : vector<32x32xf32>
    %c61 = arith.constant 61 : index
    %657 = memref.load %arg3[%c61] : memref<144xf32, #tpu.memory_space<smem>>
    %658 = vector.broadcast %657 : f32 to vector<32x32xf32>
    %659 = arith.mulf %658, %652 : vector<32x32xf32>
    %660 = arith.addf %643, %659 : vector<32x32xf32>
    %c97 = arith.constant 97 : index
    %661 = memref.load %arg3[%c97] : memref<144xf32, #tpu.memory_space<smem>>
    %662 = vector.broadcast %661 : f32 to vector<32x32xf32>
    %663 = arith.mulf %662, %652 : vector<32x32xf32>
    %664 = arith.addf %647, %663 : vector<32x32xf32>
    %c133 = arith.constant 133 : index
    %665 = memref.load %arg3[%c133] : memref<144xf32, #tpu.memory_space<smem>>
    %666 = vector.broadcast %665 : f32 to vector<32x32xf32>
    %667 = arith.mulf %666, %652 : vector<32x32xf32>
    %668 = arith.addf %651, %667 : vector<32x32xf32>
    %c127_i32_116 = arith.constant 127 : i32
    %669 = tpu.dynamic_rotate %633 by %c127_i32_116 dim 1 : vector<32x128xf32>, i32 -> vector<32x128xf32>
    %670 = vector.extract_strided_slice %669 {offsets = [0, 0], sizes = [32, 32], strides = [1, 1]} : vector<32x128xf32> to vector<32x32xf32>
    %c26_117 = arith.constant 26 : index
    %671 = memref.load %arg3[%c26_117] : memref<144xf32, #tpu.memory_space<smem>>
    %672 = vector.broadcast %671 : f32 to vector<32x32xf32>
    %673 = arith.mulf %672, %670 : vector<32x32xf32>
    %674 = arith.addf %656, %673 : vector<32x32xf32>
    %c62 = arith.constant 62 : index
    %675 = memref.load %arg3[%c62] : memref<144xf32, #tpu.memory_space<smem>>
    %676 = vector.broadcast %675 : f32 to vector<32x32xf32>
    %677 = arith.mulf %676, %670 : vector<32x32xf32>
    %678 = arith.addf %660, %677 : vector<32x32xf32>
    %c98 = arith.constant 98 : index
    %679 = memref.load %arg3[%c98] : memref<144xf32, #tpu.memory_space<smem>>
    %680 = vector.broadcast %679 : f32 to vector<32x32xf32>
    %681 = arith.mulf %680, %670 : vector<32x32xf32>
    %682 = arith.addf %664, %681 : vector<32x32xf32>
    %c134 = arith.constant 134 : index
    %683 = memref.load %arg3[%c134] : memref<144xf32, #tpu.memory_space<smem>>
    %684 = vector.broadcast %683 : f32 to vector<32x32xf32>
    %685 = arith.mulf %684, %670 : vector<32x32xf32>
    %686 = arith.addf %668, %685 : vector<32x32xf32>
    %c3_118 = arith.constant 3 : index
    %c7_119 = arith.constant 7 : index
    %c0_120 = arith.constant 0 : index
    %687 = vector.load %arg10[%c3_118, %c7_119, %c0_120] : memref<4x48x128xf32, #tpu.memory_space<vmem>>, vector<1x32x128xf32>
    %688 = vector.shape_cast %687 : vector<1x32x128xf32> to vector<32x128xf32>
    %c1_i32_121 = arith.constant 1 : i32
    %689 = tpu.dynamic_rotate %688 by %c1_i32_121 dim 1 : vector<32x128xf32>, i32 -> vector<32x128xf32>
    %690 = vector.extract_strided_slice %689 {offsets = [0, 0], sizes = [32, 32], strides = [1, 1]} : vector<32x128xf32> to vector<32x32xf32>
    %c27_122 = arith.constant 27 : index
    %691 = memref.load %arg3[%c27_122] : memref<144xf32, #tpu.memory_space<smem>>
    %692 = vector.broadcast %691 : f32 to vector<32x32xf32>
    %693 = arith.mulf %692, %690 : vector<32x32xf32>
    %694 = arith.addf %674, %693 : vector<32x32xf32>
    %c63 = arith.constant 63 : index
    %695 = memref.load %arg3[%c63] : memref<144xf32, #tpu.memory_space<smem>>
    %696 = vector.broadcast %695 : f32 to vector<32x32xf32>
    %697 = arith.mulf %696, %690 : vector<32x32xf32>
    %698 = arith.addf %678, %697 : vector<32x32xf32>
    %c99 = arith.constant 99 : index
    %699 = memref.load %arg3[%c99] : memref<144xf32, #tpu.memory_space<smem>>
    %700 = vector.broadcast %699 : f32 to vector<32x32xf32>
    %701 = arith.mulf %700, %690 : vector<32x32xf32>
    %702 = arith.addf %682, %701 : vector<32x32xf32>
    %c135 = arith.constant 135 : index
    %703 = memref.load %arg3[%c135] : memref<144xf32, #tpu.memory_space<smem>>
    %704 = vector.broadcast %703 : f32 to vector<32x32xf32>
    %705 = arith.mulf %704, %690 : vector<32x32xf32>
    %706 = arith.addf %686, %705 : vector<32x32xf32>
    %707 = vector.extract_strided_slice %688 {offsets = [0, 0], sizes = [32, 32], strides = [1, 1]} : vector<32x128xf32> to vector<32x32xf32>
    %c28_123 = arith.constant 28 : index
    %708 = memref.load %arg3[%c28_123] : memref<144xf32, #tpu.memory_space<smem>>
    %709 = vector.broadcast %708 : f32 to vector<32x32xf32>
    %710 = arith.mulf %709, %707 : vector<32x32xf32>
    %711 = arith.addf %694, %710 : vector<32x32xf32>
    %c64 = arith.constant 64 : index
    %712 = memref.load %arg3[%c64] : memref<144xf32, #tpu.memory_space<smem>>
    %713 = vector.broadcast %712 : f32 to vector<32x32xf32>
    %714 = arith.mulf %713, %707 : vector<32x32xf32>
    %715 = arith.addf %698, %714 : vector<32x32xf32>
    %c100 = arith.constant 100 : index
    %716 = memref.load %arg3[%c100] : memref<144xf32, #tpu.memory_space<smem>>
    %717 = vector.broadcast %716 : f32 to vector<32x32xf32>
    %718 = arith.mulf %717, %707 : vector<32x32xf32>
    %719 = arith.addf %702, %718 : vector<32x32xf32>
    %c136 = arith.constant 136 : index
    %720 = memref.load %arg3[%c136] : memref<144xf32, #tpu.memory_space<smem>>
    %721 = vector.broadcast %720 : f32 to vector<32x32xf32>
    %722 = arith.mulf %721, %707 : vector<32x32xf32>
    %723 = arith.addf %706, %722 : vector<32x32xf32>
    %c127_i32_124 = arith.constant 127 : i32
    %724 = tpu.dynamic_rotate %688 by %c127_i32_124 dim 1 : vector<32x128xf32>, i32 -> vector<32x128xf32>
    %725 = vector.extract_strided_slice %724 {offsets = [0, 0], sizes = [32, 32], strides = [1, 1]} : vector<32x128xf32> to vector<32x32xf32>
    %c29_125 = arith.constant 29 : index
    %726 = memref.load %arg3[%c29_125] : memref<144xf32, #tpu.memory_space<smem>>
    %727 = vector.broadcast %726 : f32 to vector<32x32xf32>
    %728 = arith.mulf %727, %725 : vector<32x32xf32>
    %729 = arith.addf %711, %728 : vector<32x32xf32>
    %c65 = arith.constant 65 : index
    %730 = memref.load %arg3[%c65] : memref<144xf32, #tpu.memory_space<smem>>
    %731 = vector.broadcast %730 : f32 to vector<32x32xf32>
    %732 = arith.mulf %731, %725 : vector<32x32xf32>
    %733 = arith.addf %715, %732 : vector<32x32xf32>
    %c101 = arith.constant 101 : index
    %734 = memref.load %arg3[%c101] : memref<144xf32, #tpu.memory_space<smem>>
    %735 = vector.broadcast %734 : f32 to vector<32x32xf32>
    %736 = arith.mulf %735, %725 : vector<32x32xf32>
    %737 = arith.addf %719, %736 : vector<32x32xf32>
    %c137 = arith.constant 137 : index
    %738 = memref.load %arg3[%c137] : memref<144xf32, #tpu.memory_space<smem>>
    %739 = vector.broadcast %738 : f32 to vector<32x32xf32>
    %740 = arith.mulf %739, %725 : vector<32x32xf32>
    %741 = arith.addf %723, %740 : vector<32x32xf32>
    %c3_126 = arith.constant 3 : index
    %c8_127 = arith.constant 8 : index
    %c0_128 = arith.constant 0 : index
    %742 = vector.load %arg10[%c3_126, %c8_127, %c0_128] : memref<4x48x128xf32, #tpu.memory_space<vmem>>, vector<1x32x128xf32>
    %743 = vector.shape_cast %742 : vector<1x32x128xf32> to vector<32x128xf32>
    %c1_i32_129 = arith.constant 1 : i32
    %744 = tpu.dynamic_rotate %743 by %c1_i32_129 dim 1 : vector<32x128xf32>, i32 -> vector<32x128xf32>
    %745 = vector.extract_strided_slice %744 {offsets = [0, 0], sizes = [32, 32], strides = [1, 1]} : vector<32x128xf32> to vector<32x32xf32>
    %c30_130 = arith.constant 30 : index
    %746 = memref.load %arg3[%c30_130] : memref<144xf32, #tpu.memory_space<smem>>
    %747 = vector.broadcast %746 : f32 to vector<32x32xf32>
    %748 = arith.mulf %747, %745 : vector<32x32xf32>
    %749 = arith.addf %729, %748 : vector<32x32xf32>
    %c66 = arith.constant 66 : index
    %750 = memref.load %arg3[%c66] : memref<144xf32, #tpu.memory_space<smem>>
    %751 = vector.broadcast %750 : f32 to vector<32x32xf32>
    %752 = arith.mulf %751, %745 : vector<32x32xf32>
    %753 = arith.addf %733, %752 : vector<32x32xf32>
    %c102 = arith.constant 102 : index
    %754 = memref.load %arg3[%c102] : memref<144xf32, #tpu.memory_space<smem>>
    %755 = vector.broadcast %754 : f32 to vector<32x32xf32>
    %756 = arith.mulf %755, %745 : vector<32x32xf32>
    %757 = arith.addf %737, %756 : vector<32x32xf32>
    %c138 = arith.constant 138 : index
    %758 = memref.load %arg3[%c138] : memref<144xf32, #tpu.memory_space<smem>>
    %759 = vector.broadcast %758 : f32 to vector<32x32xf32>
    %760 = arith.mulf %759, %745 : vector<32x32xf32>
    %761 = arith.addf %741, %760 : vector<32x32xf32>
    %762 = vector.extract_strided_slice %743 {offsets = [0, 0], sizes = [32, 32], strides = [1, 1]} : vector<32x128xf32> to vector<32x32xf32>
    %c31_131 = arith.constant 31 : index
    %763 = memref.load %arg3[%c31_131] : memref<144xf32, #tpu.memory_space<smem>>
    %764 = vector.broadcast %763 : f32 to vector<32x32xf32>
    %765 = arith.mulf %764, %762 : vector<32x32xf32>
    %766 = arith.addf %749, %765 : vector<32x32xf32>
    %c67 = arith.constant 67 : index
    %767 = memref.load %arg3[%c67] : memref<144xf32, #tpu.memory_space<smem>>
    %768 = vector.broadcast %767 : f32 to vector<32x32xf32>
    %769 = arith.mulf %768, %762 : vector<32x32xf32>
    %770 = arith.addf %753, %769 : vector<32x32xf32>
    %c103 = arith.constant 103 : index
    %771 = memref.load %arg3[%c103] : memref<144xf32, #tpu.memory_space<smem>>
    %772 = vector.broadcast %771 : f32 to vector<32x32xf32>
    %773 = arith.mulf %772, %762 : vector<32x32xf32>
    %774 = arith.addf %757, %773 : vector<32x32xf32>
    %c139 = arith.constant 139 : index
    %775 = memref.load %arg3[%c139] : memref<144xf32, #tpu.memory_space<smem>>
    %776 = vector.broadcast %775 : f32 to vector<32x32xf32>
    %777 = arith.mulf %776, %762 : vector<32x32xf32>
    %778 = arith.addf %761, %777 : vector<32x32xf32>
    %c127_i32_132 = arith.constant 127 : i32
    %779 = tpu.dynamic_rotate %743 by %c127_i32_132 dim 1 : vector<32x128xf32>, i32 -> vector<32x128xf32>
    %780 = vector.extract_strided_slice %779 {offsets = [0, 0], sizes = [32, 32], strides = [1, 1]} : vector<32x128xf32> to vector<32x32xf32>
    %c32_133 = arith.constant 32 : index
    %781 = memref.load %arg3[%c32_133] : memref<144xf32, #tpu.memory_space<smem>>
    %782 = vector.broadcast %781 : f32 to vector<32x32xf32>
    %783 = arith.mulf %782, %780 : vector<32x32xf32>
    %784 = arith.addf %766, %783 : vector<32x32xf32>
    %c68 = arith.constant 68 : index
    %785 = memref.load %arg3[%c68] : memref<144xf32, #tpu.memory_space<smem>>
    %786 = vector.broadcast %785 : f32 to vector<32x32xf32>
    %787 = arith.mulf %786, %780 : vector<32x32xf32>
    %788 = arith.addf %770, %787 : vector<32x32xf32>
    %c104 = arith.constant 104 : index
    %789 = memref.load %arg3[%c104] : memref<144xf32, #tpu.memory_space<smem>>
    %790 = vector.broadcast %789 : f32 to vector<32x32xf32>
    %791 = arith.mulf %790, %780 : vector<32x32xf32>
    %792 = arith.addf %774, %791 : vector<32x32xf32>
    %c140 = arith.constant 140 : index
    %793 = memref.load %arg3[%c140] : memref<144xf32, #tpu.memory_space<smem>>
    %794 = vector.broadcast %793 : f32 to vector<32x32xf32>
    %795 = arith.mulf %794, %780 : vector<32x32xf32>
    %796 = arith.addf %778, %795 : vector<32x32xf32>
    %c3_134 = arith.constant 3 : index
    %c9_135 = arith.constant 9 : index
    %c0_136 = arith.constant 0 : index
    %797 = vector.load %arg10[%c3_134, %c9_135, %c0_136] : memref<4x48x128xf32, #tpu.memory_space<vmem>>, vector<1x32x128xf32>
    %798 = vector.shape_cast %797 : vector<1x32x128xf32> to vector<32x128xf32>
    %c1_i32_137 = arith.constant 1 : i32
    %799 = tpu.dynamic_rotate %798 by %c1_i32_137 dim 1 : vector<32x128xf32>, i32 -> vector<32x128xf32>
    %800 = vector.extract_strided_slice %799 {offsets = [0, 0], sizes = [32, 32], strides = [1, 1]} : vector<32x128xf32> to vector<32x32xf32>
    %c33_138 = arith.constant 33 : index
    %801 = memref.load %arg3[%c33_138] : memref<144xf32, #tpu.memory_space<smem>>
    %802 = vector.broadcast %801 : f32 to vector<32x32xf32>
    %803 = arith.mulf %802, %800 : vector<32x32xf32>
    %804 = arith.addf %784, %803 : vector<32x32xf32>
    %c69 = arith.constant 69 : index
    %805 = memref.load %arg3[%c69] : memref<144xf32, #tpu.memory_space<smem>>
    %806 = vector.broadcast %805 : f32 to vector<32x32xf32>
    %807 = arith.mulf %806, %800 : vector<32x32xf32>
    %808 = arith.addf %788, %807 : vector<32x32xf32>
    %c105 = arith.constant 105 : index
    %809 = memref.load %arg3[%c105] : memref<144xf32, #tpu.memory_space<smem>>
    %810 = vector.broadcast %809 : f32 to vector<32x32xf32>
    %811 = arith.mulf %810, %800 : vector<32x32xf32>
    %812 = arith.addf %792, %811 : vector<32x32xf32>
    %c141 = arith.constant 141 : index
    %813 = memref.load %arg3[%c141] : memref<144xf32, #tpu.memory_space<smem>>
    %814 = vector.broadcast %813 : f32 to vector<32x32xf32>
    %815 = arith.mulf %814, %800 : vector<32x32xf32>
    %816 = arith.addf %796, %815 : vector<32x32xf32>
    %817 = vector.extract_strided_slice %798 {offsets = [0, 0], sizes = [32, 32], strides = [1, 1]} : vector<32x128xf32> to vector<32x32xf32>
    %c34_139 = arith.constant 34 : index
    %818 = memref.load %arg3[%c34_139] : memref<144xf32, #tpu.memory_space<smem>>
    %819 = vector.broadcast %818 : f32 to vector<32x32xf32>
    %820 = arith.mulf %819, %817 : vector<32x32xf32>
    %821 = arith.addf %804, %820 : vector<32x32xf32>
    %c70 = arith.constant 70 : index
    %822 = memref.load %arg3[%c70] : memref<144xf32, #tpu.memory_space<smem>>
    %823 = vector.broadcast %822 : f32 to vector<32x32xf32>
    %824 = arith.mulf %823, %817 : vector<32x32xf32>
    %825 = arith.addf %808, %824 : vector<32x32xf32>
    %c106 = arith.constant 106 : index
    %826 = memref.load %arg3[%c106] : memref<144xf32, #tpu.memory_space<smem>>
    %827 = vector.broadcast %826 : f32 to vector<32x32xf32>
    %828 = arith.mulf %827, %817 : vector<32x32xf32>
    %829 = arith.addf %812, %828 : vector<32x32xf32>
    %c142 = arith.constant 142 : index
    %830 = memref.load %arg3[%c142] : memref<144xf32, #tpu.memory_space<smem>>
    %831 = vector.broadcast %830 : f32 to vector<32x32xf32>
    %832 = arith.mulf %831, %817 : vector<32x32xf32>
    %833 = arith.addf %816, %832 : vector<32x32xf32>
    %c127_i32_140 = arith.constant 127 : i32
    %834 = tpu.dynamic_rotate %798 by %c127_i32_140 dim 1 : vector<32x128xf32>, i32 -> vector<32x128xf32>
    %835 = vector.extract_strided_slice %834 {offsets = [0, 0], sizes = [32, 32], strides = [1, 1]} : vector<32x128xf32> to vector<32x32xf32>
    %c35_141 = arith.constant 35 : index
    %836 = memref.load %arg3[%c35_141] : memref<144xf32, #tpu.memory_space<smem>>
    %837 = vector.broadcast %836 : f32 to vector<32x32xf32>
    %838 = arith.mulf %837, %835 : vector<32x32xf32>
    %839 = arith.addf %821, %838 : vector<32x32xf32>
    %c71 = arith.constant 71 : index
    %840 = memref.load %arg3[%c71] : memref<144xf32, #tpu.memory_space<smem>>
    %841 = vector.broadcast %840 : f32 to vector<32x32xf32>
    %842 = arith.mulf %841, %835 : vector<32x32xf32>
    %843 = arith.addf %825, %842 : vector<32x32xf32>
    %c107 = arith.constant 107 : index
    %844 = memref.load %arg3[%c107] : memref<144xf32, #tpu.memory_space<smem>>
    %845 = vector.broadcast %844 : f32 to vector<32x32xf32>
    %846 = arith.mulf %845, %835 : vector<32x32xf32>
    %847 = arith.addf %829, %846 : vector<32x32xf32>
    %c143 = arith.constant 143 : index
    %848 = memref.load %arg3[%c143] : memref<144xf32, #tpu.memory_space<smem>>
    %849 = vector.broadcast %848 : f32 to vector<32x32xf32>
    %850 = arith.mulf %849, %835 : vector<32x32xf32>
    %851 = arith.addf %833, %850 : vector<32x32xf32>
    %c0_142 = arith.constant 0 : index
    %852 = memref.load %arg4[%c0_142] : memref<4xf32, #tpu.memory_space<smem>>
    %853 = vector.broadcast %852 : f32 to vector<32x32xf32>
    %854 = arith.addf %839, %853 : vector<32x32xf32>
    %cst_143 = arith.constant 0.000000e+00 : f32
    %855 = vector.broadcast %cst_143 : f32 to vector<32x32xf32>
    %856 = arith.maximumf %854, %855 : vector<32x32xf32>
    %c1_144 = arith.constant 1 : index
    %857 = memref.load %arg4[%c1_144] : memref<4xf32, #tpu.memory_space<smem>>
    %858 = vector.broadcast %857 : f32 to vector<32x32xf32>
    %859 = arith.addf %843, %858 : vector<32x32xf32>
    %cst_145 = arith.constant 0.000000e+00 : f32
    %860 = vector.broadcast %cst_145 : f32 to vector<32x32xf32>
    %861 = arith.maximumf %859, %860 : vector<32x32xf32>
    %c2_146 = arith.constant 2 : index
    %862 = memref.load %arg4[%c2_146] : memref<4xf32, #tpu.memory_space<smem>>
    %863 = vector.broadcast %862 : f32 to vector<32x32xf32>
    %864 = arith.addf %847, %863 : vector<32x32xf32>
    %cst_147 = arith.constant 0.000000e+00 : f32
    %865 = vector.broadcast %cst_147 : f32 to vector<32x32xf32>
    %866 = arith.maximumf %864, %865 : vector<32x32xf32>
    %c3_148 = arith.constant 3 : index
    %867 = memref.load %arg4[%c3_148] : memref<4xf32, #tpu.memory_space<smem>>
    %868 = vector.broadcast %867 : f32 to vector<32x32xf32>
    %869 = arith.addf %851, %868 : vector<32x32xf32>
    %cst_149 = arith.constant 0.000000e+00 : f32
    %870 = vector.broadcast %cst_149 : f32 to vector<32x32xf32>
    %871 = arith.maximumf %869, %870 : vector<32x32xf32>
    %c0_150 = arith.constant 0 : index
    %c8_151 = arith.constant 8 : index
    %c0_152 = arith.constant 0 : index
    %872 = vector.load %arg10[%c0_150, %c8_151, %c0_152] : memref<4x48x128xf32, #tpu.memory_space<vmem>>, vector<1x32x32xf32>
    %873 = vector.shape_cast %872 : vector<1x32x32xf32> to vector<32x32xf32>
    %874 = vector.shape_cast %856 : vector<32x32xf32> to vector<1x32x32xf32>
    tpu.vector_store %arg10[%c0_150, %c8_151, %c0_152], %874 {strides = array<i32>} : memref<4x48x128xf32, #tpu.memory_space<vmem>>, vector<1x32x32xf32>,
    %c1_153 = arith.constant 1 : index
    %c8_154 = arith.constant 8 : index
    %c0_155 = arith.constant 0 : index
    %875 = vector.load %arg10[%c1_153, %c8_154, %c0_155] : memref<4x48x128xf32, #tpu.memory_space<vmem>>, vector<1x32x32xf32>
    %876 = vector.shape_cast %875 : vector<1x32x32xf32> to vector<32x32xf32>
    %877 = vector.shape_cast %861 : vector<32x32xf32> to vector<1x32x32xf32>
    tpu.vector_store %arg10[%c1_153, %c8_154, %c0_155], %877 {strides = array<i32>} : memref<4x48x128xf32, #tpu.memory_space<vmem>>, vector<1x32x32xf32>,
    %c2_156 = arith.constant 2 : index
    %c8_157 = arith.constant 8 : index
    %c0_158 = arith.constant 0 : index
    %878 = vector.load %arg10[%c2_156, %c8_157, %c0_158] : memref<4x48x128xf32, #tpu.memory_space<vmem>>, vector<1x32x32xf32>
    %879 = vector.shape_cast %878 : vector<1x32x32xf32> to vector<32x32xf32>
    %880 = vector.shape_cast %866 : vector<32x32xf32> to vector<1x32x32xf32>
    tpu.vector_store %arg10[%c2_156, %c8_157, %c0_158], %880 {strides = array<i32>} : memref<4x48x128xf32, #tpu.memory_space<vmem>>, vector<1x32x32xf32>,
    %c3_159 = arith.constant 3 : index
    %c8_160 = arith.constant 8 : index
    %c0_161 = arith.constant 0 : index
    %881 = vector.load %arg10[%c3_159, %c8_160, %c0_161] : memref<4x48x128xf32, #tpu.memory_space<vmem>>, vector<1x32x32xf32>
    %882 = vector.shape_cast %881 : vector<1x32x32xf32> to vector<32x32xf32>
    %883 = vector.shape_cast %871 : vector<32x32xf32> to vector<1x32x32xf32>
    tpu.vector_store %arg10[%c3_159, %c8_160, %c0_161], %883 {strides = array<i32>} : memref<4x48x128xf32, #tpu.memory_space<vmem>>, vector<1x32x32xf32>,
    %c0_162 = arith.constant 0 : index
    %c7_163 = arith.constant 7 : index
    %c0_164 = arith.constant 0 : index
    %884 = vector.load %arg10[%c0_162, %c7_163, %c0_164] : memref<4x48x128xf32, #tpu.memory_space<vmem>>, vector<1x32x128xf32>
    %885 = vector.shape_cast %884 : vector<1x32x128xf32> to vector<32x128xf32>
    %c1_i32_165 = arith.constant 1 : i32
    %886 = tpu.dynamic_rotate %885 by %c1_i32_165 dim 1 : vector<32x128xf32>, i32 -> vector<32x128xf32>
    %887 = vector.extract_strided_slice %886 {offsets = [0, 0], sizes = [32, 32], strides = [1, 1]} : vector<32x128xf32> to vector<32x32xf32>
    %c0_166 = arith.constant 0 : index
    %888 = memref.load %arg5[%c0_166] : memref<144xf32, #tpu.memory_space<smem>>
    %889 = vector.broadcast %888 : f32 to vector<32x32xf32>
    %890 = arith.mulf %889, %887 : vector<32x32xf32>
    %c36_167 = arith.constant 36 : index
    %891 = memref.load %arg5[%c36_167] : memref<144xf32, #tpu.memory_space<smem>>
    %892 = vector.broadcast %891 : f32 to vector<32x32xf32>
    %893 = arith.mulf %892, %887 : vector<32x32xf32>
    %c72_168 = arith.constant 72 : index
    %894 = memref.load %arg5[%c72_168] : memref<144xf32, #tpu.memory_space<smem>>
    %895 = vector.broadcast %894 : f32 to vector<32x32xf32>
    %896 = arith.mulf %895, %887 : vector<32x32xf32>
    %c108_169 = arith.constant 108 : index
    %897 = memref.load %arg5[%c108_169] : memref<144xf32, #tpu.memory_space<smem>>
    %898 = vector.broadcast %897 : f32 to vector<32x32xf32>
    %899 = arith.mulf %898, %887 : vector<32x32xf32>
    %900 = vector.extract_strided_slice %885 {offsets = [0, 0], sizes = [32, 32], strides = [1, 1]} : vector<32x128xf32> to vector<32x32xf32>
    %c1_170 = arith.constant 1 : index
    %901 = memref.load %arg5[%c1_170] : memref<144xf32, #tpu.memory_space<smem>>
    %902 = vector.broadcast %901 : f32 to vector<32x32xf32>
    %903 = arith.mulf %902, %900 : vector<32x32xf32>
    %904 = arith.addf %890, %903 : vector<32x32xf32>
    %c37_171 = arith.constant 37 : index
    %905 = memref.load %arg5[%c37_171] : memref<144xf32, #tpu.memory_space<smem>>
    %906 = vector.broadcast %905 : f32 to vector<32x32xf32>
    %907 = arith.mulf %906, %900 : vector<32x32xf32>
    %908 = arith.addf %893, %907 : vector<32x32xf32>
    %c73_172 = arith.constant 73 : index
    %909 = memref.load %arg5[%c73_172] : memref<144xf32, #tpu.memory_space<smem>>
    %910 = vector.broadcast %909 : f32 to vector<32x32xf32>
    %911 = arith.mulf %910, %900 : vector<32x32xf32>
    %912 = arith.addf %896, %911 : vector<32x32xf32>
    %c109_173 = arith.constant 109 : index
    %913 = memref.load %arg5[%c109_173] : memref<144xf32, #tpu.memory_space<smem>>
    %914 = vector.broadcast %913 : f32 to vector<32x32xf32>
    %915 = arith.mulf %914, %900 : vector<32x32xf32>
    %916 = arith.addf %899, %915 : vector<32x32xf32>
    %c127_i32_174 = arith.constant 127 : i32
    %917 = tpu.dynamic_rotate %885 by %c127_i32_174 dim 1 : vector<32x128xf32>, i32 -> vector<32x128xf32>
    %918 = vector.extract_strided_slice %917 {offsets = [0, 0], sizes = [32, 32], strides = [1, 1]} : vector<32x128xf32> to vector<32x32xf32>
    %c2_175 = arith.constant 2 : index
    %919 = memref.load %arg5[%c2_175] : memref<144xf32, #tpu.memory_space<smem>>
    %920 = vector.broadcast %919 : f32 to vector<32x32xf32>
    %921 = arith.mulf %920, %918 : vector<32x32xf32>
    %922 = arith.addf %904, %921 : vector<32x32xf32>
    %c38_176 = arith.constant 38 : index
    %923 = memref.load %arg5[%c38_176] : memref<144xf32, #tpu.memory_space<smem>>
    %924 = vector.broadcast %923 : f32 to vector<32x32xf32>
    %925 = arith.mulf %924, %918 : vector<32x32xf32>
    %926 = arith.addf %908, %925 : vector<32x32xf32>
    %c74_177 = arith.constant 74 : index
    %927 = memref.load %arg5[%c74_177] : memref<144xf32, #tpu.memory_space<smem>>
    %928 = vector.broadcast %927 : f32 to vector<32x32xf32>
    %929 = arith.mulf %928, %918 : vector<32x32xf32>
    %930 = arith.addf %912, %929 : vector<32x32xf32>
    %c110_178 = arith.constant 110 : index
    %931 = memref.load %arg5[%c110_178] : memref<144xf32, #tpu.memory_space<smem>>
    %932 = vector.broadcast %931 : f32 to vector<32x32xf32>
    %933 = arith.mulf %932, %918 : vector<32x32xf32>
    %934 = arith.addf %916, %933 : vector<32x32xf32>
    %c0_179 = arith.constant 0 : index
    %c8_180 = arith.constant 8 : index
    %c0_181 = arith.constant 0 : index
    %935 = vector.load %arg10[%c0_179, %c8_180, %c0_181] : memref<4x48x128xf32, #tpu.memory_space<vmem>>, vector<1x32x128xf32>
    %936 = vector.shape_cast %935 : vector<1x32x128xf32> to vector<32x128xf32>
    %c1_i32_182 = arith.constant 1 : i32
    %937 = tpu.dynamic_rotate %936 by %c1_i32_182 dim 1 : vector<32x128xf32>, i32 -> vector<32x128xf32>
    %938 = vector.extract_strided_slice %937 {offsets = [0, 0], sizes = [32, 32], strides = [1, 1]} : vector<32x128xf32> to vector<32x32xf32>
    %c3_183 = arith.constant 3 : index
    %939 = memref.load %arg5[%c3_183] : memref<144xf32, #tpu.memory_space<smem>>
    %940 = vector.broadcast %939 : f32 to vector<32x32xf32>
    %941 = arith.mulf %940, %938 : vector<32x32xf32>
    %942 = arith.addf %922, %941 : vector<32x32xf32>
    %c39_184 = arith.constant 39 : index
    %943 = memref.load %arg5[%c39_184] : memref<144xf32, #tpu.memory_space<smem>>
    %944 = vector.broadcast %943 : f32 to vector<32x32xf32>
    %945 = arith.mulf %944, %938 : vector<32x32xf32>
    %946 = arith.addf %926, %945 : vector<32x32xf32>
    %c75_185 = arith.constant 75 : index
    %947 = memref.load %arg5[%c75_185] : memref<144xf32, #tpu.memory_space<smem>>
    %948 = vector.broadcast %947 : f32 to vector<32x32xf32>
    %949 = arith.mulf %948, %938 : vector<32x32xf32>
    %950 = arith.addf %930, %949 : vector<32x32xf32>
    %c111_186 = arith.constant 111 : index
    %951 = memref.load %arg5[%c111_186] : memref<144xf32, #tpu.memory_space<smem>>
    %952 = vector.broadcast %951 : f32 to vector<32x32xf32>
    %953 = arith.mulf %952, %938 : vector<32x32xf32>
    %954 = arith.addf %934, %953 : vector<32x32xf32>
    %955 = vector.extract_strided_slice %936 {offsets = [0, 0], sizes = [32, 32], strides = [1, 1]} : vector<32x128xf32> to vector<32x32xf32>
    %c4_187 = arith.constant 4 : index
    %956 = memref.load %arg5[%c4_187] : memref<144xf32, #tpu.memory_space<smem>>
    %957 = vector.broadcast %956 : f32 to vector<32x32xf32>
    %958 = arith.mulf %957, %955 : vector<32x32xf32>
    %959 = arith.addf %942, %958 : vector<32x32xf32>
    %c40_188 = arith.constant 40 : index
    %960 = memref.load %arg5[%c40_188] : memref<144xf32, #tpu.memory_space<smem>>
    %961 = vector.broadcast %960 : f32 to vector<32x32xf32>
    %962 = arith.mulf %961, %955 : vector<32x32xf32>
    %963 = arith.addf %946, %962 : vector<32x32xf32>
    %c76_189 = arith.constant 76 : index
    %964 = memref.load %arg5[%c76_189] : memref<144xf32, #tpu.memory_space<smem>>
    %965 = vector.broadcast %964 : f32 to vector<32x32xf32>
    %966 = arith.mulf %965, %955 : vector<32x32xf32>
    %967 = arith.addf %950, %966 : vector<32x32xf32>
    %c112_190 = arith.constant 112 : index
    %968 = memref.load %arg5[%c112_190] : memref<144xf32, #tpu.memory_space<smem>>
    %969 = vector.broadcast %968 : f32 to vector<32x32xf32>
    %970 = arith.mulf %969, %955 : vector<32x32xf32>
    %971 = arith.addf %954, %970 : vector<32x32xf32>
    %c127_i32_191 = arith.constant 127 : i32
    %972 = tpu.dynamic_rotate %936 by %c127_i32_191 dim 1 : vector<32x128xf32>, i32 -> vector<32x128xf32>
    %973 = vector.extract_strided_slice %972 {offsets = [0, 0], sizes = [32, 32], strides = [1, 1]} : vector<32x128xf32> to vector<32x32xf32>
    %c5_192 = arith.constant 5 : index
    %974 = memref.load %arg5[%c5_192] : memref<144xf32, #tpu.memory_space<smem>>
    %975 = vector.broadcast %974 : f32 to vector<32x32xf32>
    %976 = arith.mulf %975, %973 : vector<32x32xf32>
    %977 = arith.addf %959, %976 : vector<32x32xf32>
    %c41_193 = arith.constant 41 : index
    %978 = memref.load %arg5[%c41_193] : memref<144xf32, #tpu.memory_space<smem>>
    %979 = vector.broadcast %978 : f32 to vector<32x32xf32>
    %980 = arith.mulf %979, %973 : vector<32x32xf32>
    %981 = arith.addf %963, %980 : vector<32x32xf32>
    %c77_194 = arith.constant 77 : index
    %982 = memref.load %arg5[%c77_194] : memref<144xf32, #tpu.memory_space<smem>>
    %983 = vector.broadcast %982 : f32 to vector<32x32xf32>
    %984 = arith.mulf %983, %973 : vector<32x32xf32>
    %985 = arith.addf %967, %984 : vector<32x32xf32>
    %c113_195 = arith.constant 113 : index
    %986 = memref.load %arg5[%c113_195] : memref<144xf32, #tpu.memory_space<smem>>
    %987 = vector.broadcast %986 : f32 to vector<32x32xf32>
    %988 = arith.mulf %987, %973 : vector<32x32xf32>
    %989 = arith.addf %971, %988 : vector<32x32xf32>
    %c0_196 = arith.constant 0 : index
    %c9_197 = arith.constant 9 : index
    %c0_198 = arith.constant 0 : index
    %990 = vector.load %arg10[%c0_196, %c9_197, %c0_198] : memref<4x48x128xf32, #tpu.memory_space<vmem>>, vector<1x32x128xf32>
    %991 = vector.shape_cast %990 : vector<1x32x128xf32> to vector<32x128xf32>
    %c1_i32_199 = arith.constant 1 : i32
    %992 = tpu.dynamic_rotate %991 by %c1_i32_199 dim 1 : vector<32x128xf32>, i32 -> vector<32x128xf32>
    %993 = vector.extract_strided_slice %992 {offsets = [0, 0], sizes = [32, 32], strides = [1, 1]} : vector<32x128xf32> to vector<32x32xf32>
    %c6_200 = arith.constant 6 : index
    %994 = memref.load %arg5[%c6_200] : memref<144xf32, #tpu.memory_space<smem>>
    %995 = vector.broadcast %994 : f32 to vector<32x32xf32>
    %996 = arith.mulf %995, %993 : vector<32x32xf32>
    %997 = arith.addf %977, %996 : vector<32x32xf32>
    %c42_201 = arith.constant 42 : index
    %998 = memref.load %arg5[%c42_201] : memref<144xf32, #tpu.memory_space<smem>>
    %999 = vector.broadcast %998 : f32 to vector<32x32xf32>
    %1000 = arith.mulf %999, %993 : vector<32x32xf32>
    %1001 = arith.addf %981, %1000 : vector<32x32xf32>
    %c78_202 = arith.constant 78 : index
    %1002 = memref.load %arg5[%c78_202] : memref<144xf32, #tpu.memory_space<smem>>
    %1003 = vector.broadcast %1002 : f32 to vector<32x32xf32>
    %1004 = arith.mulf %1003, %993 : vector<32x32xf32>
    %1005 = arith.addf %985, %1004 : vector<32x32xf32>
    %c114_203 = arith.constant 114 : index
    %1006 = memref.load %arg5[%c114_203] : memref<144xf32, #tpu.memory_space<smem>>
    %1007 = vector.broadcast %1006 : f32 to vector<32x32xf32>
    %1008 = arith.mulf %1007, %993 : vector<32x32xf32>
    %1009 = arith.addf %989, %1008 : vector<32x32xf32>
    %1010 = vector.extract_strided_slice %991 {offsets = [0, 0], sizes = [32, 32], strides = [1, 1]} : vector<32x128xf32> to vector<32x32xf32>
    %c7_204 = arith.constant 7 : index
    %1011 = memref.load %arg5[%c7_204] : memref<144xf32, #tpu.memory_space<smem>>
    %1012 = vector.broadcast %1011 : f32 to vector<32x32xf32>
    %1013 = arith.mulf %1012, %1010 : vector<32x32xf32>
    %1014 = arith.addf %997, %1013 : vector<32x32xf32>
    %c43_205 = arith.constant 43 : index
    %1015 = memref.load %arg5[%c43_205] : memref<144xf32, #tpu.memory_space<smem>>
    %1016 = vector.broadcast %1015 : f32 to vector<32x32xf32>
    %1017 = arith.mulf %1016, %1010 : vector<32x32xf32>
    %1018 = arith.addf %1001, %1017 : vector<32x32xf32>
    %c79_206 = arith.constant 79 : index
    %1019 = memref.load %arg5[%c79_206] : memref<144xf32, #tpu.memory_space<smem>>
    %1020 = vector.broadcast %1019 : f32 to vector<32x32xf32>
    %1021 = arith.mulf %1020, %1010 : vector<32x32xf32>
    %1022 = arith.addf %1005, %1021 : vector<32x32xf32>
    %c115_207 = arith.constant 115 : index
    %1023 = memref.load %arg5[%c115_207] : memref<144xf32, #tpu.memory_space<smem>>
    %1024 = vector.broadcast %1023 : f32 to vector<32x32xf32>
    %1025 = arith.mulf %1024, %1010 : vector<32x32xf32>
    %1026 = arith.addf %1009, %1025 : vector<32x32xf32>
    %c127_i32_208 = arith.constant 127 : i32
    %1027 = tpu.dynamic_rotate %991 by %c127_i32_208 dim 1 : vector<32x128xf32>, i32 -> vector<32x128xf32>
    %1028 = vector.extract_strided_slice %1027 {offsets = [0, 0], sizes = [32, 32], strides = [1, 1]} : vector<32x128xf32> to vector<32x32xf32>
    %c8_209 = arith.constant 8 : index
    %1029 = memref.load %arg5[%c8_209] : memref<144xf32, #tpu.memory_space<smem>>
    %1030 = vector.broadcast %1029 : f32 to vector<32x32xf32>
    %1031 = arith.mulf %1030, %1028 : vector<32x32xf32>
    %1032 = arith.addf %1014, %1031 : vector<32x32xf32>
    %c44_210 = arith.constant 44 : index
    %1033 = memref.load %arg5[%c44_210] : memref<144xf32, #tpu.memory_space<smem>>
    %1034 = vector.broadcast %1033 : f32 to vector<32x32xf32>
    %1035 = arith.mulf %1034, %1028 : vector<32x32xf32>
    %1036 = arith.addf %1018, %1035 : vector<32x32xf32>
    %c80_211 = arith.constant 80 : index
    %1037 = memref.load %arg5[%c80_211] : memref<144xf32, #tpu.memory_space<smem>>
    %1038 = vector.broadcast %1037 : f32 to vector<32x32xf32>
    %1039 = arith.mulf %1038, %1028 : vector<32x32xf32>
    %1040 = arith.addf %1022, %1039 : vector<32x32xf32>
    %c116_212 = arith.constant 116 : index
    %1041 = memref.load %arg5[%c116_212] : memref<144xf32, #tpu.memory_space<smem>>
    %1042 = vector.broadcast %1041 : f32 to vector<32x32xf32>
    %1043 = arith.mulf %1042, %1028 : vector<32x32xf32>
    %1044 = arith.addf %1026, %1043 : vector<32x32xf32>
    %c1_213 = arith.constant 1 : index
    %c7_214 = arith.constant 7 : index
    %c0_215 = arith.constant 0 : index
    %1045 = vector.load %arg10[%c1_213, %c7_214, %c0_215] : memref<4x48x128xf32, #tpu.memory_space<vmem>>, vector<1x32x128xf32>
    %1046 = vector.shape_cast %1045 : vector<1x32x128xf32> to vector<32x128xf32>
    %c1_i32_216 = arith.constant 1 : i32
    %1047 = tpu.dynamic_rotate %1046 by %c1_i32_216 dim 1 : vector<32x128xf32>, i32 -> vector<32x128xf32>
    %1048 = vector.extract_strided_slice %1047 {offsets = [0, 0], sizes = [32, 32], strides = [1, 1]} : vector<32x128xf32> to vector<32x32xf32>
    %c9_217 = arith.constant 9 : index
    %1049 = memref.load %arg5[%c9_217] : memref<144xf32, #tpu.memory_space<smem>>
    %1050 = vector.broadcast %1049 : f32 to vector<32x32xf32>
    %1051 = arith.mulf %1050, %1048 : vector<32x32xf32>
    %1052 = arith.addf %1032, %1051 : vector<32x32xf32>
    %c45_218 = arith.constant 45 : index
    %1053 = memref.load %arg5[%c45_218] : memref<144xf32, #tpu.memory_space<smem>>
    %1054 = vector.broadcast %1053 : f32 to vector<32x32xf32>
    %1055 = arith.mulf %1054, %1048 : vector<32x32xf32>
    %1056 = arith.addf %1036, %1055 : vector<32x32xf32>
    %c81_219 = arith.constant 81 : index
    %1057 = memref.load %arg5[%c81_219] : memref<144xf32, #tpu.memory_space<smem>>
    %1058 = vector.broadcast %1057 : f32 to vector<32x32xf32>
    %1059 = arith.mulf %1058, %1048 : vector<32x32xf32>
    %1060 = arith.addf %1040, %1059 : vector<32x32xf32>
    %c117_220 = arith.constant 117 : index
    %1061 = memref.load %arg5[%c117_220] : memref<144xf32, #tpu.memory_space<smem>>
    %1062 = vector.broadcast %1061 : f32 to vector<32x32xf32>
    %1063 = arith.mulf %1062, %1048 : vector<32x32xf32>
    %1064 = arith.addf %1044, %1063 : vector<32x32xf32>
    %1065 = vector.extract_strided_slice %1046 {offsets = [0, 0], sizes = [32, 32], strides = [1, 1]} : vector<32x128xf32> to vector<32x32xf32>
    %c10_221 = arith.constant 10 : index
    %1066 = memref.load %arg5[%c10_221] : memref<144xf32, #tpu.memory_space<smem>>
    %1067 = vector.broadcast %1066 : f32 to vector<32x32xf32>
    %1068 = arith.mulf %1067, %1065 : vector<32x32xf32>
    %1069 = arith.addf %1052, %1068 : vector<32x32xf32>
    %c46_222 = arith.constant 46 : index
    %1070 = memref.load %arg5[%c46_222] : memref<144xf32, #tpu.memory_space<smem>>
    %1071 = vector.broadcast %1070 : f32 to vector<32x32xf32>
    %1072 = arith.mulf %1071, %1065 : vector<32x32xf32>
    %1073 = arith.addf %1056, %1072 : vector<32x32xf32>
    %c82_223 = arith.constant 82 : index
    %1074 = memref.load %arg5[%c82_223] : memref<144xf32, #tpu.memory_space<smem>>
    %1075 = vector.broadcast %1074 : f32 to vector<32x32xf32>
    %1076 = arith.mulf %1075, %1065 : vector<32x32xf32>
    %1077 = arith.addf %1060, %1076 : vector<32x32xf32>
    %c118_224 = arith.constant 118 : index
    %1078 = memref.load %arg5[%c118_224] : memref<144xf32, #tpu.memory_space<smem>>
    %1079 = vector.broadcast %1078 : f32 to vector<32x32xf32>
    %1080 = arith.mulf %1079, %1065 : vector<32x32xf32>
    %1081 = arith.addf %1064, %1080 : vector<32x32xf32>
    %c127_i32_225 = arith.constant 127 : i32
    %1082 = tpu.dynamic_rotate %1046 by %c127_i32_225 dim 1 : vector<32x128xf32>, i32 -> vector<32x128xf32>
    %1083 = vector.extract_strided_slice %1082 {offsets = [0, 0], sizes = [32, 32], strides = [1, 1]} : vector<32x128xf32> to vector<32x32xf32>
    %c11_226 = arith.constant 11 : index
    %1084 = memref.load %arg5[%c11_226] : memref<144xf32, #tpu.memory_space<smem>>
    %1085 = vector.broadcast %1084 : f32 to vector<32x32xf32>
    %1086 = arith.mulf %1085, %1083 : vector<32x32xf32>
    %1087 = arith.addf %1069, %1086 : vector<32x32xf32>
    %c47_227 = arith.constant 47 : index
    %1088 = memref.load %arg5[%c47_227] : memref<144xf32, #tpu.memory_space<smem>>
    %1089 = vector.broadcast %1088 : f32 to vector<32x32xf32>
    %1090 = arith.mulf %1089, %1083 : vector<32x32xf32>
    %1091 = arith.addf %1073, %1090 : vector<32x32xf32>
    %c83_228 = arith.constant 83 : index
    %1092 = memref.load %arg5[%c83_228] : memref<144xf32, #tpu.memory_space<smem>>
    %1093 = vector.broadcast %1092 : f32 to vector<32x32xf32>
    %1094 = arith.mulf %1093, %1083 : vector<32x32xf32>
    %1095 = arith.addf %1077, %1094 : vector<32x32xf32>
    %c119_229 = arith.constant 119 : index
    %1096 = memref.load %arg5[%c119_229] : memref<144xf32, #tpu.memory_space<smem>>
    %1097 = vector.broadcast %1096 : f32 to vector<32x32xf32>
    %1098 = arith.mulf %1097, %1083 : vector<32x32xf32>
    %1099 = arith.addf %1081, %1098 : vector<32x32xf32>
    %c1_230 = arith.constant 1 : index
    %c8_231 = arith.constant 8 : index
    %c0_232 = arith.constant 0 : index
    %1100 = vector.load %arg10[%c1_230, %c8_231, %c0_232] : memref<4x48x128xf32, #tpu.memory_space<vmem>>, vector<1x32x128xf32>
    %1101 = vector.shape_cast %1100 : vector<1x32x128xf32> to vector<32x128xf32>
    %c1_i32_233 = arith.constant 1 : i32
    %1102 = tpu.dynamic_rotate %1101 by %c1_i32_233 dim 1 : vector<32x128xf32>, i32 -> vector<32x128xf32>
    %1103 = vector.extract_strided_slice %1102 {offsets = [0, 0], sizes = [32, 32], strides = [1, 1]} : vector<32x128xf32> to vector<32x32xf32>
    %c12_234 = arith.constant 12 : index
    %1104 = memref.load %arg5[%c12_234] : memref<144xf32, #tpu.memory_space<smem>>
    %1105 = vector.broadcast %1104 : f32 to vector<32x32xf32>
    %1106 = arith.mulf %1105, %1103 : vector<32x32xf32>
    %1107 = arith.addf %1087, %1106 : vector<32x32xf32>
    %c48_235 = arith.constant 48 : index
    %1108 = memref.load %arg5[%c48_235] : memref<144xf32, #tpu.memory_space<smem>>
    %1109 = vector.broadcast %1108 : f32 to vector<32x32xf32>
    %1110 = arith.mulf %1109, %1103 : vector<32x32xf32>
    %1111 = arith.addf %1091, %1110 : vector<32x32xf32>
    %c84_236 = arith.constant 84 : index
    %1112 = memref.load %arg5[%c84_236] : memref<144xf32, #tpu.memory_space<smem>>
    %1113 = vector.broadcast %1112 : f32 to vector<32x32xf32>
    %1114 = arith.mulf %1113, %1103 : vector<32x32xf32>
    %1115 = arith.addf %1095, %1114 : vector<32x32xf32>
    %c120_237 = arith.constant 120 : index
    %1116 = memref.load %arg5[%c120_237] : memref<144xf32, #tpu.memory_space<smem>>
    %1117 = vector.broadcast %1116 : f32 to vector<32x32xf32>
    %1118 = arith.mulf %1117, %1103 : vector<32x32xf32>
    %1119 = arith.addf %1099, %1118 : vector<32x32xf32>
    %1120 = vector.extract_strided_slice %1101 {offsets = [0, 0], sizes = [32, 32], strides = [1, 1]} : vector<32x128xf32> to vector<32x32xf32>
    %c13_238 = arith.constant 13 : index
    %1121 = memref.load %arg5[%c13_238] : memref<144xf32, #tpu.memory_space<smem>>
    %1122 = vector.broadcast %1121 : f32 to vector<32x32xf32>
    %1123 = arith.mulf %1122, %1120 : vector<32x32xf32>
    %1124 = arith.addf %1107, %1123 : vector<32x32xf32>
    %c49_239 = arith.constant 49 : index
    %1125 = memref.load %arg5[%c49_239] : memref<144xf32, #tpu.memory_space<smem>>
    %1126 = vector.broadcast %1125 : f32 to vector<32x32xf32>
    %1127 = arith.mulf %1126, %1120 : vector<32x32xf32>
    %1128 = arith.addf %1111, %1127 : vector<32x32xf32>
    %c85_240 = arith.constant 85 : index
    %1129 = memref.load %arg5[%c85_240] : memref<144xf32, #tpu.memory_space<smem>>
    %1130 = vector.broadcast %1129 : f32 to vector<32x32xf32>
    %1131 = arith.mulf %1130, %1120 : vector<32x32xf32>
    %1132 = arith.addf %1115, %1131 : vector<32x32xf32>
    %c121_241 = arith.constant 121 : index
    %1133 = memref.load %arg5[%c121_241] : memref<144xf32, #tpu.memory_space<smem>>
    %1134 = vector.broadcast %1133 : f32 to vector<32x32xf32>
    %1135 = arith.mulf %1134, %1120 : vector<32x32xf32>
    %1136 = arith.addf %1119, %1135 : vector<32x32xf32>
    %c127_i32_242 = arith.constant 127 : i32
    %1137 = tpu.dynamic_rotate %1101 by %c127_i32_242 dim 1 : vector<32x128xf32>, i32 -> vector<32x128xf32>
    %1138 = vector.extract_strided_slice %1137 {offsets = [0, 0], sizes = [32, 32], strides = [1, 1]} : vector<32x128xf32> to vector<32x32xf32>
    %c14_243 = arith.constant 14 : index
    %1139 = memref.load %arg5[%c14_243] : memref<144xf32, #tpu.memory_space<smem>>
    %1140 = vector.broadcast %1139 : f32 to vector<32x32xf32>
    %1141 = arith.mulf %1140, %1138 : vector<32x32xf32>
    %1142 = arith.addf %1124, %1141 : vector<32x32xf32>
    %c50_244 = arith.constant 50 : index
    %1143 = memref.load %arg5[%c50_244] : memref<144xf32, #tpu.memory_space<smem>>
    %1144 = vector.broadcast %1143 : f32 to vector<32x32xf32>
    %1145 = arith.mulf %1144, %1138 : vector<32x32xf32>
    %1146 = arith.addf %1128, %1145 : vector<32x32xf32>
    %c86_245 = arith.constant 86 : index
    %1147 = memref.load %arg5[%c86_245] : memref<144xf32, #tpu.memory_space<smem>>
    %1148 = vector.broadcast %1147 : f32 to vector<32x32xf32>
    %1149 = arith.mulf %1148, %1138 : vector<32x32xf32>
    %1150 = arith.addf %1132, %1149 : vector<32x32xf32>
    %c122_246 = arith.constant 122 : index
    %1151 = memref.load %arg5[%c122_246] : memref<144xf32, #tpu.memory_space<smem>>
    %1152 = vector.broadcast %1151 : f32 to vector<32x32xf32>
    %1153 = arith.mulf %1152, %1138 : vector<32x32xf32>
    %1154 = arith.addf %1136, %1153 : vector<32x32xf32>
    %c1_247 = arith.constant 1 : index
    %c9_248 = arith.constant 9 : index
    %c0_249 = arith.constant 0 : index
    %1155 = vector.load %arg10[%c1_247, %c9_248, %c0_249] : memref<4x48x128xf32, #tpu.memory_space<vmem>>, vector<1x32x128xf32>
    %1156 = vector.shape_cast %1155 : vector<1x32x128xf32> to vector<32x128xf32>
    %c1_i32_250 = arith.constant 1 : i32
    %1157 = tpu.dynamic_rotate %1156 by %c1_i32_250 dim 1 : vector<32x128xf32>, i32 -> vector<32x128xf32>
    %1158 = vector.extract_strided_slice %1157 {offsets = [0, 0], sizes = [32, 32], strides = [1, 1]} : vector<32x128xf32> to vector<32x32xf32>
    %c15_251 = arith.constant 15 : index
    %1159 = memref.load %arg5[%c15_251] : memref<144xf32, #tpu.memory_space<smem>>
    %1160 = vector.broadcast %1159 : f32 to vector<32x32xf32>
    %1161 = arith.mulf %1160, %1158 : vector<32x32xf32>
    %1162 = arith.addf %1142, %1161 : vector<32x32xf32>
    %c51_252 = arith.constant 51 : index
    %1163 = memref.load %arg5[%c51_252] : memref<144xf32, #tpu.memory_space<smem>>
    %1164 = vector.broadcast %1163 : f32 to vector<32x32xf32>
    %1165 = arith.mulf %1164, %1158 : vector<32x32xf32>
    %1166 = arith.addf %1146, %1165 : vector<32x32xf32>
    %c87_253 = arith.constant 87 : index
    %1167 = memref.load %arg5[%c87_253] : memref<144xf32, #tpu.memory_space<smem>>
    %1168 = vector.broadcast %1167 : f32 to vector<32x32xf32>
    %1169 = arith.mulf %1168, %1158 : vector<32x32xf32>
    %1170 = arith.addf %1150, %1169 : vector<32x32xf32>
    %c123_254 = arith.constant 123 : index
    %1171 = memref.load %arg5[%c123_254] : memref<144xf32, #tpu.memory_space<smem>>
    %1172 = vector.broadcast %1171 : f32 to vector<32x32xf32>
    %1173 = arith.mulf %1172, %1158 : vector<32x32xf32>
    %1174 = arith.addf %1154, %1173 : vector<32x32xf32>
    %1175 = vector.extract_strided_slice %1156 {offsets = [0, 0], sizes = [32, 32], strides = [1, 1]} : vector<32x128xf32> to vector<32x32xf32>
    %c16_255 = arith.constant 16 : index
    %1176 = memref.load %arg5[%c16_255] : memref<144xf32, #tpu.memory_space<smem>>
    %1177 = vector.broadcast %1176 : f32 to vector<32x32xf32>
    %1178 = arith.mulf %1177, %1175 : vector<32x32xf32>
    %1179 = arith.addf %1162, %1178 : vector<32x32xf32>
    %c52_256 = arith.constant 52 : index
    %1180 = memref.load %arg5[%c52_256] : memref<144xf32, #tpu.memory_space<smem>>
    %1181 = vector.broadcast %1180 : f32 to vector<32x32xf32>
    %1182 = arith.mulf %1181, %1175 : vector<32x32xf32>
    %1183 = arith.addf %1166, %1182 : vector<32x32xf32>
    %c88_257 = arith.constant 88 : index
    %1184 = memref.load %arg5[%c88_257] : memref<144xf32, #tpu.memory_space<smem>>
    %1185 = vector.broadcast %1184 : f32 to vector<32x32xf32>
    %1186 = arith.mulf %1185, %1175 : vector<32x32xf32>
    %1187 = arith.addf %1170, %1186 : vector<32x32xf32>
    %c124_258 = arith.constant 124 : index
    %1188 = memref.load %arg5[%c124_258] : memref<144xf32, #tpu.memory_space<smem>>
    %1189 = vector.broadcast %1188 : f32 to vector<32x32xf32>
    %1190 = arith.mulf %1189, %1175 : vector<32x32xf32>
    %1191 = arith.addf %1174, %1190 : vector<32x32xf32>
    %c127_i32_259 = arith.constant 127 : i32
    %1192 = tpu.dynamic_rotate %1156 by %c127_i32_259 dim 1 : vector<32x128xf32>, i32 -> vector<32x128xf32>
    %1193 = vector.extract_strided_slice %1192 {offsets = [0, 0], sizes = [32, 32], strides = [1, 1]} : vector<32x128xf32> to vector<32x32xf32>
    %c17_260 = arith.constant 17 : index
    %1194 = memref.load %arg5[%c17_260] : memref<144xf32, #tpu.memory_space<smem>>
    %1195 = vector.broadcast %1194 : f32 to vector<32x32xf32>
    %1196 = arith.mulf %1195, %1193 : vector<32x32xf32>
    %1197 = arith.addf %1179, %1196 : vector<32x32xf32>
    %c53_261 = arith.constant 53 : index
    %1198 = memref.load %arg5[%c53_261] : memref<144xf32, #tpu.memory_space<smem>>
    %1199 = vector.broadcast %1198 : f32 to vector<32x32xf32>
    %1200 = arith.mulf %1199, %1193 : vector<32x32xf32>
    %1201 = arith.addf %1183, %1200 : vector<32x32xf32>
    %c89_262 = arith.constant 89 : index
    %1202 = memref.load %arg5[%c89_262] : memref<144xf32, #tpu.memory_space<smem>>
    %1203 = vector.broadcast %1202 : f32 to vector<32x32xf32>
    %1204 = arith.mulf %1203, %1193 : vector<32x32xf32>
    %1205 = arith.addf %1187, %1204 : vector<32x32xf32>
    %c125_263 = arith.constant 125 : index
    %1206 = memref.load %arg5[%c125_263] : memref<144xf32, #tpu.memory_space<smem>>
    %1207 = vector.broadcast %1206 : f32 to vector<32x32xf32>
    %1208 = arith.mulf %1207, %1193 : vector<32x32xf32>
    %1209 = arith.addf %1191, %1208 : vector<32x32xf32>
    %c2_264 = arith.constant 2 : index
    %c7_265 = arith.constant 7 : index
    %c0_266 = arith.constant 0 : index
    %1210 = vector.load %arg10[%c2_264, %c7_265, %c0_266] : memref<4x48x128xf32, #tpu.memory_space<vmem>>, vector<1x32x128xf32>
    %1211 = vector.shape_cast %1210 : vector<1x32x128xf32> to vector<32x128xf32>
    %c1_i32_267 = arith.constant 1 : i32
    %1212 = tpu.dynamic_rotate %1211 by %c1_i32_267 dim 1 : vector<32x128xf32>, i32 -> vector<32x128xf32>
    %1213 = vector.extract_strided_slice %1212 {offsets = [0, 0], sizes = [32, 32], strides = [1, 1]} : vector<32x128xf32> to vector<32x32xf32>
    %c18_268 = arith.constant 18 : index
    %1214 = memref.load %arg5[%c18_268] : memref<144xf32, #tpu.memory_space<smem>>
    %1215 = vector.broadcast %1214 : f32 to vector<32x32xf32>
    %1216 = arith.mulf %1215, %1213 : vector<32x32xf32>
    %1217 = arith.addf %1197, %1216 : vector<32x32xf32>
    %c54_269 = arith.constant 54 : index
    %1218 = memref.load %arg5[%c54_269] : memref<144xf32, #tpu.memory_space<smem>>
    %1219 = vector.broadcast %1218 : f32 to vector<32x32xf32>
    %1220 = arith.mulf %1219, %1213 : vector<32x32xf32>
    %1221 = arith.addf %1201, %1220 : vector<32x32xf32>
    %c90_270 = arith.constant 90 : index
    %1222 = memref.load %arg5[%c90_270] : memref<144xf32, #tpu.memory_space<smem>>
    %1223 = vector.broadcast %1222 : f32 to vector<32x32xf32>
    %1224 = arith.mulf %1223, %1213 : vector<32x32xf32>
    %1225 = arith.addf %1205, %1224 : vector<32x32xf32>
    %c126_271 = arith.constant 126 : index
    %1226 = memref.load %arg5[%c126_271] : memref<144xf32, #tpu.memory_space<smem>>
    %1227 = vector.broadcast %1226 : f32 to vector<32x32xf32>
    %1228 = arith.mulf %1227, %1213 : vector<32x32xf32>
    %1229 = arith.addf %1209, %1228 : vector<32x32xf32>
    %1230 = vector.extract_strided_slice %1211 {offsets = [0, 0], sizes = [32, 32], strides = [1, 1]} : vector<32x128xf32> to vector<32x32xf32>
    %c19_272 = arith.constant 19 : index
    %1231 = memref.load %arg5[%c19_272] : memref<144xf32, #tpu.memory_space<smem>>
    %1232 = vector.broadcast %1231 : f32 to vector<32x32xf32>
    %1233 = arith.mulf %1232, %1230 : vector<32x32xf32>
    %1234 = arith.addf %1217, %1233 : vector<32x32xf32>
    %c55_273 = arith.constant 55 : index
    %1235 = memref.load %arg5[%c55_273] : memref<144xf32, #tpu.memory_space<smem>>
    %1236 = vector.broadcast %1235 : f32 to vector<32x32xf32>
    %1237 = arith.mulf %1236, %1230 : vector<32x32xf32>
    %1238 = arith.addf %1221, %1237 : vector<32x32xf32>
    %c91_274 = arith.constant 91 : index
    %1239 = memref.load %arg5[%c91_274] : memref<144xf32, #tpu.memory_space<smem>>
    %1240 = vector.broadcast %1239 : f32 to vector<32x32xf32>
    %1241 = arith.mulf %1240, %1230 : vector<32x32xf32>
    %1242 = arith.addf %1225, %1241 : vector<32x32xf32>
    %c127_275 = arith.constant 127 : index
    %1243 = memref.load %arg5[%c127_275] : memref<144xf32, #tpu.memory_space<smem>>
    %1244 = vector.broadcast %1243 : f32 to vector<32x32xf32>
    %1245 = arith.mulf %1244, %1230 : vector<32x32xf32>
    %1246 = arith.addf %1229, %1245 : vector<32x32xf32>
    %c127_i32_276 = arith.constant 127 : i32
    %1247 = tpu.dynamic_rotate %1211 by %c127_i32_276 dim 1 : vector<32x128xf32>, i32 -> vector<32x128xf32>
    %1248 = vector.extract_strided_slice %1247 {offsets = [0, 0], sizes = [32, 32], strides = [1, 1]} : vector<32x128xf32> to vector<32x32xf32>
    %c20_277 = arith.constant 20 : index
    %1249 = memref.load %arg5[%c20_277] : memref<144xf32, #tpu.memory_space<smem>>
    %1250 = vector.broadcast %1249 : f32 to vector<32x32xf32>
    %1251 = arith.mulf %1250, %1248 : vector<32x32xf32>
    %1252 = arith.addf %1234, %1251 : vector<32x32xf32>
    %c56_278 = arith.constant 56 : index
    %1253 = memref.load %arg5[%c56_278] : memref<144xf32, #tpu.memory_space<smem>>
    %1254 = vector.broadcast %1253 : f32 to vector<32x32xf32>
    %1255 = arith.mulf %1254, %1248 : vector<32x32xf32>
    %1256 = arith.addf %1238, %1255 : vector<32x32xf32>
    %c92_279 = arith.constant 92 : index
    %1257 = memref.load %arg5[%c92_279] : memref<144xf32, #tpu.memory_space<smem>>
    %1258 = vector.broadcast %1257 : f32 to vector<32x32xf32>
    %1259 = arith.mulf %1258, %1248 : vector<32x32xf32>
    %1260 = arith.addf %1242, %1259 : vector<32x32xf32>
    %c128_280 = arith.constant 128 : index
    %1261 = memref.load %arg5[%c128_280] : memref<144xf32, #tpu.memory_space<smem>>
    %1262 = vector.broadcast %1261 : f32 to vector<32x32xf32>
    %1263 = arith.mulf %1262, %1248 : vector<32x32xf32>
    %1264 = arith.addf %1246, %1263 : vector<32x32xf32>
    %c2_281 = arith.constant 2 : index
    %c8_282 = arith.constant 8 : index
    %c0_283 = arith.constant 0 : index
    %1265 = vector.load %arg10[%c2_281, %c8_282, %c0_283] : memref<4x48x128xf32, #tpu.memory_space<vmem>>, vector<1x32x128xf32>
    %1266 = vector.shape_cast %1265 : vector<1x32x128xf32> to vector<32x128xf32>
    %c1_i32_284 = arith.constant 1 : i32
    %1267 = tpu.dynamic_rotate %1266 by %c1_i32_284 dim 1 : vector<32x128xf32>, i32 -> vector<32x128xf32>
    %1268 = vector.extract_strided_slice %1267 {offsets = [0, 0], sizes = [32, 32], strides = [1, 1]} : vector<32x128xf32> to vector<32x32xf32>
    %c21_285 = arith.constant 21 : index
    %1269 = memref.load %arg5[%c21_285] : memref<144xf32, #tpu.memory_space<smem>>
    %1270 = vector.broadcast %1269 : f32 to vector<32x32xf32>
    %1271 = arith.mulf %1270, %1268 : vector<32x32xf32>
    %1272 = arith.addf %1252, %1271 : vector<32x32xf32>
    %c57_286 = arith.constant 57 : index
    %1273 = memref.load %arg5[%c57_286] : memref<144xf32, #tpu.memory_space<smem>>
    %1274 = vector.broadcast %1273 : f32 to vector<32x32xf32>
    %1275 = arith.mulf %1274, %1268 : vector<32x32xf32>
    %1276 = arith.addf %1256, %1275 : vector<32x32xf32>
    %c93_287 = arith.constant 93 : index
    %1277 = memref.load %arg5[%c93_287] : memref<144xf32, #tpu.memory_space<smem>>
    %1278 = vector.broadcast %1277 : f32 to vector<32x32xf32>
    %1279 = arith.mulf %1278, %1268 : vector<32x32xf32>
    %1280 = arith.addf %1260, %1279 : vector<32x32xf32>
    %c129_288 = arith.constant 129 : index
    %1281 = memref.load %arg5[%c129_288] : memref<144xf32, #tpu.memory_space<smem>>
    %1282 = vector.broadcast %1281 : f32 to vector<32x32xf32>
    %1283 = arith.mulf %1282, %1268 : vector<32x32xf32>
    %1284 = arith.addf %1264, %1283 : vector<32x32xf32>
    %1285 = vector.extract_strided_slice %1266 {offsets = [0, 0], sizes = [32, 32], strides = [1, 1]} : vector<32x128xf32> to vector<32x32xf32>
    %c22_289 = arith.constant 22 : index
    %1286 = memref.load %arg5[%c22_289] : memref<144xf32, #tpu.memory_space<smem>>
    %1287 = vector.broadcast %1286 : f32 to vector<32x32xf32>
    %1288 = arith.mulf %1287, %1285 : vector<32x32xf32>
    %1289 = arith.addf %1272, %1288 : vector<32x32xf32>
    %c58_290 = arith.constant 58 : index
    %1290 = memref.load %arg5[%c58_290] : memref<144xf32, #tpu.memory_space<smem>>
    %1291 = vector.broadcast %1290 : f32 to vector<32x32xf32>
    %1292 = arith.mulf %1291, %1285 : vector<32x32xf32>
    %1293 = arith.addf %1276, %1292 : vector<32x32xf32>
    %c94_291 = arith.constant 94 : index
    %1294 = memref.load %arg5[%c94_291] : memref<144xf32, #tpu.memory_space<smem>>
    %1295 = vector.broadcast %1294 : f32 to vector<32x32xf32>
    %1296 = arith.mulf %1295, %1285 : vector<32x32xf32>
    %1297 = arith.addf %1280, %1296 : vector<32x32xf32>
    %c130_292 = arith.constant 130 : index
    %1298 = memref.load %arg5[%c130_292] : memref<144xf32, #tpu.memory_space<smem>>
    %1299 = vector.broadcast %1298 : f32 to vector<32x32xf32>
    %1300 = arith.mulf %1299, %1285 : vector<32x32xf32>
    %1301 = arith.addf %1284, %1300 : vector<32x32xf32>
    %c127_i32_293 = arith.constant 127 : i32
    %1302 = tpu.dynamic_rotate %1266 by %c127_i32_293 dim 1 : vector<32x128xf32>, i32 -> vector<32x128xf32>
    %1303 = vector.extract_strided_slice %1302 {offsets = [0, 0], sizes = [32, 32], strides = [1, 1]} : vector<32x128xf32> to vector<32x32xf32>
    %c23_294 = arith.constant 23 : index
    %1304 = memref.load %arg5[%c23_294] : memref<144xf32, #tpu.memory_space<smem>>
    %1305 = vector.broadcast %1304 : f32 to vector<32x32xf32>
    %1306 = arith.mulf %1305, %1303 : vector<32x32xf32>
    %1307 = arith.addf %1289, %1306 : vector<32x32xf32>
    %c59_295 = arith.constant 59 : index
    %1308 = memref.load %arg5[%c59_295] : memref<144xf32, #tpu.memory_space<smem>>
    %1309 = vector.broadcast %1308 : f32 to vector<32x32xf32>
    %1310 = arith.mulf %1309, %1303 : vector<32x32xf32>
    %1311 = arith.addf %1293, %1310 : vector<32x32xf32>
    %c95_296 = arith.constant 95 : index
    %1312 = memref.load %arg5[%c95_296] : memref<144xf32, #tpu.memory_space<smem>>
    %1313 = vector.broadcast %1312 : f32 to vector<32x32xf32>
    %1314 = arith.mulf %1313, %1303 : vector<32x32xf32>
    %1315 = arith.addf %1297, %1314 : vector<32x32xf32>
    %c131_297 = arith.constant 131 : index
    %1316 = memref.load %arg5[%c131_297] : memref<144xf32, #tpu.memory_space<smem>>
    %1317 = vector.broadcast %1316 : f32 to vector<32x32xf32>
    %1318 = arith.mulf %1317, %1303 : vector<32x32xf32>
    %1319 = arith.addf %1301, %1318 : vector<32x32xf32>
    %c2_298 = arith.constant 2 : index
    %c9_299 = arith.constant 9 : index
    %c0_300 = arith.constant 0 : index
    %1320 = vector.load %arg10[%c2_298, %c9_299, %c0_300] : memref<4x48x128xf32, #tpu.memory_space<vmem>>, vector<1x32x128xf32>
    %1321 = vector.shape_cast %1320 : vector<1x32x128xf32> to vector<32x128xf32>
    %c1_i32_301 = arith.constant 1 : i32
    %1322 = tpu.dynamic_rotate %1321 by %c1_i32_301 dim 1 : vector<32x128xf32>, i32 -> vector<32x128xf32>
    %1323 = vector.extract_strided_slice %1322 {offsets = [0, 0], sizes = [32, 32], strides = [1, 1]} : vector<32x128xf32> to vector<32x32xf32>
    %c24_302 = arith.constant 24 : index
    %1324 = memref.load %arg5[%c24_302] : memref<144xf32, #tpu.memory_space<smem>>
    %1325 = vector.broadcast %1324 : f32 to vector<32x32xf32>
    %1326 = arith.mulf %1325, %1323 : vector<32x32xf32>
    %1327 = arith.addf %1307, %1326 : vector<32x32xf32>
    %c60_303 = arith.constant 60 : index
    %1328 = memref.load %arg5[%c60_303] : memref<144xf32, #tpu.memory_space<smem>>
    %1329 = vector.broadcast %1328 : f32 to vector<32x32xf32>
    %1330 = arith.mulf %1329, %1323 : vector<32x32xf32>
    %1331 = arith.addf %1311, %1330 : vector<32x32xf32>
    %c96_304 = arith.constant 96 : index
    %1332 = memref.load %arg5[%c96_304] : memref<144xf32, #tpu.memory_space<smem>>
    %1333 = vector.broadcast %1332 : f32 to vector<32x32xf32>
    %1334 = arith.mulf %1333, %1323 : vector<32x32xf32>
    %1335 = arith.addf %1315, %1334 : vector<32x32xf32>
    %c132_305 = arith.constant 132 : index
    %1336 = memref.load %arg5[%c132_305] : memref<144xf32, #tpu.memory_space<smem>>
    %1337 = vector.broadcast %1336 : f32 to vector<32x32xf32>
    %1338 = arith.mulf %1337, %1323 : vector<32x32xf32>
    %1339 = arith.addf %1319, %1338 : vector<32x32xf32>
    %1340 = vector.extract_strided_slice %1321 {offsets = [0, 0], sizes = [32, 32], strides = [1, 1]} : vector<32x128xf32> to vector<32x32xf32>
    %c25_306 = arith.constant 25 : index
    %1341 = memref.load %arg5[%c25_306] : memref<144xf32, #tpu.memory_space<smem>>
    %1342 = vector.broadcast %1341 : f32 to vector<32x32xf32>
    %1343 = arith.mulf %1342, %1340 : vector<32x32xf32>
    %1344 = arith.addf %1327, %1343 : vector<32x32xf32>
    %c61_307 = arith.constant 61 : index
    %1345 = memref.load %arg5[%c61_307] : memref<144xf32, #tpu.memory_space<smem>>
    %1346 = vector.broadcast %1345 : f32 to vector<32x32xf32>
    %1347 = arith.mulf %1346, %1340 : vector<32x32xf32>
    %1348 = arith.addf %1331, %1347 : vector<32x32xf32>
    %c97_308 = arith.constant 97 : index
    %1349 = memref.load %arg5[%c97_308] : memref<144xf32, #tpu.memory_space<smem>>
    %1350 = vector.broadcast %1349 : f32 to vector<32x32xf32>
    %1351 = arith.mulf %1350, %1340 : vector<32x32xf32>
    %1352 = arith.addf %1335, %1351 : vector<32x32xf32>
    %c133_309 = arith.constant 133 : index
    %1353 = memref.load %arg5[%c133_309] : memref<144xf32, #tpu.memory_space<smem>>
    %1354 = vector.broadcast %1353 : f32 to vector<32x32xf32>
    %1355 = arith.mulf %1354, %1340 : vector<32x32xf32>
    %1356 = arith.addf %1339, %1355 : vector<32x32xf32>
    %c127_i32_310 = arith.constant 127 : i32
    %1357 = tpu.dynamic_rotate %1321 by %c127_i32_310 dim 1 : vector<32x128xf32>, i32 -> vector<32x128xf32>
    %1358 = vector.extract_strided_slice %1357 {offsets = [0, 0], sizes = [32, 32], strides = [1, 1]} : vector<32x128xf32> to vector<32x32xf32>
    %c26_311 = arith.constant 26 : index
    %1359 = memref.load %arg5[%c26_311] : memref<144xf32, #tpu.memory_space<smem>>
    %1360 = vector.broadcast %1359 : f32 to vector<32x32xf32>
    %1361 = arith.mulf %1360, %1358 : vector<32x32xf32>
    %1362 = arith.addf %1344, %1361 : vector<32x32xf32>
    %c62_312 = arith.constant 62 : index
    %1363 = memref.load %arg5[%c62_312] : memref<144xf32, #tpu.memory_space<smem>>
    %1364 = vector.broadcast %1363 : f32 to vector<32x32xf32>
    %1365 = arith.mulf %1364, %1358 : vector<32x32xf32>
    %1366 = arith.addf %1348, %1365 : vector<32x32xf32>
    %c98_313 = arith.constant 98 : index
    %1367 = memref.load %arg5[%c98_313] : memref<144xf32, #tpu.memory_space<smem>>
    %1368 = vector.broadcast %1367 : f32 to vector<32x32xf32>
    %1369 = arith.mulf %1368, %1358 : vector<32x32xf32>
    %1370 = arith.addf %1352, %1369 : vector<32x32xf32>
    %c134_314 = arith.constant 134 : index
    %1371 = memref.load %arg5[%c134_314] : memref<144xf32, #tpu.memory_space<smem>>
    %1372 = vector.broadcast %1371 : f32 to vector<32x32xf32>
    %1373 = arith.mulf %1372, %1358 : vector<32x32xf32>
    %1374 = arith.addf %1356, %1373 : vector<32x32xf32>
    %c3_315 = arith.constant 3 : index
    %c7_316 = arith.constant 7 : index
    %c0_317 = arith.constant 0 : index
    %1375 = vector.load %arg10[%c3_315, %c7_316, %c0_317] : memref<4x48x128xf32, #tpu.memory_space<vmem>>, vector<1x32x128xf32>
    %1376 = vector.shape_cast %1375 : vector<1x32x128xf32> to vector<32x128xf32>
    %c1_i32_318 = arith.constant 1 : i32
    %1377 = tpu.dynamic_rotate %1376 by %c1_i32_318 dim 1 : vector<32x128xf32>, i32 -> vector<32x128xf32>
    %1378 = vector.extract_strided_slice %1377 {offsets = [0, 0], sizes = [32, 32], strides = [1, 1]} : vector<32x128xf32> to vector<32x32xf32>
    %c27_319 = arith.constant 27 : index
    %1379 = memref.load %arg5[%c27_319] : memref<144xf32, #tpu.memory_space<smem>>
    %1380 = vector.broadcast %1379 : f32 to vector<32x32xf32>
    %1381 = arith.mulf %1380, %1378 : vector<32x32xf32>
    %1382 = arith.addf %1362, %1381 : vector<32x32xf32>
    %c63_320 = arith.constant 63 : index
    %1383 = memref.load %arg5[%c63_320] : memref<144xf32, #tpu.memory_space<smem>>
    %1384 = vector.broadcast %1383 : f32 to vector<32x32xf32>
    %1385 = arith.mulf %1384, %1378 : vector<32x32xf32>
    %1386 = arith.addf %1366, %1385 : vector<32x32xf32>
    %c99_321 = arith.constant 99 : index
    %1387 = memref.load %arg5[%c99_321] : memref<144xf32, #tpu.memory_space<smem>>
    %1388 = vector.broadcast %1387 : f32 to vector<32x32xf32>
    %1389 = arith.mulf %1388, %1378 : vector<32x32xf32>
    %1390 = arith.addf %1370, %1389 : vector<32x32xf32>
    %c135_322 = arith.constant 135 : index
    %1391 = memref.load %arg5[%c135_322] : memref<144xf32, #tpu.memory_space<smem>>
    %1392 = vector.broadcast %1391 : f32 to vector<32x32xf32>
    %1393 = arith.mulf %1392, %1378 : vector<32x32xf32>
    %1394 = arith.addf %1374, %1393 : vector<32x32xf32>
    %1395 = vector.extract_strided_slice %1376 {offsets = [0, 0], sizes = [32, 32], strides = [1, 1]} : vector<32x128xf32> to vector<32x32xf32>
    %c28_323 = arith.constant 28 : index
    %1396 = memref.load %arg5[%c28_323] : memref<144xf32, #tpu.memory_space<smem>>
    %1397 = vector.broadcast %1396 : f32 to vector<32x32xf32>
    %1398 = arith.mulf %1397, %1395 : vector<32x32xf32>
    %1399 = arith.addf %1382, %1398 : vector<32x32xf32>
    %c64_324 = arith.constant 64 : index
    %1400 = memref.load %arg5[%c64_324] : memref<144xf32, #tpu.memory_space<smem>>
    %1401 = vector.broadcast %1400 : f32 to vector<32x32xf32>
    %1402 = arith.mulf %1401, %1395 : vector<32x32xf32>
    %1403 = arith.addf %1386, %1402 : vector<32x32xf32>
    %c100_325 = arith.constant 100 : index
    %1404 = memref.load %arg5[%c100_325] : memref<144xf32, #tpu.memory_space<smem>>
    %1405 = vector.broadcast %1404 : f32 to vector<32x32xf32>
    %1406 = arith.mulf %1405, %1395 : vector<32x32xf32>
    %1407 = arith.addf %1390, %1406 : vector<32x32xf32>
    %c136_326 = arith.constant 136 : index
    %1408 = memref.load %arg5[%c136_326] : memref<144xf32, #tpu.memory_space<smem>>
    %1409 = vector.broadcast %1408 : f32 to vector<32x32xf32>
    %1410 = arith.mulf %1409, %1395 : vector<32x32xf32>
    %1411 = arith.addf %1394, %1410 : vector<32x32xf32>
    %c127_i32_327 = arith.constant 127 : i32
    %1412 = tpu.dynamic_rotate %1376 by %c127_i32_327 dim 1 : vector<32x128xf32>, i32 -> vector<32x128xf32>
    %1413 = vector.extract_strided_slice %1412 {offsets = [0, 0], sizes = [32, 32], strides = [1, 1]} : vector<32x128xf32> to vector<32x32xf32>
    %c29_328 = arith.constant 29 : index
    %1414 = memref.load %arg5[%c29_328] : memref<144xf32, #tpu.memory_space<smem>>
    %1415 = vector.broadcast %1414 : f32 to vector<32x32xf32>
    %1416 = arith.mulf %1415, %1413 : vector<32x32xf32>
    %1417 = arith.addf %1399, %1416 : vector<32x32xf32>
    %c65_329 = arith.constant 65 : index
    %1418 = memref.load %arg5[%c65_329] : memref<144xf32, #tpu.memory_space<smem>>
    %1419 = vector.broadcast %1418 : f32 to vector<32x32xf32>
    %1420 = arith.mulf %1419, %1413 : vector<32x32xf32>
    %1421 = arith.addf %1403, %1420 : vector<32x32xf32>
    %c101_330 = arith.constant 101 : index
    %1422 = memref.load %arg5[%c101_330] : memref<144xf32, #tpu.memory_space<smem>>
    %1423 = vector.broadcast %1422 : f32 to vector<32x32xf32>
    %1424 = arith.mulf %1423, %1413 : vector<32x32xf32>
    %1425 = arith.addf %1407, %1424 : vector<32x32xf32>
    %c137_331 = arith.constant 137 : index
    %1426 = memref.load %arg5[%c137_331] : memref<144xf32, #tpu.memory_space<smem>>
    %1427 = vector.broadcast %1426 : f32 to vector<32x32xf32>
    %1428 = arith.mulf %1427, %1413 : vector<32x32xf32>
    %1429 = arith.addf %1411, %1428 : vector<32x32xf32>
    %c3_332 = arith.constant 3 : index
    %c8_333 = arith.constant 8 : index
    %c0_334 = arith.constant 0 : index
    %1430 = vector.load %arg10[%c3_332, %c8_333, %c0_334] : memref<4x48x128xf32, #tpu.memory_space<vmem>>, vector<1x32x128xf32>
    %1431 = vector.shape_cast %1430 : vector<1x32x128xf32> to vector<32x128xf32>
    %c1_i32_335 = arith.constant 1 : i32
    %1432 = tpu.dynamic_rotate %1431 by %c1_i32_335 dim 1 : vector<32x128xf32>, i32 -> vector<32x128xf32>
    %1433 = vector.extract_strided_slice %1432 {offsets = [0, 0], sizes = [32, 32], strides = [1, 1]} : vector<32x128xf32> to vector<32x32xf32>
    %c30_336 = arith.constant 30 : index
    %1434 = memref.load %arg5[%c30_336] : memref<144xf32, #tpu.memory_space<smem>>
    %1435 = vector.broadcast %1434 : f32 to vector<32x32xf32>
    %1436 = arith.mulf %1435, %1433 : vector<32x32xf32>
    %1437 = arith.addf %1417, %1436 : vector<32x32xf32>
    %c66_337 = arith.constant 66 : index
    %1438 = memref.load %arg5[%c66_337] : memref<144xf32, #tpu.memory_space<smem>>
    %1439 = vector.broadcast %1438 : f32 to vector<32x32xf32>
    %1440 = arith.mulf %1439, %1433 : vector<32x32xf32>
    %1441 = arith.addf %1421, %1440 : vector<32x32xf32>
    %c102_338 = arith.constant 102 : index
    %1442 = memref.load %arg5[%c102_338] : memref<144xf32, #tpu.memory_space<smem>>
    %1443 = vector.broadcast %1442 : f32 to vector<32x32xf32>
    %1444 = arith.mulf %1443, %1433 : vector<32x32xf32>
    %1445 = arith.addf %1425, %1444 : vector<32x32xf32>
    %c138_339 = arith.constant 138 : index
    %1446 = memref.load %arg5[%c138_339] : memref<144xf32, #tpu.memory_space<smem>>
    %1447 = vector.broadcast %1446 : f32 to vector<32x32xf32>
    %1448 = arith.mulf %1447, %1433 : vector<32x32xf32>
    %1449 = arith.addf %1429, %1448 : vector<32x32xf32>
    %1450 = vector.extract_strided_slice %1431 {offsets = [0, 0], sizes = [32, 32], strides = [1, 1]} : vector<32x128xf32> to vector<32x32xf32>
    %c31_340 = arith.constant 31 : index
    %1451 = memref.load %arg5[%c31_340] : memref<144xf32, #tpu.memory_space<smem>>
    %1452 = vector.broadcast %1451 : f32 to vector<32x32xf32>
    %1453 = arith.mulf %1452, %1450 : vector<32x32xf32>
    %1454 = arith.addf %1437, %1453 : vector<32x32xf32>
    %c67_341 = arith.constant 67 : index
    %1455 = memref.load %arg5[%c67_341] : memref<144xf32, #tpu.memory_space<smem>>
    %1456 = vector.broadcast %1455 : f32 to vector<32x32xf32>
    %1457 = arith.mulf %1456, %1450 : vector<32x32xf32>
    %1458 = arith.addf %1441, %1457 : vector<32x32xf32>
    %c103_342 = arith.constant 103 : index
    %1459 = memref.load %arg5[%c103_342] : memref<144xf32, #tpu.memory_space<smem>>
    %1460 = vector.broadcast %1459 : f32 to vector<32x32xf32>
    %1461 = arith.mulf %1460, %1450 : vector<32x32xf32>
    %1462 = arith.addf %1445, %1461 : vector<32x32xf32>
    %c139_343 = arith.constant 139 : index
    %1463 = memref.load %arg5[%c139_343] : memref<144xf32, #tpu.memory_space<smem>>
    %1464 = vector.broadcast %1463 : f32 to vector<32x32xf32>
    %1465 = arith.mulf %1464, %1450 : vector<32x32xf32>
    %1466 = arith.addf %1449, %1465 : vector<32x32xf32>
    %c127_i32_344 = arith.constant 127 : i32
    %1467 = tpu.dynamic_rotate %1431 by %c127_i32_344 dim 1 : vector<32x128xf32>, i32 -> vector<32x128xf32>
    %1468 = vector.extract_strided_slice %1467 {offsets = [0, 0], sizes = [32, 32], strides = [1, 1]} : vector<32x128xf32> to vector<32x32xf32>
    %c32_345 = arith.constant 32 : index
    %1469 = memref.load %arg5[%c32_345] : memref<144xf32, #tpu.memory_space<smem>>
    %1470 = vector.broadcast %1469 : f32 to vector<32x32xf32>
    %1471 = arith.mulf %1470, %1468 : vector<32x32xf32>
    %1472 = arith.addf %1454, %1471 : vector<32x32xf32>
    %c68_346 = arith.constant 68 : index
    %1473 = memref.load %arg5[%c68_346] : memref<144xf32, #tpu.memory_space<smem>>
    %1474 = vector.broadcast %1473 : f32 to vector<32x32xf32>
    %1475 = arith.mulf %1474, %1468 : vector<32x32xf32>
    %1476 = arith.addf %1458, %1475 : vector<32x32xf32>
    %c104_347 = arith.constant 104 : index
    %1477 = memref.load %arg5[%c104_347] : memref<144xf32, #tpu.memory_space<smem>>
    %1478 = vector.broadcast %1477 : f32 to vector<32x32xf32>
    %1479 = arith.mulf %1478, %1468 : vector<32x32xf32>
    %1480 = arith.addf %1462, %1479 : vector<32x32xf32>
    %c140_348 = arith.constant 140 : index
    %1481 = memref.load %arg5[%c140_348] : memref<144xf32, #tpu.memory_space<smem>>
    %1482 = vector.broadcast %1481 : f32 to vector<32x32xf32>
    %1483 = arith.mulf %1482, %1468 : vector<32x32xf32>
    %1484 = arith.addf %1466, %1483 : vector<32x32xf32>
    %c3_349 = arith.constant 3 : index
    %c9_350 = arith.constant 9 : index
    %c0_351 = arith.constant 0 : index
    %1485 = vector.load %arg10[%c3_349, %c9_350, %c0_351] : memref<4x48x128xf32, #tpu.memory_space<vmem>>, vector<1x32x128xf32>
    %1486 = vector.shape_cast %1485 : vector<1x32x128xf32> to vector<32x128xf32>
    %c1_i32_352 = arith.constant 1 : i32
    %1487 = tpu.dynamic_rotate %1486 by %c1_i32_352 dim 1 : vector<32x128xf32>, i32 -> vector<32x128xf32>
    %1488 = vector.extract_strided_slice %1487 {offsets = [0, 0], sizes = [32, 32], strides = [1, 1]} : vector<32x128xf32> to vector<32x32xf32>
    %c33_353 = arith.constant 33 : index
    %1489 = memref.load %arg5[%c33_353] : memref<144xf32, #tpu.memory_space<smem>>
    %1490 = vector.broadcast %1489 : f32 to vector<32x32xf32>
    %1491 = arith.mulf %1490, %1488 : vector<32x32xf32>
    %1492 = arith.addf %1472, %1491 : vector<32x32xf32>
    %c69_354 = arith.constant 69 : index
    %1493 = memref.load %arg5[%c69_354] : memref<144xf32, #tpu.memory_space<smem>>
    %1494 = vector.broadcast %1493 : f32 to vector<32x32xf32>
    %1495 = arith.mulf %1494, %1488 : vector<32x32xf32>
    %1496 = arith.addf %1476, %1495 : vector<32x32xf32>
    %c105_355 = arith.constant 105 : index
    %1497 = memref.load %arg5[%c105_355] : memref<144xf32, #tpu.memory_space<smem>>
    %1498 = vector.broadcast %1497 : f32 to vector<32x32xf32>
    %1499 = arith.mulf %1498, %1488 : vector<32x32xf32>
    %1500 = arith.addf %1480, %1499 : vector<32x32xf32>
    %c141_356 = arith.constant 141 : index
    %1501 = memref.load %arg5[%c141_356] : memref<144xf32, #tpu.memory_space<smem>>
    %1502 = vector.broadcast %1501 : f32 to vector<32x32xf32>
    %1503 = arith.mulf %1502, %1488 : vector<32x32xf32>
    %1504 = arith.addf %1484, %1503 : vector<32x32xf32>
    %1505 = vector.extract_strided_slice %1486 {offsets = [0, 0], sizes = [32, 32], strides = [1, 1]} : vector<32x128xf32> to vector<32x32xf32>
    %c34_357 = arith.constant 34 : index
    %1506 = memref.load %arg5[%c34_357] : memref<144xf32, #tpu.memory_space<smem>>
    %1507 = vector.broadcast %1506 : f32 to vector<32x32xf32>
    %1508 = arith.mulf %1507, %1505 : vector<32x32xf32>
    %1509 = arith.addf %1492, %1508 : vector<32x32xf32>
    %c70_358 = arith.constant 70 : index
    %1510 = memref.load %arg5[%c70_358] : memref<144xf32, #tpu.memory_space<smem>>
    %1511 = vector.broadcast %1510 : f32 to vector<32x32xf32>
    %1512 = arith.mulf %1511, %1505 : vector<32x32xf32>
    %1513 = arith.addf %1496, %1512 : vector<32x32xf32>
    %c106_359 = arith.constant 106 : index
    %1514 = memref.load %arg5[%c106_359] : memref<144xf32, #tpu.memory_space<smem>>
    %1515 = vector.broadcast %1514 : f32 to vector<32x32xf32>
    %1516 = arith.mulf %1515, %1505 : vector<32x32xf32>
    %1517 = arith.addf %1500, %1516 : vector<32x32xf32>
    %c142_360 = arith.constant 142 : index
    %1518 = memref.load %arg5[%c142_360] : memref<144xf32, #tpu.memory_space<smem>>
    %1519 = vector.broadcast %1518 : f32 to vector<32x32xf32>
    %1520 = arith.mulf %1519, %1505 : vector<32x32xf32>
    %1521 = arith.addf %1504, %1520 : vector<32x32xf32>
    %c127_i32_361 = arith.constant 127 : i32
    %1522 = tpu.dynamic_rotate %1486 by %c127_i32_361 dim 1 : vector<32x128xf32>, i32 -> vector<32x128xf32>
    %1523 = vector.extract_strided_slice %1522 {offsets = [0, 0], sizes = [32, 32], strides = [1, 1]} : vector<32x128xf32> to vector<32x32xf32>
    %c35_362 = arith.constant 35 : index
    %1524 = memref.load %arg5[%c35_362] : memref<144xf32, #tpu.memory_space<smem>>
    %1525 = vector.broadcast %1524 : f32 to vector<32x32xf32>
    %1526 = arith.mulf %1525, %1523 : vector<32x32xf32>
    %1527 = arith.addf %1509, %1526 : vector<32x32xf32>
    %c71_363 = arith.constant 71 : index
    %1528 = memref.load %arg5[%c71_363] : memref<144xf32, #tpu.memory_space<smem>>
    %1529 = vector.broadcast %1528 : f32 to vector<32x32xf32>
    %1530 = arith.mulf %1529, %1523 : vector<32x32xf32>
    %1531 = arith.addf %1513, %1530 : vector<32x32xf32>
    %c107_364 = arith.constant 107 : index
    %1532 = memref.load %arg5[%c107_364] : memref<144xf32, #tpu.memory_space<smem>>
    %1533 = vector.broadcast %1532 : f32 to vector<32x32xf32>
    %1534 = arith.mulf %1533, %1523 : vector<32x32xf32>
    %1535 = arith.addf %1517, %1534 : vector<32x32xf32>
    %c143_365 = arith.constant 143 : index
    %1536 = memref.load %arg5[%c143_365] : memref<144xf32, #tpu.memory_space<smem>>
    %1537 = vector.broadcast %1536 : f32 to vector<32x32xf32>
    %1538 = arith.mulf %1537, %1523 : vector<32x32xf32>
    %1539 = arith.addf %1521, %1538 : vector<32x32xf32>
    %1540 = arith.addf %1527, %174 : vector<32x32xf32>
    %c0_366 = arith.constant 0 : index
    %c0_367 = arith.constant 0 : index
    %c0_368 = arith.constant 0 : index
    %c0_369 = arith.constant 0 : index
    %1541 = vector.load %arg8[%c0_366, %c0_367, %c0_368, %c0_369] : memref<1x4x32x32xf32, #tpu.memory_space<vmem>>, vector<1x1x32x32xf32>
    %1542 = vector.shape_cast %1541 : vector<1x1x32x32xf32> to vector<32x32xf32>
    %c0_370 = arith.constant 0 : index
    %1543 = memref.load %arg6[%c0_370] : memref<4xf32, #tpu.memory_space<smem>>
    %1544 = vector.broadcast %1543 : f32 to vector<32x32xf32>
    %1545 = arith.addf %1542, %1544 : vector<32x32xf32>
    %1546 = arith.addf %1540, %1545 : vector<32x32xf32>
    %c0_371 = arith.constant 0 : index
    %c0_372 = arith.constant 0 : index
    %c0_373 = arith.constant 0 : index
    %c0_374 = arith.constant 0 : index
    %1547 = vector.load %arg9[%c0_371, %c0_372, %c0_373, %c0_374] : memref<1x4x32x32xf32, #tpu.memory_space<vmem>>, vector<1x1x32x32xf32>
    %1548 = vector.shape_cast %1547 : vector<1x1x32x32xf32> to vector<32x32xf32>
    %1549 = vector.shape_cast %1546 : vector<32x32xf32> to vector<1x1x32x32xf32>
    tpu.vector_store %arg9[%c0_371, %c0_372, %c0_373, %c0_374], %1549 {strides = array<i32>} : memref<1x4x32x32xf32, #tpu.memory_space<vmem>>, vector<1x1x32x32xf32>,
    %1550 = arith.addf %1531, %177 : vector<32x32xf32>
    %c0_375 = arith.constant 0 : index
    %c1_376 = arith.constant 1 : index
    %c0_377 = arith.constant 0 : index
    %c0_378 = arith.constant 0 : index
    %1551 = vector.load %arg8[%c0_375, %c1_376, %c0_377, %c0_378] : memref<1x4x32x32xf32, #tpu.memory_space<vmem>>, vector<1x1x32x32xf32>
    %1552 = vector.shape_cast %1551 : vector<1x1x32x32xf32> to vector<32x32xf32>
    %c1_379 = arith.constant 1 : index
    %1553 = memref.load %arg6[%c1_379] : memref<4xf32, #tpu.memory_space<smem>>
    %1554 = vector.broadcast %1553 : f32 to vector<32x32xf32>
    %1555 = arith.addf %1552, %1554 : vector<32x32xf32>
    %1556 = arith.addf %1550, %1555 : vector<32x32xf32>
    %c0_380 = arith.constant 0 : index
    %c1_381 = arith.constant 1 : index
    %c0_382 = arith.constant 0 : index
    %c0_383 = arith.constant 0 : index
    %1557 = vector.load %arg9[%c0_380, %c1_381, %c0_382, %c0_383] : memref<1x4x32x32xf32, #tpu.memory_space<vmem>>, vector<1x1x32x32xf32>
    %1558 = vector.shape_cast %1557 : vector<1x1x32x32xf32> to vector<32x32xf32>
    %1559 = vector.shape_cast %1556 : vector<32x32xf32> to vector<1x1x32x32xf32>
    tpu.vector_store %arg9[%c0_380, %c1_381, %c0_382, %c0_383], %1559 {strides = array<i32>} : memref<1x4x32x32xf32, #tpu.memory_space<vmem>>, vector<1x1x32x32xf32>,
    %1560 = arith.addf %1535, %180 : vector<32x32xf32>
    %c0_384 = arith.constant 0 : index
    %c2_385 = arith.constant 2 : index
    %c0_386 = arith.constant 0 : index
    %c0_387 = arith.constant 0 : index
    %1561 = vector.load %arg8[%c0_384, %c2_385, %c0_386, %c0_387] : memref<1x4x32x32xf32, #tpu.memory_space<vmem>>, vector<1x1x32x32xf32>
    %1562 = vector.shape_cast %1561 : vector<1x1x32x32xf32> to vector<32x32xf32>
    %c2_388 = arith.constant 2 : index
    %1563 = memref.load %arg6[%c2_388] : memref<4xf32, #tpu.memory_space<smem>>
    %1564 = vector.broadcast %1563 : f32 to vector<32x32xf32>
    %1565 = arith.addf %1562, %1564 : vector<32x32xf32>
    %1566 = arith.addf %1560, %1565 : vector<32x32xf32>
    %c0_389 = arith.constant 0 : index
    %c2_390 = arith.constant 2 : index
    %c0_391 = arith.constant 0 : index
    %c0_392 = arith.constant 0 : index
    %1567 = vector.load %arg9[%c0_389, %c2_390, %c0_391, %c0_392] : memref<1x4x32x32xf32, #tpu.memory_space<vmem>>, vector<1x1x32x32xf32>
    %1568 = vector.shape_cast %1567 : vector<1x1x32x32xf32> to vector<32x32xf32>
    %1569 = vector.shape_cast %1566 : vector<32x32xf32> to vector<1x1x32x32xf32>
    tpu.vector_store %arg9[%c0_389, %c2_390, %c0_391, %c0_392], %1569 {strides = array<i32>} : memref<1x4x32x32xf32, #tpu.memory_space<vmem>>, vector<1x1x32x32xf32>,
    %1570 = arith.addf %1539, %183 : vector<32x32xf32>
    %c0_393 = arith.constant 0 : index
    %c3_394 = arith.constant 3 : index
    %c0_395 = arith.constant 0 : index
    %c0_396 = arith.constant 0 : index
    %1571 = vector.load %arg8[%c0_393, %c3_394, %c0_395, %c0_396] : memref<1x4x32x32xf32, #tpu.memory_space<vmem>>, vector<1x1x32x32xf32>
    %1572 = vector.shape_cast %1571 : vector<1x1x32x32xf32> to vector<32x32xf32>
    %c3_397 = arith.constant 3 : index
    %1573 = memref.load %arg6[%c3_397] : memref<4xf32, #tpu.memory_space<smem>>
    %1574 = vector.broadcast %1573 : f32 to vector<32x32xf32>
    %1575 = arith.addf %1572, %1574 : vector<32x32xf32>
    %1576 = arith.addf %1570, %1575 : vector<32x32xf32>
    %c0_398 = arith.constant 0 : index
    %c3_399 = arith.constant 3 : index
    %c0_400 = arith.constant 0 : index
    %c0_401 = arith.constant 0 : index
    %1577 = vector.load %arg9[%c0_398, %c3_399, %c0_400, %c0_401] : memref<1x4x32x32xf32, #tpu.memory_space<vmem>>, vector<1x1x32x32xf32>
    %1578 = vector.shape_cast %1577 : vector<1x1x32x32xf32> to vector<32x32xf32>
    %1579 = vector.shape_cast %1576 : vector<32x32xf32> to vector<1x1x32x32xf32>
    tpu.vector_store %arg9[%c0_398, %c3_399, %c0_400, %c0_401], %1579 {strides = array<i32>} : memref<1x4x32x32xf32, #tpu.memory_space<vmem>>, vector<1x1x32x32xf32>,
    return
  }
  func.func @transform_0(%arg0: i32) -> i32 {
    %c0_i32 = arith.constant 0 : i32
    %c0_i32_0 = arith.constant 0 : i32
    return %c0_i32 : i32
  }
  func.func @transform_1(%arg0: i32) -> i32 {
    %c0_i32 = arith.constant 0 : i32
    %c0_i32_0 = arith.constant 0 : i32
    return %c0_i32 : i32
  }
  func.func @transform_2(%arg0: i32) -> i32 {
    %c0_i32 = arith.constant 0 : i32
    %c0_i32_0 = arith.constant 0 : i32
    return %c0_i32 : i32
  }
  func.func @transform_3(%arg0: i32) -> i32 {
    %c0_i32 = arith.constant 0 : i32
    %c0_i32_0 = arith.constant 0 : i32
    return %c0_i32 : i32
  }
  func.func @transform_4(%arg0: i32) -> i32 {
    %c0_i32 = arith.constant 0 : i32
    %c0_i32_0 = arith.constant 0 : i32
    return %c0_i32 : i32
  }
  func.func @transform_5(%arg0: i32) -> i32 {
    %c0_i32 = arith.constant 0 : i32
    %c0_i32_0 = arith.constant 0 : i32
    return %c0_i32 : i32
  }
  func.func @transform_6(%arg0: i32) -> (i32, i32, i32, i32) {
    %c0_i32 = arith.constant 0 : i32
    %c0_i32_0 = arith.constant 0 : i32
    %c0_i32_1 = arith.constant 0 : i32
    %c0_i32_2 = arith.constant 0 : i32
    return %arg0, %c0_i32, %c0_i32_0, %c0_i32_1 : i32, i32, i32, i32
  }
  func.func @transform_7(%arg0: i32) -> (i32, i32, i32, i32) {
    %c0_i32 = arith.constant 0 : i32
    %c0_i32_0 = arith.constant 0 : i32
    %c0_i32_1 = arith.constant 0 : i32
    %c0_i32_2 = arith.constant 0 : i32
    return %arg0, %c0_i32, %c0_i32_0, %c0_i32_1 : i32, i32, i32, i32
  }
  func.func @transform_8(%arg0: i32) -> (i32, i32, i32, i32) {
    %c0_i32 = arith.constant 0 : i32
    %c0_i32_0 = arith.constant 0 : i32
    %c0_i32_1 = arith.constant 0 : i32
    %c0_i32_2 = arith.constant 0 : i32
    return %arg0, %c0_i32, %c0_i32_0, %c0_i32_1 : i32, i32, i32, i32
  }
}

</mosaic_0001>

<llo_original>
// kernel: squeeze.1
$region0: #{squeeze.1}
  %s0 = inlined_call_operand.hbm [shape: bf16[2,1,32,32], index: 0, kind: input, shape index: {}]
  %s1 = inlined_call_operand.vmem [shape: bf16[2,1024], index: 1, kind: output, shape index: {}]
  $region1: #{squeeze.1} parent=0
    #allocation0 [shape = 'u8[16384]{0}', space=vmem, size = 0x4000, scoped, tag = 'operand span for operand 0']
    #allocation1 [shape = 's32[1]{0}', space=sflag, size = 0x4, scoped, tag = 'scoped memory for squeeze.1']
    #allocation2 [shape = 'u8[32768]{0}', space=vmem, size = 0x8000, scoped, tag = 'scoped mem for output reshape']
    #allocation3 [shape = 'u8[32768]{0}', space=vmem, size = 0x8000, scoped, tag = 'scoped mem for input reshape']
    %2 = vsyncpa [#allocation1], 0
    %s4 = ssub.s32 512, 512
    %5 = vsyncadd [#allocation1], %s4
    %s7 = sshll.u32 [#allocation0], 4
    %s8 = int_to_ptr.vmem [resolvable:$true] %s7
    %10 = dma.hbm_to_vmem [thread:$0]  %s0, 512, %s8, [#allocation1]
    %11 = dma.done [#allocation1], 512
    %s13 = smul.u32 4, 2
    %s14 = sshllo.u32 0, %s13
    %s15 = smul.addr 4, 7
    %s16 = scalar_lea.vmem [#allocation0], %s15
    %s17 = sshrl.u32 %s14, 1
    %s18 = sor.u32 %s14, %s17
    %s19 = sand.u32 %s18, 85
    %s20 = sshrl.u32 %s19, 1
    %s21 = sor.u32 %s19, %s20
    %s22 = sand.u32 51, %s21
    %s23 = sshrl.u32 %s22, 2
    %s24 = sor.u32 %s22, %s23
    %s25 = sand.u32 15, %s24
    %v26 = vld [vmem:[%s16] sm:%s25]
    %v27 = vunpack.c.l.bf16 %v26
    %v28 = vunpack.c.h.bf16 %v26
    %s29 = scalar_lea.vmem [#allocation3], 56
    %30 = vst [vmem:[%s29] sm:%s14] %v27
    %s31 = smul.addr 4, 6
    %s32 = scalar_lea.vmem [#allocation0], %s31
    %s33 = sshrl.u32 %s14, 1
    %s34 = sor.u32 %s14, %s33
    %s35 = sand.u32 %s34, 85
    %s36 = sshrl.u32 %s35, 1
    %s37 = sor.u32 %s35, %s36
    %s38 = sand.u32 51, %s37
    %s39 = sshrl.u32 %s38, 2
    %s40 = sor.u32 %s38, %s39
    %s41 = sand.u32 15, %s40
    %v42 = vld [vmem:[%s32] sm:%s41]
    %v43 = vunpack.c.l.bf16 %v42
    %v44 = vunpack.c.h.bf16 %v42
    %s45 = scalar_lea.vmem [#allocation3], 48
    %46 = vst [vmem:[%s45] sm:%s14] %v43
    %s47 = smul.addr 4, 5
    %s48 = scalar_lea.vmem [#allocation0], %s47
    %s49 = sshrl.u32 %s14, 1
    %s50 = sor.u32 %s14, %s49
    %s51 = sand.u32 %s50, 85
    %s52 = sshrl.u32 %s51, 1
    %s53 = sor.u32 %s51, %s52
    %s54 = sand.u32 51, %s53
    %s55 = sshrl.u32 %s54, 2
    %s56 = sor.u32 %s54, %s55
    %s57 = sand.u32 15, %s56
    %v58 = vld [vmem:[%s48] sm:%s57]
    %v59 = vunpack.c.l.bf16 %v58
    %v60 = vunpack.c.h.bf16 %v58
    %s61 = scalar_lea.vmem [#allocation3], 40
    %62 = vst [vmem:[%s61] sm:%s14] %v59
    %s63 = smul.addr 4, 4
    %s64 = scalar_lea.vmem [#allocation0], %s63
    %s65 = sshrl.u32 %s14, 1
    %s66 = sor.u32 %s14, %s65
    %s67 = sand.u32 %s66, 85
    %s68 = sshrl.u32 %s67, 1
    %s69 = sor.u32 %s67, %s68
    %s70 = sand.u32 51, %s69
    %s71 = sshrl.u32 %s70, 2
    %s72 = sor.u32 %s70, %s71
    %s73 = sand.u32 15, %s72
    %v74 = vld [vmem:[%s64] sm:%s73]
    %v75 = vunpack.c.l.bf16 %v74
    %v76 = vunpack.c.h.bf16 %v74
    %s77 = scalar_lea.vmem [#allocation3], 32
    %78 = vst [vmem:[%s77] sm:%s14] %v75
    %s79 = smul.addr 4, 3
    %s80 = scalar_lea.vmem [#allocation0], %s79
    %s81 = sshrl.u32 %s14, 1
    %s82 = sor.u32 %s14, %s81
    %s83 = sand.u32 %s82, 85
    %s84 = sshrl.u32 %s83, 1
    %s85 = sor.u32 %s83, %s84
    %s86 = sand.u32 51, %s85
    %s87 = sshrl.u32 %s86, 2
    %s88 = sor.u32 %s86, %s87
    %s89 = sand.u32 15, %s88
    %v90 = vld [vmem:[%s80] sm:%s89]
    %v91 = vunpack.c.l.bf16 %v90
    %v92 = vunpack.c.h.bf16 %v90
    %s93 = scalar_lea.vmem [#allocation3], 24
    %94 = vst [vmem:[%s93] sm:%s14] %v91
    %s95 = smul.addr 4, 2
    %s96 = scalar_lea.vmem [#allocation0], %s95
    %s97 = sshrl.u32 %s14, 1
    %s98 = sor.u32 %s14, %s97
    %s99 = sand.u32 %s98, 85
    %s100 = sshrl.u32 %s99, 1
    %s101 = sor.u32 %s99, %s100
    %s102 = sand.u32 51, %s101
    %s103 = sshrl.u32 %s102, 2
    %s104 = sor.u32 %s102, %s103
    %s105 = sand.u32 15, %s104
    %v106 = vld [vmem:[%s96] sm:%s105]
    %v107 = vunpack.c.l.bf16 %v106
    %v108 = vunpack.c.h.bf16 %v106
    %s109 = scalar_lea.vmem [#allocation3], 16
    %110 = vst [vmem:[%s109] sm:%s14] %v107
    %s111 = scalar_lea.vmem [#allocation0], 4
    %s112 = sshrl.u32 %s14, 1
    %s113 = sor.u32 %s14, %s112
    %s114 = sand.u32 %s113, 85
    %s115 = sshrl.u32 %s114, 1
    %s116 = sor.u32 %s114, %s115
    %s117 = sand.u32 51, %s116
    %s118 = sshrl.u32 %s117, 2
    %s119 = sor.u32 %s117, %s118
    %s120 = sand.u32 15, %s119
    %v121 = vld [vmem:[%s111] sm:%s120]
    %v122 = vunpack.c.l.bf16 %v121
    %v123 = vunpack.c.h.bf16 %v121
    %s124 = scalar_lea.vmem [#allocation3], 8
    %125 = vst [vmem:[%s124] sm:%s14] %v122
    %s126 = sshrl.u32 %s14, 1
    %s127 = sor.u32 %s14, %s126
    %s128 = sand.u32 %s127, 85
    %s129 = sshrl.u32 %s128, 1
    %s130 = sor.u32 %s128, %s129
    %s131 = sand.u32 51, %s130
    %s132 = sshrl.u32 %s131, 2
    %s133 = sor.u32 %s131, %s132
    %s134 = sand.u32 15, %s133
    %v135 = vld [vmem:[#allocation0] sm:%s134]
    %v136 = vunpack.c.l.bf16 %v135
    %v137 = vunpack.c.h.bf16 %v135
    %138 = vst [vmem:[#allocation3] sm:%s14] %v136
    %v139 = vld [vmem:[#allocation3] ss:$4 sm:$0xff]
    %vm140 = vcmask 261120
    %141 = vst.msk [vmem:[#allocation2] ss:$8 sm:$0xf] %vm140, %v139
    %142 = vst.msk [vmem:[#allocation2] ss:$8 sm:$0xf0] %vm140, %v139
    %s143 = scalar_lea.vmem [#allocation3], 32
    %v144 = vld [vmem:[%s143] ss:$4 sm:$0xff]
    %vm145 = vcmask 261120
    %s146 = scalar_lea.vmem [#allocation2], 1
    %147 = vst.msk [vmem:[%s146] ss:$8 sm:$0xf] %vm145, %v144
    %s148 = scalar_lea.vmem [#allocation2], 1
    %149 = vst.msk [vmem:[%s148] ss:$8 sm:$0xf0] %vm145, %v144
    %s150 = scalar_lea.vmem [#allocation3], 3
    %v151 = vld [vmem:[%s150] sm:$0x1]
    %s152 = scalar_lea.vmem [#allocation3], 63
    %s153 = smov 6
    %v154 = vld [vmem:[%s152] ss:$-28 sm:%s153]
    %vm155 = vcmask 1042433
    %v156 = vsel %vm155, %v154, %v151
    %s157 = scalar_lea.vmem [#allocation3], 123
    %s158 = smov 24
    %v159 = vld [vmem:[%s157] ss:$-28 sm:%s158]
    %vm160 = vcmask 1044483
    %v161 = vsel %vm160, %v159, %v156
    %s162 = scalar_lea.vmem [#allocation3], 183
    %s163 = smov 96
    %v164 = vld [vmem:[%s162] ss:$-28 sm:%s163]
    %vm165 = vcmask 1046533
    %v166 = vsel %vm165, %v164, %v161
    %s167 = scalar_lea.vmem [#allocation3], 40
    %v168 = vld [vmem:[%s167] sm:$0x80]
    %vm169 = vcmask 1047559
    %v170 = vsel %vm169, %v168, %v166
    %171 = vrot.lane.b32.xlu0 %v170, 96
    %v172 = vpop.permute.xlu0 %171
    %vm173 = vcmask 1048320
    %174 = vst.msk [vmem:[#allocation2] sm:$0x3] %vm173, %v172
    %s175 = scalar_lea.vmem [#allocation2], 6
    %176 = vst.msk [vmem:[%s175] sm:$0xc] %vm173, %v172
    %s177 = scalar_lea.vmem [#allocation2], 12
    %178 = vst.msk [vmem:[%s177] sm:$0x30] %vm173, %v172
    %s179 = scalar_lea.vmem [#allocation2], 18
    %180 = vst.msk [vmem:[%s179] sm:$0xc0] %vm173, %v172
    %s181 = scalar_lea.vmem [#allocation3], 19
    %v182 = vld [vmem:[%s181] sm:$0x1]
    %s183 = scalar_lea.vmem [#allocation3], 79
    %s184 = smov 6
    %v185 = vld [vmem:[%s183] ss:$-28 sm:%s184]
    %vm186 = vcmask 1042433
    %v187 = vsel %vm186, %v185, %v182
    %s188 = scalar_lea.vmem [#allocation3], 139
    %s189 = smov 24
    %v190 = vld [vmem:[%s188] ss:$-28 sm:%s189]
    %vm191 = vcmask 1044483
    %v192 = vsel %vm191, %v190, %v187
    %s193 = scalar_lea.vmem [#allocation3], 199
    %s194 = smov 96
    %v195 = vld [vmem:[%s193] ss:$-28 sm:%s194]
    %vm196 = vcmask 1046533
    %v197 = vsel %vm196, %v195, %v192
    %s198 = scalar_lea.vmem [#allocation3], 56
    %v199 = vld [vmem:[%s198] sm:$0x80]
    %vm200 = vcmask 1047559
    %v201 = vsel %vm200, %v199, %v197
    %202 = vrot.lane.b32.xlu0 %v201, 96
    %v203 = vpop.permute.xlu0 %202
    %vm204 = vcmask 1048320
    %s205 = scalar_lea.vmem [#allocation2], 32
    %206 = vst.msk [vmem:[%s205] sm:$0x3] %vm204, %v203
    %s207 = scalar_lea.vmem [#allocation2], 38
    %208 = vst.msk [vmem:[%s207] sm:$0xc] %vm204, %v203
    %s209 = scalar_lea.vmem [#allocation2], 44
    %210 = vst.msk [vmem:[%s209] sm:$0x30] %vm204, %v203
    %s211 = scalar_lea.vmem [#allocation2], 50
    %212 = vst.msk [vmem:[%s211] sm:$0xc0] %vm204, %v203
    %s213 = scalar_lea.vmem [#allocation3], 2
    %v214 = vld [vmem:[%s213] sm:$0x1]
    %s215 = scalar_lea.vmem [#allocation3], 62
    %s216 = smov 6
    %v217 = vld [vmem:[%s215] ss:$-28 sm:%s216]
    %vm218 = vcmask 1042433
    %v219 = vsel %vm218, %v217, %v214
    %s220 = scalar_lea.vmem [#allocation3], 122
    %s221 = smov 24
    %v222 = vld [vmem:[%s220] ss:$-28 sm:%s221]
    %vm223 = vcmask 1044483
    %v224 = vsel %vm223, %v222, %v219
    %s225 = scalar_lea.vmem [#allocation3], 182
    %s226 = smov 96
    %v227 = vld [vmem:[%s225] ss:$-28 sm:%s226]
    %vm228 = vcmask 1046533
    %v229 = vsel %vm228, %v227, %v224
    %s230 = scalar_lea.vmem [#allocation3], 39
    %v231 = vld [vmem:[%s230] sm:$0x80]
    %vm232 = vcmask 1047559
    %v233 = vsel %vm232, %v231, %v229
    %234 = vrot.lane.b32.xlu0 %v233, 64
    %v235 = vpop.permute.xlu0 %234
    %vm236 = vcmask 785920
    %237 = vst.msk [vmem:[#allocation2] sm:$0x3] %vm236, %v235
    %s238 = scalar_lea.vmem [#allocation2], 6
    %239 = vst.msk [vmem:[%s238] sm:$0xc] %vm236, %v235
    %s240 = scalar_lea.vmem [#allocation2], 12
    %241 = vst.msk [vmem:[%s240] sm:$0x30] %vm236, %v235
    %s242 = scalar_lea.vmem [#allocation2], 18
    %243 = vst.msk [vmem:[%s242] sm:$0xc0] %vm236, %v235
    %s244 = scalar_lea.vmem [#allocation3], 18
    %v245 = vld [vmem:[%s244] sm:$0x1]
    %s246 = scalar_lea.vmem [#allocation3], 78
    %s247 = smov 6
    %v248 = vld [vmem:[%s246] ss:$-28 sm:%s247]
    %vm249 = vcmask 1042433
    %v250 = vsel %vm249, %v248, %v245
    %s251 = scalar_lea.vmem [#allocation3], 138
    %s252 = smov 24
    %v253 = vld [vmem:[%s251] ss:$-28 sm:%s252]
    %vm254 = vcmask 1044483
    %v255 = vsel %vm254, %v253, %v250
    %s256 = scalar_lea.vmem [#allocation3], 198
    %s257 = smov 96
    %v258 = vld [vmem:[%s256] ss:$-28 sm:%s257]
    %vm259 = vcmask 1046533
    %v260 = vsel %vm259, %v258, %v255
    %s261 = scalar_lea.vmem [#allocation3], 55
    %v262 = vld [vmem:[%s261] sm:$0x80]
    %vm263 = vcmask 1047559
    %v264 = vsel %vm263, %v262, %v260
    %265 = vrot.lane.b32.xlu0 %v264, 64
    %v266 = vpop.permute.xlu0 %265
    %vm267 = vcmask 785920
    %s268 = scalar_lea.vmem [#allocation2], 32
    %269 = vst.msk [vmem:[%s268] sm:$0x3] %vm267, %v266
    %s270 = scalar_lea.vmem [#allocation2], 38
    %271 = vst.msk [vmem:[%s270] sm:$0xc] %vm267, %v266
    %s272 = scalar_lea.vmem [#allocation2], 44
    %273 = vst.msk [vmem:[%s272] sm:$0x30] %vm267, %v266
    %s274 = scalar_lea.vmem [#allocation2], 50
    %275 = vst.msk [vmem:[%s274] sm:$0xc0] %vm267, %v266
    %s276 = scalar_lea.vmem [#allocation3], 1
    %v277 = vld [vmem:[%s276] sm:$0x1]
    %s278 = scalar_lea.vmem [#allocation3], 61
    %s279 = smov 6
    %v280 = vld [vmem:[%s278] ss:$-28 sm:%s279]
    %vm281 = vcmask 1042433
    %v282 = vsel %vm281, %v280, %v277
    %s283 = scalar_lea.vmem [#allocation3], 121
    %s284 = smov 24
    %v285 = vld [vmem:[%s283] ss:$-28 sm:%s284]
    %vm286 = vcmask 1044483
    %v287 = vsel %vm286, %v285, %v282
    %s288 = scalar_lea.vmem [#allocation3], 181
    %s289 = smov 96
    %v290 = vld [vmem:[%s288] ss:$-28 sm:%s289]
    %vm291 = vcmask 1046533
    %v292 = vsel %vm291, %v290, %v287
    %s293 = scalar_lea.vmem [#allocation3], 38
    %v294 = vld [vmem:[%s293] sm:$0x80]
    %vm295 = vcmask 1047559
    %v296 = vsel %vm295, %v294, %v292
    %297 = vrot.lane.b32.xlu0 %v296, 32
    %v298 = vpop.permute.xlu0 %297
    %vm299 = vcmask 523520
    %300 = vst.msk [vmem:[#allocation2] sm:$0x3] %vm299, %v298
    %s301 = scalar_lea.vmem [#allocation2], 6
    %302 = vst.msk [vmem:[%s301] sm:$0xc] %vm299, %v298
    %s303 = scalar_lea.vmem [#allocation2], 12
    %304 = vst.msk [vmem:[%s303] sm:$0x30] %vm299, %v298
    %s305 = scalar_lea.vmem [#allocation2], 18
    %306 = vst.msk [vmem:[%s305] sm:$0xc0] %vm299, %v298
    %s307 = scalar_lea.vmem [#allocation3], 17
    %v308 = vld [vmem:[%s307] sm:$0x1]
    %s309 = scalar_lea.vmem [#allocation3], 77
    %s310 = smov 6
    %v311 = vld [vmem:[%s309] ss:$-28 sm:%s310]
    %vm312 = vcmask 1042433
    %v313 = vsel %vm312, %v311, %v308
    %s314 = scalar_lea.vmem [#allocation3], 137
    %s315 = smov 24
    %v316 = vld [vmem:[%s314] ss:$-28 sm:%s315]
    %vm317 = vcmask 1044483
    %v318 = vsel %vm317, %v316, %v313
    %s319 = scalar_lea.vmem [#allocation3], 197
    %s320 = smov 96
    %v321 = vld [vmem:[%s319] ss:$-28 sm:%s320]
    %vm322 = vcmask 1046533
    %v323 = vsel %vm322, %v321, %v318
    %s324 = scalar_lea.vmem [#allocation3], 54
    %v325 = vld [vmem:[%s324] sm:$0x80]
    %vm326 = vcmask 1047559
    %v327 = vsel %vm326, %v325, %v323
    %328 = vrot.lane.b32.xlu0 %v327, 32
    %v329 = vpop.permute.xlu0 %328
    %vm330 = vcmask 523520
    %s331 = scalar_lea.vmem [#allocation2], 32
    %332 = vst.msk [vmem:[%s331] sm:$0x3] %vm330, %v329
    %s333 = scalar_lea.vmem [#allocation2], 38
    %334 = vst.msk [vmem:[%s333] sm:$0xc] %vm330, %v329
    %s335 = scalar_lea.vmem [#allocation2], 44
    %336 = vst.msk [vmem:[%s335] sm:$0x30] %vm330, %v329
    %s337 = scalar_lea.vmem [#allocation2], 50
    %338 = vst.msk [vmem:[%s337] sm:$0xc0] %vm330, %v329
    %s340 = smul.u32 1, 2
    %s341 = sshllo.u32 0, %s340
    %s342 = sshrl.u32 %s340, 1
    %v343 = vld [vmem:[#allocation2] sm:%s341]
    %v344 = vpack.c.bf16 0.0, %v343
    %s345 = sshllo.u32 0, %s342
    %346 = vst [vmem:[%s1] sm:%s345] %v344
    %s347 = scalar_lea.vmem [#allocation2], 8
    %v348 = vld [vmem:[%s347] sm:%s341]
    %v349 = vpack.c.bf16 0.0, %v348
    %s350 = sshllo.u32 0, %s342
    %s351 = scalar_lea.vmem %s1, 1
    %352 = vst [vmem:[%s351] sm:%s350] %v349
    %s353 = scalar_lea.vmem [#allocation2], 16
    %v354 = vld [vmem:[%s353] sm:%s341]
    %v355 = vpack.c.bf16 0.0, %v354
    %s356 = sshllo.u32 0, %s342
    %s357 = smul.addr 1, 2
    %s358 = scalar_lea.vmem %s1, %s357
    %359 = vst [vmem:[%s358] sm:%s356] %v355
    %s360 = scalar_lea.vmem [#allocation2], 24
    %v361 = vld [vmem:[%s360] sm:%s341]
    %v362 = vpack.c.bf16 0.0, %v361
    %s363 = sshllo.u32 0, %s342
    %s364 = smul.addr 1, 3
    %s365 = scalar_lea.vmem %s1, %s364
    %366 = vst [vmem:[%s365] sm:%s363] %v362
    %s367 = scalar_lea.vmem [#allocation2], 32
    %v368 = vld [vmem:[%s367] sm:%s341]
    %v369 = vpack.c.bf16 0.0, %v368
    %s370 = sshllo.u32 0, %s342
    %s371 = smul.addr 1, 4
    %s372 = scalar_lea.vmem %s1, %s371
    %373 = vst [vmem:[%s372] sm:%s370] %v369
    %s374 = scalar_lea.vmem [#allocation2], 40
    %v375 = vld [vmem:[%s374] sm:%s341]
    %v376 = vpack.c.bf16 0.0, %v375
    %s377 = sshllo.u32 0, %s342
    %s378 = smul.addr 1, 5
    %s379 = scalar_lea.vmem %s1, %s378
    %380 = vst [vmem:[%s379] sm:%s377] %v376
    %s381 = scalar_lea.vmem [#allocation2], 48
    %v382 = vld [vmem:[%s381] sm:%s341]
    %v383 = vpack.c.bf16 0.0, %v382
    %s384 = sshllo.u32 0, %s342
    %s385 = smul.addr 1, 6
    %s386 = scalar_lea.vmem %s1, %s385
    %387 = vst [vmem:[%s386] sm:%s384] %v383
    %s388 = scalar_lea.vmem [#allocation2], 56
    %v389 = vld [vmem:[%s388] sm:%s341]
    %v390 = vpack.c.bf16 0.0, %v389
    %s391 = sshllo.u32 0, %s342
    %s392 = smul.addr 1, 7
    %s393 = scalar_lea.vmem %s1, %s392
    %394 = vst [vmem:[%s393] sm:%s391] %v390
    %395 = vsyncpa [#allocation1], 1

// kernel: grad_block_forward.3
$region0: #{grad_block_forward.3}
  #allocation0 [shape = 'u32[]', space=smem, size = 0x4, offset = 0x4, fixed_abs, tag = 'smem constant byte address 0x4 - core index']
  #allocation1 [shape = 'u32[144,128]{1,0:T(1,128)}', space=vmem, size = 0x12000, scoped, tag = 'internal scratch']
  #allocation2 [shape = 'f32[4,48,128]{2,1,0:T(8,128)}', space=vmem, size = 0x18000, scoped, tag = 'scratch operand']
  #allocation3 [shape = 'f32[1]{0:T(128)S(6)}', space=smem, size = 0x200, scoped, tag = 'scoped memory for grad_block_forward.3']
  %s0 = inlined_call_operand.hbm [shape: f32[36], index: 0, kind: input, shape index: {}]
  %s1 = inlined_call_operand.<no memory space> [shape: f32[1], index: 1, kind: input, shape index: {}]
  %s2 = inlined_call_operand.hbm [shape: f32[2,4,32,32], index: 2, kind: input, shape index: {}]
  %s3 = inlined_call_operand.hbm [shape: bf16[2,1,32,32], index: 3, kind: output, shape index: {}]
  %s4 = sld [smem:[#allocation0]]
  $region53: #{grad_block_forward.3} parent=0
    _
  %s6 = ssub.s32 1, %s4
  %s7 = scalar_select 0, %s6, %s4
  %8 = sst [smem:[#allocation3]] %s1
  $region1: #{grad_block_forward.3} parent=0
    #allocation4 [shape = 'u8[512]{0}', space=smem, size = 0x200, scoped, tag = 'input window, operand 0, single buffered']
    #allocation5 [shape = 's32[2]{0}', space=sflag, size = 0x8, scoped, tag = 'scoped memory for grad_block_forward.3']
    #allocation6 [shape = 's32[2]{0}', space=sflag, size = 0x8, scoped, tag = 'scoped memory for grad_block_forward.3']
    #allocation7 [shape = 's32[2]{0}', space=sflag, size = 0x8, scoped, tag = 'scoped memory for grad_block_forward.3']
    #allocation8 [shape = 'u8[131072]{0}', space=vmem, size = 0x20000, scoped, tag = 'input window, operand 2']
    #allocation9 [shape = 'u8[16384]{0}', space=vmem, size = 0x4000, scoped, tag = 'output window, operand 0']
    %9 = vsyncpa [#allocation7], 0
    %10 = vsyncpa [#allocation5], 0
    %s11 = scalar_lea.sflag [#allocation5], 1
    %12 = vsyncpa %s11, 0
    %13 = vsyncpa [#allocation6], 0
    %s14 = scalar_lea.sflag [#allocation6], 1
    %15 = vsyncpa %s14, 0
    loop: start=0, step=1, limit=4
    $region2: #{grad_block_forward.3} parent=1 // loop_pre_header
      _
    $region3: #{grad_block_forward.3} parent=1 // loop_header
      %s17 = sphi 0, %s21
      %p18 = scmp.ge.s32.totalorder %s17, 4
      %s25 = sphi 0, %s25
      %s27 = sphi 0, %s25
      %s28 = sphi 0, %s27
      %s42 = sphi 0, %s28
      %s46 = sphi 0, %s46
      %s48 = sphi 0, %s46
      %s49 = sphi 0, %s48
      %s63 = sphi 0, %s49
      %s69 = sphi 0, %s71
      %s72 = sphi 0, %s69
      %s73 = sphi 0, %s72
      %s89 = sphi 0, %s73
      %s95 = sphi 0, %s97
      %s98 = sphi 0, %s95
      %s99 = sphi 0, %s98
      %s115 = sphi 0, %s99
    $region4: #{grad_block_forward.3} parent=1 // loop_header_branch
      %20 = sbr.rel (%p18) target = $region8
    $region5: #{grad_block_forward.3} parent=1 // loop_body
      %s22 = ssub.s32 %s17, 1
      %s23 = ssub.s32 %s17, 2
      %s24 = sadd.s32 %s17, 1
      %s26 = sadd.s32 %s25, 1
      %p29 = scmp.eq.s32.totalorder %s17, 1
      %p30 = scmp.ne.s32.totalorder %s25, %s27
      %p31 = scmp.eq.s32.totalorder %s17, 0
      %p32 = por %p30, %p31
      %p33 = scmp.ne.s32.totalorder %s25, %s27
      %p34 = scmp.eq.s32.totalorder %s22, 1
      %p35 = por %p33, %p34
      %p36 = scmp.ne.s32.totalorder %s27, %s28
      %p37 = scmp.eq.s32.totalorder %s22, 0
      %p38 = por %p36, %p37
      %p39 = scmp.ne.s32.totalorder %s27, %s28
      %p40 = scmp.eq.s32.totalorder %s23, 1
      %p41 = por %p39, %p40
      %p43 = scmp.ne.s32.totalorder %s28, %s42
      %p44 = scmp.eq.s32.totalorder %s23, 0
      %p45 = por %p43, %p44
      %s47 = sadd.s32 %s46, 1
      %p50 = scmp.eq.s32.totalorder %s17, 1
      %p51 = scmp.ne.s32.totalorder %s46, %s48
      %p52 = scmp.eq.s32.totalorder %s17, 0
      %p53 = por %p51, %p52
      %p54 = scmp.ne.s32.totalorder %s46, %s48
      %p55 = scmp.eq.s32.totalorder %s22, 1
      %p56 = por %p54, %p55
      %p57 = scmp.ne.s32.totalorder %s48, %s49
      %p58 = scmp.eq.s32.totalorder %s22, 0
      %p59 = por %p57, %p58
      %p60 = scmp.ne.s32.totalorder %s48, %s49
      %p61 = scmp.eq.s32.totalorder %s23, 1
      %p62 = por %p60, %p61
      %p64 = scmp.ne.s32.totalorder %s49, %s63
      %p65 = scmp.eq.s32.totalorder %s23, 0
      %p66 = por %p64, %p65
      %s67 = ssub.s32 %s17, %s24
      %p68 = scmp.eq.s32.totalorder %s67, 0
      %s70 = sadd.s32 %s69, 1
      %s71 = scalar_select %p68, %s69, %s70
      %p74 = pneg %p68
      %p75 = scmp.eq.s32.totalorder %s17, 1
      %p76 = por %p74, %p75
      %p77 = scmp.ne.s32.totalorder %s69, %s72
      %p78 = scmp.eq.s32.totalorder %s17, 0
      %p79 = por %p77, %p78
      %p80 = scmp.ne.s32.totalorder %s69, %s72
      %p81 = scmp.eq.s32.totalorder %s22, 1
      %p82 = por %p80, %p81
      %p83 = scmp.ne.s32.totalorder %s72, %s73
      %p84 = scmp.eq.s32.totalorder %s22, 0
      %p85 = por %p83, %p84
      %p86 = scmp.ne.s32.totalorder %s72, %s73
      %p87 = scmp.eq.s32.totalorder %s23, 1
      %p88 = por %p86, %p87
      %p90 = scmp.ne.s32.totalorder %s73, %s89
      %p91 = scmp.eq.s32.totalorder %s23, 0
      %p92 = por %p90, %p91
      %s93 = ssub.s32 %s17, %s24
      %p94 = scmp.eq.s32.totalorder %s93, 0
      %s96 = sadd.s32 %s95, 1
      %s97 = scalar_select %p94, %s95, %s96
      %p100 = pneg %p94
      %p101 = scmp.eq.s32.totalorder %s17, 1
      %p102 = por %p100, %p101
      %p103 = scmp.ne.s32.totalorder %s95, %s98
      %p104 = scmp.eq.s32.totalorder %s17, 0
      %p105 = por %p103, %p104
      %p106 = scmp.ne.s32.totalorder %s95, %s98
      %p107 = scmp.eq.s32.totalorder %s22, 1
      %p108 = por %p106, %p107
      %p109 = scmp.ne.s32.totalorder %s98, %s99
      %p110 = scmp.eq.s32.totalorder %s22, 0
      %p111 = por %p109, %p110
      %p112 = scmp.ne.s32.totalorder %s98, %s99
      %p113 = scmp.eq.s32.totalorder %s23, 1
      %p114 = por %p112, %p113
      %p116 = scmp.ne.s32.totalorder %s99, %s115
      %p117 = scmp.eq.s32.totalorder %s23, 0
      %p118 = por %p116, %p117
      %p119 = scmp.le.s32.totalorder 1, %s17
      %p120 = scmp.lt.s32.totalorder %s17, 3
      %p121 = pnand %p119, %p120
      %p122 = pneg %p121
      // Predicated region
      $region9: #{grad_block_forward.3} parent=5 // pred_check
        _
      $region10: #{grad_block_forward.3} parent=5 // pred_check_branch
        %124 = sbr.rel (%p121) target = $region12
      $region11: #{grad_block_forward.3} parent=5 // pred_region
        %s125 = ssub.s32 %s17, 1
        // Predicated region
        $region13: #{grad_block_forward.3} parent=11 // pred_check
          %p126 = pneg %p38
        $region14: #{grad_block_forward.3} parent=11 // pred_check_branch
          %128 = sbr.rel (%p126) target = $region16
        $region15: #{grad_block_forward.3} parent=11 // pred_region
          %s130 = ssub.s32 16, 16
          %131 = vsyncadd [#allocation7], %s130
          %134 = dma.hbm_to_smem %s0, 16, [#allocation4], [#allocation7]
        $region16: #{grad_block_forward.3} parent=11 // pred_fallthru
          _
        // Predicated region
        $region17: #{grad_block_forward.3} parent=11 // pred_check
          %p135 = pneg %p59
        $region18: #{grad_block_forward.3} parent=11 // pred_check_branch
          %137 = sbr.rel (%p135) target = $region20
        $region19: #{grad_block_forward.3} parent=11 // pred_region
          _
        $region20: #{grad_block_forward.3} parent=11 // pred_fallthru
          _
      $region12: #{grad_block_forward.3} parent=5 // pred_fallthru
        _
      %p138 = scmp.lt.s32.totalorder %s17, 2
      // Predicated region
      $region21: #{grad_block_forward.3} parent=5 // pred_check
        %p139 = pneg %p138
      $region22: #{grad_block_forward.3} parent=5 // pred_check_branch
        %141 = sbr.rel (%p139) target = $region24
      $region23: #{grad_block_forward.3} parent=5 // pred_region
        // Predicated region
        $region25: #{grad_block_forward.3} parent=23 // pred_check
          %p142 = pneg %p79
        $region26: #{grad_block_forward.3} parent=23 // pred_check_branch
          %144 = sbr.rel (%p142) target = $region28
        $region27: #{grad_block_forward.3} parent=23 // pred_region
          %s145 = sand.u32 %s69, 1
          %s146 = scalar_lea.sflag [#allocation5], %s145
          %s147 = sand.u32 %s69, 1
          %s148 = smul.addr %s147, 128
          %s149 = scalar_lea.vmem [#allocation8], %s148
          %s151 = ssub.s32 2048, 2048
          %152 = vsyncadd %s146, %s151
          %s153 = smul.addr %s17, 16
          %s154 = smul.addr %s153, 128
          %s155 = scalar_lea.hbm %s2, %s154
          %s156 = sshll.u32 %s149, 4
          %s157 = int_to_ptr.vmem [resolvable:$true] %s156
          %162 = dma.hbm_to_vmem [thread:$0]  %s155, 2048, %s157, %s146, 128, 128, 8
        $region28: #{grad_block_forward.3} parent=23 // pred_fallthru
          _
      $region24: #{grad_block_forward.3} parent=5 // pred_fallthru
        _
      %p163 = scmp.le.s32.totalorder 1, %s17
      %p164 = scmp.lt.s32.totalorder %s17, 3
      %p165 = pnand %p163, %p164
      %p166 = pneg %p165
      // Predicated region
      $region29: #{grad_block_forward.3} parent=5 // pred_check
        _
      $region30: #{grad_block_forward.3} parent=5 // pred_check_branch
        %168 = sbr.rel (%p165) target = $region32
      $region31: #{grad_block_forward.3} parent=5 // pred_region
        %s169 = ssub.s32 %s17, 1
        // Predicated region
        $region33: #{grad_block_forward.3} parent=31 // pred_check
          %p170 = pneg %p38
        $region34: #{grad_block_forward.3} parent=31 // pred_check_branch
          %172 = sbr.rel (%p170) target = $region36
        $region35: #{grad_block_forward.3} parent=31 // pred_region
          %173 = dma.done [#allocation7], 16
        $region36: #{grad_block_forward.3} parent=31 // pred_fallthru
          _
        %s174 = sand.u32 %s72, 1
        %s175 = scalar_lea.sflag [#allocation5], %s174
        %s176 = sand.u32 %s72, 1
        %s177 = smul.addr %s176, 128
        %s178 = scalar_lea.vmem [#allocation8], %s177
        // Predicated region
        $region37: #{grad_block_forward.3} parent=31 // pred_check
          %p179 = pneg %p85
        $region38: #{grad_block_forward.3} parent=31 // pred_check_branch
          %181 = sbr.rel (%p179) target = $region40
        $region39: #{grad_block_forward.3} parent=31 // pred_region
          %182 = dma.done %s175, 2048
        $region40: #{grad_block_forward.3} parent=31 // pred_fallthru
          _
        %183 = sfence
        %p184 = pneg %p38
        %p185 = pneg %p35
        %p186 = pneg %p59
        %p187 = pneg %p56
        %s188 = sand.u32 %s72, 1
        %s189 = scalar_lea.sflag [#allocation5], %s188
        %s190 = sand.u32 %s72, 1
        %s191 = smul.addr %s190, 128
        %s192 = scalar_lea.vmem [#allocation8], %s191
        %p193 = pneg %p85
        %p194 = pneg %p82
        %p195 = pneg %p111
        %p196 = pneg %p108
        %s197 = sand.u32 %s98, 1
        %s198 = scalar_lea.sflag [#allocation6], %s197
        %s199 = sand.u32 %s98, 1
        %s200 = smul.addr %s199, 16
        %s201 = scalar_lea.vmem [#allocation9], %s200
        %202 = vst [vmem:[#allocation2] sm:$0xff] 0.0
        %203 = vst [vmem:[#allocation2 + $0x30] sm:$0xff] 0.0
        %204 = vst [vmem:[#allocation2 + $0x60] sm:$0xff] 0.0
        %205 = vst [vmem:[#allocation2 + $0x90] sm:$0xff] 0.0
        %206 = vst [vmem:[#allocation2 + $0x28] sm:$0xff] 0.0
        %207 = vst [vmem:[#allocation2 + $0x58] sm:$0xff] 0.0
        %208 = vst [vmem:[#allocation2 + $0x88] sm:$0xff] 0.0
        %209 = vst [vmem:[#allocation2 + $0xb8] sm:$0xff] 0.0
        %vm210 = vcmask 1047808
        %211 = vst.msk [vmem:[#allocation2 + $0x8] sm:$0xff] %vm210, 0.0
        %212 = vst.msk [vmem:[#allocation2 + $0x10] sm:$0xff] %vm210, 0.0
        %213 = vst.msk [vmem:[#allocation2 + $0x18] sm:$0xff] %vm210, 0.0
        %214 = vst.msk [vmem:[#allocation2 + $0x20] sm:$0xff] %vm210, 0.0
        %215 = vst.msk [vmem:[#allocation2 + $0x38] sm:$0xff] %vm210, 0.0
        %216 = vst.msk [vmem:[#allocation2 + $0x40] sm:$0xff] %vm210, 0.0
        %217 = vst.msk [vmem:[#allocation2 + $0x48] sm:$0xff] %vm210, 0.0
        %218 = vst.msk [vmem:[#allocation2 + $0x50] sm:$0xff] %vm210, 0.0
        %219 = vst.msk [vmem:[#allocation2 + $0x68] sm:$0xff] %vm210, 0.0
        %220 = vst.msk [vmem:[#allocation2 + $0x70] sm:$0xff] %vm210, 0.0
        %221 = vst.msk [vmem:[#allocation2 + $0x78] sm:$0xff] %vm210, 0.0
        %222 = vst.msk [vmem:[#allocation2 + $0x80] sm:$0xff] %vm210, 0.0
        %223 = vst.msk [vmem:[#allocation2 + $0x98] sm:$0xff] %vm210, 0.0
        %224 = vst.msk [vmem:[#allocation2 + $0xa0] sm:$0xff] %vm210, 0.0
        %225 = vst.msk [vmem:[#allocation2 + $0xa8] sm:$0xff] %vm210, 0.0
        %226 = vst.msk [vmem:[#allocation2 + $0xb0] sm:$0xff] %vm210, 0.0
        %v227 = vld [vmem:[%s178] sm:$0xff]
        %v228 = vld [vmem:[%s178 + $0x8] sm:$0xff]
        %v229 = vld [vmem:[%s178 + $0x10] sm:$0xff]
        %v230 = vld [vmem:[%s178 + $0x18] sm:$0xff]
        %s231 = scalar_lea.vmem %s178, 32 [#allocation8]
        %v232 = vld [vmem:[%s231] sm:$0xff]
        %v233 = vld [vmem:[%s231 + $0x8] sm:$0xff]
        %v234 = vld [vmem:[%s231 + $0x10] sm:$0xff]
        %v235 = vld [vmem:[%s231 + $0x18] sm:$0xff]
        %s236 = scalar_lea.vmem %s178, 64 [#allocation8]
        %v237 = vld [vmem:[%s236] sm:$0xff]
        %v238 = vld [vmem:[%s236 + $0x8] sm:$0xff]
        %v239 = vld [vmem:[%s236 + $0x10] sm:$0xff]
        %v240 = vld [vmem:[%s236 + $0x18] sm:$0xff]
        %s241 = scalar_lea.vmem %s178, 96 [#allocation8]
        %v242 = vld [vmem:[%s241] sm:$0xff]
        %v243 = vld [vmem:[%s241 + $0x8] sm:$0xff]
        %v244 = vld [vmem:[%s241 + $0x10] sm:$0xff]
        %v245 = vld [vmem:[%s241 + $0x18] sm:$0xff]
        %vm246 = vcmask 261120
        %247 = vst.msk [vmem:[#allocation2 + $0x8] sm:$0xff] %vm246, %v227
        %248 = vst.msk [vmem:[#allocation2 + $0x10] sm:$0xff] %vm246, %v228
        %249 = vst.msk [vmem:[#allocation2 + $0x18] sm:$0xff] %vm246, %v229
        %250 = vst.msk [vmem:[#allocation2 + $0x20] sm:$0xff] %vm246, %v230
        %s251 = scalar_lea.vmem [#allocation2], 48
        %252 = vst.msk [vmem:[%s251 + $0x8] sm:$0xff] %vm246, %v232
        %253 = vst.msk [vmem:[%s251 + $0x10] sm:$0xff] %vm246, %v233
        %254 = vst.msk [vmem:[%s251 + $0x18] sm:$0xff] %vm246, %v234
        %255 = vst.msk [vmem:[%s251 + $0x20] sm:$0xff] %vm246, %v235
        %s256 = scalar_lea.vmem [#allocation2], 96
        %257 = vst.msk [vmem:[%s256 + $0x8] sm:$0xff] %vm246, %v237
        %258 = vst.msk [vmem:[%s256 + $0x10] sm:$0xff] %vm246, %v238
        %259 = vst.msk [vmem:[%s256 + $0x18] sm:$0xff] %vm246, %v239
        %260 = vst.msk [vmem:[%s256 + $0x20] sm:$0xff] %vm246, %v240
        %s261 = scalar_lea.vmem [#allocation2], 144
        %262 = vst.msk [vmem:[%s261 + $0x8] sm:$0xff] %vm246, %v242
        %263 = vst.msk [vmem:[%s261 + $0x10] sm:$0xff] %vm246, %v243
        %264 = vst.msk [vmem:[%s261 + $0x18] sm:$0xff] %vm246, %v244
        %265 = vst.msk [vmem:[%s261 + $0x20] sm:$0xff] %vm246, %v245
        %v266 = vld [vmem:[#allocation2 + $0x7] sm:$0xff]
        %v267 = vld [vmem:[#allocation2 + $0xf] sm:$0xff]
        %v268 = vld [vmem:[#allocation2 + $0x17] sm:$0xff]
        %v269 = vld [vmem:[#allocation2 + $0x1f] sm:$0xff]
        %270 = vrot.lane.b32.xlu0 %v266, 1
        %v271 = vpop.permute.xlu0 %270
        %272 = vrot.lane.b32.xlu0 %v267, 1
        %v273 = vpop.permute.xlu0 %272
        %274 = vrot.lane.b32.xlu0 %v268, 1
        %v275 = vpop.permute.xlu0 %274
        %276 = vrot.lane.b32.xlu0 %v269, 1
        %v277 = vpop.permute.xlu0 %276
        %s278 = sld [smem:[#allocation4]]
        %v279 = vstv %s278
        %v280 = vmul.f32 %v279, %v271
        %v281 = vmul.f32 %v279, %v273
        %v282 = vmul.f32 %v279, %v275
        %v283 = vmul.f32 %v279, %v277
        %s284 = sld [smem:[#allocation4 + $0x1]]
        %v285 = vstv %s284
        %v286 = vmul.f32 %v285, %v266
        %v287 = vmul.f32 %v285, %v267
        %v288 = vmul.f32 %v285, %v268
        %v289 = vmul.f32 %v285, %v269
        %v290 = vadd.f32 %v280, %v286
        %v291 = vadd.f32 %v281, %v287
        %v292 = vadd.f32 %v282, %v288
        %v293 = vadd.f32 %v283, %v289
        %294 = vrot.lane.b32.xlu0 %v266, 127
        %v295 = vpop.permute.xlu0 %294
        %296 = vrot.lane.b32.xlu0 %v267, 127
        %v297 = vpop.permute.xlu0 %296
        %298 = vrot.lane.b32.xlu0 %v268, 127
        %v299 = vpop.permute.xlu0 %298
        %300 = vrot.lane.b32.xlu0 %v269, 127
        %v301 = vpop.permute.xlu0 %300
        %s302 = sld [smem:[#allocation4 + $0x2]]
        %v303 = vstv %s302
        %v304 = vmul.f32 %v303, %v295
        %v305 = vmul.f32 %v303, %v297
        %v306 = vmul.f32 %v303, %v299
        %v307 = vmul.f32 %v303, %v301
        %v308 = vadd.f32 %v290, %v304
        %v309 = vadd.f32 %v291, %v305
        %v310 = vadd.f32 %v292, %v306
        %v311 = vadd.f32 %v293, %v307
        %v312 = vld [vmem:[#allocation2 + $0x8] sm:$0xff]
        %v313 = vld [vmem:[#allocation2 + $0x10] sm:$0xff]
        %v314 = vld [vmem:[#allocation2 + $0x18] sm:$0xff]
        %v315 = vld [vmem:[#allocation2 + $0x20] sm:$0xff]
        %316 = vrot.lane.b32.xlu0 %v312, 1
        %v317 = vpop.permute.xlu0 %316
        %318 = vrot.lane.b32.xlu0 %v313, 1
        %v319 = vpop.permute.xlu0 %318
        %320 = vrot.lane.b32.xlu0 %v314, 1
        %v321 = vpop.permute.xlu0 %320
        %322 = vrot.lane.b32.xlu0 %v315, 1
        %v323 = vpop.permute.xlu0 %322
        %s324 = sld [smem:[#allocation4 + $0x3]]
        %v325 = vstv %s324
        %v326 = vmul.f32 %v325, %v317
        %v327 = vmul.f32 %v325, %v319
        %v328 = vmul.f32 %v325, %v321
        %v329 = vmul.f32 %v325, %v323
        %v330 = vadd.f32 %v308, %v326
        %v331 = vadd.f32 %v309, %v327
        %v332 = vadd.f32 %v310, %v328
        %v333 = vadd.f32 %v311, %v329
        %s334 = sld [smem:[#allocation4 + $0x4]]
        %v335 = vstv %s334
        %v336 = vmul.f32 %v335, %v312
        %v337 = vmul.f32 %v335, %v313
        %v338 = vmul.f32 %v335, %v314
        %v339 = vmul.f32 %v335, %v315
        %v340 = vadd.f32 %v330, %v336
        %v341 = vadd.f32 %v331, %v337
        %v342 = vadd.f32 %v332, %v338
        %v343 = vadd.f32 %v333, %v339
        %344 = vrot.lane.b32.xlu0 %v312, 127
        %v345 = vpop.permute.xlu0 %344
        %346 = vrot.lane.b32.xlu0 %v313, 127
        %v347 = vpop.permute.xlu0 %346
        %348 = vrot.lane.b32.xlu0 %v314, 127
        %v349 = vpop.permute.xlu0 %348
        %350 = vrot.lane.b32.xlu0 %v315, 127
        %v351 = vpop.permute.xlu0 %350
        %s352 = sld [smem:[#allocation4 + $0x5]]
        %v353 = vstv %s352
        %v354 = vmul.f32 %v353, %v345
        %v355 = vmul.f32 %v353, %v347
        %v356 = vmul.f32 %v353, %v349
        %v357 = vmul.f32 %v353, %v351
        %v358 = vadd.f32 %v340, %v354
        %v359 = vadd.f32 %v341, %v355
        %v360 = vadd.f32 %v342, %v356
        %v361 = vadd.f32 %v343, %v357
        %v362 = vld [vmem:[#allocation2 + $0x9] sm:$0xff]
        %v363 = vld [vmem:[#allocation2 + $0x11] sm:$0xff]
        %v364 = vld [vmem:[#allocation2 + $0x19] sm:$0xff]
        %v365 = vld [vmem:[#allocation2 + $0x21] sm:$0xff]
        %366 = vrot.lane.b32.xlu0 %v362, 1
        %v367 = vpop.permute.xlu0 %366
        %368 = vrot.lane.b32.xlu0 %v363, 1
        %v369 = vpop.permute.xlu0 %368
        %370 = vrot.lane.b32.xlu0 %v364, 1
        %v371 = vpop.permute.xlu0 %370
        %372 = vrot.lane.b32.xlu0 %v365, 1
        %v373 = vpop.permute.xlu0 %372
        %s374 = sld [smem:[#allocation4 + $0x6]]
        %v375 = vstv %s374
        %v376 = vmul.f32 %v375, %v367
        %v377 = vmul.f32 %v375, %v369
        %v378 = vmul.f32 %v375, %v371
        %v379 = vmul.f32 %v375, %v373
        %v380 = vadd.f32 %v358, %v376
        %v381 = vadd.f32 %v359, %v377
        %v382 = vadd.f32 %v360, %v378
        %v383 = vadd.f32 %v361, %v379
        %s384 = sld [smem:[#allocation4 + $0x7]]
        %v385 = vstv %s384
        %v386 = vmul.f32 %v385, %v362
        %v387 = vmul.f32 %v385, %v363
        %v388 = vmul.f32 %v385, %v364
        %v389 = vmul.f32 %v385, %v365
        %v390 = vadd.f32 %v380, %v386
        %v391 = vadd.f32 %v381, %v387
        %v392 = vadd.f32 %v382, %v388
        %v393 = vadd.f32 %v383, %v389
        %394 = vrot.lane.b32.xlu0 %v362, 127
        %v395 = vpop.permute.xlu0 %394
        %396 = vrot.lane.b32.xlu0 %v363, 127
        %v397 = vpop.permute.xlu0 %396
        %398 = vrot.lane.b32.xlu0 %v364, 127
        %v399 = vpop.permute.xlu0 %398
        %400 = vrot.lane.b32.xlu0 %v365, 127
        %v401 = vpop.permute.xlu0 %400
        %s402 = sld [smem:[#allocation4 + $0x8]]
        %v403 = vstv %s402
        %v404 = vmul.f32 %v403, %v395
        %v405 = vmul.f32 %v403, %v397
        %v406 = vmul.f32 %v403, %v399
        %v407 = vmul.f32 %v403, %v401
        %v408 = vadd.f32 %v390, %v404
        %v409 = vadd.f32 %v391, %v405
        %v410 = vadd.f32 %v392, %v406
        %v411 = vadd.f32 %v393, %v407
        %v412 = vld [vmem:[%s251 + $0x7] sm:$0xff]
        %v413 = vld [vmem:[%s251 + $0xf] sm:$0xff]
        %v414 = vld [vmem:[%s251 + $0x17] sm:$0xff]
        %v415 = vld [vmem:[%s251 + $0x1f] sm:$0xff]
        %416 = vrot.lane.b32.xlu0 %v412, 1
        %v417 = vpop.permute.xlu0 %416
        %418 = vrot.lane.b32.xlu0 %v413, 1
        %v419 = vpop.permute.xlu0 %418
        %420 = vrot.lane.b32.xlu0 %v414, 1
        %v421 = vpop.permute.xlu0 %420
        %422 = vrot.lane.b32.xlu0 %v415, 1
        %v423 = vpop.permute.xlu0 %422
        %s424 = sld [smem:[#allocation4 + $0x9]]
        %v425 = vstv %s424
        %v426 = vmul.f32 %v425, %v417
        %v427 = vmul.f32 %v425, %v419
        %v428 = vmul.f32 %v425, %v421
        %v429 = vmul.f32 %v425, %v423
        %v430 = vadd.f32 %v408, %v426
        %v431 = vadd.f32 %v409, %v427
        %v432 = vadd.f32 %v410, %v428
        %v433 = vadd.f32 %v411, %v429
        %s434 = sld [smem:[#allocation4 + $0xa]]
        %v435 = vstv %s434
        %v436 = vmul.f32 %v435, %v412
        %v437 = vmul.f32 %v435, %v413
        %v438 = vmul.f32 %v435, %v414
        %v439 = vmul.f32 %v435, %v415
        %v440 = vadd.f32 %v430, %v436
        %v441 = vadd.f32 %v431, %v437
        %v442 = vadd.f32 %v432, %v438
        %v443 = vadd.f32 %v433, %v439
        %444 = vrot.lane.b32.xlu0 %v412, 127
        %v445 = vpop.permute.xlu0 %444
        %446 = vrot.lane.b32.xlu0 %v413, 127
        %v447 = vpop.permute.xlu0 %446
        %448 = vrot.lane.b32.xlu0 %v414, 127
        %v449 = vpop.permute.xlu0 %448
        %450 = vrot.lane.b32.xlu0 %v415, 127
        %v451 = vpop.permute.xlu0 %450
        %s452 = sld [smem:[#allocation4 + $0xb]]
        %v453 = vstv %s452
        %v454 = vmul.f32 %v453, %v445
        %v455 = vmul.f32 %v453, %v447
        %v456 = vmul.f32 %v453, %v449
        %v457 = vmul.f32 %v453, %v451
        %v458 = vadd.f32 %v440, %v454
        %v459 = vadd.f32 %v441, %v455
        %v460 = vadd.f32 %v442, %v456
        %v461 = vadd.f32 %v443, %v457
        %v462 = vld [vmem:[%s251 + $0x8] sm:$0xff]
        %v463 = vld [vmem:[%s251 + $0x10] sm:$0xff]
        %v464 = vld [vmem:[%s251 + $0x18] sm:$0xff]
        %v465 = vld [vmem:[%s251 + $0x20] sm:$0xff]
        %466 = vrot.lane.b32.xlu0 %v462, 1
        %v467 = vpop.permute.xlu0 %466
        %468 = vrot.lane.b32.xlu0 %v463, 1
        %v469 = vpop.permute.xlu0 %468
        %470 = vrot.lane.b32.xlu0 %v464, 1
        %v471 = vpop.permute.xlu0 %470
        %472 = vrot.lane.b32.xlu0 %v465, 1
        %v473 = vpop.permute.xlu0 %472
        %s474 = sld [smem:[#allocation4 + $0xc]]
        %v475 = vstv %s474
        %v476 = vmul.f32 %v475, %v467
        %v477 = vmul.f32 %v475, %v469
        %v478 = vmul.f32 %v475, %v471
        %v479 = vmul.f32 %v475, %v473
        %v480 = vadd.f32 %v458, %v476
        %v481 = vadd.f32 %v459, %v477
        %v482 = vadd.f32 %v460, %v478
        %v483 = vadd.f32 %v461, %v479
        %s484 = sld [smem:[#allocation4 + $0xd]]
        %v485 = vstv %s484
        %v486 = vmul.f32 %v485, %v462
        %v487 = vmul.f32 %v485, %v463
        %v488 = vmul.f32 %v485, %v464
        %v489 = vmul.f32 %v485, %v465
        %v490 = vadd.f32 %v480, %v486
        %v491 = vadd.f32 %v481, %v487
        %v492 = vadd.f32 %v482, %v488
        %v493 = vadd.f32 %v483, %v489
        %494 = vrot.lane.b32.xlu0 %v462, 127
        %v495 = vpop.permute.xlu0 %494
        %496 = vrot.lane.b32.xlu0 %v463, 127
        %v497 = vpop.permute.xlu0 %496
        %498 = vrot.lane.b32.xlu0 %v464, 127
        %v499 = vpop.permute.xlu0 %498
        %500 = vrot.lane.b32.xlu0 %v465, 127
        %v501 = vpop.permute.xlu0 %500
        %s502 = sld [smem:[#allocation4 + $0xe]]
        %v503 = vstv %s502
        %v504 = vmul.f32 %v503, %v495
        %v505 = vmul.f32 %v503, %v497
        %v506 = vmul.f32 %v503, %v499
        %v507 = vmul.f32 %v503, %v501
        %v508 = vadd.f32 %v490, %v504
        %v509 = vadd.f32 %v491, %v505
        %v510 = vadd.f32 %v492, %v506
        %v511 = vadd.f32 %v493, %v507
        %v512 = vld [vmem:[%s251 + $0x9] sm:$0xff]
        %v513 = vld [vmem:[%s251 + $0x11] sm:$0xff]
        %v514 = vld [vmem:[%s251 + $0x19] sm:$0xff]
        %v515 = vld [vmem:[%s251 + $0x21] sm:$0xff]
        %516 = vrot.lane.b32.xlu0 %v512, 1
        %v517 = vpop.permute.xlu0 %516
        %518 = vrot.lane.b32.xlu0 %v513, 1
        %v519 = vpop.permute.xlu0 %518
        %520 = vrot.lane.b32.xlu0 %v514, 1
        %v521 = vpop.permute.xlu0 %520
        %522 = vrot.lane.b32.xlu0 %v515, 1
        %v523 = vpop.permute.xlu0 %522
        %s524 = sld [smem:[#allocation4 + $0xf]]
        %v525 = vstv %s524
        %v526 = vmul.f32 %v525, %v517
        %v527 = vmul.f32 %v525, %v519
        %v528 = vmul.f32 %v525, %v521
        %v529 = vmul.f32 %v525, %v523
        %v530 = vadd.f32 %v508, %v526
        %v531 = vadd.f32 %v509, %v527
        %v532 = vadd.f32 %v510, %v528
        %v533 = vadd.f32 %v511, %v529
        %s534 = sld [smem:[#allocation4 + $0x10]]
        %v535 = vstv %s534
        %v536 = vmul.f32 %v535, %v512
        %v537 = vmul.f32 %v535, %v513
        %v538 = vmul.f32 %v535, %v514
        %v539 = vmul.f32 %v535, %v515
        %v540 = vadd.f32 %v530, %v536
        %v541 = vadd.f32 %v531, %v537
        %v542 = vadd.f32 %v532, %v538
        %v543 = vadd.f32 %v533, %v539
        %544 = vrot.lane.b32.xlu0 %v512, 127
        %v545 = vpop.permute.xlu0 %544
        %546 = vrot.lane.b32.xlu0 %v513, 127
        %v547 = vpop.permute.xlu0 %546
        %548 = vrot.lane.b32.xlu0 %v514, 127
        %v549 = vpop.permute.xlu0 %548
        %550 = vrot.lane.b32.xlu0 %v515, 127
        %v551 = vpop.permute.xlu0 %550
        %s552 = sld [smem:[#allocation4 + $0x11]]
        %v553 = vstv %s552
        %v554 = vmul.f32 %v553, %v545
        %v555 = vmul.f32 %v553, %v547
        %v556 = vmul.f32 %v553, %v549
        %v557 = vmul.f32 %v553, %v551
        %v558 = vadd.f32 %v540, %v554
        %v559 = vadd.f32 %v541, %v555
        %v560 = vadd.f32 %v542, %v556
        %v561 = vadd.f32 %v543, %v557
        %v562 = vld [vmem:[%s256 + $0x7] sm:$0xff]
        %v563 = vld [vmem:[%s256 + $0xf] sm:$0xff]
        %v564 = vld [vmem:[%s256 + $0x17] sm:$0xff]
        %v565 = vld [vmem:[%s256 + $0x1f] sm:$0xff]
        %566 = vrot.lane.b32.xlu0 %v562, 1
        %v567 = vpop.permute.xlu0 %566
        %568 = vrot.lane.b32.xlu0 %v563, 1
        %v569 = vpop.permute.xlu0 %568
        %570 = vrot.lane.b32.xlu0 %v564, 1
        %v571 = vpop.permute.xlu0 %570
        %572 = vrot.lane.b32.xlu0 %v565, 1
        %v573 = vpop.permute.xlu0 %572
        %s574 = sld [smem:[#allocation4 + $0x12]]
        %v575 = vstv %s574
        %v576 = vmul.f32 %v575, %v567
        %v577 = vmul.f32 %v575, %v569
        %v578 = vmul.f32 %v575, %v571
        %v579 = vmul.f32 %v575, %v573
        %v580 = vadd.f32 %v558, %v576
        %v581 = vadd.f32 %v559, %v577
        %v582 = vadd.f32 %v560, %v578
        %v583 = vadd.f32 %v561, %v579
        %s584 = sld [smem:[#allocation4 + $0x13]]
        %v585 = vstv %s584
        %v586 = vmul.f32 %v585, %v562
        %v587 = vmul.f32 %v585, %v563
        %v588 = vmul.f32 %v585, %v564
        %v589 = vmul.f32 %v585, %v565
        %v590 = vadd.f32 %v580, %v586
        %v591 = vadd.f32 %v581, %v587
        %v592 = vadd.f32 %v582, %v588
        %v593 = vadd.f32 %v583, %v589
        %594 = vrot.lane.b32.xlu0 %v562, 127
        %v595 = vpop.permute.xlu0 %594
        %596 = vrot.lane.b32.xlu0 %v563, 127
        %v597 = vpop.permute.xlu0 %596
        %598 = vrot.lane.b32.xlu0 %v564, 127
        %v599 = vpop.permute.xlu0 %598
        %600 = vrot.lane.b32.xlu0 %v565, 127
        %v601 = vpop.permute.xlu0 %600
        %s602 = sld [smem:[#allocation4 + $0x14]]
        %v603 = vstv %s602
        %v604 = vmul.f32 %v603, %v595
        %v605 = vmul.f32 %v603, %v597
        %v606 = vmul.f32 %v603, %v599
        %v607 = vmul.f32 %v603, %v601
        %v608 = vadd.f32 %v590, %v604
        %v609 = vadd.f32 %v591, %v605
        %v610 = vadd.f32 %v592, %v606
        %v611 = vadd.f32 %v593, %v607
        %v612 = vld [vmem:[%s256 + $0x8] sm:$0xff]
        %v613 = vld [vmem:[%s256 + $0x10] sm:$0xff]
        %v614 = vld [vmem:[%s256 + $0x18] sm:$0xff]
        %v615 = vld [vmem:[%s256 + $0x20] sm:$0xff]
        %616 = vrot.lane.b32.xlu0 %v612, 1
        %v617 = vpop.permute.xlu0 %616
        %618 = vrot.lane.b32.xlu0 %v613, 1
        %v619 = vpop.permute.xlu0 %618
        %620 = vrot.lane.b32.xlu0 %v614, 1
        %v621 = vpop.permute.xlu0 %620
        %622 = vrot.lane.b32.xlu0 %v615, 1
        %v623 = vpop.permute.xlu0 %622
        %s624 = sld [smem:[#allocation4 + $0x15]]
        %v625 = vstv %s624
        %v626 = vmul.f32 %v625, %v617
        %v627 = vmul.f32 %v625, %v619
        %v628 = vmul.f32 %v625, %v621
        %v629 = vmul.f32 %v625, %v623
        %v630 = vadd.f32 %v608, %v626
        %v631 = vadd.f32 %v609, %v627
        %v632 = vadd.f32 %v610, %v628
        %v633 = vadd.f32 %v611, %v629
        %s634 = sld [smem:[#allocation4 + $0x16]]
        %v635 = vstv %s634
        %v636 = vmul.f32 %v635, %v612
        %v637 = vmul.f32 %v635, %v613
        %v638 = vmul.f32 %v635, %v614
        %v639 = vmul.f32 %v635, %v615
        %v640 = vadd.f32 %v630, %v636
        %v641 = vadd.f32 %v631, %v637
        %v642 = vadd.f32 %v632, %v638
        %v643 = vadd.f32 %v633, %v639
        %644 = vrot.lane.b32.xlu0 %v612, 127
        %v645 = vpop.permute.xlu0 %644
        %646 = vrot.lane.b32.xlu0 %v613, 127
        %v647 = vpop.permute.xlu0 %646
        %648 = vrot.lane.b32.xlu0 %v614, 127
        %v649 = vpop.permute.xlu0 %648
        %650 = vrot.lane.b32.xlu0 %v615, 127
        %v651 = vpop.permute.xlu0 %650
        %s652 = sld [smem:[#allocation4 + $0x17]]
        %v653 = vstv %s652
        %v654 = vmul.f32 %v653, %v645
        %v655 = vmul.f32 %v653, %v647
        %v656 = vmul.f32 %v653, %v649
        %v657 = vmul.f32 %v653, %v651
        %v658 = vadd.f32 %v640, %v654
        %v659 = vadd.f32 %v641, %v655
        %v660 = vadd.f32 %v642, %v656
        %v661 = vadd.f32 %v643, %v657
        %v662 = vld [vmem:[%s256 + $0x9] sm:$0xff]
        %v663 = vld [vmem:[%s256 + $0x11] sm:$0xff]
        %v664 = vld [vmem:[%s256 + $0x19] sm:$0xff]
        %v665 = vld [vmem:[%s256 + $0x21] sm:$0xff]
        %666 = vrot.lane.b32.xlu0 %v662, 1
        %v667 = vpop.permute.xlu0 %666
        %668 = vrot.lane.b32.xlu0 %v663, 1
        %v669 = vpop.permute.xlu0 %668
        %670 = vrot.lane.b32.xlu0 %v664, 1
        %v671 = vpop.permute.xlu0 %670
        %672 = vrot.lane.b32.xlu0 %v665, 1
        %v673 = vpop.permute.xlu0 %672
        %s674 = sld [smem:[#allocation4 + $0x18]]
        %v675 = vstv %s674
        %v676 = vmul.f32 %v675, %v667
        %v677 = vmul.f32 %v675, %v669
        %v678 = vmul.f32 %v675, %v671
        %v679 = vmul.f32 %v675, %v673
        %v680 = vadd.f32 %v658, %v676
        %v681 = vadd.f32 %v659, %v677
        %v682 = vadd.f32 %v660, %v678
        %v683 = vadd.f32 %v661, %v679
        %s684 = sld [smem:[#allocation4 + $0x19]]
        %v685 = vstv %s684
        %v686 = vmul.f32 %v685, %v662
        %v687 = vmul.f32 %v685, %v663
        %v688 = vmul.f32 %v685, %v664
        %v689 = vmul.f32 %v685, %v665
        %v690 = vadd.f32 %v680, %v686
        %v691 = vadd.f32 %v681, %v687
        %v692 = vadd.f32 %v682, %v688
        %v693 = vadd.f32 %v683, %v689
        %694 = vrot.lane.b32.xlu0 %v662, 127
        %v695 = vpop.permute.xlu0 %694
        %696 = vrot.lane.b32.xlu0 %v663, 127
        %v697 = vpop.permute.xlu0 %696
        %698 = vrot.lane.b32.xlu0 %v664, 127
        %v699 = vpop.permute.xlu0 %698
        %700 = vrot.lane.b32.xlu0 %v665, 127
        %v701 = vpop.permute.xlu0 %700
        %s702 = sld [smem:[#allocation4 + $0x1a]]
        %v703 = vstv %s702
        %v704 = vmul.f32 %v703, %v695
        %v705 = vmul.f32 %v703, %v697
        %v706 = vmul.f32 %v703, %v699
        %v707 = vmul.f32 %v703, %v701
        %v708 = vadd.f32 %v690, %v704
        %v709 = vadd.f32 %v691, %v705
        %v710 = vadd.f32 %v692, %v706
        %v711 = vadd.f32 %v693, %v707
        %v712 = vld [vmem:[%s261 + $0x7] sm:$0xff]
        %v713 = vld [vmem:[%s261 + $0xf] sm:$0xff]
        %v714 = vld [vmem:[%s261 + $0x17] sm:$0xff]
        %v715 = vld [vmem:[%s261 + $0x1f] sm:$0xff]
        %716 = vrot.lane.b32.xlu0 %v712, 1
        %v717 = vpop.permute.xlu0 %716
        %718 = vrot.lane.b32.xlu0 %v713, 1
        %v719 = vpop.permute.xlu0 %718
        %720 = vrot.lane.b32.xlu0 %v714, 1
        %v721 = vpop.permute.xlu0 %720
        %722 = vrot.lane.b32.xlu0 %v715, 1
        %v723 = vpop.permute.xlu0 %722
        %s724 = sld [smem:[#allocation4 + $0x1b]]
        %v725 = vstv %s724
        %v726 = vmul.f32 %v725, %v717
        %v727 = vmul.f32 %v725, %v719
        %v728 = vmul.f32 %v725, %v721
        %v729 = vmul.f32 %v725, %v723
        %v730 = vadd.f32 %v708, %v726
        %v731 = vadd.f32 %v709, %v727
        %v732 = vadd.f32 %v710, %v728
        %v733 = vadd.f32 %v711, %v729
        %s734 = sld [smem:[#allocation4 + $0x1c]]
        %v735 = vstv %s734
        %v736 = vmul.f32 %v735, %v712
        %v737 = vmul.f32 %v735, %v713
        %v738 = vmul.f32 %v735, %v714
        %v739 = vmul.f32 %v735, %v715
        %v740 = vadd.f32 %v730, %v736
        %v741 = vadd.f32 %v731, %v737
        %v742 = vadd.f32 %v732, %v738
        %v743 = vadd.f32 %v733, %v739
        %744 = vrot.lane.b32.xlu0 %v712, 127
        %v745 = vpop.permute.xlu0 %744
        %746 = vrot.lane.b32.xlu0 %v713, 127
        %v747 = vpop.permute.xlu0 %746
        %748 = vrot.lane.b32.xlu0 %v714, 127
        %v749 = vpop.permute.xlu0 %748
        %750 = vrot.lane.b32.xlu0 %v715, 127
        %v751 = vpop.permute.xlu0 %750
        %s752 = sld [smem:[#allocation4 + $0x1d]]
        %v753 = vstv %s752
        %v754 = vmul.f32 %v753, %v745
        %v755 = vmul.f32 %v753, %v747
        %v756 = vmul.f32 %v753, %v749
        %v757 = vmul.f32 %v753, %v751
        %v758 = vadd.f32 %v740, %v754
        %v759 = vadd.f32 %v741, %v755
        %v760 = vadd.f32 %v742, %v756
        %v761 = vadd.f32 %v743, %v757
        %v762 = vld [vmem:[%s261 + $0x8] sm:$0xff]
        %v763 = vld [vmem:[%s261 + $0x10] sm:$0xff]
        %v764 = vld [vmem:[%s261 + $0x18] sm:$0xff]
        %v765 = vld [vmem:[%s261 + $0x20] sm:$0xff]
        %766 = vrot.lane.b32.xlu0 %v762, 1
        %v767 = vpop.permute.xlu0 %766
        %768 = vrot.lane.b32.xlu0 %v763, 1
        %v769 = vpop.permute.xlu0 %768
        %770 = vrot.lane.b32.xlu0 %v764, 1
        %v771 = vpop.permute.xlu0 %770
        %772 = vrot.lane.b32.xlu0 %v765, 1
        %v773 = vpop.permute.xlu0 %772
        %s774 = sld [smem:[#allocation4 + $0x1e]]
        %v775 = vstv %s774
        %v776 = vmul.f32 %v775, %v767
        %v777 = vmul.f32 %v775, %v769
        %v778 = vmul.f32 %v775, %v771
        %v779 = vmul.f32 %v775, %v773
        %v780 = vadd.f32 %v758, %v776
        %v781 = vadd.f32 %v759, %v777
        %v782 = vadd.f32 %v760, %v778
        %v783 = vadd.f32 %v761, %v779
        %s784 = sld [smem:[#allocation4 + $0x1f]]
        %v785 = vstv %s784
        %v786 = vmul.f32 %v785, %v762
        %v787 = vmul.f32 %v785, %v763
        %v788 = vmul.f32 %v785, %v764
        %v789 = vmul.f32 %v785, %v765
        %v790 = vadd.f32 %v780, %v786
        %v791 = vadd.f32 %v781, %v787
        %v792 = vadd.f32 %v782, %v788
        %v793 = vadd.f32 %v783, %v789
        %794 = vrot.lane.b32.xlu0 %v762, 127
        %v795 = vpop.permute.xlu0 %794
        %796 = vrot.lane.b32.xlu0 %v763, 127
        %v797 = vpop.permute.xlu0 %796
        %798 = vrot.lane.b32.xlu0 %v764, 127
        %v799 = vpop.permute.xlu0 %798
        %800 = vrot.lane.b32.xlu0 %v765, 127
        %v801 = vpop.permute.xlu0 %800
        %s802 = sld [smem:[#allocation4 + $0x20]]
        %v803 = vstv %s802
        %v804 = vmul.f32 %v803, %v795
        %v805 = vmul.f32 %v803, %v797
        %v806 = vmul.f32 %v803, %v799
        %v807 = vmul.f32 %v803, %v801
        %v808 = vadd.f32 %v790, %v804
        %v809 = vadd.f32 %v791, %v805
        %v810 = vadd.f32 %v792, %v806
        %v811 = vadd.f32 %v793, %v807
        %v812 = vld [vmem:[%s261 + $0x9] sm:$0xff]
        %v813 = vld [vmem:[%s261 + $0x11] sm:$0xff]
        %v814 = vld [vmem:[%s261 + $0x19] sm:$0xff]
        %v815 = vld [vmem:[%s261 + $0x21] sm:$0xff]
        %816 = vrot.lane.b32.xlu0 %v812, 1
        %v817 = vpop.permute.xlu0 %816
        %818 = vrot.lane.b32.xlu0 %v813, 1
        %v819 = vpop.permute.xlu0 %818
        %820 = vrot.lane.b32.xlu0 %v814, 1
        %v821 = vpop.permute.xlu0 %820
        %822 = vrot.lane.b32.xlu0 %v815, 1
        %v823 = vpop.permute.xlu0 %822
        %s824 = sld [smem:[#allocation4 + $0x21]]
        %v825 = vstv %s824
        %v826 = vmul.f32 %v825, %v817
        %v827 = vmul.f32 %v825, %v819
        %v828 = vmul.f32 %v825, %v821
        %v829 = vmul.f32 %v825, %v823
        %v830 = vadd.f32 %v808, %v826
        %v831 = vadd.f32 %v809, %v827
        %v832 = vadd.f32 %v810, %v828
        %v833 = vadd.f32 %v811, %v829
        %s834 = sld [smem:[#allocation4 + $0x22]]
        %v835 = vstv %s834
        %v836 = vmul.f32 %v835, %v812
        %v837 = vmul.f32 %v835, %v813
        %v838 = vmul.f32 %v835, %v814
        %v839 = vmul.f32 %v835, %v815
        %v840 = vadd.f32 %v830, %v836
        %v841 = vadd.f32 %v831, %v837
        %v842 = vadd.f32 %v832, %v838
        %v843 = vadd.f32 %v833, %v839
        %844 = vrot.lane.b32.xlu0 %v812, 127
        %v845 = vpop.permute.xlu0 %844
        %846 = vrot.lane.b32.xlu0 %v813, 127
        %v847 = vpop.permute.xlu0 %846
        %848 = vrot.lane.b32.xlu0 %v814, 127
        %v849 = vpop.permute.xlu0 %848
        %850 = vrot.lane.b32.xlu0 %v815, 127
        %v851 = vpop.permute.xlu0 %850
        %s852 = sld [smem:[#allocation4 + $0x23]]
        %v853 = vstv %s852
        %v854 = vmul.f32 %v853, %v845
        %v855 = vmul.f32 %v853, %v847
        %v856 = vmul.f32 %v853, %v849
        %v857 = vmul.f32 %v853, %v851
        %v858 = vadd.f32 %v840, %v854
        %v859 = vadd.f32 %v841, %v855
        %v860 = vadd.f32 %v842, %v856
        %v861 = vadd.f32 %v843, %v857
        %s862 = sld [smem:[#allocation3]]
        %v863 = vstv %s862
        %v864 = vadd.f32 %v858, %v863
        %v865 = vadd.f32 %v859, %v863
        %v866 = vadd.f32 %v860, %v863
        %v867 = vadd.f32 %v861, %v863
        %v868 = vpack.c.bf16 %v865, %v864
        %v869 = vpack.c.bf16 %v867, %v866
        %v872 = vunpack.c.l.b16 %v868
        %v873 = vunpack.c.h.b16 %v868
        %v874 = vunpack.c.l.b16 %v869
        %v875 = vunpack.c.h.b16 %v869
        %v876 = vpack.c.b16 %v872, %v872
        %v877 = vpack.c.b16 %v873, %v873
        %v878 = vpack.c.b16 %v874, %v874
        %v879 = vpack.c.b16 %v875, %v875
        %vm884 = vcmask 257024
        %885 = vst.msk [vmem:[%s201] sm:$0xf] %vm884, %v876
        %886 = vst.msk [vmem:[%s201 + $0x4] sm:$0xf] %vm884, %v877
        %887 = vst.msk [vmem:[%s201 + $0x8] sm:$0xf] %vm884, %v878
        %888 = vst.msk [vmem:[%s201 + $0xc] sm:$0xf] %vm884, %v879
        %s889 = sand.u32 %s98, 1
        %s890 = scalar_lea.sflag [#allocation6], %s889
        %s891 = sand.u32 %s98, 1
        %s892 = smul.addr %s891, 16
        %s893 = scalar_lea.vmem [#allocation9], %s892
        // Predicated region
        $region41: #{grad_block_forward.3} parent=31 // pred_check
          %p894 = pneg %p108
        $region42: #{grad_block_forward.3} parent=31 // pred_check_branch
          %896 = sbr.rel (%p894) target = $region44
        $region43: #{grad_block_forward.3} parent=31 // pred_region
          %s898 = ssub.s32 256, 256
          %899 = vsyncadd %s890, %s898
          %s900 = smul.addr %s22, 4
          %s901 = smul.addr %s900, 64
          %s902 = scalar_lea.hbm %s3, %s901
          %s903 = sshll.u32 %s893, 4
          %s904 = int_to_ptr.vmem [resolvable:$true] %s903
          %909 = dma.vmem_to_hbm [thread:$0]  %s904, 256, %s902, %s890, 64, 64, 4
        $region44: #{grad_block_forward.3} parent=31 // pred_fallthru
          _
      $region32: #{grad_block_forward.3} parent=5 // pred_fallthru
        _
      %p910 = scmp.le.s32.totalorder 2, %s17
      // Predicated region
      $region45: #{grad_block_forward.3} parent=5 // pred_check
        %p911 = pneg %p910
      $region46: #{grad_block_forward.3} parent=5 // pred_check_branch
        %913 = sbr.rel (%p911) target = $region48
      $region47: #{grad_block_forward.3} parent=5 // pred_region
        %s914 = ssub.s32 %s17, 2
        // Predicated region
        $region49: #{grad_block_forward.3} parent=47 // pred_check
          %p915 = pneg %p114
        $region50: #{grad_block_forward.3} parent=47 // pred_check_branch
          %917 = sbr.rel (%p915) target = $region52
        $region51: #{grad_block_forward.3} parent=47 // pred_region
          %s918 = sand.u32 %s99, 1
          %s919 = scalar_lea.sflag [#allocation6], %s918
          %s920 = sand.u32 %s99, 1
          %s921 = smul.addr %s920, 16
          %s922 = scalar_lea.vmem [#allocation9], %s921
          %923 = dma.done %s919, 256
        $region52: #{grad_block_forward.3} parent=47 // pred_fallthru
          _
      $region48: #{grad_block_forward.3} parent=5 // pred_fallthru
        _
    $region6: #{grad_block_forward.3} parent=1 // loop_footer
      %s21 = sadd.s32 1, %s17
    $region7: #{grad_block_forward.3} parent=1 // loop_footer_branch
      %16 = sbr.rel target = $region3
    $region8: #{grad_block_forward.3} parent=1 // loop_exit
      _
    %924 = vsyncpa [#allocation5], 1
    %s925 = scalar_lea.sflag [#allocation5], 1
    %926 = vsyncpa %s925, 1
    %927 = vsyncpa [#allocation6], 1
    %s928 = scalar_lea.sflag [#allocation6], 1
    %929 = vsyncpa %s928, 1
    %930 = vsyncpa [#allocation7], 1
    %s931 = scalar_lea.sflag [#allocation7], 1
    %932 = vsyncpa %s931, 1

// kernel: grad_block_forward.4
$region0: #{grad_block_forward.4}
  #allocation0 [shape = 'u32[]', space=smem, size = 0x4, offset = 0x4, fixed_abs, tag = 'smem constant byte address 0x4 - core index']
  #allocation1 [shape = 'u32[144,128]{1,0:T(1,128)}', space=vmem, size = 0x12000, scoped, tag = 'internal scratch']
  %s0 = inlined_call_operand.vmem [shape: bf16[2,1024], index: 0, kind: input, shape index: {}]
  %s1 = inlined_call_operand.hbm [shape: bf16[1024,32], index: 1, kind: input, shape index: {}]
  %s2 = inlined_call_operand.vmem [shape: f32[2,32], index: 2, kind: input, shape index: {}]
  %s3 = inlined_call_operand.hbm [shape: bf16[32,1024], index: 3, kind: input, shape index: {}]
  %s4 = inlined_call_operand.vmem [shape: bf16[2,1024], index: 4, kind: output, shape index: {}]
  %s5 = sld [smem:[#allocation0]]
  $region34: #{grad_block_forward.4} parent=0
    _
  %s7 = ssub.s32 1, %s5
  %s8 = scalar_select 0, %s7, %s5
  $region1: #{grad_block_forward.4} parent=0
    #allocation2 [shape = 'u8[262144]{0}', space=vmem, size = 0x40000, scoped, tag = 'input window, operand 1, single buffered']
    #allocation3 [shape = 's32[1]{0}', space=sflag, size = 0x4, scoped, tag = 'scoped memory for grad_block_forward.4']
    #allocation4 [shape = 'u8[65536]{0}', space=vmem, size = 0x10000, scoped, tag = 'input window, operand 3, single buffered']
    #allocation5 [shape = 's32[1]{0}', space=sflag, size = 0x4, scoped, tag = 'scoped memory for grad_block_forward.4']
    %9 = vsyncpa [#allocation3], 0
    %10 = vsyncpa [#allocation5], 0
    // Predicated region
    $region2: #{grad_block_forward.4} parent=1 // pred_check
      _
    $region3: #{grad_block_forward.4} parent=1 // pred_check_branch
      %12 = sbr.rel (0) target = $region5
    $region4: #{grad_block_forward.4} parent=1 // pred_region
      _
    $region5: #{grad_block_forward.4} parent=1 // pred_fallthru
      _
    // Predicated region
    $region6: #{grad_block_forward.4} parent=1 // pred_check
      _
    $region7: #{grad_block_forward.4} parent=1 // pred_check_branch
      %14 = sbr.rel (0) target = $region9
    $region8: #{grad_block_forward.4} parent=1 // pred_region
      %s16 = ssub.s32 8192, 8192
      %17 = vsyncadd [#allocation3], %s16
      %s18 = sshll.u32 [#allocation2], 4
      %s19 = int_to_ptr.vmem [resolvable:$true] %s18
      %24 = dma.hbm_to_vmem [thread:$0]  %s1, 8192, %s19, [#allocation3], 64, 64, 4
    $region9: #{grad_block_forward.4} parent=1 // pred_fallthru
      _
    // Predicated region
    $region10: #{grad_block_forward.4} parent=1 // pred_check
      _
    $region11: #{grad_block_forward.4} parent=1 // pred_check_branch
      %26 = sbr.rel (0) target = $region13
    $region12: #{grad_block_forward.4} parent=1 // pred_region
      _
    $region13: #{grad_block_forward.4} parent=1 // pred_fallthru
      _
    // Predicated region
    $region14: #{grad_block_forward.4} parent=1 // pred_check
      _
    $region15: #{grad_block_forward.4} parent=1 // pred_check_branch
      %28 = sbr.rel (0) target = $region17
    $region16: #{grad_block_forward.4} parent=1 // pred_region
      %s30 = ssub.s32 2048, 2048
      %31 = vsyncadd [#allocation5], %s30
      %s32 = sshll.u32 [#allocation4], 4
      %s33 = int_to_ptr.vmem [resolvable:$true] %s32
      %38 = dma.hbm_to_vmem [thread:$0]  %s3, 2048, %s33, [#allocation5], 512, 512, 32
    $region17: #{grad_block_forward.4} parent=1 // pred_fallthru
      _
    // Predicated region
    $region18: #{grad_block_forward.4} parent=1 // pred_check
      _
    $region19: #{grad_block_forward.4} parent=1 // pred_check_branch
      %40 = sbr.rel (0) target = $region21
    $region20: #{grad_block_forward.4} parent=1 // pred_region
      %41 = dma.done [#allocation3], 8192
    $region21: #{grad_block_forward.4} parent=1 // pred_fallthru
      _
    // Predicated region
    $region22: #{grad_block_forward.4} parent=1 // pred_check
      _
    $region23: #{grad_block_forward.4} parent=1 // pred_check_branch
      %43 = sbr.rel (0) target = $region25
    $region24: #{grad_block_forward.4} parent=1 // pred_region
      %44 = dma.done [#allocation5], 2048
    $region25: #{grad_block_forward.4} parent=1 // pred_fallthru
      _
    %v46 = vld [vmem:[%s0] sm:$0xff]
    %v47 = vld [vmem:[#allocation2] sm:$0xf]
    %v48 = vld [vmem:[#allocation2 + $0x4] sm:$0xf]
    %v49 = vld [vmem:[#allocation2 + $0x8] sm:$0xf]
    %v50 = vld [vmem:[#allocation2 + $0xc] sm:$0xf]
    %v51 = vld [vmem:[#allocation2 + $0x10] sm:$0xf]
    %v52 = vld [vmem:[#allocation2 + $0x14] sm:$0xf]
    %v53 = vld [vmem:[#allocation2 + $0x18] sm:$0xf]
    %v54 = vld [vmem:[#allocation2 + $0x1c] sm:$0xf]
    %v55 = vld [vmem:[#allocation2 + $0x20] sm:$0xf]
    %v56 = vld [vmem:[#allocation2 + $0x24] sm:$0xf]
    %v57 = vld [vmem:[#allocation2 + $0x28] sm:$0xf]
    %v58 = vld [vmem:[#allocation2 + $0x2c] sm:$0xf]
    %v59 = vld [vmem:[#allocation2 + $0x30] sm:$0xf]
    %v60 = vld [vmem:[#allocation2 + $0x34] sm:$0xf]
    %v61 = vld [vmem:[#allocation2 + $0x38] sm:$0xf]
    %v62 = vld [vmem:[#allocation2 + $0x3c] sm:$0xf]
    %v63 = vld [vmem:[#allocation2 + $0x40] sm:$0xf]
    %v64 = vld [vmem:[#allocation2 + $0x44] sm:$0xf]
    %v65 = vld [vmem:[#allocation2 + $0x48] sm:$0xf]
    %v66 = vld [vmem:[#allocation2 + $0x4c] sm:$0xf]
    %v67 = vld [vmem:[#allocation2 + $0x50] sm:$0xf]
    %v68 = vld [vmem:[#allocation2 + $0x54] sm:$0xf]
    %v69 = vld [vmem:[#allocation2 + $0x58] sm:$0xf]
    %v70 = vld [vmem:[#allocation2 + $0x5c] sm:$0xf]
    %v71 = vld [vmem:[#allocation2 + $0x60] sm:$0xf]
    %v72 = vld [vmem:[#allocation2 + $0x64] sm:$0xf]
    %v73 = vld [vmem:[#allocation2 + $0x68] sm:$0xf]
    %v74 = vld [vmem:[#allocation2 + $0x6c] sm:$0xf]
    %v75 = vld [vmem:[#allocation2 + $0x70] sm:$0xf]
    %v76 = vld [vmem:[#allocation2 + $0x74] sm:$0xf]
    %v77 = vld [vmem:[#allocation2 + $0x78] sm:$0xf]
    %v78 = vld [vmem:[#allocation2 + $0x7c] sm:$0xf]
    %v79 = vld [vmem:[#allocation2 + $0x80] sm:$0xf]
    %v80 = vld [vmem:[#allocation2 + $0x84] sm:$0xf]
    %v81 = vld [vmem:[#allocation2 + $0x88] sm:$0xf]
    %v82 = vld [vmem:[#allocation2 + $0x8c] sm:$0xf]
    %v83 = vld [vmem:[#allocation2 + $0x90] sm:$0xf]
    %v84 = vld [vmem:[#allocation2 + $0x94] sm:$0xf]
    %v85 = vld [vmem:[#allocation2 + $0x98] sm:$0xf]
    %v86 = vld [vmem:[#allocation2 + $0x9c] sm:$0xf]
    %v87 = vld [vmem:[#allocation2 + $0xa0] sm:$0xf]
    %v88 = vld [vmem:[#allocation2 + $0xa4] sm:$0xf]
    %v89 = vld [vmem:[#allocation2 + $0xa8] sm:$0xf]
    %v90 = vld [vmem:[#allocation2 + $0xac] sm:$0xf]
    %v91 = vld [vmem:[#allocation2 + $0xb0] sm:$0xf]
    %v92 = vld [vmem:[#allocation2 + $0xb4] sm:$0xf]
    %v93 = vld [vmem:[#allocation2 + $0xb8] sm:$0xf]
    %v94 = vld [vmem:[#allocation2 + $0xbc] sm:$0xf]
    %v95 = vld [vmem:[#allocation2 + $0xc0] sm:$0xf]
    %v96 = vld [vmem:[#allocation2 + $0xc4] sm:$0xf]
    %v97 = vld [vmem:[#allocation2 + $0xc8] sm:$0xf]
    %v98 = vld [vmem:[#allocation2 + $0xcc] sm:$0xf]
    %v99 = vld [vmem:[#allocation2 + $0xd0] sm:$0xf]
    %v100 = vld [vmem:[#allocation2 + $0xd4] sm:$0xf]
    %v101 = vld [vmem:[#allocation2 + $0xd8] sm:$0xf]
    %v102 = vld [vmem:[#allocation2 + $0xdc] sm:$0xf]
    %v103 = vld [vmem:[#allocation2 + $0xe0] sm:$0xf]
    %v104 = vld [vmem:[#allocation2 + $0xe4] sm:$0xf]
    %v105 = vld [vmem:[#allocation2 + $0xe8] sm:$0xf]
    %v106 = vld [vmem:[#allocation2 + $0xec] sm:$0xf]
    %v107 = vld [vmem:[#allocation2 + $0xf0] sm:$0xf]
    %v108 = vld [vmem:[#allocation2 + $0xf4] sm:$0xf]
    %v109 = vld [vmem:[#allocation2 + $0xf8] sm:$0xf]
    %v110 = vld [vmem:[#allocation2 + $0xfc] sm:$0xf]
    %v111 = vld [vmem:[#allocation2 + $0x100] sm:$0xf]
    %v112 = vld [vmem:[#allocation2 + $0x104] sm:$0xf]
    %v113 = vld [vmem:[#allocation2 + $0x108] sm:$0xf]
    %v114 = vld [vmem:[#allocation2 + $0x10c] sm:$0xf]
    %v115 = vld [vmem:[#allocation2 + $0x110] sm:$0xf]
    %v116 = vld [vmem:[#allocation2 + $0x114] sm:$0xf]
    %v117 = vld [vmem:[#allocation2 + $0x118] sm:$0xf]
    %v118 = vld [vmem:[#allocation2 + $0x11c] sm:$0xf]
    %v119 = vld [vmem:[#allocation2 + $0x120] sm:$0xf]
    %v120 = vld [vmem:[#allocation2 + $0x124] sm:$0xf]
    %v121 = vld [vmem:[#allocation2 + $0x128] sm:$0xf]
    %v122 = vld [vmem:[#allocation2 + $0x12c] sm:$0xf]
    %v123 = vld [vmem:[#allocation2 + $0x130] sm:$0xf]
    %v124 = vld [vmem:[#allocation2 + $0x134] sm:$0xf]
    %v125 = vld [vmem:[#allocation2 + $0x138] sm:$0xf]
    %v126 = vld [vmem:[#allocation2 + $0x13c] sm:$0xf]
    %v127 = vld [vmem:[#allocation2 + $0x140] sm:$0xf]
    %v128 = vld [vmem:[#allocation2 + $0x144] sm:$0xf]
    %v129 = vld [vmem:[#allocation2 + $0x148] sm:$0xf]
    %v130 = vld [vmem:[#allocation2 + $0x14c] sm:$0xf]
    %v131 = vld [vmem:[#allocation2 + $0x150] sm:$0xf]
    %v132 = vld [vmem:[#allocation2 + $0x154] sm:$0xf]
    %v133 = vld [vmem:[#allocation2 + $0x158] sm:$0xf]
    %v134 = vld [vmem:[#allocation2 + $0x15c] sm:$0xf]
    %v135 = vld [vmem:[#allocation2 + $0x160] sm:$0xf]
    %v136 = vld [vmem:[#allocation2 + $0x164] sm:$0xf]
    %v137 = vld [vmem:[#allocation2 + $0x168] sm:$0xf]
    %v138 = vld [vmem:[#allocation2 + $0x16c] sm:$0xf]
    %v139 = vld [vmem:[#allocation2 + $0x170] sm:$0xf]
    %v140 = vld [vmem:[#allocation2 + $0x174] sm:$0xf]
    %v141 = vld [vmem:[#allocation2 + $0x178] sm:$0xf]
    %v142 = vld [vmem:[#allocation2 + $0x17c] sm:$0xf]
    %v143 = vld [vmem:[#allocation2 + $0x180] sm:$0xf]
    %v144 = vld [vmem:[#allocation2 + $0x184] sm:$0xf]
    %v145 = vld [vmem:[#allocation2 + $0x188] sm:$0xf]
    %v146 = vld [vmem:[#allocation2 + $0x18c] sm:$0xf]
    %v147 = vld [vmem:[#allocation2 + $0x190] sm:$0xf]
    %v148 = vld [vmem:[#allocation2 + $0x194] sm:$0xf]
    %v149 = vld [vmem:[#allocation2 + $0x198] sm:$0xf]
    %v150 = vld [vmem:[#allocation2 + $0x19c] sm:$0xf]
    %v151 = vld [vmem:[#allocation2 + $0x1a0] sm:$0xf]
    %v152 = vld [vmem:[#allocation2 + $0x1a4] sm:$0xf]
    %v153 = vld [vmem:[#allocation2 + $0x1a8] sm:$0xf]
    %v154 = vld [vmem:[#allocation2 + $0x1ac] sm:$0xf]
    %v155 = vld [vmem:[#allocation2 + $0x1b0] sm:$0xf]
    %v156 = vld [vmem:[#allocation2 + $0x1b4] sm:$0xf]
    %v157 = vld [vmem:[#allocation2 + $0x1b8] sm:$0xf]
    %v158 = vld [vmem:[#allocation2 + $0x1bc] sm:$0xf]
    %v159 = vld [vmem:[#allocation2 + $0x1c0] sm:$0xf]
    %v160 = vld [vmem:[#allocation2 + $0x1c4] sm:$0xf]
    %v161 = vld [vmem:[#allocation2 + $0x1c8] sm:$0xf]
    %v162 = vld [vmem:[#allocation2 + $0x1cc] sm:$0xf]
    %v163 = vld [vmem:[#allocation2 + $0x1d0] sm:$0xf]
    %v164 = vld [vmem:[#allocation2 + $0x1d4] sm:$0xf]
    %v165 = vld [vmem:[#allocation2 + $0x1d8] sm:$0xf]
    %v166 = vld [vmem:[#allocation2 + $0x1dc] sm:$0xf]
    %v167 = vld [vmem:[#allocation2 + $0x1e0] sm:$0xf]
    %v168 = vld [vmem:[#allocation2 + $0x1e4] sm:$0xf]
    %v169 = vld [vmem:[#allocation2 + $0x1e8] sm:$0xf]
    %v170 = vld [vmem:[#allocation2 + $0x1ec] sm:$0xf]
    %v171 = vld [vmem:[#allocation2 + $0x1f0] sm:$0xf]
    %v172 = vld [vmem:[#allocation2 + $0x1f4] sm:$0xf]
    %v173 = vld [vmem:[#allocation2 + $0x1f8] sm:$0xf]
    %v174 = vld [vmem:[#allocation2 + $0x1fc] sm:$0xf]
    %v176 = vcombine.high %v46, %v46
    %v178 = vunpack.c.l.s4 1966171168
    %v179 = vunpack.c.0.s8 %v178
    %v180 = vlaneseq
    %v181 = vshrl.u32 %v180, 7
    %v182 = vsub.s32 %v179, %v181
    %v183 = vrot.slane %v46, %v182
    %v185 = vunpack.c.l.s4 1966171168
    %v186 = vunpack.c.0.s8 %v185
    %v187 = vlaneseq
    %v188 = vshrl.u32 %v187, 7
    %v189 = vsub.s32 %v186, %v188
    %v190 = vrot.slane %v176, %v189
    %v191 = vcombine.high %v183, %v183
    %v192 = vcombine.high %v190, %v190
    %v194 = vunpack.c.l.s4 1966171168
    %v195 = vunpack.c.0.s8 %v194
    %v196 = vlaneseq
    %v197 = vshrl.u32 %v196, 7
    %v198 = vsub.s32 %v195, %v197
    %v199 = vrot.slane %v183, %v198
    %v201 = vunpack.c.l.s4 1966171168
    %v202 = vunpack.c.0.s8 %v201
    %v203 = vlaneseq
    %v204 = vshrl.u32 %v203, 7
    %v205 = vsub.s32 %v202, %v204
    %v206 = vrot.slane %v190, %v205
    %v208 = vunpack.c.l.s4 1966171168
    %v209 = vunpack.c.0.s8 %v208
    %v210 = vlaneseq
    %v211 = vshrl.u32 %v210, 7
    %v212 = vsub.s32 %v209, %v211
    %v213 = vrot.slane %v191, %v212
    %v215 = vunpack.c.l.s4 1966171168
    %v216 = vunpack.c.0.s8 %v215
    %v217 = vlaneseq
    %v218 = vshrl.u32 %v217, 7
    %v219 = vsub.s32 %v216, %v218
    %v220 = vrot.slane %v192, %v219
    %v221 = vcombine.high %v199, %v199
    %v222 = vcombine.high %v206, %v206
    %v223 = vcombine.high %v213, %v213
    %v224 = vcombine.high %v220, %v220
    %v361 = vunpack.c.l.b16 %v47
    %v362 = vunpack.c.l.b16 %v48
    %v363 = vunpack.c.l.b16 %v49
    %v364 = vunpack.c.l.b16 %v50
    %v365 = vunpack.c.l.b16 %v51
    %v366 = vunpack.c.l.b16 %v52
    %v367 = vunpack.c.l.b16 %v53
    %v368 = vunpack.c.l.b16 %v54
    %v369 = vunpack.c.l.b16 %v55
    %v370 = vunpack.c.l.b16 %v56
    %v371 = vunpack.c.l.b16 %v57
    %v372 = vunpack.c.l.b16 %v58
    %v373 = vunpack.c.l.b16 %v59
    %v374 = vunpack.c.l.b16 %v60
    %v375 = vunpack.c.l.b16 %v61
    %v376 = vunpack.c.l.b16 %v62
    %v377 = vunpack.c.l.b16 %v63
    %v378 = vunpack.c.l.b16 %v64
    %v379 = vunpack.c.l.b16 %v65
    %v380 = vunpack.c.l.b16 %v66
    %v381 = vunpack.c.l.b16 %v67
    %v382 = vunpack.c.l.b16 %v68
    %v383 = vunpack.c.l.b16 %v69
    %v384 = vunpack.c.l.b16 %v70
    %v385 = vunpack.c.l.b16 %v71
    %v386 = vunpack.c.l.b16 %v72
    %v387 = vunpack.c.l.b16 %v73
    %v388 = vunpack.c.l.b16 %v74
    %v389 = vunpack.c.l.b16 %v75
    %v390 = vunpack.c.l.b16 %v76
    %v391 = vunpack.c.l.b16 %v77
    %v392 = vunpack.c.l.b16 %v78
    %v393 = vunpack.c.l.b16 %v79
    %v394 = vunpack.c.l.b16 %v80
    %v395 = vunpack.c.l.b16 %v81
    %v396 = vunpack.c.l.b16 %v82
    %v397 = vunpack.c.l.b16 %v83
    %v398 = vunpack.c.l.b16 %v84
    %v399 = vunpack.c.l.b16 %v85
    %v400 = vunpack.c.l.b16 %v86
    %v401 = vunpack.c.l.b16 %v87
    %v402 = vunpack.c.l.b16 %v88
    %v403 = vunpack.c.l.b16 %v89
    %v404 = vunpack.c.l.b16 %v90
    %v405 = vunpack.c.l.b16 %v91
    %v406 = vunpack.c.l.b16 %v92
    %v407 = vunpack.c.l.b16 %v93
    %v408 = vunpack.c.l.b16 %v94
    %v409 = vunpack.c.l.b16 %v95
    %v410 = vunpack.c.l.b16 %v96
    %v411 = vunpack.c.l.b16 %v97
    %v412 = vunpack.c.l.b16 %v98
    %v413 = vunpack.c.l.b16 %v99
    %v414 = vunpack.c.l.b16 %v100
    %v415 = vunpack.c.l.b16 %v101
    %v416 = vunpack.c.l.b16 %v102
    %v417 = vunpack.c.l.b16 %v103
    %v418 = vunpack.c.l.b16 %v104
    %v419 = vunpack.c.l.b16 %v105
    %v420 = vunpack.c.l.b16 %v106
    %v421 = vunpack.c.l.b16 %v107
    %v422 = vunpack.c.l.b16 %v108
    %v423 = vunpack.c.l.b16 %v109
    %v424 = vunpack.c.l.b16 %v110
    %v425 = vunpack.c.l.b16 %v111
    %v426 = vunpack.c.l.b16 %v112
    %v427 = vunpack.c.l.b16 %v113
    %v428 = vunpack.c.l.b16 %v114
    %v429 = vunpack.c.l.b16 %v115
    %v430 = vunpack.c.l.b16 %v116
    %v431 = vunpack.c.l.b16 %v117
    %v432 = vunpack.c.l.b16 %v118
    %v433 = vunpack.c.l.b16 %v119
    %v434 = vunpack.c.l.b16 %v120
    %v435 = vunpack.c.l.b16 %v121
    %v436 = vunpack.c.l.b16 %v122
    %v437 = vunpack.c.l.b16 %v123
    %v438 = vunpack.c.l.b16 %v124
    %v439 = vunpack.c.l.b16 %v125
    %v440 = vunpack.c.l.b16 %v126
    %v441 = vunpack.c.l.b16 %v127
    %v442 = vunpack.c.l.b16 %v128
    %v443 = vunpack.c.l.b16 %v129
    %v444 = vunpack.c.l.b16 %v130
    %v445 = vunpack.c.l.b16 %v131
    %v446 = vunpack.c.l.b16 %v132
    %v447 = vunpack.c.l.b16 %v133
    %v448 = vunpack.c.l.b16 %v134
    %v449 = vunpack.c.l.b16 %v135
    %v450 = vunpack.c.l.b16 %v136
    %v451 = vunpack.c.l.b16 %v137
    %v452 = vunpack.c.l.b16 %v138
    %v453 = vunpack.c.l.b16 %v139
    %v454 = vunpack.c.l.b16 %v140
    %v455 = vunpack.c.l.b16 %v141
    %v456 = vunpack.c.l.b16 %v142
    %v457 = vunpack.c.l.b16 %v143
    %v458 = vunpack.c.l.b16 %v144
    %v459 = vunpack.c.l.b16 %v145
    %v460 = vunpack.c.l.b16 %v146
    %v461 = vunpack.c.l.b16 %v147
    %v462 = vunpack.c.l.b16 %v148
    %v463 = vunpack.c.l.b16 %v149
    %v464 = vunpack.c.l.b16 %v150
    %v465 = vunpack.c.l.b16 %v151
    %v466 = vunpack.c.l.b16 %v152
    %v467 = vunpack.c.l.b16 %v153
    %v468 = vunpack.c.l.b16 %v154
    %v469 = vunpack.c.l.b16 %v155
    %v470 = vunpack.c.l.b16 %v156
    %v471 = vunpack.c.l.b16 %v157
    %v472 = vunpack.c.l.b16 %v158
    %v473 = vunpack.c.l.b16 %v159
    %v474 = vunpack.c.l.b16 %v160
    %v475 = vunpack.c.l.b16 %v161
    %v476 = vunpack.c.l.b16 %v162
    %v477 = vunpack.c.l.b16 %v163
    %v478 = vunpack.c.l.b16 %v164
    %v479 = vunpack.c.l.b16 %v165
    %v480 = vunpack.c.l.b16 %v166
    %v481 = vunpack.c.l.b16 %v167
    %v482 = vunpack.c.l.b16 %v168
    %v483 = vunpack.c.l.b16 %v169
    %v484 = vunpack.c.l.b16 %v170
    %v485 = vunpack.c.l.b16 %v171
    %v486 = vunpack.c.l.b16 %v172
    %v487 = vunpack.c.l.b16 %v173
    %v488 = vunpack.c.l.b16 %v174
    %v489 = vpack.c.b16 %v362, %v361
    %v490 = vpack.c.b16 %v364, %v363
    %v491 = vpack.c.b16 %v366, %v365
    %v492 = vpack.c.b16 %v368, %v367
    %v493 = vpack.c.b16 %v370, %v369
    %v494 = vpack.c.b16 %v372, %v371
    %v495 = vpack.c.b16 %v374, %v373
    %v496 = vpack.c.b16 %v376, %v375
    %v497 = vpack.c.b16 %v378, %v377
    %v498 = vpack.c.b16 %v380, %v379
    %v499 = vpack.c.b16 %v382, %v381
    %v500 = vpack.c.b16 %v384, %v383
    %v501 = vpack.c.b16 %v386, %v385
    %v502 = vpack.c.b16 %v388, %v387
    %v503 = vpack.c.b16 %v390, %v389
    %v504 = vpack.c.b16 %v392, %v391
    %v505 = vpack.c.b16 %v394, %v393
    %v506 = vpack.c.b16 %v396, %v395
    %v507 = vpack.c.b16 %v398, %v397
    %v508 = vpack.c.b16 %v400, %v399
    %v509 = vpack.c.b16 %v402, %v401
    %v510 = vpack.c.b16 %v404, %v403
    %v511 = vpack.c.b16 %v406, %v405
    %v512 = vpack.c.b16 %v408, %v407
    %v513 = vpack.c.b16 %v410, %v409
    %v514 = vpack.c.b16 %v412, %v411
    %v515 = vpack.c.b16 %v414, %v413
    %v516 = vpack.c.b16 %v416, %v415
    %v517 = vpack.c.b16 %v418, %v417
    %v518 = vpack.c.b16 %v420, %v419
    %v519 = vpack.c.b16 %v422, %v421
    %v520 = vpack.c.b16 %v424, %v423
    %v521 = vpack.c.b16 %v426, %v425
    %v522 = vpack.c.b16 %v428, %v427
    %v523 = vpack.c.b16 %v430, %v429
    %v524 = vpack.c.b16 %v432, %v431
    %v525 = vpack.c.b16 %v434, %v433
    %v526 = vpack.c.b16 %v436, %v435
    %v527 = vpack.c.b16 %v438, %v437
    %v528 = vpack.c.b16 %v440, %v439
    %v529 = vpack.c.b16 %v442, %v441
    %v530 = vpack.c.b16 %v444, %v443
    %v531 = vpack.c.b16 %v446, %v445
    %v532 = vpack.c.b16 %v448, %v447
    %v533 = vpack.c.b16 %v450, %v449
    %v534 = vpack.c.b16 %v452, %v451
    %v535 = vpack.c.b16 %v454, %v453
    %v536 = vpack.c.b16 %v456, %v455
    %v537 = vpack.c.b16 %v458, %v457
    %v538 = vpack.c.b16 %v460, %v459
    %v539 = vpack.c.b16 %v462, %v461
    %v540 = vpack.c.b16 %v464, %v463
    %v541 = vpack.c.b16 %v466, %v465
    %v542 = vpack.c.b16 %v468, %v467
    %v543 = vpack.c.b16 %v470, %v469
    %v544 = vpack.c.b16 %v472, %v471
    %v545 = vpack.c.b16 %v474, %v473
    %v546 = vpack.c.b16 %v476, %v475
    %v547 = vpack.c.b16 %v478, %v477
    %v548 = vpack.c.b16 %v480, %v479
    %v549 = vpack.c.b16 %v482, %v481
    %v550 = vpack.c.b16 %v484, %v483
    %v551 = vpack.c.b16 %v486, %v485
    %v552 = vpack.c.b16 %v488, %v487
    %617 = vmatprep.subr.bf16.mxu0 0
    %618 = vmatpush1.bf16.msra.mxu0 %v489
    %619 = vmatprep.subr.bf16.mxu0 0
    %620 = vmatpush1.bf16.msra.mxu0 %v490
    %621 = vmatprep.subr.bf16.mxu0 0
    %622 = vmatpush1.bf16.msra.mxu0 %v491
    %623 = vmatprep.subr.bf16.mxu0 0
    %624 = vmatpush1.bf16.msra.mxu0 %v492
    %625 = vmatprep.subr.bf16.mxu0 0
    %626 = vmatpush1.bf16.msra.mxu0 %v493
    %627 = vmatprep.subr.bf16.mxu0 0
    %628 = vmatpush1.bf16.msra.mxu0 %v494
    %629 = vmatprep.subr.bf16.mxu0 0
    %630 = vmatpush1.bf16.msra.mxu0 %v495
    %631 = vmatprep.subr.bf16.mxu0 0
    %632 = vmatpush1.bf16.msra.mxu0 %v496
    %633 = vmatprep.subr.bf16.mxu0 0
    %634 = vmatpush1.bf16.msra.mxu0 %v497
    %635 = vmatprep.subr.bf16.mxu0 0
    %636 = vmatpush1.bf16.msra.mxu0 %v498
    %637 = vmatprep.subr.bf16.mxu0 0
    %638 = vmatpush1.bf16.msra.mxu0 %v499
    %639 = vmatprep.subr.bf16.mxu0 0
    %640 = vmatpush1.bf16.msra.mxu0 %v500
    %641 = vmatprep.subr.bf16.mxu0 0
    %642 = vmatpush1.bf16.msra.mxu0 %v501
    %643 = vmatprep.subr.bf16.mxu0 0
    %644 = vmatpush1.bf16.msra.mxu0 %v502
    %645 = vmatprep.subr.bf16.mxu0 0
    %646 = vmatpush1.bf16.msra.mxu0 %v503
    %647 = vmatprep.subr.bf16.mxu0 0
    %648 = vmatpush1.bf16.msra.mxu0 %v504
    %649 = vmatprep.mubr.bf16.mxu0 %v213
    %650 = vmatmul.mubr.bf16.gmra.mrb[0].mxu0 %v199
    %v651 = vpop.f32.mrb[0].mxu0
    %v652 = vadd.f32 0.0, %v651
    %v653 = vpop.f32.mrb[0].mxu0
    %v654 = vpop.f32.mrb[0].mxu0
    %v655 = vpop.f32.mrb[0].mxu0
    %656 = vdwg.mxu0
    %657 = vmatprep.subr.bf16.mxu0 0
    %658 = vmatpush1.bf16.msra.mxu0 %v505
    %659 = vmatprep.subr.bf16.mxu0 0
    %660 = vmatpush1.bf16.msra.mxu0 %v506
    %661 = vmatprep.subr.bf16.mxu0 0
    %662 = vmatpush1.bf16.msra.mxu0 %v507
    %663 = vmatprep.subr.bf16.mxu0 0
    %664 = vmatpush1.bf16.msra.mxu0 %v508
    %665 = vmatprep.subr.bf16.mxu0 0
    %666 = vmatpush1.bf16.msra.mxu0 %v509
    %667 = vmatprep.subr.bf16.mxu0 0
    %668 = vmatpush1.bf16.msra.mxu0 %v510
    %669 = vmatprep.subr.bf16.mxu0 0
    %670 = vmatpush1.bf16.msra.mxu0 %v511
    %671 = vmatprep.subr.bf16.mxu0 0
    %672 = vmatpush1.bf16.msra.mxu0 %v512
    %673 = vmatprep.subr.bf16.mxu0 0
    %674 = vmatpush1.bf16.msra.mxu0 %v513
    %675 = vmatprep.subr.bf16.mxu0 0
    %676 = vmatpush1.bf16.msra.mxu0 %v514
    %677 = vmatprep.subr.bf16.mxu0 0
    %678 = vmatpush1.bf16.msra.mxu0 %v515
    %679 = vmatprep.subr.bf16.mxu0 0
    %680 = vmatpush1.bf16.msra.mxu0 %v516
    %681 = vmatprep.subr.bf16.mxu0 0
    %682 = vmatpush1.bf16.msra.mxu0 %v517
    %683 = vmatprep.subr.bf16.mxu0 0
    %684 = vmatpush1.bf16.msra.mxu0 %v518
    %685 = vmatprep.subr.bf16.mxu0 0
    %686 = vmatpush1.bf16.msra.mxu0 %v519
    %687 = vmatprep.subr.bf16.mxu0 0
    %688 = vmatpush1.bf16.msra.mxu0 %v520
    %689 = vmatprep.mubr.bf16.mxu0 %v223
    %690 = vmatmul.mubr.bf16.gmra.mrb[0].mxu0 %v221
    %v691 = vpop.f32.mrb[0].mxu0
    %v692 = vadd.f32 %v652, %v691
    %v693 = vpop.f32.mrb[0].mxu0
    %v694 = vpop.f32.mrb[0].mxu0
    %v695 = vpop.f32.mrb[0].mxu0
    %696 = vdwg.mxu0
    %697 = vmatprep.subr.bf16.mxu0 0
    %698 = vmatpush1.bf16.msra.mxu0 %v521
    %699 = vmatprep.subr.bf16.mxu0 0
    %700 = vmatpush1.bf16.msra.mxu0 %v522
    %701 = vmatprep.subr.bf16.mxu0 0
    %702 = vmatpush1.bf16.msra.mxu0 %v523
    %703 = vmatprep.subr.bf16.mxu0 0
    %704 = vmatpush1.bf16.msra.mxu0 %v524
    %705 = vmatprep.subr.bf16.mxu0 0
    %706 = vmatpush1.bf16.msra.mxu0 %v525
    %707 = vmatprep.subr.bf16.mxu0 0
    %708 = vmatpush1.bf16.msra.mxu0 %v526
    %709 = vmatprep.subr.bf16.mxu0 0
    %710 = vmatpush1.bf16.msra.mxu0 %v527
    %711 = vmatprep.subr.bf16.mxu0 0
    %712 = vmatpush1.bf16.msra.mxu0 %v528
    %713 = vmatprep.subr.bf16.mxu0 0
    %714 = vmatpush1.bf16.msra.mxu0 %v529
    %715 = vmatprep.subr.bf16.mxu0 0
    %716 = vmatpush1.bf16.msra.mxu0 %v530
    %717 = vmatprep.subr.bf16.mxu0 0
    %718 = vmatpush1.bf16.msra.mxu0 %v531
    %719 = vmatprep.subr.bf16.mxu0 0
    %720 = vmatpush1.bf16.msra.mxu0 %v532
    %721 = vmatprep.subr.bf16.mxu0 0
    %722 = vmatpush1.bf16.msra.mxu0 %v533
    %723 = vmatprep.subr.bf16.mxu0 0
    %724 = vmatpush1.bf16.msra.mxu0 %v534
    %725 = vmatprep.subr.bf16.mxu0 0
    %726 = vmatpush1.bf16.msra.mxu0 %v535
    %727 = vmatprep.subr.bf16.mxu0 0
    %728 = vmatpush1.bf16.msra.mxu0 %v536
    %729 = vmatprep.mubr.bf16.mxu0 %v220
    %730 = vmatmul.mubr.bf16.gmra.mrb[0].mxu0 %v206
    %v731 = vpop.f32.mrb[0].mxu0
    %v732 = vadd.f32 %v692, %v731
    %v733 = vpop.f32.mrb[0].mxu0
    %v734 = vpop.f32.mrb[0].mxu0
    %v735 = vpop.f32.mrb[0].mxu0
    %736 = vdwg.mxu0
    %737 = vmatprep.subr.bf16.mxu0 0
    %738 = vmatpush1.bf16.msra.mxu0 %v537
    %739 = vmatprep.subr.bf16.mxu0 0
    %740 = vmatpush1.bf16.msra.mxu0 %v538
    %741 = vmatprep.subr.bf16.mxu0 0
    %742 = vmatpush1.bf16.msra.mxu0 %v539
    %743 = vmatprep.subr.bf16.mxu0 0
    %744 = vmatpush1.bf16.msra.mxu0 %v540
    %745 = vmatprep.subr.bf16.mxu0 0
    %746 = vmatpush1.bf16.msra.mxu0 %v541
    %747 = vmatprep.subr.bf16.mxu0 0
    %748 = vmatpush1.bf16.msra.mxu0 %v542
    %749 = vmatprep.subr.bf16.mxu0 0
    %750 = vmatpush1.bf16.msra.mxu0 %v543
    %751 = vmatprep.subr.bf16.mxu0 0
    %752 = vmatpush1.bf16.msra.mxu0 %v544
    %753 = vmatprep.subr.bf16.mxu0 0
    %754 = vmatpush1.bf16.msra.mxu0 %v545
    %755 = vmatprep.subr.bf16.mxu0 0
    %756 = vmatpush1.bf16.msra.mxu0 %v546
    %757 = vmatprep.subr.bf16.mxu0 0
    %758 = vmatpush1.bf16.msra.mxu0 %v547
    %759 = vmatprep.subr.bf16.mxu0 0
    %760 = vmatpush1.bf16.msra.mxu0 %v548
    %761 = vmatprep.subr.bf16.mxu0 0
    %762 = vmatpush1.bf16.msra.mxu0 %v549
    %763 = vmatprep.subr.bf16.mxu0 0
    %764 = vmatpush1.bf16.msra.mxu0 %v550
    %765 = vmatprep.subr.bf16.mxu0 0
    %766 = vmatpush1.bf16.msra.mxu0 %v551
    %767 = vmatprep.subr.bf16.mxu0 0
    %768 = vmatpush1.bf16.msra.mxu0 %v552
    %769 = vmatprep.mubr.bf16.mxu0 %v224
    %770 = vmatmul.mubr.bf16.gmra.mrb[0].mxu0 %v222
    %v771 = vpop.f32.mrb[0].mxu0
    %v772 = vadd.f32 %v732, %v771
    %v773 = vpop.f32.mrb[0].mxu0
    %v774 = vpop.f32.mrb[0].mxu0
    %v775 = vpop.f32.mrb[0].mxu0
    %776 = vdwg.mxu0
    %v777 = vld [vmem:[%s2] sm:$0x3]
    %v778 = vsub.f32 %v777, %v772
    %v779 = vpack.c.bf16 %v778, %v778
    %v780 = vld [vmem:[#allocation4] sm:$0xff]
    %v781 = vld [vmem:[#allocation4 + $0x8] sm:$0xff]
    %v782 = vld [vmem:[#allocation4 + $0x10] sm:$0xff]
    %v783 = vld [vmem:[#allocation4 + $0x18] sm:$0xff]
    %v784 = vld [vmem:[#allocation4 + $0x20] sm:$0xff]
    %v785 = vld [vmem:[#allocation4 + $0x28] sm:$0xff]
    %v786 = vld [vmem:[#allocation4 + $0x30] sm:$0xff]
    %v787 = vld [vmem:[#allocation4 + $0x38] sm:$0xff]
    %v788 = vld [vmem:[#allocation4 + $0x40] sm:$0xff]
    %v789 = vld [vmem:[#allocation4 + $0x48] sm:$0xff]
    %v790 = vld [vmem:[#allocation4 + $0x50] sm:$0xff]
    %v791 = vld [vmem:[#allocation4 + $0x58] sm:$0xff]
    %v792 = vld [vmem:[#allocation4 + $0x60] sm:$0xff]
    %v793 = vld [vmem:[#allocation4 + $0x68] sm:$0xff]
    %v794 = vld [vmem:[#allocation4 + $0x70] sm:$0xff]
    %v795 = vld [vmem:[#allocation4 + $0x78] sm:$0xff]
    %v812 = vunpack.c.l.b16 %v780
    %v813 = vunpack.c.h.b16 %v780
    %v814 = vunpack.c.l.b16 %v781
    %v815 = vunpack.c.h.b16 %v781
    %v816 = vunpack.c.l.b16 %v782
    %v817 = vunpack.c.h.b16 %v782
    %v818 = vunpack.c.l.b16 %v783
    %v819 = vunpack.c.h.b16 %v783
    %v820 = vunpack.c.l.b16 %v784
    %v821 = vunpack.c.h.b16 %v784
    %v822 = vunpack.c.l.b16 %v785
    %v823 = vunpack.c.h.b16 %v785
    %v824 = vunpack.c.l.b16 %v786
    %v825 = vunpack.c.h.b16 %v786
    %v826 = vunpack.c.l.b16 %v787
    %v827 = vunpack.c.h.b16 %v787
    %v828 = vunpack.c.l.b16 %v788
    %v829 = vunpack.c.h.b16 %v788
    %v830 = vunpack.c.l.b16 %v789
    %v831 = vunpack.c.h.b16 %v789
    %v832 = vunpack.c.l.b16 %v790
    %v833 = vunpack.c.h.b16 %v790
    %v834 = vunpack.c.l.b16 %v791
    %v835 = vunpack.c.h.b16 %v791
    %v836 = vunpack.c.l.b16 %v792
    %v837 = vunpack.c.h.b16 %v792
    %v838 = vunpack.c.l.b16 %v793
    %v839 = vunpack.c.h.b16 %v793
    %v840 = vunpack.c.l.b16 %v794
    %v841 = vunpack.c.h.b16 %v794
    %v842 = vunpack.c.l.b16 %v795
    %v843 = vunpack.c.h.b16 %v795
    %v844 = vpack.c.b16 %v820, %v812
    %v845 = vpack.c.b16 %v821, %v813
    %v846 = vpack.c.b16 %v822, %v814
    %v847 = vpack.c.b16 %v823, %v815
    %v848 = vpack.c.b16 %v824, %v816
    %v849 = vpack.c.b16 %v825, %v817
    %v850 = vpack.c.b16 %v826, %v818
    %v851 = vpack.c.b16 %v827, %v819
    %v852 = vpack.c.b16 %v836, %v828
    %v853 = vpack.c.b16 %v837, %v829
    %v854 = vpack.c.b16 %v838, %v830
    %v855 = vpack.c.b16 %v839, %v831
    %v856 = vpack.c.b16 %v840, %v832
    %v857 = vpack.c.b16 %v841, %v833
    %v858 = vpack.c.b16 %v842, %v834
    %v859 = vpack.c.b16 %v843, %v835
    %vm876 = vcmask 261120
    %v878 = vsel %vm876, %v779, 0
    %880 = vmatprep.subr.bf16.mxu0 %v845
    %881 = vmatpush1.bf16.msra.mxu0 %v844
    %882 = vmatprep.subr.bf16.mxu0 %v853
    %883 = vmatpush1.bf16.msra.mxu0 %v852
    %884 = vmatprep.subr.bf16.mxu0 0
    %885 = vmatpush1.bf16.msra.mxu0 0
    %886 = vmatprep.subr.bf16.mxu0 0
    %887 = vmatpush1.bf16.msra.mxu0 0
    %888 = vmatprep.subr.bf16.mxu0 0
    %889 = vmatpush1.bf16.msra.mxu0 0
    %890 = vmatprep.subr.bf16.mxu0 0
    %891 = vmatpush1.bf16.msra.mxu0 0
    %892 = vmatprep.subr.bf16.mxu0 0
    %893 = vmatpush1.bf16.msra.mxu0 0
    %894 = vmatprep.subr.bf16.mxu0 0
    %895 = vmatpush1.bf16.msra.mxu0 0
    %896 = vmatprep.subr.bf16.mxu0 0
    %897 = vmatpush1.bf16.msra.mxu0 0
    %898 = vmatprep.subr.bf16.mxu0 0
    %899 = vmatpush1.bf16.msra.mxu0 0
    %900 = vmatprep.subr.bf16.mxu0 0
    %901 = vmatpush1.bf16.msra.mxu0 0
    %902 = vmatprep.subr.bf16.mxu0 0
    %903 = vmatpush1.bf16.msra.mxu0 0
    %904 = vmatprep.subr.bf16.mxu0 0
    %905 = vmatpush1.bf16.msra.mxu0 0
    %906 = vmatprep.subr.bf16.mxu0 0
    %907 = vmatpush1.bf16.msra.mxu0 0
    %908 = vmatprep.subr.bf16.mxu0 0
    %909 = vmatpush1.bf16.msra.mxu0 0
    %910 = vmatprep.subr.bf16.mxu0 0
    %911 = vmatpush1.bf16.msra.mxu0 0
    %912 = vmatprep.mubr.bf16.mxu0 0
    %913 = vmatmul.mubr.bf16.gmra.mrb[0].mxu0 %v878
    %v914 = vpop.f32.mrb[0].mxu0
    %v915 = vadd.f32 0.0, %v914
    %v916 = vpop.f32.mrb[0].mxu0
    %v917 = vadd.f32 0.0, %v916
    %v918 = vpop.f32.mrb[0].mxu0
    %v919 = vpop.f32.mrb[0].mxu0
    %920 = vdwg.mxu0
    %921 = vmatprep.subr.bf16.mxu0 %v847
    %922 = vmatpush1.bf16.msra.mxu0 %v846
    %923 = vmatprep.subr.bf16.mxu0 %v855
    %924 = vmatpush1.bf16.msra.mxu0 %v854
    %925 = vmatprep.subr.bf16.mxu0 0
    %926 = vmatpush1.bf16.msra.mxu0 0
    %927 = vmatprep.subr.bf16.mxu0 0
    %928 = vmatpush1.bf16.msra.mxu0 0
    %929 = vmatprep.subr.bf16.mxu0 0
    %930 = vmatpush1.bf16.msra.mxu0 0
    %931 = vmatprep.subr.bf16.mxu0 0
    %932 = vmatpush1.bf16.msra.mxu0 0
    %933 = vmatprep.subr.bf16.mxu0 0
    %934 = vmatpush1.bf16.msra.mxu0 0
    %935 = vmatprep.subr.bf16.mxu0 0
    %936 = vmatpush1.bf16.msra.mxu0 0
    %937 = vmatprep.subr.bf16.mxu0 0
    %938 = vmatpush1.bf16.msra.mxu0 0
    %939 = vmatprep.subr.bf16.mxu0 0
    %940 = vmatpush1.bf16.msra.mxu0 0
    %941 = vmatprep.subr.bf16.mxu0 0
    %942 = vmatpush1.bf16.msra.mxu0 0
    %943 = vmatprep.subr.bf16.mxu0 0
    %944 = vmatpush1.bf16.msra.mxu0 0
    %945 = vmatprep.subr.bf16.mxu0 0
    %946 = vmatpush1.bf16.msra.mxu0 0
    %947 = vmatprep.subr.bf16.mxu0 0
    %948 = vmatpush1.bf16.msra.mxu0 0
    %949 = vmatprep.subr.bf16.mxu0 0
    %950 = vmatpush1.bf16.msra.mxu0 0
    %951 = vmatprep.subr.bf16.mxu0 0
    %952 = vmatpush1.bf16.msra.mxu0 0
    %953 = vmatprep.mubr.bf16.mxu0 0
    %954 = vmatmul.mubr.bf16.gmra.mrb[0].mxu0 %v878
    %v955 = vpop.f32.mrb[0].mxu0
    %v956 = vadd.f32 0.0, %v955
    %v957 = vpop.f32.mrb[0].mxu0
    %v958 = vadd.f32 0.0, %v957
    %v959 = vpop.f32.mrb[0].mxu0
    %v960 = vpop.f32.mrb[0].mxu0
    %961 = vdwg.mxu0
    %962 = vmatprep.subr.bf16.mxu0 %v849
    %963 = vmatpush1.bf16.msra.mxu0 %v848
    %964 = vmatprep.subr.bf16.mxu0 %v857
    %965 = vmatpush1.bf16.msra.mxu0 %v856
    %966 = vmatprep.subr.bf16.mxu0 0
    %967 = vmatpush1.bf16.msra.mxu0 0
    %968 = vmatprep.subr.bf16.mxu0 0
    %969 = vmatpush1.bf16.msra.mxu0 0
    %970 = vmatprep.subr.bf16.mxu0 0
    %971 = vmatpush1.bf16.msra.mxu0 0
    %972 = vmatprep.subr.bf16.mxu0 0
    %973 = vmatpush1.bf16.msra.mxu0 0
    %974 = vmatprep.subr.bf16.mxu0 0
    %975 = vmatpush1.bf16.msra.mxu0 0
    %976 = vmatprep.subr.bf16.mxu0 0
    %977 = vmatpush1.bf16.msra.mxu0 0
    %978 = vmatprep.subr.bf16.mxu0 0
    %979 = vmatpush1.bf16.msra.mxu0 0
    %980 = vmatprep.subr.bf16.mxu0 0
    %981 = vmatpush1.bf16.msra.mxu0 0
    %982 = vmatprep.subr.bf16.mxu0 0
    %983 = vmatpush1.bf16.msra.mxu0 0
    %984 = vmatprep.subr.bf16.mxu0 0
    %985 = vmatpush1.bf16.msra.mxu0 0
    %986 = vmatprep.subr.bf16.mxu0 0
    %987 = vmatpush1.bf16.msra.mxu0 0
    %988 = vmatprep.subr.bf16.mxu0 0
    %989 = vmatpush1.bf16.msra.mxu0 0
    %990 = vmatprep.subr.bf16.mxu0 0
    %991 = vmatpush1.bf16.msra.mxu0 0
    %992 = vmatprep.subr.bf16.mxu0 0
    %993 = vmatpush1.bf16.msra.mxu0 0
    %994 = vmatprep.mubr.bf16.mxu0 0
    %995 = vmatmul.mubr.bf16.gmra.mrb[0].mxu0 %v878
    %v996 = vpop.f32.mrb[0].mxu0
    %v997 = vadd.f32 0.0, %v996
    %v998 = vpop.f32.mrb[0].mxu0
    %v999 = vadd.f32 0.0, %v998
    %v1000 = vpop.f32.mrb[0].mxu0
    %v1001 = vpop.f32.mrb[0].mxu0
    %1002 = vdwg.mxu0
    %1003 = vmatprep.subr.bf16.mxu0 %v851
    %1004 = vmatpush1.bf16.msra.mxu0 %v850
    %1005 = vmatprep.subr.bf16.mxu0 %v859
    %1006 = vmatpush1.bf16.msra.mxu0 %v858
    %1007 = vmatprep.subr.bf16.mxu0 0
    %1008 = vmatpush1.bf16.msra.mxu0 0
    %1009 = vmatprep.subr.bf16.mxu0 0
    %1010 = vmatpush1.bf16.msra.mxu0 0
    %1011 = vmatprep.subr.bf16.mxu0 0
    %1012 = vmatpush1.bf16.msra.mxu0 0
    %1013 = vmatprep.subr.bf16.mxu0 0
    %1014 = vmatpush1.bf16.msra.mxu0 0
    %1015 = vmatprep.subr.bf16.mxu0 0
    %1016 = vmatpush1.bf16.msra.mxu0 0
    %1017 = vmatprep.subr.bf16.mxu0 0
    %1018 = vmatpush1.bf16.msra.mxu0 0
    %1019 = vmatprep.subr.bf16.mxu0 0
    %1020 = vmatpush1.bf16.msra.mxu0 0
    %1021 = vmatprep.subr.bf16.mxu0 0
    %1022 = vmatpush1.bf16.msra.mxu0 0
    %1023 = vmatprep.subr.bf16.mxu0 0
    %1024 = vmatpush1.bf16.msra.mxu0 0
    %1025 = vmatprep.subr.bf16.mxu0 0
    %1026 = vmatpush1.bf16.msra.mxu0 0
    %1027 = vmatprep.subr.bf16.mxu0 0
    %1028 = vmatpush1.bf16.msra.mxu0 0
    %1029 = vmatprep.subr.bf16.mxu0 0
    %1030 = vmatpush1.bf16.msra.mxu0 0
    %1031 = vmatprep.subr.bf16.mxu0 0
    %1032 = vmatpush1.bf16.msra.mxu0 0
    %1033 = vmatprep.subr.bf16.mxu0 0
    %1034 = vmatpush1.bf16.msra.mxu0 0
    %1035 = vmatprep.mubr.bf16.mxu0 0
    %1036 = vmatmul.mubr.bf16.gmra.mrb[0].mxu0 %v878
    %v1037 = vpop.f32.mrb[0].mxu0
    %v1038 = vadd.f32 0.0, %v1037
    %v1039 = vpop.f32.mrb[0].mxu0
    %v1040 = vadd.f32 0.0, %v1039
    %v1041 = vpop.f32.mrb[0].mxu0
    %v1042 = vpop.f32.mrb[0].mxu0
    %1043 = vdwg.mxu0
    %v1044 = vpack.c.bf16 %v915, %v915
    %v1045 = vpack.c.bf16 %v917, %v917
    %v1046 = vpack.c.bf16 %v956, %v956
    %v1047 = vpack.c.bf16 %v958, %v958
    %v1048 = vpack.c.bf16 %v997, %v997
    %v1049 = vpack.c.bf16 %v999, %v999
    %v1050 = vpack.c.bf16 %v1038, %v1038
    %v1051 = vpack.c.bf16 %v1040, %v1040
    %v1060 = vcombine.low %v1044, %v1045
    %v1061 = vcombine.low %v1046, %v1047
    %v1062 = vcombine.low %v1048, %v1049
    %v1063 = vcombine.low %v1050, %v1051
    %v1065 = vunpack.c.l.s4 1966171168
    %v1066 = vunpack.c.0.s8 %v1065
    %v1067 = vlaneseq
    %v1068 = vshrl.u32 %v1067, 7
    %v1069 = vsub.s32 %v1066, %v1068
    %v1070 = vrot.slane %v1060, %v1069
    %v1072 = vunpack.c.l.s4 1966171168
    %v1073 = vunpack.c.0.s8 %v1072
    %v1074 = vlaneseq
    %v1075 = vshrl.u32 %v1074, 7
    %v1076 = vsub.s32 %v1073, %v1075
    %v1077 = vrot.slane %v1061, %v1076
    %v1079 = vunpack.c.l.s4 1966171168
    %v1080 = vunpack.c.0.s8 %v1079
    %v1081 = vlaneseq
    %v1082 = vshrl.u32 %v1081, 7
    %v1083 = vsub.s32 %v1080, %v1082
    %v1084 = vrot.slane %v1062, %v1083
    %v1086 = vunpack.c.l.s4 1966171168
    %v1087 = vunpack.c.0.s8 %v1086
    %v1088 = vlaneseq
    %v1089 = vshrl.u32 %v1088, 7
    %v1090 = vsub.s32 %v1087, %v1089
    %v1091 = vrot.slane %v1063, %v1090
    %v1092 = vcombine.low %v1070, %v1077
    %v1093 = vcombine.low %v1084, %v1091
    %v1095 = vunpack.c.l.s4 1966171168
    %v1096 = vunpack.c.0.s8 %v1095
    %v1097 = vlaneseq
    %v1098 = vshrl.u32 %v1097, 7
    %v1099 = vsub.s32 %v1096, %v1098
    %v1100 = vrot.slane %v1092, %v1099
    %v1102 = vunpack.c.l.s4 1966171168
    %v1103 = vunpack.c.0.s8 %v1102
    %v1104 = vlaneseq
    %v1105 = vshrl.u32 %v1104, 7
    %v1106 = vsub.s32 %v1103, %v1105
    %v1107 = vrot.slane %v1093, %v1106
    %v1108 = vcombine.low %v1100, %v1107
    %1110 = vst [vmem:[%s4] sm:$0xff] %v1108
    // Predicated region
    $region26: #{grad_block_forward.4} parent=1 // pred_check
      _
    $region27: #{grad_block_forward.4} parent=1 // pred_check_branch
      %1112 = sbr.rel (0) target = $region29
    $region28: #{grad_block_forward.4} parent=1 // pred_region
      _
    $region29: #{grad_block_forward.4} parent=1 // pred_fallthru
      _
    // Predicated region
    $region30: #{grad_block_forward.4} parent=1 // pred_check
      _
    $region31: #{grad_block_forward.4} parent=1 // pred_check_branch
      %1114 = sbr.rel (0) target = $region33
    $region32: #{grad_block_forward.4} parent=1 // pred_region
      _
    $region33: #{grad_block_forward.4} parent=1 // pred_fallthru
      _
    %1115 = vsyncpa [#allocation3], 1
    %1116 = vsyncpa [#allocation5], 1

// kernel: grad_block_forward.5
$region0: #{grad_block_forward.5}
  #allocation0 [shape = 'u32[]', space=smem, size = 0x4, offset = 0x4, fixed_abs, tag = 'smem constant byte address 0x4 - core index']
  #allocation1 [shape = 'u32[144,128]{1,0:T(1,128)}', space=vmem, size = 0x12000, scoped, tag = 'internal scratch']
  #allocation2 [shape = 'f32[4,48,128]{2,1,0:T(8,128)}', space=vmem, size = 0x18000, scoped, tag = 'scratch operand']
  %s0 = inlined_call_operand.hbm [shape: f32[36], index: 0, kind: input, shape index: {}]
  %s1 = inlined_call_operand.hbm [shape: f32[4], index: 1, kind: input, shape index: {}]
  %s2 = inlined_call_operand.hbm [shape: f32[144], index: 2, kind: input, shape index: {}]
  %s3 = inlined_call_operand.hbm [shape: f32[4], index: 3, kind: input, shape index: {}]
  %s4 = inlined_call_operand.hbm [shape: f32[144], index: 4, kind: input, shape index: {}]
  %s5 = inlined_call_operand.hbm [shape: f32[4], index: 5, kind: input, shape index: {}]
  %s6 = inlined_call_operand.hbm [shape: bf16[2,1,32,32], index: 6, kind: input, shape index: {}]
  %s7 = inlined_call_operand.hbm [shape: f32[2,4,32,32], index: 7, kind: input, shape index: {}]
  %s8 = inlined_call_operand.hbm [shape: f32[2,4,32,32], index: 8, kind: output, shape index: {}]
  %s9 = sld [smem:[#allocation0]]
  $region97: #{grad_block_forward.5} parent=0
    _
  %s11 = ssub.s32 1, %s9
  %s12 = scalar_select 0, %s11, %s9
  $region1: #{grad_block_forward.5} parent=0
    #allocation3 [shape = 'u8[512]{0}', space=smem, size = 0x200, scoped, tag = 'input window, operand 0, single buffered']
    #allocation4 [shape = 's32[2]{0}', space=sflag, size = 0x8, scoped, tag = 'scoped memory for grad_block_forward.5']
    #allocation5 [shape = 's32[2]{0}', space=sflag, size = 0x8, scoped, tag = 'scoped memory for grad_block_forward.5']
    #allocation6 [shape = 's32[2]{0}', space=sflag, size = 0x8, scoped, tag = 'scoped memory for grad_block_forward.5']
    #allocation7 [shape = 'u8[512]{0}', space=smem, size = 0x200, scoped, tag = 'input window, operand 1, single buffered']
    #allocation8 [shape = 's32[1]{0}', space=sflag, size = 0x4, scoped, tag = 'scoped memory for grad_block_forward.5']
    #allocation9 [shape = 'u8[1024]{0}', space=smem, size = 0x400, scoped, tag = 'input window, operand 2, single buffered']
    #allocation10 [shape = 'u8[512]{0}', space=smem, size = 0x200, scoped, tag = 'input window, operand 3, single buffered']
    #allocation11 [shape = 's32[1]{0}', space=sflag, size = 0x4, scoped, tag = 'scoped memory for grad_block_forward.5']
    #allocation12 [shape = 'u8[1024]{0}', space=smem, size = 0x400, scoped, tag = 'input window, operand 4, single buffered']
    #allocation13 [shape = 'u8[512]{0}', space=smem, size = 0x200, scoped, tag = 'input window, operand 5, single buffered']
    #allocation14 [shape = 's32[1]{0}', space=sflag, size = 0x4, scoped, tag = 'scoped memory for grad_block_forward.5']
    #allocation15 [shape = 'u8[16384]{0}', space=vmem, size = 0x4000, scoped, tag = 'input window, operand 6']
    #allocation16 [shape = 'u8[131072]{0}', space=vmem, size = 0x20000, scoped, tag = 'input window, operand 7']
    #allocation17 [shape = 's32[2]{0}', space=sflag, size = 0x8, scoped, tag = 'scoped memory for grad_block_forward.5']
    #allocation18 [shape = 'u8[131072]{0}', space=vmem, size = 0x20000, scoped, tag = 'output window, operand 0']
    %13 = vsyncpa [#allocation6], 0
    %14 = vsyncpa [#allocation8], 0
    %15 = vsyncpa [#allocation11], 0
    %16 = vsyncpa [#allocation14], 0
    %17 = vsyncpa [#allocation4], 0
    %s18 = scalar_lea.sflag [#allocation4], 1
    %19 = vsyncpa %s18, 0
    %20 = vsyncpa [#allocation17], 0
    %s21 = scalar_lea.sflag [#allocation17], 1
    %22 = vsyncpa %s21, 0
    %23 = vsyncpa [#allocation5], 0
    %s24 = scalar_lea.sflag [#allocation5], 1
    %25 = vsyncpa %s24, 0
    loop: start=0, step=1, limit=4
    $region2: #{grad_block_forward.5} parent=1 // loop_pre_header
      _
    $region3: #{grad_block_forward.5} parent=1 // loop_header
      %s27 = sphi 0, %s31
      %p28 = scmp.ge.s32.totalorder %s27, 4
      %s35 = sphi 0, %s35
      %s37 = sphi 0, %s35
      %s38 = sphi 0, %s37
      %s52 = sphi 0, %s38
      %s56 = sphi 0, %s56
      %s58 = sphi 0, %s56
      %s59 = sphi 0, %s58
      %s73 = sphi 0, %s59
      %s77 = sphi 0, %s77
      %s79 = sphi 0, %s77
      %s80 = sphi 0, %s79
      %s94 = sphi 0, %s80
      %s98 = sphi 0, %s98
      %s100 = sphi 0, %s98
      %s101 = sphi 0, %s100
      %s115 = sphi 0, %s101
      %s119 = sphi 0, %s119
      %s121 = sphi 0, %s119
      %s122 = sphi 0, %s121
      %s136 = sphi 0, %s122
      %s140 = sphi 0, %s140
      %s142 = sphi 0, %s140
      %s143 = sphi 0, %s142
      %s157 = sphi 0, %s143
      %s163 = sphi 0, %s165
      %s166 = sphi 0, %s163
      %s167 = sphi 0, %s166
      %s183 = sphi 0, %s167
      %s189 = sphi 0, %s191
      %s192 = sphi 0, %s189
      %s193 = sphi 0, %s192
      %s209 = sphi 0, %s193
      %s215 = sphi 0, %s217
      %s218 = sphi 0, %s215
      %s219 = sphi 0, %s218
      %s235 = sphi 0, %s219
    $region4: #{grad_block_forward.5} parent=1 // loop_header_branch
      %30 = sbr.rel (%p28) target = $region8
    $region5: #{grad_block_forward.5} parent=1 // loop_body
      %s32 = ssub.s32 %s27, 1
      %s33 = ssub.s32 %s27, 2
      %s34 = sadd.s32 %s27, 1
      %s36 = sadd.s32 %s35, 1
      %p39 = scmp.eq.s32.totalorder %s27, 1
      %p40 = scmp.ne.s32.totalorder %s35, %s37
      %p41 = scmp.eq.s32.totalorder %s27, 0
      %p42 = por %p40, %p41
      %p43 = scmp.ne.s32.totalorder %s35, %s37
      %p44 = scmp.eq.s32.totalorder %s32, 1
      %p45 = por %p43, %p44
      %p46 = scmp.ne.s32.totalorder %s37, %s38
      %p47 = scmp.eq.s32.totalorder %s32, 0
      %p48 = por %p46, %p47
      %p49 = scmp.ne.s32.totalorder %s37, %s38
      %p50 = scmp.eq.s32.totalorder %s33, 1
      %p51 = por %p49, %p50
      %p53 = scmp.ne.s32.totalorder %s38, %s52
      %p54 = scmp.eq.s32.totalorder %s33, 0
      %p55 = por %p53, %p54
      %s57 = sadd.s32 %s56, 1
      %p60 = scmp.eq.s32.totalorder %s27, 1
      %p61 = scmp.ne.s32.totalorder %s56, %s58
      %p62 = scmp.eq.s32.totalorder %s27, 0
      %p63 = por %p61, %p62
      %p64 = scmp.ne.s32.totalorder %s56, %s58
      %p65 = scmp.eq.s32.totalorder %s32, 1
      %p66 = por %p64, %p65
      %p67 = scmp.ne.s32.totalorder %s58, %s59
      %p68 = scmp.eq.s32.totalorder %s32, 0
      %p69 = por %p67, %p68
      %p70 = scmp.ne.s32.totalorder %s58, %s59
      %p71 = scmp.eq.s32.totalorder %s33, 1
      %p72 = por %p70, %p71
      %p74 = scmp.ne.s32.totalorder %s59, %s73
      %p75 = scmp.eq.s32.totalorder %s33, 0
      %p76 = por %p74, %p75
      %s78 = sadd.s32 %s77, 1
      %p81 = scmp.eq.s32.totalorder %s27, 1
      %p82 = scmp.ne.s32.totalorder %s77, %s79
      %p83 = scmp.eq.s32.totalorder %s27, 0
      %p84 = por %p82, %p83
      %p85 = scmp.ne.s32.totalorder %s77, %s79
      %p86 = scmp.eq.s32.totalorder %s32, 1
      %p87 = por %p85, %p86
      %p88 = scmp.ne.s32.totalorder %s79, %s80
      %p89 = scmp.eq.s32.totalorder %s32, 0
      %p90 = por %p88, %p89
      %p91 = scmp.ne.s32.totalorder %s79, %s80
      %p92 = scmp.eq.s32.totalorder %s33, 1
      %p93 = por %p91, %p92
      %p95 = scmp.ne.s32.totalorder %s80, %s94
      %p96 = scmp.eq.s32.totalorder %s33, 0
      %p97 = por %p95, %p96
      %s99 = sadd.s32 %s98, 1
      %p102 = scmp.eq.s32.totalorder %s27, 1
      %p103 = scmp.ne.s32.totalorder %s98, %s100
      %p104 = scmp.eq.s32.totalorder %s27, 0
      %p105 = por %p103, %p104
      %p106 = scmp.ne.s32.totalorder %s98, %s100
      %p107 = scmp.eq.s32.totalorder %s32, 1
      %p108 = por %p106, %p107
      %p109 = scmp.ne.s32.totalorder %s100, %s101
      %p110 = scmp.eq.s32.totalorder %s32, 0
      %p111 = por %p109, %p110
      %p112 = scmp.ne.s32.totalorder %s100, %s101
      %p113 = scmp.eq.s32.totalorder %s33, 1
      %p114 = por %p112, %p113
      %p116 = scmp.ne.s32.totalorder %s101, %s115
      %p117 = scmp.eq.s32.totalorder %s33, 0
      %p118 = por %p116, %p117
      %s120 = sadd.s32 %s119, 1
      %p123 = scmp.eq.s32.totalorder %s27, 1
      %p124 = scmp.ne.s32.totalorder %s119, %s121
      %p125 = scmp.eq.s32.totalorder %s27, 0
      %p126 = por %p124, %p125
      %p127 = scmp.ne.s32.totalorder %s119, %s121
      %p128 = scmp.eq.s32.totalorder %s32, 1
      %p129 = por %p127, %p128
      %p130 = scmp.ne.s32.totalorder %s121, %s122
      %p131 = scmp.eq.s32.totalorder %s32, 0
      %p132 = por %p130, %p131
      %p133 = scmp.ne.s32.totalorder %s121, %s122
      %p134 = scmp.eq.s32.totalorder %s33, 1
      %p135 = por %p133, %p134
      %p137 = scmp.ne.s32.totalorder %s122, %s136
      %p138 = scmp.eq.s32.totalorder %s33, 0
      %p139 = por %p137, %p138
      %s141 = sadd.s32 %s140, 1
      %p144 = scmp.eq.s32.totalorder %s27, 1
      %p145 = scmp.ne.s32.totalorder %s140, %s142
      %p146 = scmp.eq.s32.totalorder %s27, 0
      %p147 = por %p145, %p146
      %p148 = scmp.ne.s32.totalorder %s140, %s142
      %p149 = scmp.eq.s32.totalorder %s32, 1
      %p150 = por %p148, %p149
      %p151 = scmp.ne.s32.totalorder %s142, %s143
      %p152 = scmp.eq.s32.totalorder %s32, 0
      %p153 = por %p151, %p152
      %p154 = scmp.ne.s32.totalorder %s142, %s143
      %p155 = scmp.eq.s32.totalorder %s33, 1
      %p156 = por %p154, %p155
      %p158 = scmp.ne.s32.totalorder %s143, %s157
      %p159 = scmp.eq.s32.totalorder %s33, 0
      %p160 = por %p158, %p159
      %s161 = ssub.s32 %s27, %s34
      %p162 = scmp.eq.s32.totalorder %s161, 0
      %s164 = sadd.s32 %s163, 1
      %s165 = scalar_select %p162, %s163, %s164
      %p168 = pneg %p162
      %p169 = scmp.eq.s32.totalorder %s27, 1
      %p170 = por %p168, %p169
      %p171 = scmp.ne.s32.totalorder %s163, %s166
      %p172 = scmp.eq.s32.totalorder %s27, 0
      %p173 = por %p171, %p172
      %p174 = scmp.ne.s32.totalorder %s163, %s166
      %p175 = scmp.eq.s32.totalorder %s32, 1
      %p176 = por %p174, %p175
      %p177 = scmp.ne.s32.totalorder %s166, %s167
      %p178 = scmp.eq.s32.totalorder %s32, 0
      %p179 = por %p177, %p178
      %p180 = scmp.ne.s32.totalorder %s166, %s167
      %p181 = scmp.eq.s32.totalorder %s33, 1
      %p182 = por %p180, %p181
      %p184 = scmp.ne.s32.totalorder %s167, %s183
      %p185 = scmp.eq.s32.totalorder %s33, 0
      %p186 = por %p184, %p185
      %s187 = ssub.s32 %s27, %s34
      %p188 = scmp.eq.s32.totalorder %s187, 0
      %s190 = sadd.s32 %s189, 1
      %s191 = scalar_select %p188, %s189, %s190
      %p194 = pneg %p188
      %p195 = scmp.eq.s32.totalorder %s27, 1
      %p196 = por %p194, %p195
      %p197 = scmp.ne.s32.totalorder %s189, %s192
      %p198 = scmp.eq.s32.totalorder %s27, 0
      %p199 = por %p197, %p198
      %p200 = scmp.ne.s32.totalorder %s189, %s192
      %p201 = scmp.eq.s32.totalorder %s32, 1
      %p202 = por %p200, %p201
      %p203 = scmp.ne.s32.totalorder %s192, %s193
      %p204 = scmp.eq.s32.totalorder %s32, 0
      %p205 = por %p203, %p204
      %p206 = scmp.ne.s32.totalorder %s192, %s193
      %p207 = scmp.eq.s32.totalorder %s33, 1
      %p208 = por %p206, %p207
      %p210 = scmp.ne.s32.totalorder %s193, %s209
      %p211 = scmp.eq.s32.totalorder %s33, 0
      %p212 = por %p210, %p211
      %s213 = ssub.s32 %s27, %s34
      %p214 = scmp.eq.s32.totalorder %s213, 0
      %s216 = sadd.s32 %s215, 1
      %s217 = scalar_select %p214, %s215, %s216
      %p220 = pneg %p214
      %p221 = scmp.eq.s32.totalorder %s27, 1
      %p222 = por %p220, %p221
      %p223 = scmp.ne.s32.totalorder %s215, %s218
      %p224 = scmp.eq.s32.totalorder %s27, 0
      %p225 = por %p223, %p224
      %p226 = scmp.ne.s32.totalorder %s215, %s218
      %p227 = scmp.eq.s32.totalorder %s32, 1
      %p228 = por %p226, %p227
      %p229 = scmp.ne.s32.totalorder %s218, %s219
      %p230 = scmp.eq.s32.totalorder %s32, 0
      %p231 = por %p229, %p230
      %p232 = scmp.ne.s32.totalorder %s218, %s219
      %p233 = scmp.eq.s32.totalorder %s33, 1
      %p234 = por %p232, %p233
      %p236 = scmp.ne.s32.totalorder %s219, %s235
      %p237 = scmp.eq.s32.totalorder %s33, 0
      %p238 = por %p236, %p237
      %p239 = scmp.le.s32.totalorder 1, %s27
      %p240 = scmp.lt.s32.totalorder %s27, 3
      %p241 = pnand %p239, %p240
      %p242 = pneg %p241
      // Predicated region
      $region9: #{grad_block_forward.5} parent=5 // pred_check
        _
      $region10: #{grad_block_forward.5} parent=5 // pred_check_branch
        %244 = sbr.rel (%p241) target = $region12
      $region11: #{grad_block_forward.5} parent=5 // pred_region
        %s245 = ssub.s32 %s27, 1
        // Predicated region
        $region13: #{grad_block_forward.5} parent=11 // pred_check
          %p246 = pneg %p48
        $region14: #{grad_block_forward.5} parent=11 // pred_check_branch
          %248 = sbr.rel (%p246) target = $region16
        $region15: #{grad_block_forward.5} parent=11 // pred_region
          %s250 = ssub.s32 16, 16
          %251 = vsyncadd [#allocation6], %s250
          %254 = dma.hbm_to_smem %s0, 16, [#allocation3], [#allocation6]
        $region16: #{grad_block_forward.5} parent=11 // pred_fallthru
          _
        // Predicated region
        $region17: #{grad_block_forward.5} parent=11 // pred_check
          %p255 = pneg %p69
        $region18: #{grad_block_forward.5} parent=11 // pred_check_branch
          %257 = sbr.rel (%p255) target = $region20
        $region19: #{grad_block_forward.5} parent=11 // pred_region
          %s259 = ssub.s32 16, 16
          %260 = vsyncadd [#allocation8], %s259
          %263 = dma.hbm_to_smem %s1, 16, [#allocation7], [#allocation8]
        $region20: #{grad_block_forward.5} parent=11 // pred_fallthru
          _
        // Predicated region
        $region21: #{grad_block_forward.5} parent=11 // pred_check
          %p264 = pneg %p90
        $region22: #{grad_block_forward.5} parent=11 // pred_check_branch
          %266 = sbr.rel (%p264) target = $region24
        $region23: #{grad_block_forward.5} parent=11 // pred_region
          %s268 = ssub.s32 32, 32
          %269 = vsyncadd [#allocation8], %s268
          %272 = dma.hbm_to_smem %s2, 32, [#allocation9], [#allocation8]
        $region24: #{grad_block_forward.5} parent=11 // pred_fallthru
          _
        // Predicated region
        $region25: #{grad_block_forward.5} parent=11 // pred_check
          %p273 = pneg %p111
        $region26: #{grad_block_forward.5} parent=11 // pred_check_branch
          %275 = sbr.rel (%p273) target = $region28
        $region27: #{grad_block_forward.5} parent=11 // pred_region
          %s277 = ssub.s32 16, 16
          %278 = vsyncadd [#allocation11], %s277
          %281 = dma.hbm_to_smem %s3, 16, [#allocation10], [#allocation11]
        $region28: #{grad_block_forward.5} parent=11 // pred_fallthru
          _
        // Predicated region
        $region29: #{grad_block_forward.5} parent=11 // pred_check
          %p282 = pneg %p132
        $region30: #{grad_block_forward.5} parent=11 // pred_check_branch
          %284 = sbr.rel (%p282) target = $region32
        $region31: #{grad_block_forward.5} parent=11 // pred_region
          %s286 = ssub.s32 32, 32
          %287 = vsyncadd [#allocation11], %s286
          %290 = dma.hbm_to_smem %s4, 32, [#allocation12], [#allocation11]
        $region32: #{grad_block_forward.5} parent=11 // pred_fallthru
          _
        // Predicated region
        $region33: #{grad_block_forward.5} parent=11 // pred_check
          %p291 = pneg %p153
        $region34: #{grad_block_forward.5} parent=11 // pred_check_branch
          %293 = sbr.rel (%p291) target = $region36
        $region35: #{grad_block_forward.5} parent=11 // pred_region
          %s295 = ssub.s32 16, 16
          %296 = vsyncadd [#allocation14], %s295
          %299 = dma.hbm_to_smem %s5, 16, [#allocation13], [#allocation14]
        $region36: #{grad_block_forward.5} parent=11 // pred_fallthru
          _
      $region12: #{grad_block_forward.5} parent=5 // pred_fallthru
        _
      %p300 = scmp.lt.s32.totalorder %s27, 2
      // Predicated region
      $region37: #{grad_block_forward.5} parent=5 // pred_check
        %p301 = pneg %p300
      $region38: #{grad_block_forward.5} parent=5 // pred_check_branch
        %303 = sbr.rel (%p301) target = $region40
      $region39: #{grad_block_forward.5} parent=5 // pred_region
        // Predicated region
        $region41: #{grad_block_forward.5} parent=39 // pred_check
          %p304 = pneg %p173
        $region42: #{grad_block_forward.5} parent=39 // pred_check_branch
          %306 = sbr.rel (%p304) target = $region44
        $region43: #{grad_block_forward.5} parent=39 // pred_region
          %s307 = sand.u32 %s163, 1
          %s308 = scalar_lea.sflag [#allocation4], %s307
          %s309 = sand.u32 %s163, 1
          %s310 = smul.addr %s309, 16
          %s311 = scalar_lea.vmem [#allocation15], %s310
          %s313 = ssub.s32 256, 256
          %314 = vsyncadd %s308, %s313
          %s315 = smul.addr %s27, 4
          %s316 = smul.addr %s315, 64
          %s317 = scalar_lea.hbm %s6, %s316
          %s318 = sshll.u32 %s311, 4
          %s319 = int_to_ptr.vmem [resolvable:$true] %s318
          %324 = dma.hbm_to_vmem [thread:$0]  %s317, 256, %s319, %s308, 64, 64, 4
        $region44: #{grad_block_forward.5} parent=39 // pred_fallthru
          _
        // Predicated region
        $region45: #{grad_block_forward.5} parent=39 // pred_check
          %p325 = pneg %p199
        $region46: #{grad_block_forward.5} parent=39 // pred_check_branch
          %327 = sbr.rel (%p325) target = $region48
        $region47: #{grad_block_forward.5} parent=39 // pred_region
          %s328 = sand.u32 %s189, 1
          %s329 = scalar_lea.sflag [#allocation17], %s328
          %s330 = sand.u32 %s189, 1
          %s331 = smul.addr %s330, 128
          %s332 = scalar_lea.vmem [#allocation16], %s331
          %s334 = ssub.s32 2048, 2048
          %335 = vsyncadd %s329, %s334
          %s336 = smul.addr %s27, 16
          %s337 = smul.addr %s336, 128
          %s338 = scalar_lea.hbm %s7, %s337
          %s339 = sshll.u32 %s332, 4
          %s340 = int_to_ptr.vmem [resolvable:$true] %s339
          %345 = dma.hbm_to_vmem [thread:$0]  %s338, 2048, %s340, %s329, 128, 128, 8
        $region48: #{grad_block_forward.5} parent=39 // pred_fallthru
          _
      $region40: #{grad_block_forward.5} parent=5 // pred_fallthru
        _
      %p346 = scmp.le.s32.totalorder 1, %s27
      %p347 = scmp.lt.s32.totalorder %s27, 3
      %p348 = pnand %p346, %p347
      %p349 = pneg %p348
      // Predicated region
      $region49: #{grad_block_forward.5} parent=5 // pred_check
        _
      $region50: #{grad_block_forward.5} parent=5 // pred_check_branch
        %351 = sbr.rel (%p348) target = $region52
      $region51: #{grad_block_forward.5} parent=5 // pred_region
        %s352 = ssub.s32 %s27, 1
        // Predicated region
        $region53: #{grad_block_forward.5} parent=51 // pred_check
          %p353 = pneg %p48
        $region54: #{grad_block_forward.5} parent=51 // pred_check_branch
          %355 = sbr.rel (%p353) target = $region56
        $region55: #{grad_block_forward.5} parent=51 // pred_region
          %356 = dma.done [#allocation6], 16
        $region56: #{grad_block_forward.5} parent=51 // pred_fallthru
          _
        // Predicated region
        $region57: #{grad_block_forward.5} parent=51 // pred_check
          %p357 = pneg %p69
        $region58: #{grad_block_forward.5} parent=51 // pred_check_branch
          %359 = sbr.rel (%p357) target = $region60
        $region59: #{grad_block_forward.5} parent=51 // pred_region
          %360 = dma.done [#allocation8], 16
        $region60: #{grad_block_forward.5} parent=51 // pred_fallthru
          _
        // Predicated region
        $region61: #{grad_block_forward.5} parent=51 // pred_check
          %p361 = pneg %p90
        $region62: #{grad_block_forward.5} parent=51 // pred_check_branch
          %363 = sbr.rel (%p361) target = $region64
        $region63: #{grad_block_forward.5} parent=51 // pred_region
          %364 = dma.done [#allocation8], 32
        $region64: #{grad_block_forward.5} parent=51 // pred_fallthru
          _
        // Predicated region
        $region65: #{grad_block_forward.5} parent=51 // pred_check
          %p365 = pneg %p111
        $region66: #{grad_block_forward.5} parent=51 // pred_check_branch
          %367 = sbr.rel (%p365) target = $region68
        $region67: #{grad_block_forward.5} parent=51 // pred_region
          %368 = dma.done [#allocation11], 16
        $region68: #{grad_block_forward.5} parent=51 // pred_fallthru
          _
        // Predicated region
        $region69: #{grad_block_forward.5} parent=51 // pred_check
          %p369 = pneg %p132
        $region70: #{grad_block_forward.5} parent=51 // pred_check_branch
          %371 = sbr.rel (%p369) target = $region72
        $region71: #{grad_block_forward.5} parent=51 // pred_region
          %372 = dma.done [#allocation11], 32
        $region72: #{grad_block_forward.5} parent=51 // pred_fallthru
          _
        // Predicated region
        $region73: #{grad_block_forward.5} parent=51 // pred_check
          %p373 = pneg %p153
        $region74: #{grad_block_forward.5} parent=51 // pred_check_branch
          %375 = sbr.rel (%p373) target = $region76
        $region75: #{grad_block_forward.5} parent=51 // pred_region
          %376 = dma.done [#allocation14], 16
        $region76: #{grad_block_forward.5} parent=51 // pred_fallthru
          _
        %s377 = sand.u32 %s166, 1
        %s378 = scalar_lea.sflag [#allocation4], %s377
        %s379 = sand.u32 %s166, 1
        %s380 = smul.addr %s379, 16
        %s381 = scalar_lea.vmem [#allocation15], %s380
        // Predicated region
        $region77: #{grad_block_forward.5} parent=51 // pred_check
          %p382 = pneg %p179
        $region78: #{grad_block_forward.5} parent=51 // pred_check_branch
          %384 = sbr.rel (%p382) target = $region80
        $region79: #{grad_block_forward.5} parent=51 // pred_region
          %385 = dma.done %s378, 256
        $region80: #{grad_block_forward.5} parent=51 // pred_fallthru
          _
        %s386 = sand.u32 %s192, 1
        %s387 = scalar_lea.sflag [#allocation17], %s386
        %s388 = sand.u32 %s192, 1
        %s389 = smul.addr %s388, 128
        %s390 = scalar_lea.vmem [#allocation16], %s389
        // Predicated region
        $region81: #{grad_block_forward.5} parent=51 // pred_check
          %p391 = pneg %p205
        $region82: #{grad_block_forward.5} parent=51 // pred_check_branch
          %393 = sbr.rel (%p391) target = $region84
        $region83: #{grad_block_forward.5} parent=51 // pred_region
          %394 = dma.done %s387, 2048
        $region84: #{grad_block_forward.5} parent=51 // pred_fallthru
          _
        %395 = sfence
        %p396 = pneg %p48
        %p397 = pneg %p45
        %p398 = pneg %p69
        %p399 = pneg %p66
        %p400 = pneg %p90
        %p401 = pneg %p87
        %p402 = pneg %p111
        %p403 = pneg %p108
        %p404 = pneg %p132
        %p405 = pneg %p129
        %p406 = pneg %p153
        %p407 = pneg %p150
        %s408 = sand.u32 %s166, 1
        %s409 = scalar_lea.sflag [#allocation4], %s408
        %s410 = sand.u32 %s166, 1
        %s411 = smul.addr %s410, 16
        %s412 = scalar_lea.vmem [#allocation15], %s411
        %p413 = pneg %p179
        %p414 = pneg %p176
        %s415 = sand.u32 %s192, 1
        %s416 = scalar_lea.sflag [#allocation17], %s415
        %s417 = sand.u32 %s192, 1
        %s418 = smul.addr %s417, 128
        %s419 = scalar_lea.vmem [#allocation16], %s418
        %p420 = pneg %p205
        %p421 = pneg %p202
        %p422 = pneg %p231
        %p423 = pneg %p228
        %s424 = sand.u32 %s218, 1
        %s425 = scalar_lea.sflag [#allocation5], %s424
        %s426 = sand.u32 %s218, 1
        %s427 = smul.addr %s426, 128
        %s428 = scalar_lea.vmem [#allocation18], %s427
        %429 = vst [vmem:[#allocation2] sm:$0xff] 0.0
        %430 = vst [vmem:[#allocation2 + $0x30] sm:$0xff] 0.0
        %431 = vst [vmem:[#allocation2 + $0x60] sm:$0xff] 0.0
        %432 = vst [vmem:[#allocation2 + $0x90] sm:$0xff] 0.0
        %433 = vst [vmem:[#allocation2 + $0x28] sm:$0xff] 0.0
        %434 = vst [vmem:[#allocation2 + $0x58] sm:$0xff] 0.0
        %435 = vst [vmem:[#allocation2 + $0x88] sm:$0xff] 0.0
        %436 = vst [vmem:[#allocation2 + $0xb8] sm:$0xff] 0.0
        %vm437 = vcmask 1047808
        %438 = vst.msk [vmem:[#allocation2 + $0x8] sm:$0xff] %vm437, 0.0
        %439 = vst.msk [vmem:[#allocation2 + $0x10] sm:$0xff] %vm437, 0.0
        %440 = vst.msk [vmem:[#allocation2 + $0x18] sm:$0xff] %vm437, 0.0
        %441 = vst.msk [vmem:[#allocation2 + $0x20] sm:$0xff] %vm437, 0.0
        %442 = vst.msk [vmem:[#allocation2 + $0x38] sm:$0xff] %vm437, 0.0
        %443 = vst.msk [vmem:[#allocation2 + $0x40] sm:$0xff] %vm437, 0.0
        %444 = vst.msk [vmem:[#allocation2 + $0x48] sm:$0xff] %vm437, 0.0
        %445 = vst.msk [vmem:[#allocation2 + $0x50] sm:$0xff] %vm437, 0.0
        %446 = vst.msk [vmem:[#allocation2 + $0x68] sm:$0xff] %vm437, 0.0
        %447 = vst.msk [vmem:[#allocation2 + $0x70] sm:$0xff] %vm437, 0.0
        %448 = vst.msk [vmem:[#allocation2 + $0x78] sm:$0xff] %vm437, 0.0
        %449 = vst.msk [vmem:[#allocation2 + $0x80] sm:$0xff] %vm437, 0.0
        %450 = vst.msk [vmem:[#allocation2 + $0x98] sm:$0xff] %vm437, 0.0
        %451 = vst.msk [vmem:[#allocation2 + $0xa0] sm:$0xff] %vm437, 0.0
        %452 = vst.msk [vmem:[#allocation2 + $0xa8] sm:$0xff] %vm437, 0.0
        %453 = vst.msk [vmem:[#allocation2 + $0xb0] sm:$0xff] %vm437, 0.0
        %v454 = vld [vmem:[%s381] sm:$0xf]
        %v455 = vld [vmem:[%s381 + $0x4] sm:$0xf]
        %v456 = vld [vmem:[%s381 + $0x8] sm:$0xf]
        %v457 = vld [vmem:[%s381 + $0xc] sm:$0xf]
        %v458 = vunpack.c.l.bf16 %v454
        %v459 = vunpack.c.l.bf16 %v455
        %v460 = vunpack.c.l.bf16 %v456
        %v461 = vunpack.c.l.bf16 %v457
        %vm462 = vcmask 261120
        %463 = vst.msk [vmem:[#allocation2 + $0x8] sm:$0xff] %vm462, %v458
        %464 = vst.msk [vmem:[#allocation2 + $0x10] sm:$0xff] %vm462, %v459
        %465 = vst.msk [vmem:[#allocation2 + $0x18] sm:$0xff] %vm462, %v460
        %466 = vst.msk [vmem:[#allocation2 + $0x20] sm:$0xff] %vm462, %v461
        %v467 = vld [vmem:[#allocation2 + $0x7] sm:$0xff]
        %v468 = vld [vmem:[#allocation2 + $0xf] sm:$0xff]
        %v469 = vld [vmem:[#allocation2 + $0x17] sm:$0xff]
        %v470 = vld [vmem:[#allocation2 + $0x1f] sm:$0xff]
        %471 = vrot.lane.b32.xlu0 %v467, 1
        %v472 = vpop.permute.xlu0 %471
        %473 = vrot.lane.b32.xlu0 %v468, 1
        %v474 = vpop.permute.xlu0 %473
        %475 = vrot.lane.b32.xlu0 %v469, 1
        %v476 = vpop.permute.xlu0 %475
        %477 = vrot.lane.b32.xlu0 %v470, 1
        %v478 = vpop.permute.xlu0 %477
        %s479 = sld [smem:[#allocation3]]
        %v480 = vstv %s479
        %v481 = vmul.f32 %v480, %v472
        %v482 = vmul.f32 %v480, %v474
        %v483 = vmul.f32 %v480, %v476
        %v484 = vmul.f32 %v480, %v478
        %s485 = sld [smem:[#allocation3 + $0x9]]
        %v486 = vstv %s485
        %v487 = vmul.f32 %v486, %v472
        %v488 = vmul.f32 %v486, %v474
        %v489 = vmul.f32 %v486, %v476
        %v490 = vmul.f32 %v486, %v478
        %s491 = sld [smem:[#allocation3 + $0x12]]
        %v492 = vstv %s491
        %v493 = vmul.f32 %v492, %v472
        %v494 = vmul.f32 %v492, %v474
        %v495 = vmul.f32 %v492, %v476
        %v496 = vmul.f32 %v492, %v478
        %s497 = sld [smem:[#allocation3 + $0x1b]]
        %v498 = vstv %s497
        %v499 = vmul.f32 %v498, %v472
        %v500 = vmul.f32 %v498, %v474
        %v501 = vmul.f32 %v498, %v476
        %v502 = vmul.f32 %v498, %v478
        %s503 = sld [smem:[#allocation3 + $0x1]]
        %v504 = vstv %s503
        %v505 = vmul.f32 %v504, %v467
        %v506 = vmul.f32 %v504, %v468
        %v507 = vmul.f32 %v504, %v469
        %v508 = vmul.f32 %v504, %v470
        %v509 = vadd.f32 %v481, %v505
        %v510 = vadd.f32 %v482, %v506
        %v511 = vadd.f32 %v483, %v507
        %v512 = vadd.f32 %v484, %v508
        %s513 = sld [smem:[#allocation3 + $0xa]]
        %v514 = vstv %s513
        %v515 = vmul.f32 %v514, %v467
        %v516 = vmul.f32 %v514, %v468
        %v517 = vmul.f32 %v514, %v469
        %v518 = vmul.f32 %v514, %v470
        %v519 = vadd.f32 %v487, %v515
        %v520 = vadd.f32 %v488, %v516
        %v521 = vadd.f32 %v489, %v517
        %v522 = vadd.f32 %v490, %v518
        %s523 = sld [smem:[#allocation3 + $0x13]]
        %v524 = vstv %s523
        %v525 = vmul.f32 %v524, %v467
        %v526 = vmul.f32 %v524, %v468
        %v527 = vmul.f32 %v524, %v469
        %v528 = vmul.f32 %v524, %v470
        %v529 = vadd.f32 %v493, %v525
        %v530 = vadd.f32 %v494, %v526
        %v531 = vadd.f32 %v495, %v527
        %v532 = vadd.f32 %v496, %v528
        %s533 = sld [smem:[#allocation3 + $0x1c]]
        %v534 = vstv %s533
        %v535 = vmul.f32 %v534, %v467
        %v536 = vmul.f32 %v534, %v468
        %v537 = vmul.f32 %v534, %v469
        %v538 = vmul.f32 %v534, %v470
        %v539 = vadd.f32 %v499, %v535
        %v540 = vadd.f32 %v500, %v536
        %v541 = vadd.f32 %v501, %v537
        %v542 = vadd.f32 %v502, %v538
        %543 = vrot.lane.b32.xlu0 %v467, 127
        %v544 = vpop.permute.xlu0 %543
        %545 = vrot.lane.b32.xlu0 %v468, 127
        %v546 = vpop.permute.xlu0 %545
        %547 = vrot.lane.b32.xlu0 %v469, 127
        %v548 = vpop.permute.xlu0 %547
        %549 = vrot.lane.b32.xlu0 %v470, 127
        %v550 = vpop.permute.xlu0 %549
        %s551 = sld [smem:[#allocation3 + $0x2]]
        %v552 = vstv %s551
        %v553 = vmul.f32 %v552, %v544
        %v554 = vmul.f32 %v552, %v546
        %v555 = vmul.f32 %v552, %v548
        %v556 = vmul.f32 %v552, %v550
        %v557 = vadd.f32 %v509, %v553
        %v558 = vadd.f32 %v510, %v554
        %v559 = vadd.f32 %v511, %v555
        %v560 = vadd.f32 %v512, %v556
        %s561 = sld [smem:[#allocation3 + $0xb]]
        %v562 = vstv %s561
        %v563 = vmul.f32 %v562, %v544
        %v564 = vmul.f32 %v562, %v546
        %v565 = vmul.f32 %v562, %v548
        %v566 = vmul.f32 %v562, %v550
        %v567 = vadd.f32 %v519, %v563
        %v568 = vadd.f32 %v520, %v564
        %v569 = vadd.f32 %v521, %v565
        %v570 = vadd.f32 %v522, %v566
        %s571 = sld [smem:[#allocation3 + $0x14]]
        %v572 = vstv %s571
        %v573 = vmul.f32 %v572, %v544
        %v574 = vmul.f32 %v572, %v546
        %v575 = vmul.f32 %v572, %v548
        %v576 = vmul.f32 %v572, %v550
        %v577 = vadd.f32 %v529, %v573
        %v578 = vadd.f32 %v530, %v574
        %v579 = vadd.f32 %v531, %v575
        %v580 = vadd.f32 %v532, %v576
        %s581 = sld [smem:[#allocation3 + $0x1d]]
        %v582 = vstv %s581
        %v583 = vmul.f32 %v582, %v544
        %v584 = vmul.f32 %v582, %v546
        %v585 = vmul.f32 %v582, %v548
        %v586 = vmul.f32 %v582, %v550
        %v587 = vadd.f32 %v539, %v583
        %v588 = vadd.f32 %v540, %v584
        %v589 = vadd.f32 %v541, %v585
        %v590 = vadd.f32 %v542, %v586
        %v591 = vld [vmem:[#allocation2 + $0x8] sm:$0xff]
        %v592 = vld [vmem:[#allocation2 + $0x10] sm:$0xff]
        %v593 = vld [vmem:[#allocation2 + $0x18] sm:$0xff]
        %v594 = vld [vmem:[#allocation2 + $0x20] sm:$0xff]
        %595 = vrot.lane.b32.xlu0 %v591, 1
        %v596 = vpop.permute.xlu0 %595
        %597 = vrot.lane.b32.xlu0 %v592, 1
        %v598 = vpop.permute.xlu0 %597
        %599 = vrot.lane.b32.xlu0 %v593, 1
        %v600 = vpop.permute.xlu0 %599
        %601 = vrot.lane.b32.xlu0 %v594, 1
        %v602 = vpop.permute.xlu0 %601
        %s603 = sld [smem:[#allocation3 + $0x3]]
        %v604 = vstv %s603
        %v605 = vmul.f32 %v604, %v596
        %v606 = vmul.f32 %v604, %v598
        %v607 = vmul.f32 %v604, %v600
        %v608 = vmul.f32 %v604, %v602
        %v609 = vadd.f32 %v557, %v605
        %v610 = vadd.f32 %v558, %v606
        %v611 = vadd.f32 %v559, %v607
        %v612 = vadd.f32 %v560, %v608
        %s613 = sld [smem:[#allocation3 + $0xc]]
        %v614 = vstv %s613
        %v615 = vmul.f32 %v614, %v596
        %v616 = vmul.f32 %v614, %v598
        %v617 = vmul.f32 %v614, %v600
        %v618 = vmul.f32 %v614, %v602
        %v619 = vadd.f32 %v567, %v615
        %v620 = vadd.f32 %v568, %v616
        %v621 = vadd.f32 %v569, %v617
        %v622 = vadd.f32 %v570, %v618
        %s623 = sld [smem:[#allocation3 + $0x15]]
        %v624 = vstv %s623
        %v625 = vmul.f32 %v624, %v596
        %v626 = vmul.f32 %v624, %v598
        %v627 = vmul.f32 %v624, %v600
        %v628 = vmul.f32 %v624, %v602
        %v629 = vadd.f32 %v577, %v625
        %v630 = vadd.f32 %v578, %v626
        %v631 = vadd.f32 %v579, %v627
        %v632 = vadd.f32 %v580, %v628
        %s633 = sld [smem:[#allocation3 + $0x1e]]
        %v634 = vstv %s633
        %v635 = vmul.f32 %v634, %v596
        %v636 = vmul.f32 %v634, %v598
        %v637 = vmul.f32 %v634, %v600
        %v638 = vmul.f32 %v634, %v602
        %v639 = vadd.f32 %v587, %v635
        %v640 = vadd.f32 %v588, %v636
        %v641 = vadd.f32 %v589, %v637
        %v642 = vadd.f32 %v590, %v638
        %s643 = sld [smem:[#allocation3 + $0x4]]
        %v644 = vstv %s643
        %v645 = vmul.f32 %v644, %v591
        %v646 = vmul.f32 %v644, %v592
        %v647 = vmul.f32 %v644, %v593
        %v648 = vmul.f32 %v644, %v594
        %v649 = vadd.f32 %v609, %v645
        %v650 = vadd.f32 %v610, %v646
        %v651 = vadd.f32 %v611, %v647
        %v652 = vadd.f32 %v612, %v648
        %s653 = sld [smem:[#allocation3 + $0xd]]
        %v654 = vstv %s653
        %v655 = vmul.f32 %v654, %v591
        %v656 = vmul.f32 %v654, %v592
        %v657 = vmul.f32 %v654, %v593
        %v658 = vmul.f32 %v654, %v594
        %v659 = vadd.f32 %v619, %v655
        %v660 = vadd.f32 %v620, %v656
        %v661 = vadd.f32 %v621, %v657
        %v662 = vadd.f32 %v622, %v658
        %s663 = sld [smem:[#allocation3 + $0x16]]
        %v664 = vstv %s663
        %v665 = vmul.f32 %v664, %v591
        %v666 = vmul.f32 %v664, %v592
        %v667 = vmul.f32 %v664, %v593
        %v668 = vmul.f32 %v664, %v594
        %v669 = vadd.f32 %v629, %v665
        %v670 = vadd.f32 %v630, %v666
        %v671 = vadd.f32 %v631, %v667
        %v672 = vadd.f32 %v632, %v668
        %s673 = sld [smem:[#allocation3 + $0x1f]]
        %v674 = vstv %s673
        %v675 = vmul.f32 %v674, %v591
        %v676 = vmul.f32 %v674, %v592
        %v677 = vmul.f32 %v674, %v593
        %v678 = vmul.f32 %v674, %v594
        %v679 = vadd.f32 %v639, %v675
        %v680 = vadd.f32 %v640, %v676
        %v681 = vadd.f32 %v641, %v677
        %v682 = vadd.f32 %v642, %v678
        %683 = vrot.lane.b32.xlu0 %v591, 127
        %v684 = vpop.permute.xlu0 %683
        %685 = vrot.lane.b32.xlu0 %v592, 127
        %v686 = vpop.permute.xlu0 %685
        %687 = vrot.lane.b32.xlu0 %v593, 127
        %v688 = vpop.permute.xlu0 %687
        %689 = vrot.lane.b32.xlu0 %v594, 127
        %v690 = vpop.permute.xlu0 %689
        %s691 = sld [smem:[#allocation3 + $0x5]]
        %v692 = vstv %s691
        %v693 = vmul.f32 %v692, %v684
        %v694 = vmul.f32 %v692, %v686
        %v695 = vmul.f32 %v692, %v688
        %v696 = vmul.f32 %v692, %v690
        %v697 = vadd.f32 %v649, %v693
        %v698 = vadd.f32 %v650, %v694
        %v699 = vadd.f32 %v651, %v695
        %v700 = vadd.f32 %v652, %v696
        %s701 = sld [smem:[#allocation3 + $0xe]]
        %v702 = vstv %s701
        %v703 = vmul.f32 %v702, %v684
        %v704 = vmul.f32 %v702, %v686
        %v705 = vmul.f32 %v702, %v688
        %v706 = vmul.f32 %v702, %v690
        %v707 = vadd.f32 %v659, %v703
        %v708 = vadd.f32 %v660, %v704
        %v709 = vadd.f32 %v661, %v705
        %v710 = vadd.f32 %v662, %v706
        %s711 = sld [smem:[#allocation3 + $0x17]]
        %v712 = vstv %s711
        %v713 = vmul.f32 %v712, %v684
        %v714 = vmul.f32 %v712, %v686
        %v715 = vmul.f32 %v712, %v688
        %v716 = vmul.f32 %v712, %v690
        %v717 = vadd.f32 %v669, %v713
        %v718 = vadd.f32 %v670, %v714
        %v719 = vadd.f32 %v671, %v715
        %v720 = vadd.f32 %v672, %v716
        %s721 = sld [smem:[#allocation3 + $0x20]]
        %v722 = vstv %s721
        %v723 = vmul.f32 %v722, %v684
        %v724 = vmul.f32 %v722, %v686
        %v725 = vmul.f32 %v722, %v688
        %v726 = vmul.f32 %v722, %v690
        %v727 = vadd.f32 %v679, %v723
        %v728 = vadd.f32 %v680, %v724
        %v729 = vadd.f32 %v681, %v725
        %v730 = vadd.f32 %v682, %v726
        %v731 = vld [vmem:[#allocation2 + $0x9] sm:$0xff]
        %v732 = vld [vmem:[#allocation2 + $0x11] sm:$0xff]
        %v733 = vld [vmem:[#allocation2 + $0x19] sm:$0xff]
        %v734 = vld [vmem:[#allocation2 + $0x21] sm:$0xff]
        %735 = vrot.lane.b32.xlu0 %v731, 1
        %v736 = vpop.permute.xlu0 %735
        %737 = vrot.lane.b32.xlu0 %v732, 1
        %v738 = vpop.permute.xlu0 %737
        %739 = vrot.lane.b32.xlu0 %v733, 1
        %v740 = vpop.permute.xlu0 %739
        %741 = vrot.lane.b32.xlu0 %v734, 1
        %v742 = vpop.permute.xlu0 %741
        %s743 = sld [smem:[#allocation3 + $0x6]]
        %v744 = vstv %s743
        %v745 = vmul.f32 %v744, %v736
        %v746 = vmul.f32 %v744, %v738
        %v747 = vmul.f32 %v744, %v740
        %v748 = vmul.f32 %v744, %v742
        %v749 = vadd.f32 %v697, %v745
        %v750 = vadd.f32 %v698, %v746
        %v751 = vadd.f32 %v699, %v747
        %v752 = vadd.f32 %v700, %v748
        %s753 = sld [smem:[#allocation3 + $0xf]]
        %v754 = vstv %s753
        %v755 = vmul.f32 %v754, %v736
        %v756 = vmul.f32 %v754, %v738
        %v757 = vmul.f32 %v754, %v740
        %v758 = vmul.f32 %v754, %v742
        %v759 = vadd.f32 %v707, %v755
        %v760 = vadd.f32 %v708, %v756
        %v761 = vadd.f32 %v709, %v757
        %v762 = vadd.f32 %v710, %v758
        %s763 = sld [smem:[#allocation3 + $0x18]]
        %v764 = vstv %s763
        %v765 = vmul.f32 %v764, %v736
        %v766 = vmul.f32 %v764, %v738
        %v767 = vmul.f32 %v764, %v740
        %v768 = vmul.f32 %v764, %v742
        %v769 = vadd.f32 %v717, %v765
        %v770 = vadd.f32 %v718, %v766
        %v771 = vadd.f32 %v719, %v767
        %v772 = vadd.f32 %v720, %v768
        %s773 = sld [smem:[#allocation3 + $0x21]]
        %v774 = vstv %s773
        %v775 = vmul.f32 %v774, %v736
        %v776 = vmul.f32 %v774, %v738
        %v777 = vmul.f32 %v774, %v740
        %v778 = vmul.f32 %v774, %v742
        %v779 = vadd.f32 %v727, %v775
        %v780 = vadd.f32 %v728, %v776
        %v781 = vadd.f32 %v729, %v777
        %v782 = vadd.f32 %v730, %v778
        %s783 = sld [smem:[#allocation3 + $0x7]]
        %v784 = vstv %s783
        %v785 = vmul.f32 %v784, %v731
        %v786 = vmul.f32 %v784, %v732
        %v787 = vmul.f32 %v784, %v733
        %v788 = vmul.f32 %v784, %v734
        %v789 = vadd.f32 %v749, %v785
        %v790 = vadd.f32 %v750, %v786
        %v791 = vadd.f32 %v751, %v787
        %v792 = vadd.f32 %v752, %v788
        %s793 = sld [smem:[#allocation3 + $0x10]]
        %v794 = vstv %s793
        %v795 = vmul.f32 %v794, %v731
        %v796 = vmul.f32 %v794, %v732
        %v797 = vmul.f32 %v794, %v733
        %v798 = vmul.f32 %v794, %v734
        %v799 = vadd.f32 %v759, %v795
        %v800 = vadd.f32 %v760, %v796
        %v801 = vadd.f32 %v761, %v797
        %v802 = vadd.f32 %v762, %v798
        %s803 = sld [smem:[#allocation3 + $0x19]]
        %v804 = vstv %s803
        %v805 = vmul.f32 %v804, %v731
        %v806 = vmul.f32 %v804, %v732
        %v807 = vmul.f32 %v804, %v733
        %v808 = vmul.f32 %v804, %v734
        %v809 = vadd.f32 %v769, %v805
        %v810 = vadd.f32 %v770, %v806
        %v811 = vadd.f32 %v771, %v807
        %v812 = vadd.f32 %v772, %v808
        %s813 = sld [smem:[#allocation3 + $0x22]]
        %v814 = vstv %s813
        %v815 = vmul.f32 %v814, %v731
        %v816 = vmul.f32 %v814, %v732
        %v817 = vmul.f32 %v814, %v733
        %v818 = vmul.f32 %v814, %v734
        %v819 = vadd.f32 %v779, %v815
        %v820 = vadd.f32 %v780, %v816
        %v821 = vadd.f32 %v781, %v817
        %v822 = vadd.f32 %v782, %v818
        %823 = vrot.lane.b32.xlu0 %v731, 127
        %v824 = vpop.permute.xlu0 %823
        %825 = vrot.lane.b32.xlu0 %v732, 127
        %v826 = vpop.permute.xlu0 %825
        %827 = vrot.lane.b32.xlu0 %v733, 127
        %v828 = vpop.permute.xlu0 %827
        %829 = vrot.lane.b32.xlu0 %v734, 127
        %v830 = vpop.permute.xlu0 %829
        %s831 = sld [smem:[#allocation3 + $0x8]]
        %v832 = vstv %s831
        %v833 = vmul.f32 %v832, %v824
        %v834 = vmul.f32 %v832, %v826
        %v835 = vmul.f32 %v832, %v828
        %v836 = vmul.f32 %v832, %v830
        %v837 = vadd.f32 %v789, %v833
        %v838 = vadd.f32 %v790, %v834
        %v839 = vadd.f32 %v791, %v835
        %v840 = vadd.f32 %v792, %v836
        %s841 = sld [smem:[#allocation3 + $0x11]]
        %v842 = vstv %s841
        %v843 = vmul.f32 %v842, %v824
        %v844 = vmul.f32 %v842, %v826
        %v845 = vmul.f32 %v842, %v828
        %v846 = vmul.f32 %v842, %v830
        %v847 = vadd.f32 %v799, %v843
        %v848 = vadd.f32 %v800, %v844
        %v849 = vadd.f32 %v801, %v845
        %v850 = vadd.f32 %v802, %v846
        %s851 = sld [smem:[#allocation3 + $0x1a]]
        %v852 = vstv %s851
        %v853 = vmul.f32 %v852, %v824
        %v854 = vmul.f32 %v852, %v826
        %v855 = vmul.f32 %v852, %v828
        %v856 = vmul.f32 %v852, %v830
        %v857 = vadd.f32 %v809, %v853
        %v858 = vadd.f32 %v810, %v854
        %v859 = vadd.f32 %v811, %v855
        %v860 = vadd.f32 %v812, %v856
        %s861 = sld [smem:[#allocation3 + $0x23]]
        %v862 = vstv %s861
        %v863 = vmul.f32 %v862, %v824
        %v864 = vmul.f32 %v862, %v826
        %v865 = vmul.f32 %v862, %v828
        %v866 = vmul.f32 %v862, %v830
        %v867 = vadd.f32 %v819, %v863
        %v868 = vadd.f32 %v820, %v864
        %v869 = vadd.f32 %v821, %v865
        %v870 = vadd.f32 %v822, %v866
        %s871 = sld [smem:[#allocation7]]
        %v872 = vstv %s871
        %v873 = vadd.f32 %v837, %v872
        %v874 = vadd.f32 %v838, %v872
        %v875 = vadd.f32 %v839, %v872
        %v876 = vadd.f32 %v840, %v872
        %s877 = sld [smem:[#allocation7 + $0x1]]
        %v878 = vstv %s877
        %v879 = vadd.f32 %v847, %v878
        %v880 = vadd.f32 %v848, %v878
        %v881 = vadd.f32 %v849, %v878
        %v882 = vadd.f32 %v850, %v878
        %s883 = sld [smem:[#allocation7 + $0x2]]
        %v884 = vstv %s883
        %v885 = vadd.f32 %v857, %v884
        %v886 = vadd.f32 %v858, %v884
        %v887 = vadd.f32 %v859, %v884
        %v888 = vadd.f32 %v860, %v884
        %s889 = sld [smem:[#allocation7 + $0x3]]
        %v890 = vstv %s889
        %v891 = vadd.f32 %v867, %v890
        %v892 = vadd.f32 %v868, %v890
        %v893 = vadd.f32 %v869, %v890
        %v894 = vadd.f32 %v870, %v890
        %895 = vst.msk [vmem:[#allocation2 + $0x8] sm:$0xff] %vm462, %v873
        %896 = vst.msk [vmem:[#allocation2 + $0x10] sm:$0xff] %vm462, %v874
        %897 = vst.msk [vmem:[#allocation2 + $0x18] sm:$0xff] %vm462, %v875
        %898 = vst.msk [vmem:[#allocation2 + $0x20] sm:$0xff] %vm462, %v876
        %s899 = scalar_lea.vmem [#allocation2], 48
        %900 = vst.msk [vmem:[%s899 + $0x8] sm:$0xff] %vm462, %v879
        %901 = vst.msk [vmem:[%s899 + $0x10] sm:$0xff] %vm462, %v880
        %902 = vst.msk [vmem:[%s899 + $0x18] sm:$0xff] %vm462, %v881
        %903 = vst.msk [vmem:[%s899 + $0x20] sm:$0xff] %vm462, %v882
        %s904 = scalar_lea.vmem [#allocation2], 96
        %905 = vst.msk [vmem:[%s904 + $0x8] sm:$0xff] %vm462, %v885
        %906 = vst.msk [vmem:[%s904 + $0x10] sm:$0xff] %vm462, %v886
        %907 = vst.msk [vmem:[%s904 + $0x18] sm:$0xff] %vm462, %v887
        %908 = vst.msk [vmem:[%s904 + $0x20] sm:$0xff] %vm462, %v888
        %s909 = scalar_lea.vmem [#allocation2], 144
        %910 = vst.msk [vmem:[%s909 + $0x8] sm:$0xff] %vm462, %v891
        %911 = vst.msk [vmem:[%s909 + $0x10] sm:$0xff] %vm462, %v892
        %912 = vst.msk [vmem:[%s909 + $0x18] sm:$0xff] %vm462, %v893
        %913 = vst.msk [vmem:[%s909 + $0x20] sm:$0xff] %vm462, %v894
        %v914 = vld [vmem:[#allocation2 + $0x7] sm:$0xff]
        %v915 = vld [vmem:[#allocation2 + $0xf] sm:$0xff]
        %v916 = vld [vmem:[#allocation2 + $0x17] sm:$0xff]
        %v917 = vld [vmem:[#allocation2 + $0x1f] sm:$0xff]
        %918 = vrot.lane.b32.xlu0 %v914, 1
        %v919 = vpop.permute.xlu0 %918
        %920 = vrot.lane.b32.xlu0 %v915, 1
        %v921 = vpop.permute.xlu0 %920
        %922 = vrot.lane.b32.xlu0 %v916, 1
        %v923 = vpop.permute.xlu0 %922
        %924 = vrot.lane.b32.xlu0 %v917, 1
        %v925 = vpop.permute.xlu0 %924
        %s926 = sld [smem:[#allocation9]]
        %v927 = vstv %s926
        %v928 = vmul.f32 %v927, %v919
        %v929 = vmul.f32 %v927, %v921
        %v930 = vmul.f32 %v927, %v923
        %v931 = vmul.f32 %v927, %v925
        %s932 = sld [smem:[#allocation9 + $0x24]]
        %v933 = vstv %s932
        %v934 = vmul.f32 %v933, %v919
        %v935 = vmul.f32 %v933, %v921
        %v936 = vmul.f32 %v933, %v923
        %v937 = vmul.f32 %v933, %v925
        %s938 = sld [smem:[#allocation9 + $0x48]]
        %v939 = vstv %s938
        %v940 = vmul.f32 %v939, %v919
        %v941 = vmul.f32 %v939, %v921
        %v942 = vmul.f32 %v939, %v923
        %v943 = vmul.f32 %v939, %v925
        %s944 = sld [smem:[#allocation9 + $0x6c]]
        %v945 = vstv %s944
        %v946 = vmul.f32 %v945, %v919
        %v947 = vmul.f32 %v945, %v921
        %v948 = vmul.f32 %v945, %v923
        %v949 = vmul.f32 %v945, %v925
        %s950 = sld [smem:[#allocation9 + $0x1]]
        %v951 = vstv %s950
        %v952 = vmul.f32 %v951, %v914
        %v953 = vmul.f32 %v951, %v915
        %v954 = vmul.f32 %v951, %v916
        %v955 = vmul.f32 %v951, %v917
        %v956 = vadd.f32 %v928, %v952
        %v957 = vadd.f32 %v929, %v953
        %v958 = vadd.f32 %v930, %v954
        %v959 = vadd.f32 %v931, %v955
        %s960 = sld [smem:[#allocation9 + $0x25]]
        %v961 = vstv %s960
        %v962 = vmul.f32 %v961, %v914
        %v963 = vmul.f32 %v961, %v915
        %v964 = vmul.f32 %v961, %v916
        %v965 = vmul.f32 %v961, %v917
        %v966 = vadd.f32 %v934, %v962
        %v967 = vadd.f32 %v935, %v963
        %v968 = vadd.f32 %v936, %v964
        %v969 = vadd.f32 %v937, %v965
        %s970 = sld [smem:[#allocation9 + $0x49]]
        %v971 = vstv %s970
        %v972 = vmul.f32 %v971, %v914
        %v973 = vmul.f32 %v971, %v915
        %v974 = vmul.f32 %v971, %v916
        %v975 = vmul.f32 %v971, %v917
        %v976 = vadd.f32 %v940, %v972
        %v977 = vadd.f32 %v941, %v973
        %v978 = vadd.f32 %v942, %v974
        %v979 = vadd.f32 %v943, %v975
        %s980 = sld [smem:[#allocation9 + $0x6d]]
        %v981 = vstv %s980
        %v982 = vmul.f32 %v981, %v914
        %v983 = vmul.f32 %v981, %v915
        %v984 = vmul.f32 %v981, %v916
        %v985 = vmul.f32 %v981, %v917
        %v986 = vadd.f32 %v946, %v982
        %v987 = vadd.f32 %v947, %v983
        %v988 = vadd.f32 %v948, %v984
        %v989 = vadd.f32 %v949, %v985
        %990 = vrot.lane.b32.xlu0 %v914, 127
        %v991 = vpop.permute.xlu0 %990
        %992 = vrot.lane.b32.xlu0 %v915, 127
        %v993 = vpop.permute.xlu0 %992
        %994 = vrot.lane.b32.xlu0 %v916, 127
        %v995 = vpop.permute.xlu0 %994
        %996 = vrot.lane.b32.xlu0 %v917, 127
        %v997 = vpop.permute.xlu0 %996
        %s998 = sld [smem:[#allocation9 + $0x2]]
        %v999 = vstv %s998
        %v1000 = vmul.f32 %v999, %v991
        %v1001 = vmul.f32 %v999, %v993
        %v1002 = vmul.f32 %v999, %v995
        %v1003 = vmul.f32 %v999, %v997
        %v1004 = vadd.f32 %v956, %v1000
        %v1005 = vadd.f32 %v957, %v1001
        %v1006 = vadd.f32 %v958, %v1002
        %v1007 = vadd.f32 %v959, %v1003
        %s1008 = sld [smem:[#allocation9 + $0x26]]
        %v1009 = vstv %s1008
        %v1010 = vmul.f32 %v1009, %v991
        %v1011 = vmul.f32 %v1009, %v993
        %v1012 = vmul.f32 %v1009, %v995
        %v1013 = vmul.f32 %v1009, %v997
        %v1014 = vadd.f32 %v966, %v1010
        %v1015 = vadd.f32 %v967, %v1011
        %v1016 = vadd.f32 %v968, %v1012
        %v1017 = vadd.f32 %v969, %v1013
        %s1018 = sld [smem:[#allocation9 + $0x4a]]
        %v1019 = vstv %s1018
        %v1020 = vmul.f32 %v1019, %v991
        %v1021 = vmul.f32 %v1019, %v993
        %v1022 = vmul.f32 %v1019, %v995
        %v1023 = vmul.f32 %v1019, %v997
        %v1024 = vadd.f32 %v976, %v1020
        %v1025 = vadd.f32 %v977, %v1021
        %v1026 = vadd.f32 %v978, %v1022
        %v1027 = vadd.f32 %v979, %v1023
        %s1028 = sld [smem:[#allocation9 + $0x6e]]
        %v1029 = vstv %s1028
        %v1030 = vmul.f32 %v1029, %v991
        %v1031 = vmul.f32 %v1029, %v993
        %v1032 = vmul.f32 %v1029, %v995
        %v1033 = vmul.f32 %v1029, %v997
        %v1034 = vadd.f32 %v986, %v1030
        %v1035 = vadd.f32 %v987, %v1031
        %v1036 = vadd.f32 %v988, %v1032
        %v1037 = vadd.f32 %v989, %v1033
        %v1038 = vld [vmem:[#allocation2 + $0x8] sm:$0xff]
        %v1039 = vld [vmem:[#allocation2 + $0x10] sm:$0xff]
        %v1040 = vld [vmem:[#allocation2 + $0x18] sm:$0xff]
        %v1041 = vld [vmem:[#allocation2 + $0x20] sm:$0xff]
        %1042 = vrot.lane.b32.xlu0 %v1038, 1
        %v1043 = vpop.permute.xlu0 %1042
        %1044 = vrot.lane.b32.xlu0 %v1039, 1
        %v1045 = vpop.permute.xlu0 %1044
        %1046 = vrot.lane.b32.xlu0 %v1040, 1
        %v1047 = vpop.permute.xlu0 %1046
        %1048 = vrot.lane.b32.xlu0 %v1041, 1
        %v1049 = vpop.permute.xlu0 %1048
        %s1050 = sld [smem:[#allocation9 + $0x3]]
        %v1051 = vstv %s1050
        %v1052 = vmul.f32 %v1051, %v1043
        %v1053 = vmul.f32 %v1051, %v1045
        %v1054 = vmul.f32 %v1051, %v1047
        %v1055 = vmul.f32 %v1051, %v1049
        %v1056 = vadd.f32 %v1004, %v1052
        %v1057 = vadd.f32 %v1005, %v1053
        %v1058 = vadd.f32 %v1006, %v1054
        %v1059 = vadd.f32 %v1007, %v1055
        %s1060 = sld [smem:[#allocation9 + $0x27]]
        %v1061 = vstv %s1060
        %v1062 = vmul.f32 %v1061, %v1043
        %v1063 = vmul.f32 %v1061, %v1045
        %v1064 = vmul.f32 %v1061, %v1047
        %v1065 = vmul.f32 %v1061, %v1049
        %v1066 = vadd.f32 %v1014, %v1062
        %v1067 = vadd.f32 %v1015, %v1063
        %v1068 = vadd.f32 %v1016, %v1064
        %v1069 = vadd.f32 %v1017, %v1065
        %s1070 = sld [smem:[#allocation9 + $0x4b]]
        %v1071 = vstv %s1070
        %v1072 = vmul.f32 %v1071, %v1043
        %v1073 = vmul.f32 %v1071, %v1045
        %v1074 = vmul.f32 %v1071, %v1047
        %v1075 = vmul.f32 %v1071, %v1049
        %v1076 = vadd.f32 %v1024, %v1072
        %v1077 = vadd.f32 %v1025, %v1073
        %v1078 = vadd.f32 %v1026, %v1074
        %v1079 = vadd.f32 %v1027, %v1075
        %s1080 = sld [smem:[#allocation9 + $0x6f]]
        %v1081 = vstv %s1080
        %v1082 = vmul.f32 %v1081, %v1043
        %v1083 = vmul.f32 %v1081, %v1045
        %v1084 = vmul.f32 %v1081, %v1047
        %v1085 = vmul.f32 %v1081, %v1049
        %v1086 = vadd.f32 %v1034, %v1082
        %v1087 = vadd.f32 %v1035, %v1083
        %v1088 = vadd.f32 %v1036, %v1084
        %v1089 = vadd.f32 %v1037, %v1085
        %s1090 = sld [smem:[#allocation9 + $0x4]]
        %v1091 = vstv %s1090
        %v1092 = vmul.f32 %v1091, %v1038
        %v1093 = vmul.f32 %v1091, %v1039
        %v1094 = vmul.f32 %v1091, %v1040
        %v1095 = vmul.f32 %v1091, %v1041
        %v1096 = vadd.f32 %v1056, %v1092
        %v1097 = vadd.f32 %v1057, %v1093
        %v1098 = vadd.f32 %v1058, %v1094
        %v1099 = vadd.f32 %v1059, %v1095
        %s1100 = sld [smem:[#allocation9 + $0x28]]
        %v1101 = vstv %s1100
        %v1102 = vmul.f32 %v1101, %v1038
        %v1103 = vmul.f32 %v1101, %v1039
        %v1104 = vmul.f32 %v1101, %v1040
        %v1105 = vmul.f32 %v1101, %v1041
        %v1106 = vadd.f32 %v1066, %v1102
        %v1107 = vadd.f32 %v1067, %v1103
        %v1108 = vadd.f32 %v1068, %v1104
        %v1109 = vadd.f32 %v1069, %v1105
        %s1110 = sld [smem:[#allocation9 + $0x4c]]
        %v1111 = vstv %s1110
        %v1112 = vmul.f32 %v1111, %v1038
        %v1113 = vmul.f32 %v1111, %v1039
        %v1114 = vmul.f32 %v1111, %v1040
        %v1115 = vmul.f32 %v1111, %v1041
        %v1116 = vadd.f32 %v1076, %v1112
        %v1117 = vadd.f32 %v1077, %v1113
        %v1118 = vadd.f32 %v1078, %v1114
        %v1119 = vadd.f32 %v1079, %v1115
        %s1120 = sld [smem:[#allocation9 + $0x70]]
        %v1121 = vstv %s1120
        %v1122 = vmul.f32 %v1121, %v1038
        %v1123 = vmul.f32 %v1121, %v1039
        %v1124 = vmul.f32 %v1121, %v1040
        %v1125 = vmul.f32 %v1121, %v1041
        %v1126 = vadd.f32 %v1086, %v1122
        %v1127 = vadd.f32 %v1087, %v1123
        %v1128 = vadd.f32 %v1088, %v1124
        %v1129 = vadd.f32 %v1089, %v1125
        %1130 = vrot.lane.b32.xlu0 %v1038, 127
        %v1131 = vpop.permute.xlu0 %1130
        %1132 = vrot.lane.b32.xlu0 %v1039, 127
        %v1133 = vpop.permute.xlu0 %1132
        %1134 = vrot.lane.b32.xlu0 %v1040, 127
        %v1135 = vpop.permute.xlu0 %1134
        %1136 = vrot.lane.b32.xlu0 %v1041, 127
        %v1137 = vpop.permute.xlu0 %1136
        %s1138 = sld [smem:[#allocation9 + $0x5]]
        %v1139 = vstv %s1138
        %v1140 = vmul.f32 %v1139, %v1131
        %v1141 = vmul.f32 %v1139, %v1133
        %v1142 = vmul.f32 %v1139, %v1135
        %v1143 = vmul.f32 %v1139, %v1137
        %v1144 = vadd.f32 %v1096, %v1140
        %v1145 = vadd.f32 %v1097, %v1141
        %v1146 = vadd.f32 %v1098, %v1142
        %v1147 = vadd.f32 %v1099, %v1143
        %s1148 = sld [smem:[#allocation9 + $0x29]]
        %v1149 = vstv %s1148
        %v1150 = vmul.f32 %v1149, %v1131
        %v1151 = vmul.f32 %v1149, %v1133
        %v1152 = vmul.f32 %v1149, %v1135
        %v1153 = vmul.f32 %v1149, %v1137
        %v1154 = vadd.f32 %v1106, %v1150
        %v1155 = vadd.f32 %v1107, %v1151
        %v1156 = vadd.f32 %v1108, %v1152
        %v1157 = vadd.f32 %v1109, %v1153
        %s1158 = sld [smem:[#allocation9 + $0x4d]]
        %v1159 = vstv %s1158
        %v1160 = vmul.f32 %v1159, %v1131
        %v1161 = vmul.f32 %v1159, %v1133
        %v1162 = vmul.f32 %v1159, %v1135
        %v1163 = vmul.f32 %v1159, %v1137
        %v1164 = vadd.f32 %v1116, %v1160
        %v1165 = vadd.f32 %v1117, %v1161
        %v1166 = vadd.f32 %v1118, %v1162
        %v1167 = vadd.f32 %v1119, %v1163
        %s1168 = sld [smem:[#allocation9 + $0x71]]
        %v1169 = vstv %s1168
        %v1170 = vmul.f32 %v1169, %v1131
        %v1171 = vmul.f32 %v1169, %v1133
        %v1172 = vmul.f32 %v1169, %v1135
        %v1173 = vmul.f32 %v1169, %v1137
        %v1174 = vadd.f32 %v1126, %v1170
        %v1175 = vadd.f32 %v1127, %v1171
        %v1176 = vadd.f32 %v1128, %v1172
        %v1177 = vadd.f32 %v1129, %v1173
        %v1178 = vld [vmem:[#allocation2 + $0x9] sm:$0xff]
        %v1179 = vld [vmem:[#allocation2 + $0x11] sm:$0xff]
        %v1180 = vld [vmem:[#allocation2 + $0x19] sm:$0xff]
        %v1181 = vld [vmem:[#allocation2 + $0x21] sm:$0xff]
        %1182 = vrot.lane.b32.xlu0 %v1178, 1
        %v1183 = vpop.permute.xlu0 %1182
        %1184 = vrot.lane.b32.xlu0 %v1179, 1
        %v1185 = vpop.permute.xlu0 %1184
        %1186 = vrot.lane.b32.xlu0 %v1180, 1
        %v1187 = vpop.permute.xlu0 %1186
        %1188 = vrot.lane.b32.xlu0 %v1181, 1
        %v1189 = vpop.permute.xlu0 %1188
        %s1190 = sld [smem:[#allocation9 + $0x6]]
        %v1191 = vstv %s1190
        %v1192 = vmul.f32 %v1191, %v1183
        %v1193 = vmul.f32 %v1191, %v1185
        %v1194 = vmul.f32 %v1191, %v1187
        %v1195 = vmul.f32 %v1191, %v1189
        %v1196 = vadd.f32 %v1144, %v1192
        %v1197 = vadd.f32 %v1145, %v1193
        %v1198 = vadd.f32 %v1146, %v1194
        %v1199 = vadd.f32 %v1147, %v1195
        %s1200 = sld [smem:[#allocation9 + $0x2a]]
        %v1201 = vstv %s1200
        %v1202 = vmul.f32 %v1201, %v1183
        %v1203 = vmul.f32 %v1201, %v1185
        %v1204 = vmul.f32 %v1201, %v1187
        %v1205 = vmul.f32 %v1201, %v1189
        %v1206 = vadd.f32 %v1154, %v1202
        %v1207 = vadd.f32 %v1155, %v1203
        %v1208 = vadd.f32 %v1156, %v1204
        %v1209 = vadd.f32 %v1157, %v1205
        %s1210 = sld [smem:[#allocation9 + $0x4e]]
        %v1211 = vstv %s1210
        %v1212 = vmul.f32 %v1211, %v1183
        %v1213 = vmul.f32 %v1211, %v1185
        %v1214 = vmul.f32 %v1211, %v1187
        %v1215 = vmul.f32 %v1211, %v1189
        %v1216 = vadd.f32 %v1164, %v1212
        %v1217 = vadd.f32 %v1165, %v1213
        %v1218 = vadd.f32 %v1166, %v1214
        %v1219 = vadd.f32 %v1167, %v1215
        %s1220 = sld [smem:[#allocation9 + $0x72]]
        %v1221 = vstv %s1220
        %v1222 = vmul.f32 %v1221, %v1183
        %v1223 = vmul.f32 %v1221, %v1185
        %v1224 = vmul.f32 %v1221, %v1187
        %v1225 = vmul.f32 %v1221, %v1189
        %v1226 = vadd.f32 %v1174, %v1222
        %v1227 = vadd.f32 %v1175, %v1223
        %v1228 = vadd.f32 %v1176, %v1224
        %v1229 = vadd.f32 %v1177, %v1225
        %s1230 = sld [smem:[#allocation9 + $0x7]]
        %v1231 = vstv %s1230
        %v1232 = vmul.f32 %v1231, %v1178
        %v1233 = vmul.f32 %v1231, %v1179
        %v1234 = vmul.f32 %v1231, %v1180
        %v1235 = vmul.f32 %v1231, %v1181
        %v1236 = vadd.f32 %v1196, %v1232
        %v1237 = vadd.f32 %v1197, %v1233
        %v1238 = vadd.f32 %v1198, %v1234
        %v1239 = vadd.f32 %v1199, %v1235
        %s1240 = sld [smem:[#allocation9 + $0x2b]]
        %v1241 = vstv %s1240
        %v1242 = vmul.f32 %v1241, %v1178
        %v1243 = vmul.f32 %v1241, %v1179
        %v1244 = vmul.f32 %v1241, %v1180
        %v1245 = vmul.f32 %v1241, %v1181
        %v1246 = vadd.f32 %v1206, %v1242
        %v1247 = vadd.f32 %v1207, %v1243
        %v1248 = vadd.f32 %v1208, %v1244
        %v1249 = vadd.f32 %v1209, %v1245
        %s1250 = sld [smem:[#allocation9 + $0x4f]]
        %v1251 = vstv %s1250
        %v1252 = vmul.f32 %v1251, %v1178
        %v1253 = vmul.f32 %v1251, %v1179
        %v1254 = vmul.f32 %v1251, %v1180
        %v1255 = vmul.f32 %v1251, %v1181
        %v1256 = vadd.f32 %v1216, %v1252
        %v1257 = vadd.f32 %v1217, %v1253
        %v1258 = vadd.f32 %v1218, %v1254
        %v1259 = vadd.f32 %v1219, %v1255
        %s1260 = sld [smem:[#allocation9 + $0x73]]
        %v1261 = vstv %s1260
        %v1262 = vmul.f32 %v1261, %v1178
        %v1263 = vmul.f32 %v1261, %v1179
        %v1264 = vmul.f32 %v1261, %v1180
        %v1265 = vmul.f32 %v1261, %v1181
        %v1266 = vadd.f32 %v1226, %v1262
        %v1267 = vadd.f32 %v1227, %v1263
        %v1268 = vadd.f32 %v1228, %v1264
        %v1269 = vadd.f32 %v1229, %v1265
        %1270 = vrot.lane.b32.xlu0 %v1178, 127
        %v1271 = vpop.permute.xlu0 %1270
        %1272 = vrot.lane.b32.xlu0 %v1179, 127
        %v1273 = vpop.permute.xlu0 %1272
        %1274 = vrot.lane.b32.xlu0 %v1180, 127
        %v1275 = vpop.permute.xlu0 %1274
        %1276 = vrot.lane.b32.xlu0 %v1181, 127
        %v1277 = vpop.permute.xlu0 %1276
        %s1278 = sld [smem:[#allocation9 + $0x8]]
        %v1279 = vstv %s1278
        %v1280 = vmul.f32 %v1279, %v1271
        %v1281 = vmul.f32 %v1279, %v1273
        %v1282 = vmul.f32 %v1279, %v1275
        %v1283 = vmul.f32 %v1279, %v1277
        %v1284 = vadd.f32 %v1236, %v1280
        %v1285 = vadd.f32 %v1237, %v1281
        %v1286 = vadd.f32 %v1238, %v1282
        %v1287 = vadd.f32 %v1239, %v1283
        %s1288 = sld [smem:[#allocation9 + $0x2c]]
        %v1289 = vstv %s1288
        %v1290 = vmul.f32 %v1289, %v1271
        %v1291 = vmul.f32 %v1289, %v1273
        %v1292 = vmul.f32 %v1289, %v1275
        %v1293 = vmul.f32 %v1289, %v1277
        %v1294 = vadd.f32 %v1246, %v1290
        %v1295 = vadd.f32 %v1247, %v1291
        %v1296 = vadd.f32 %v1248, %v1292
        %v1297 = vadd.f32 %v1249, %v1293
        %s1298 = sld [smem:[#allocation9 + $0x50]]
        %v1299 = vstv %s1298
        %v1300 = vmul.f32 %v1299, %v1271
        %v1301 = vmul.f32 %v1299, %v1273
        %v1302 = vmul.f32 %v1299, %v1275
        %v1303 = vmul.f32 %v1299, %v1277
        %v1304 = vadd.f32 %v1256, %v1300
        %v1305 = vadd.f32 %v1257, %v1301
        %v1306 = vadd.f32 %v1258, %v1302
        %v1307 = vadd.f32 %v1259, %v1303
        %s1308 = sld [smem:[#allocation9 + $0x74]]
        %v1309 = vstv %s1308
        %v1310 = vmul.f32 %v1309, %v1271
        %v1311 = vmul.f32 %v1309, %v1273
        %v1312 = vmul.f32 %v1309, %v1275
        %v1313 = vmul.f32 %v1309, %v1277
        %v1314 = vadd.f32 %v1266, %v1310
        %v1315 = vadd.f32 %v1267, %v1311
        %v1316 = vadd.f32 %v1268, %v1312
        %v1317 = vadd.f32 %v1269, %v1313
        %v1318 = vld [vmem:[%s899 + $0x7] sm:$0xff]
        %v1319 = vld [vmem:[%s899 + $0xf] sm:$0xff]
        %v1320 = vld [vmem:[%s899 + $0x17] sm:$0xff]
        %v1321 = vld [vmem:[%s899 + $0x1f] sm:$0xff]
        %1322 = vrot.lane.b32.xlu0 %v1318, 1
        %v1323 = vpop.permute.xlu0 %1322
        %1324 = vrot.lane.b32.xlu0 %v1319, 1
        %v1325 = vpop.permute.xlu0 %1324
        %1326 = vrot.lane.b32.xlu0 %v1320, 1
        %v1327 = vpop.permute.xlu0 %1326
        %1328 = vrot.lane.b32.xlu0 %v1321, 1
        %v1329 = vpop.permute.xlu0 %1328
        %s1330 = sld [smem:[#allocation9 + $0x9]]
        %v1331 = vstv %s1330
        %v1332 = vmul.f32 %v1331, %v1323
        %v1333 = vmul.f32 %v1331, %v1325
        %v1334 = vmul.f32 %v1331, %v1327
        %v1335 = vmul.f32 %v1331, %v1329
        %v1336 = vadd.f32 %v1284, %v1332
        %v1337 = vadd.f32 %v1285, %v1333
        %v1338 = vadd.f32 %v1286, %v1334
        %v1339 = vadd.f32 %v1287, %v1335
        %s1340 = sld [smem:[#allocation9 + $0x2d]]
        %v1341 = vstv %s1340
        %v1342 = vmul.f32 %v1341, %v1323
        %v1343 = vmul.f32 %v1341, %v1325
        %v1344 = vmul.f32 %v1341, %v1327
        %v1345 = vmul.f32 %v1341, %v1329
        %v1346 = vadd.f32 %v1294, %v1342
        %v1347 = vadd.f32 %v1295, %v1343
        %v1348 = vadd.f32 %v1296, %v1344
        %v1349 = vadd.f32 %v1297, %v1345
        %s1350 = sld [smem:[#allocation9 + $0x51]]
        %v1351 = vstv %s1350
        %v1352 = vmul.f32 %v1351, %v1323
        %v1353 = vmul.f32 %v1351, %v1325
        %v1354 = vmul.f32 %v1351, %v1327
        %v1355 = vmul.f32 %v1351, %v1329
        %v1356 = vadd.f32 %v1304, %v1352
        %v1357 = vadd.f32 %v1305, %v1353
        %v1358 = vadd.f32 %v1306, %v1354
        %v1359 = vadd.f32 %v1307, %v1355
        %s1360 = sld [smem:[#allocation9 + $0x75]]
        %v1361 = vstv %s1360
        %v1362 = vmul.f32 %v1361, %v1323
        %v1363 = vmul.f32 %v1361, %v1325
        %v1364 = vmul.f32 %v1361, %v1327
        %v1365 = vmul.f32 %v1361, %v1329
        %v1366 = vadd.f32 %v1314, %v1362
        %v1367 = vadd.f32 %v1315, %v1363
        %v1368 = vadd.f32 %v1316, %v1364
        %v1369 = vadd.f32 %v1317, %v1365
        %s1370 = sld [smem:[#allocation9 + $0xa]]
        %v1371 = vstv %s1370
        %v1372 = vmul.f32 %v1371, %v1318
        %v1373 = vmul.f32 %v1371, %v1319
        %v1374 = vmul.f32 %v1371, %v1320
        %v1375 = vmul.f32 %v1371, %v1321
        %v1376 = vadd.f32 %v1336, %v1372
        %v1377 = vadd.f32 %v1337, %v1373
        %v1378 = vadd.f32 %v1338, %v1374
        %v1379 = vadd.f32 %v1339, %v1375
        %s1380 = sld [smem:[#allocation9 + $0x2e]]
        %v1381 = vstv %s1380
        %v1382 = vmul.f32 %v1381, %v1318
        %v1383 = vmul.f32 %v1381, %v1319
        %v1384 = vmul.f32 %v1381, %v1320
        %v1385 = vmul.f32 %v1381, %v1321
        %v1386 = vadd.f32 %v1346, %v1382
        %v1387 = vadd.f32 %v1347, %v1383
        %v1388 = vadd.f32 %v1348, %v1384
        %v1389 = vadd.f32 %v1349, %v1385
        %s1390 = sld [smem:[#allocation9 + $0x52]]
        %v1391 = vstv %s1390
        %v1392 = vmul.f32 %v1391, %v1318
        %v1393 = vmul.f32 %v1391, %v1319
        %v1394 = vmul.f32 %v1391, %v1320
        %v1395 = vmul.f32 %v1391, %v1321
        %v1396 = vadd.f32 %v1356, %v1392
        %v1397 = vadd.f32 %v1357, %v1393
        %v1398 = vadd.f32 %v1358, %v1394
        %v1399 = vadd.f32 %v1359, %v1395
        %s1400 = sld [smem:[#allocation9 + $0x76]]
        %v1401 = vstv %s1400
        %v1402 = vmul.f32 %v1401, %v1318
        %v1403 = vmul.f32 %v1401, %v1319
        %v1404 = vmul.f32 %v1401, %v1320
        %v1405 = vmul.f32 %v1401, %v1321
        %v1406 = vadd.f32 %v1366, %v1402
        %v1407 = vadd.f32 %v1367, %v1403
        %v1408 = vadd.f32 %v1368, %v1404
        %v1409 = vadd.f32 %v1369, %v1405
        %1410 = vrot.lane.b32.xlu0 %v1318, 127
        %v1411 = vpop.permute.xlu0 %1410
        %1412 = vrot.lane.b32.xlu0 %v1319, 127
        %v1413 = vpop.permute.xlu0 %1412
        %1414 = vrot.lane.b32.xlu0 %v1320, 127
        %v1415 = vpop.permute.xlu0 %1414
        %1416 = vrot.lane.b32.xlu0 %v1321, 127
        %v1417 = vpop.permute.xlu0 %1416
        %s1418 = sld [smem:[#allocation9 + $0xb]]
        %v1419 = vstv %s1418
        %v1420 = vmul.f32 %v1419, %v1411
        %v1421 = vmul.f32 %v1419, %v1413
        %v1422 = vmul.f32 %v1419, %v1415
        %v1423 = vmul.f32 %v1419, %v1417
        %v1424 = vadd.f32 %v1376, %v1420
        %v1425 = vadd.f32 %v1377, %v1421
        %v1426 = vadd.f32 %v1378, %v1422
        %v1427 = vadd.f32 %v1379, %v1423
        %s1428 = sld [smem:[#allocation9 + $0x2f]]
        %v1429 = vstv %s1428
        %v1430 = vmul.f32 %v1429, %v1411
        %v1431 = vmul.f32 %v1429, %v1413
        %v1432 = vmul.f32 %v1429, %v1415
        %v1433 = vmul.f32 %v1429, %v1417
        %v1434 = vadd.f32 %v1386, %v1430
        %v1435 = vadd.f32 %v1387, %v1431
        %v1436 = vadd.f32 %v1388, %v1432
        %v1437 = vadd.f32 %v1389, %v1433
        %s1438 = sld [smem:[#allocation9 + $0x53]]
        %v1439 = vstv %s1438
        %v1440 = vmul.f32 %v1439, %v1411
        %v1441 = vmul.f32 %v1439, %v1413
        %v1442 = vmul.f32 %v1439, %v1415
        %v1443 = vmul.f32 %v1439, %v1417
        %v1444 = vadd.f32 %v1396, %v1440
        %v1445 = vadd.f32 %v1397, %v1441
        %v1446 = vadd.f32 %v1398, %v1442
        %v1447 = vadd.f32 %v1399, %v1443
        %s1448 = sld [smem:[#allocation9 + $0x77]]
        %v1449 = vstv %s1448
        %v1450 = vmul.f32 %v1449, %v1411
        %v1451 = vmul.f32 %v1449, %v1413
        %v1452 = vmul.f32 %v1449, %v1415
        %v1453 = vmul.f32 %v1449, %v1417
        %v1454 = vadd.f32 %v1406, %v1450
        %v1455 = vadd.f32 %v1407, %v1451
        %v1456 = vadd.f32 %v1408, %v1452
        %v1457 = vadd.f32 %v1409, %v1453
        %v1458 = vld [vmem:[%s899 + $0x8] sm:$0xff]
        %v1459 = vld [vmem:[%s899 + $0x10] sm:$0xff]
        %v1460 = vld [vmem:[%s899 + $0x18] sm:$0xff]
        %v1461 = vld [vmem:[%s899 + $0x20] sm:$0xff]
        %1462 = vrot.lane.b32.xlu0 %v1458, 1
        %v1463 = vpop.permute.xlu0 %1462
        %1464 = vrot.lane.b32.xlu0 %v1459, 1
        %v1465 = vpop.permute.xlu0 %1464
        %1466 = vrot.lane.b32.xlu0 %v1460, 1
        %v1467 = vpop.permute.xlu0 %1466
        %1468 = vrot.lane.b32.xlu0 %v1461, 1
        %v1469 = vpop.permute.xlu0 %1468
        %s1470 = sld [smem:[#allocation9 + $0xc]]
        %v1471 = vstv %s1470
        %v1472 = vmul.f32 %v1471, %v1463
        %v1473 = vmul.f32 %v1471, %v1465
        %v1474 = vmul.f32 %v1471, %v1467
        %v1475 = vmul.f32 %v1471, %v1469
        %v1476 = vadd.f32 %v1424, %v1472
        %v1477 = vadd.f32 %v1425, %v1473
        %v1478 = vadd.f32 %v1426, %v1474
        %v1479 = vadd.f32 %v1427, %v1475
        %s1480 = sld [smem:[#allocation9 + $0x30]]
        %v1481 = vstv %s1480
        %v1482 = vmul.f32 %v1481, %v1463
        %v1483 = vmul.f32 %v1481, %v1465
        %v1484 = vmul.f32 %v1481, %v1467
        %v1485 = vmul.f32 %v1481, %v1469
        %v1486 = vadd.f32 %v1434, %v1482
        %v1487 = vadd.f32 %v1435, %v1483
        %v1488 = vadd.f32 %v1436, %v1484
        %v1489 = vadd.f32 %v1437, %v1485
        %s1490 = sld [smem:[#allocation9 + $0x54]]
        %v1491 = vstv %s1490
        %v1492 = vmul.f32 %v1491, %v1463
        %v1493 = vmul.f32 %v1491, %v1465
        %v1494 = vmul.f32 %v1491, %v1467
        %v1495 = vmul.f32 %v1491, %v1469
        %v1496 = vadd.f32 %v1444, %v1492
        %v1497 = vadd.f32 %v1445, %v1493
        %v1498 = vadd.f32 %v1446, %v1494
        %v1499 = vadd.f32 %v1447, %v1495
        %s1500 = sld [smem:[#allocation9 + $0x78]]
        %v1501 = vstv %s1500
        %v1502 = vmul.f32 %v1501, %v1463
        %v1503 = vmul.f32 %v1501, %v1465
        %v1504 = vmul.f32 %v1501, %v1467
        %v1505 = vmul.f32 %v1501, %v1469
        %v1506 = vadd.f32 %v1454, %v1502
        %v1507 = vadd.f32 %v1455, %v1503
        %v1508 = vadd.f32 %v1456, %v1504
        %v1509 = vadd.f32 %v1457, %v1505
        %s1510 = sld [smem:[#allocation9 + $0xd]]
        %v1511 = vstv %s1510
        %v1512 = vmul.f32 %v1511, %v1458
        %v1513 = vmul.f32 %v1511, %v1459
        %v1514 = vmul.f32 %v1511, %v1460
        %v1515 = vmul.f32 %v1511, %v1461
        %v1516 = vadd.f32 %v1476, %v1512
        %v1517 = vadd.f32 %v1477, %v1513
        %v1518 = vadd.f32 %v1478, %v1514
        %v1519 = vadd.f32 %v1479, %v1515
        %s1520 = sld [smem:[#allocation9 + $0x31]]
        %v1521 = vstv %s1520
        %v1522 = vmul.f32 %v1521, %v1458
        %v1523 = vmul.f32 %v1521, %v1459
        %v1524 = vmul.f32 %v1521, %v1460
        %v1525 = vmul.f32 %v1521, %v1461
        %v1526 = vadd.f32 %v1486, %v1522
        %v1527 = vadd.f32 %v1487, %v1523
        %v1528 = vadd.f32 %v1488, %v1524
        %v1529 = vadd.f32 %v1489, %v1525
        %s1530 = sld [smem:[#allocation9 + $0x55]]
        %v1531 = vstv %s1530
        %v1532 = vmul.f32 %v1531, %v1458
        %v1533 = vmul.f32 %v1531, %v1459
        %v1534 = vmul.f32 %v1531, %v1460
        %v1535 = vmul.f32 %v1531, %v1461
        %v1536 = vadd.f32 %v1496, %v1532
        %v1537 = vadd.f32 %v1497, %v1533
        %v1538 = vadd.f32 %v1498, %v1534
        %v1539 = vadd.f32 %v1499, %v1535
        %s1540 = sld [smem:[#allocation9 + $0x79]]
        %v1541 = vstv %s1540
        %v1542 = vmul.f32 %v1541, %v1458
        %v1543 = vmul.f32 %v1541, %v1459
        %v1544 = vmul.f32 %v1541, %v1460
        %v1545 = vmul.f32 %v1541, %v1461
        %v1546 = vadd.f32 %v1506, %v1542
        %v1547 = vadd.f32 %v1507, %v1543
        %v1548 = vadd.f32 %v1508, %v1544
        %v1549 = vadd.f32 %v1509, %v1545
        %1550 = vrot.lane.b32.xlu0 %v1458, 127
        %v1551 = vpop.permute.xlu0 %1550
        %1552 = vrot.lane.b32.xlu0 %v1459, 127
        %v1553 = vpop.permute.xlu0 %1552
        %1554 = vrot.lane.b32.xlu0 %v1460, 127
        %v1555 = vpop.permute.xlu0 %1554
        %1556 = vrot.lane.b32.xlu0 %v1461, 127
        %v1557 = vpop.permute.xlu0 %1556
        %s1558 = sld [smem:[#allocation9 + $0xe]]
        %v1559 = vstv %s1558
        %v1560 = vmul.f32 %v1559, %v1551
        %v1561 = vmul.f32 %v1559, %v1553
        %v1562 = vmul.f32 %v1559, %v1555
        %v1563 = vmul.f32 %v1559, %v1557
        %v1564 = vadd.f32 %v1516, %v1560
        %v1565 = vadd.f32 %v1517, %v1561
        %v1566 = vadd.f32 %v1518, %v1562
        %v1567 = vadd.f32 %v1519, %v1563
        %s1568 = sld [smem:[#allocation9 + $0x32]]
        %v1569 = vstv %s1568
        %v1570 = vmul.f32 %v1569, %v1551
        %v1571 = vmul.f32 %v1569, %v1553
        %v1572 = vmul.f32 %v1569, %v1555
        %v1573 = vmul.f32 %v1569, %v1557
        %v1574 = vadd.f32 %v1526, %v1570
        %v1575 = vadd.f32 %v1527, %v1571
        %v1576 = vadd.f32 %v1528, %v1572
        %v1577 = vadd.f32 %v1529, %v1573
        %s1578 = sld [smem:[#allocation9 + $0x56]]
        %v1579 = vstv %s1578
        %v1580 = vmul.f32 %v1579, %v1551
        %v1581 = vmul.f32 %v1579, %v1553
        %v1582 = vmul.f32 %v1579, %v1555
        %v1583 = vmul.f32 %v1579, %v1557
        %v1584 = vadd.f32 %v1536, %v1580
        %v1585 = vadd.f32 %v1537, %v1581
        %v1586 = vadd.f32 %v1538, %v1582
        %v1587 = vadd.f32 %v1539, %v1583
        %s1588 = sld [smem:[#allocation9 + $0x7a]]
        %v1589 = vstv %s1588
        %v1590 = vmul.f32 %v1589, %v1551
        %v1591 = vmul.f32 %v1589, %v1553
        %v1592 = vmul.f32 %v1589, %v1555
        %v1593 = vmul.f32 %v1589, %v1557
        %v1594 = vadd.f32 %v1546, %v1590
        %v1595 = vadd.f32 %v1547, %v1591
        %v1596 = vadd.f32 %v1548, %v1592
        %v1597 = vadd.f32 %v1549, %v1593
        %v1598 = vld [vmem:[%s899 + $0x9] sm:$0xff]
        %v1599 = vld [vmem:[%s899 + $0x11] sm:$0xff]
        %v1600 = vld [vmem:[%s899 + $0x19] sm:$0xff]
        %v1601 = vld [vmem:[%s899 + $0x21] sm:$0xff]
        %1602 = vrot.lane.b32.xlu0 %v1598, 1
        %v1603 = vpop.permute.xlu0 %1602
        %1604 = vrot.lane.b32.xlu0 %v1599, 1
        %v1605 = vpop.permute.xlu0 %1604
        %1606 = vrot.lane.b32.xlu0 %v1600, 1
        %v1607 = vpop.permute.xlu0 %1606
        %1608 = vrot.lane.b32.xlu0 %v1601, 1
        %v1609 = vpop.permute.xlu0 %1608
        %s1610 = sld [smem:[#allocation9 + $0xf]]
        %v1611 = vstv %s1610
        %v1612 = vmul.f32 %v1611, %v1603
        %v1613 = vmul.f32 %v1611, %v1605
        %v1614 = vmul.f32 %v1611, %v1607
        %v1615 = vmul.f32 %v1611, %v1609
        %v1616 = vadd.f32 %v1564, %v1612
        %v1617 = vadd.f32 %v1565, %v1613
        %v1618 = vadd.f32 %v1566, %v1614
        %v1619 = vadd.f32 %v1567, %v1615
        %s1620 = sld [smem:[#allocation9 + $0x33]]
        %v1621 = vstv %s1620
        %v1622 = vmul.f32 %v1621, %v1603
        %v1623 = vmul.f32 %v1621, %v1605
        %v1624 = vmul.f32 %v1621, %v1607
        %v1625 = vmul.f32 %v1621, %v1609
        %v1626 = vadd.f32 %v1574, %v1622
        %v1627 = vadd.f32 %v1575, %v1623
        %v1628 = vadd.f32 %v1576, %v1624
        %v1629 = vadd.f32 %v1577, %v1625
        %s1630 = sld [smem:[#allocation9 + $0x57]]
        %v1631 = vstv %s1630
        %v1632 = vmul.f32 %v1631, %v1603
        %v1633 = vmul.f32 %v1631, %v1605
        %v1634 = vmul.f32 %v1631, %v1607
        %v1635 = vmul.f32 %v1631, %v1609
        %v1636 = vadd.f32 %v1584, %v1632
        %v1637 = vadd.f32 %v1585, %v1633
        %v1638 = vadd.f32 %v1586, %v1634
        %v1639 = vadd.f32 %v1587, %v1635
        %s1640 = sld [smem:[#allocation9 + $0x7b]]
        %v1641 = vstv %s1640
        %v1642 = vmul.f32 %v1641, %v1603
        %v1643 = vmul.f32 %v1641, %v1605
        %v1644 = vmul.f32 %v1641, %v1607
        %v1645 = vmul.f32 %v1641, %v1609
        %v1646 = vadd.f32 %v1594, %v1642
        %v1647 = vadd.f32 %v1595, %v1643
        %v1648 = vadd.f32 %v1596, %v1644
        %v1649 = vadd.f32 %v1597, %v1645
        %s1650 = sld [smem:[#allocation9 + $0x10]]
        %v1651 = vstv %s1650
        %v1652 = vmul.f32 %v1651, %v1598
        %v1653 = vmul.f32 %v1651, %v1599
        %v1654 = vmul.f32 %v1651, %v1600
        %v1655 = vmul.f32 %v1651, %v1601
        %v1656 = vadd.f32 %v1616, %v1652
        %v1657 = vadd.f32 %v1617, %v1653
        %v1658 = vadd.f32 %v1618, %v1654
        %v1659 = vadd.f32 %v1619, %v1655
        %s1660 = sld [smem:[#allocation9 + $0x34]]
        %v1661 = vstv %s1660
        %v1662 = vmul.f32 %v1661, %v1598
        %v1663 = vmul.f32 %v1661, %v1599
        %v1664 = vmul.f32 %v1661, %v1600
        %v1665 = vmul.f32 %v1661, %v1601
        %v1666 = vadd.f32 %v1626, %v1662
        %v1667 = vadd.f32 %v1627, %v1663
        %v1668 = vadd.f32 %v1628, %v1664
        %v1669 = vadd.f32 %v1629, %v1665
        %s1670 = sld [smem:[#allocation9 + $0x58]]
        %v1671 = vstv %s1670
        %v1672 = vmul.f32 %v1671, %v1598
        %v1673 = vmul.f32 %v1671, %v1599
        %v1674 = vmul.f32 %v1671, %v1600
        %v1675 = vmul.f32 %v1671, %v1601
        %v1676 = vadd.f32 %v1636, %v1672
        %v1677 = vadd.f32 %v1637, %v1673
        %v1678 = vadd.f32 %v1638, %v1674
        %v1679 = vadd.f32 %v1639, %v1675
        %s1680 = sld [smem:[#allocation9 + $0x7c]]
        %v1681 = vstv %s1680
        %v1682 = vmul.f32 %v1681, %v1598
        %v1683 = vmul.f32 %v1681, %v1599
        %v1684 = vmul.f32 %v1681, %v1600
        %v1685 = vmul.f32 %v1681, %v1601
        %v1686 = vadd.f32 %v1646, %v1682
        %v1687 = vadd.f32 %v1647, %v1683
        %v1688 = vadd.f32 %v1648, %v1684
        %v1689 = vadd.f32 %v1649, %v1685
        %1690 = vrot.lane.b32.xlu0 %v1598, 127
        %v1691 = vpop.permute.xlu0 %1690
        %1692 = vrot.lane.b32.xlu0 %v1599, 127
        %v1693 = vpop.permute.xlu0 %1692
        %1694 = vrot.lane.b32.xlu0 %v1600, 127
        %v1695 = vpop.permute.xlu0 %1694
        %1696 = vrot.lane.b32.xlu0 %v1601, 127
        %v1697 = vpop.permute.xlu0 %1696
        %s1698 = sld [smem:[#allocation9 + $0x11]]
        %v1699 = vstv %s1698
        %v1700 = vmul.f32 %v1699, %v1691
        %v1701 = vmul.f32 %v1699, %v1693
        %v1702 = vmul.f32 %v1699, %v1695
        %v1703 = vmul.f32 %v1699, %v1697
        %v1704 = vadd.f32 %v1656, %v1700
        %v1705 = vadd.f32 %v1657, %v1701
        %v1706 = vadd.f32 %v1658, %v1702
        %v1707 = vadd.f32 %v1659, %v1703
        %s1708 = sld [smem:[#allocation9 + $0x35]]
        %v1709 = vstv %s1708
        %v1710 = vmul.f32 %v1709, %v1691
        %v1711 = vmul.f32 %v1709, %v1693
        %v1712 = vmul.f32 %v1709, %v1695
        %v1713 = vmul.f32 %v1709, %v1697
        %v1714 = vadd.f32 %v1666, %v1710
        %v1715 = vadd.f32 %v1667, %v1711
        %v1716 = vadd.f32 %v1668, %v1712
        %v1717 = vadd.f32 %v1669, %v1713
        %s1718 = sld [smem:[#allocation9 + $0x59]]
        %v1719 = vstv %s1718
        %v1720 = vmul.f32 %v1719, %v1691
        %v1721 = vmul.f32 %v1719, %v1693
        %v1722 = vmul.f32 %v1719, %v1695
        %v1723 = vmul.f32 %v1719, %v1697
        %v1724 = vadd.f32 %v1676, %v1720
        %v1725 = vadd.f32 %v1677, %v1721
        %v1726 = vadd.f32 %v1678, %v1722
        %v1727 = vadd.f32 %v1679, %v1723
        %s1728 = sld [smem:[#allocation9 + $0x7d]]
        %v1729 = vstv %s1728
        %v1730 = vmul.f32 %v1729, %v1691
        %v1731 = vmul.f32 %v1729, %v1693
        %v1732 = vmul.f32 %v1729, %v1695
        %v1733 = vmul.f32 %v1729, %v1697
        %v1734 = vadd.f32 %v1686, %v1730
        %v1735 = vadd.f32 %v1687, %v1731
        %v1736 = vadd.f32 %v1688, %v1732
        %v1737 = vadd.f32 %v1689, %v1733
        %v1738 = vld [vmem:[%s904 + $0x7] sm:$0xff]
        %v1739 = vld [vmem:[%s904 + $0xf] sm:$0xff]
        %v1740 = vld [vmem:[%s904 + $0x17] sm:$0xff]
        %v1741 = vld [vmem:[%s904 + $0x1f] sm:$0xff]
        %1742 = vrot.lane.b32.xlu0 %v1738, 1
        %v1743 = vpop.permute.xlu0 %1742
        %1744 = vrot.lane.b32.xlu0 %v1739, 1
        %v1745 = vpop.permute.xlu0 %1744
        %1746 = vrot.lane.b32.xlu0 %v1740, 1
        %v1747 = vpop.permute.xlu0 %1746
        %1748 = vrot.lane.b32.xlu0 %v1741, 1
        %v1749 = vpop.permute.xlu0 %1748
        %s1750 = sld [smem:[#allocation9 + $0x12]]
        %v1751 = vstv %s1750
        %v1752 = vmul.f32 %v1751, %v1743
        %v1753 = vmul.f32 %v1751, %v1745
        %v1754 = vmul.f32 %v1751, %v1747
        %v1755 = vmul.f32 %v1751, %v1749
        %v1756 = vadd.f32 %v1704, %v1752
        %v1757 = vadd.f32 %v1705, %v1753
        %v1758 = vadd.f32 %v1706, %v1754
        %v1759 = vadd.f32 %v1707, %v1755
        %s1760 = sld [smem:[#allocation9 + $0x36]]
        %v1761 = vstv %s1760
        %v1762 = vmul.f32 %v1761, %v1743
        %v1763 = vmul.f32 %v1761, %v1745
        %v1764 = vmul.f32 %v1761, %v1747
        %v1765 = vmul.f32 %v1761, %v1749
        %v1766 = vadd.f32 %v1714, %v1762
        %v1767 = vadd.f32 %v1715, %v1763
        %v1768 = vadd.f32 %v1716, %v1764
        %v1769 = vadd.f32 %v1717, %v1765
        %s1770 = sld [smem:[#allocation9 + $0x5a]]
        %v1771 = vstv %s1770
        %v1772 = vmul.f32 %v1771, %v1743
        %v1773 = vmul.f32 %v1771, %v1745
        %v1774 = vmul.f32 %v1771, %v1747
        %v1775 = vmul.f32 %v1771, %v1749
        %v1776 = vadd.f32 %v1724, %v1772
        %v1777 = vadd.f32 %v1725, %v1773
        %v1778 = vadd.f32 %v1726, %v1774
        %v1779 = vadd.f32 %v1727, %v1775
        %s1780 = sld [smem:[#allocation9 + $0x7e]]
        %v1781 = vstv %s1780
        %v1782 = vmul.f32 %v1781, %v1743
        %v1783 = vmul.f32 %v1781, %v1745
        %v1784 = vmul.f32 %v1781, %v1747
        %v1785 = vmul.f32 %v1781, %v1749
        %v1786 = vadd.f32 %v1734, %v1782
        %v1787 = vadd.f32 %v1735, %v1783
        %v1788 = vadd.f32 %v1736, %v1784
        %v1789 = vadd.f32 %v1737, %v1785
        %s1790 = sld [smem:[#allocation9 + $0x13]]
        %v1791 = vstv %s1790
        %v1792 = vmul.f32 %v1791, %v1738
        %v1793 = vmul.f32 %v1791, %v1739
        %v1794 = vmul.f32 %v1791, %v1740
        %v1795 = vmul.f32 %v1791, %v1741
        %v1796 = vadd.f32 %v1756, %v1792
        %v1797 = vadd.f32 %v1757, %v1793
        %v1798 = vadd.f32 %v1758, %v1794
        %v1799 = vadd.f32 %v1759, %v1795
        %s1800 = sld [smem:[#allocation9 + $0x37]]
        %v1801 = vstv %s1800
        %v1802 = vmul.f32 %v1801, %v1738
        %v1803 = vmul.f32 %v1801, %v1739
        %v1804 = vmul.f32 %v1801, %v1740
        %v1805 = vmul.f32 %v1801, %v1741
        %v1806 = vadd.f32 %v1766, %v1802
        %v1807 = vadd.f32 %v1767, %v1803
        %v1808 = vadd.f32 %v1768, %v1804
        %v1809 = vadd.f32 %v1769, %v1805
        %s1810 = sld [smem:[#allocation9 + $0x5b]]
        %v1811 = vstv %s1810
        %v1812 = vmul.f32 %v1811, %v1738
        %v1813 = vmul.f32 %v1811, %v1739
        %v1814 = vmul.f32 %v1811, %v1740
        %v1815 = vmul.f32 %v1811, %v1741
        %v1816 = vadd.f32 %v1776, %v1812
        %v1817 = vadd.f32 %v1777, %v1813
        %v1818 = vadd.f32 %v1778, %v1814
        %v1819 = vadd.f32 %v1779, %v1815
        %s1820 = sld [smem:[#allocation9 + $0x7f]]
        %v1821 = vstv %s1820
        %v1822 = vmul.f32 %v1821, %v1738
        %v1823 = vmul.f32 %v1821, %v1739
        %v1824 = vmul.f32 %v1821, %v1740
        %v1825 = vmul.f32 %v1821, %v1741
        %v1826 = vadd.f32 %v1786, %v1822
        %v1827 = vadd.f32 %v1787, %v1823
        %v1828 = vadd.f32 %v1788, %v1824
        %v1829 = vadd.f32 %v1789, %v1825
        %1830 = vrot.lane.b32.xlu0 %v1738, 127
        %v1831 = vpop.permute.xlu0 %1830
        %1832 = vrot.lane.b32.xlu0 %v1739, 127
        %v1833 = vpop.permute.xlu0 %1832
        %1834 = vrot.lane.b32.xlu0 %v1740, 127
        %v1835 = vpop.permute.xlu0 %1834
        %1836 = vrot.lane.b32.xlu0 %v1741, 127
        %v1837 = vpop.permute.xlu0 %1836
        %s1838 = sld [smem:[#allocation9 + $0x14]]
        %v1839 = vstv %s1838
        %v1840 = vmul.f32 %v1839, %v1831
        %v1841 = vmul.f32 %v1839, %v1833
        %v1842 = vmul.f32 %v1839, %v1835
        %v1843 = vmul.f32 %v1839, %v1837
        %v1844 = vadd.f32 %v1796, %v1840
        %v1845 = vadd.f32 %v1797, %v1841
        %v1846 = vadd.f32 %v1798, %v1842
        %v1847 = vadd.f32 %v1799, %v1843
        %s1848 = sld [smem:[#allocation9 + $0x38]]
        %v1849 = vstv %s1848
        %v1850 = vmul.f32 %v1849, %v1831
        %v1851 = vmul.f32 %v1849, %v1833
        %v1852 = vmul.f32 %v1849, %v1835
        %v1853 = vmul.f32 %v1849, %v1837
        %v1854 = vadd.f32 %v1806, %v1850
        %v1855 = vadd.f32 %v1807, %v1851
        %v1856 = vadd.f32 %v1808, %v1852
        %v1857 = vadd.f32 %v1809, %v1853
        %s1858 = sld [smem:[#allocation9 + $0x5c]]
        %v1859 = vstv %s1858
        %v1860 = vmul.f32 %v1859, %v1831
        %v1861 = vmul.f32 %v1859, %v1833
        %v1862 = vmul.f32 %v1859, %v1835
        %v1863 = vmul.f32 %v1859, %v1837
        %v1864 = vadd.f32 %v1816, %v1860
        %v1865 = vadd.f32 %v1817, %v1861
        %v1866 = vadd.f32 %v1818, %v1862
        %v1867 = vadd.f32 %v1819, %v1863
        %s1868 = sld [smem:[#allocation9 + $0x80]]
        %v1869 = vstv %s1868
        %v1870 = vmul.f32 %v1869, %v1831
        %v1871 = vmul.f32 %v1869, %v1833
        %v1872 = vmul.f32 %v1869, %v1835
        %v1873 = vmul.f32 %v1869, %v1837
        %v1874 = vadd.f32 %v1826, %v1870
        %v1875 = vadd.f32 %v1827, %v1871
        %v1876 = vadd.f32 %v1828, %v1872
        %v1877 = vadd.f32 %v1829, %v1873
        %v1878 = vld [vmem:[%s904 + $0x8] sm:$0xff]
        %v1879 = vld [vmem:[%s904 + $0x10] sm:$0xff]
        %v1880 = vld [vmem:[%s904 + $0x18] sm:$0xff]
        %v1881 = vld [vmem:[%s904 + $0x20] sm:$0xff]
        %1882 = vrot.lane.b32.xlu0 %v1878, 1
        %v1883 = vpop.permute.xlu0 %1882
        %1884 = vrot.lane.b32.xlu0 %v1879, 1
        %v1885 = vpop.permute.xlu0 %1884
        %1886 = vrot.lane.b32.xlu0 %v1880, 1
        %v1887 = vpop.permute.xlu0 %1886
        %1888 = vrot.lane.b32.xlu0 %v1881, 1
        %v1889 = vpop.permute.xlu0 %1888
        %s1890 = sld [smem:[#allocation9 + $0x15]]
        %v1891 = vstv %s1890
        %v1892 = vmul.f32 %v1891, %v1883
        %v1893 = vmul.f32 %v1891, %v1885
        %v1894 = vmul.f32 %v1891, %v1887
        %v1895 = vmul.f32 %v1891, %v1889
        %v1896 = vadd.f32 %v1844, %v1892
        %v1897 = vadd.f32 %v1845, %v1893
        %v1898 = vadd.f32 %v1846, %v1894
        %v1899 = vadd.f32 %v1847, %v1895
        %s1900 = sld [smem:[#allocation9 + $0x39]]
        %v1901 = vstv %s1900
        %v1902 = vmul.f32 %v1901, %v1883
        %v1903 = vmul.f32 %v1901, %v1885
        %v1904 = vmul.f32 %v1901, %v1887
        %v1905 = vmul.f32 %v1901, %v1889
        %v1906 = vadd.f32 %v1854, %v1902
        %v1907 = vadd.f32 %v1855, %v1903
        %v1908 = vadd.f32 %v1856, %v1904
        %v1909 = vadd.f32 %v1857, %v1905
        %s1910 = sld [smem:[#allocation9 + $0x5d]]
        %v1911 = vstv %s1910
        %v1912 = vmul.f32 %v1911, %v1883
        %v1913 = vmul.f32 %v1911, %v1885
        %v1914 = vmul.f32 %v1911, %v1887
        %v1915 = vmul.f32 %v1911, %v1889
        %v1916 = vadd.f32 %v1864, %v1912
        %v1917 = vadd.f32 %v1865, %v1913
        %v1918 = vadd.f32 %v1866, %v1914
        %v1919 = vadd.f32 %v1867, %v1915
        %s1920 = sld [smem:[#allocation9 + $0x81]]
        %v1921 = vstv %s1920
        %v1922 = vmul.f32 %v1921, %v1883
        %v1923 = vmul.f32 %v1921, %v1885
        %v1924 = vmul.f32 %v1921, %v1887
        %v1925 = vmul.f32 %v1921, %v1889
        %v1926 = vadd.f32 %v1874, %v1922
        %v1927 = vadd.f32 %v1875, %v1923
        %v1928 = vadd.f32 %v1876, %v1924
        %v1929 = vadd.f32 %v1877, %v1925
        %s1930 = sld [smem:[#allocation9 + $0x16]]
        %v1931 = vstv %s1930
        %v1932 = vmul.f32 %v1931, %v1878
        %v1933 = vmul.f32 %v1931, %v1879
        %v1934 = vmul.f32 %v1931, %v1880
        %v1935 = vmul.f32 %v1931, %v1881
        %v1936 = vadd.f32 %v1896, %v1932
        %v1937 = vadd.f32 %v1897, %v1933
        %v1938 = vadd.f32 %v1898, %v1934
        %v1939 = vadd.f32 %v1899, %v1935
        %s1940 = sld [smem:[#allocation9 + $0x3a]]
        %v1941 = vstv %s1940
        %v1942 = vmul.f32 %v1941, %v1878
        %v1943 = vmul.f32 %v1941, %v1879
        %v1944 = vmul.f32 %v1941, %v1880
        %v1945 = vmul.f32 %v1941, %v1881
        %v1946 = vadd.f32 %v1906, %v1942
        %v1947 = vadd.f32 %v1907, %v1943
        %v1948 = vadd.f32 %v1908, %v1944
        %v1949 = vadd.f32 %v1909, %v1945
        %s1950 = sld [smem:[#allocation9 + $0x5e]]
        %v1951 = vstv %s1950
        %v1952 = vmul.f32 %v1951, %v1878
        %v1953 = vmul.f32 %v1951, %v1879
        %v1954 = vmul.f32 %v1951, %v1880
        %v1955 = vmul.f32 %v1951, %v1881
        %v1956 = vadd.f32 %v1916, %v1952
        %v1957 = vadd.f32 %v1917, %v1953
        %v1958 = vadd.f32 %v1918, %v1954
        %v1959 = vadd.f32 %v1919, %v1955
        %s1960 = sld [smem:[#allocation9 + $0x82]]
        %v1961 = vstv %s1960
        %v1962 = vmul.f32 %v1961, %v1878
        %v1963 = vmul.f32 %v1961, %v1879
        %v1964 = vmul.f32 %v1961, %v1880
        %v1965 = vmul.f32 %v1961, %v1881
        %v1966 = vadd.f32 %v1926, %v1962
        %v1967 = vadd.f32 %v1927, %v1963
        %v1968 = vadd.f32 %v1928, %v1964
        %v1969 = vadd.f32 %v1929, %v1965
        %1970 = vrot.lane.b32.xlu0 %v1878, 127
        %v1971 = vpop.permute.xlu0 %1970
        %1972 = vrot.lane.b32.xlu0 %v1879, 127
        %v1973 = vpop.permute.xlu0 %1972
        %1974 = vrot.lane.b32.xlu0 %v1880, 127
        %v1975 = vpop.permute.xlu0 %1974
        %1976 = vrot.lane.b32.xlu0 %v1881, 127
        %v1977 = vpop.permute.xlu0 %1976
        %s1978 = sld [smem:[#allocation9 + $0x17]]
        %v1979 = vstv %s1978
        %v1980 = vmul.f32 %v1979, %v1971
        %v1981 = vmul.f32 %v1979, %v1973
        %v1982 = vmul.f32 %v1979, %v1975
        %v1983 = vmul.f32 %v1979, %v1977
        %v1984 = vadd.f32 %v1936, %v1980
        %v1985 = vadd.f32 %v1937, %v1981
        %v1986 = vadd.f32 %v1938, %v1982
        %v1987 = vadd.f32 %v1939, %v1983
        %s1988 = sld [smem:[#allocation9 + $0x3b]]
        %v1989 = vstv %s1988
        %v1990 = vmul.f32 %v1989, %v1971
        %v1991 = vmul.f32 %v1989, %v1973
        %v1992 = vmul.f32 %v1989, %v1975
        %v1993 = vmul.f32 %v1989, %v1977
        %v1994 = vadd.f32 %v1946, %v1990
        %v1995 = vadd.f32 %v1947, %v1991
        %v1996 = vadd.f32 %v1948, %v1992
        %v1997 = vadd.f32 %v1949, %v1993
        %s1998 = sld [smem:[#allocation9 + $0x5f]]
        %v1999 = vstv %s1998
        %v2000 = vmul.f32 %v1999, %v1971
        %v2001 = vmul.f32 %v1999, %v1973
        %v2002 = vmul.f32 %v1999, %v1975
        %v2003 = vmul.f32 %v1999, %v1977
        %v2004 = vadd.f32 %v1956, %v2000
        %v2005 = vadd.f32 %v1957, %v2001
        %v2006 = vadd.f32 %v1958, %v2002
        %v2007 = vadd.f32 %v1959, %v2003
        %s2008 = sld [smem:[#allocation9 + $0x83]]
        %v2009 = vstv %s2008
        %v2010 = vmul.f32 %v2009, %v1971
        %v2011 = vmul.f32 %v2009, %v1973
        %v2012 = vmul.f32 %v2009, %v1975
        %v2013 = vmul.f32 %v2009, %v1977
        %v2014 = vadd.f32 %v1966, %v2010
        %v2015 = vadd.f32 %v1967, %v2011
        %v2016 = vadd.f32 %v1968, %v2012
        %v2017 = vadd.f32 %v1969, %v2013
        %v2018 = vld [vmem:[%s904 + $0x9] sm:$0xff]
        %v2019 = vld [vmem:[%s904 + $0x11] sm:$0xff]
        %v2020 = vld [vmem:[%s904 + $0x19] sm:$0xff]
        %v2021 = vld [vmem:[%s904 + $0x21] sm:$0xff]
        %2022 = vrot.lane.b32.xlu0 %v2018, 1
        %v2023 = vpop.permute.xlu0 %2022
        %2024 = vrot.lane.b32.xlu0 %v2019, 1
        %v2025 = vpop.permute.xlu0 %2024
        %2026 = vrot.lane.b32.xlu0 %v2020, 1
        %v2027 = vpop.permute.xlu0 %2026
        %2028 = vrot.lane.b32.xlu0 %v2021, 1
        %v2029 = vpop.permute.xlu0 %2028
        %s2030 = sld [smem:[#allocation9 + $0x18]]
        %v2031 = vstv %s2030
        %v2032 = vmul.f32 %v2031, %v2023
        %v2033 = vmul.f32 %v2031, %v2025
        %v2034 = vmul.f32 %v2031, %v2027
        %v2035 = vmul.f32 %v2031, %v2029
        %v2036 = vadd.f32 %v1984, %v2032
        %v2037 = vadd.f32 %v1985, %v2033
        %v2038 = vadd.f32 %v1986, %v2034
        %v2039 = vadd.f32 %v1987, %v2035
        %s2040 = sld [smem:[#allocation9 + $0x3c]]
        %v2041 = vstv %s2040
        %v2042 = vmul.f32 %v2041, %v2023
        %v2043 = vmul.f32 %v2041, %v2025
        %v2044 = vmul.f32 %v2041, %v2027
        %v2045 = vmul.f32 %v2041, %v2029
        %v2046 = vadd.f32 %v1994, %v2042
        %v2047 = vadd.f32 %v1995, %v2043
        %v2048 = vadd.f32 %v1996, %v2044
        %v2049 = vadd.f32 %v1997, %v2045
        %s2050 = sld [smem:[#allocation9 + $0x60]]
        %v2051 = vstv %s2050
        %v2052 = vmul.f32 %v2051, %v2023
        %v2053 = vmul.f32 %v2051, %v2025
        %v2054 = vmul.f32 %v2051, %v2027
        %v2055 = vmul.f32 %v2051, %v2029
        %v2056 = vadd.f32 %v2004, %v2052
        %v2057 = vadd.f32 %v2005, %v2053
        %v2058 = vadd.f32 %v2006, %v2054
        %v2059 = vadd.f32 %v2007, %v2055
        %s2060 = sld [smem:[#allocation9 + $0x84]]
        %v2061 = vstv %s2060
        %v2062 = vmul.f32 %v2061, %v2023
        %v2063 = vmul.f32 %v2061, %v2025
        %v2064 = vmul.f32 %v2061, %v2027
        %v2065 = vmul.f32 %v2061, %v2029
        %v2066 = vadd.f32 %v2014, %v2062
        %v2067 = vadd.f32 %v2015, %v2063
        %v2068 = vadd.f32 %v2016, %v2064
        %v2069 = vadd.f32 %v2017, %v2065
        %s2070 = sld [smem:[#allocation9 + $0x19]]
        %v2071 = vstv %s2070
        %v2072 = vmul.f32 %v2071, %v2018
        %v2073 = vmul.f32 %v2071, %v2019
        %v2074 = vmul.f32 %v2071, %v2020
        %v2075 = vmul.f32 %v2071, %v2021
        %v2076 = vadd.f32 %v2036, %v2072
        %v2077 = vadd.f32 %v2037, %v2073
        %v2078 = vadd.f32 %v2038, %v2074
        %v2079 = vadd.f32 %v2039, %v2075
        %s2080 = sld [smem:[#allocation9 + $0x3d]]
        %v2081 = vstv %s2080
        %v2082 = vmul.f32 %v2081, %v2018
        %v2083 = vmul.f32 %v2081, %v2019
        %v2084 = vmul.f32 %v2081, %v2020
        %v2085 = vmul.f32 %v2081, %v2021
        %v2086 = vadd.f32 %v2046, %v2082
        %v2087 = vadd.f32 %v2047, %v2083
        %v2088 = vadd.f32 %v2048, %v2084
        %v2089 = vadd.f32 %v2049, %v2085
        %s2090 = sld [smem:[#allocation9 + $0x61]]
        %v2091 = vstv %s2090
        %v2092 = vmul.f32 %v2091, %v2018
        %v2093 = vmul.f32 %v2091, %v2019
        %v2094 = vmul.f32 %v2091, %v2020
        %v2095 = vmul.f32 %v2091, %v2021
        %v2096 = vadd.f32 %v2056, %v2092
        %v2097 = vadd.f32 %v2057, %v2093
        %v2098 = vadd.f32 %v2058, %v2094
        %v2099 = vadd.f32 %v2059, %v2095
        %s2100 = sld [smem:[#allocation9 + $0x85]]
        %v2101 = vstv %s2100
        %v2102 = vmul.f32 %v2101, %v2018
        %v2103 = vmul.f32 %v2101, %v2019
        %v2104 = vmul.f32 %v2101, %v2020
        %v2105 = vmul.f32 %v2101, %v2021
        %v2106 = vadd.f32 %v2066, %v2102
        %v2107 = vadd.f32 %v2067, %v2103
        %v2108 = vadd.f32 %v2068, %v2104
        %v2109 = vadd.f32 %v2069, %v2105
        %2110 = vrot.lane.b32.xlu0 %v2018, 127
        %v2111 = vpop.permute.xlu0 %2110
        %2112 = vrot.lane.b32.xlu0 %v2019, 127
        %v2113 = vpop.permute.xlu0 %2112
        %2114 = vrot.lane.b32.xlu0 %v2020, 127
        %v2115 = vpop.permute.xlu0 %2114
        %2116 = vrot.lane.b32.xlu0 %v2021, 127
        %v2117 = vpop.permute.xlu0 %2116
        %s2118 = sld [smem:[#allocation9 + $0x1a]]
        %v2119 = vstv %s2118
        %v2120 = vmul.f32 %v2119, %v2111
        %v2121 = vmul.f32 %v2119, %v2113
        %v2122 = vmul.f32 %v2119, %v2115
        %v2123 = vmul.f32 %v2119, %v2117
        %v2124 = vadd.f32 %v2076, %v2120
        %v2125 = vadd.f32 %v2077, %v2121
        %v2126 = vadd.f32 %v2078, %v2122
        %v2127 = vadd.f32 %v2079, %v2123
        %s2128 = sld [smem:[#allocation9 + $0x3e]]
        %v2129 = vstv %s2128
        %v2130 = vmul.f32 %v2129, %v2111
        %v2131 = vmul.f32 %v2129, %v2113
        %v2132 = vmul.f32 %v2129, %v2115
        %v2133 = vmul.f32 %v2129, %v2117
        %v2134 = vadd.f32 %v2086, %v2130
        %v2135 = vadd.f32 %v2087, %v2131
        %v2136 = vadd.f32 %v2088, %v2132
        %v2137 = vadd.f32 %v2089, %v2133
        %s2138 = sld [smem:[#allocation9 + $0x62]]
        %v2139 = vstv %s2138
        %v2140 = vmul.f32 %v2139, %v2111
        %v2141 = vmul.f32 %v2139, %v2113
        %v2142 = vmul.f32 %v2139, %v2115
        %v2143 = vmul.f32 %v2139, %v2117
        %v2144 = vadd.f32 %v2096, %v2140
        %v2145 = vadd.f32 %v2097, %v2141
        %v2146 = vadd.f32 %v2098, %v2142
        %v2147 = vadd.f32 %v2099, %v2143
        %s2148 = sld [smem:[#allocation9 + $0x86]]
        %v2149 = vstv %s2148
        %v2150 = vmul.f32 %v2149, %v2111
        %v2151 = vmul.f32 %v2149, %v2113
        %v2152 = vmul.f32 %v2149, %v2115
        %v2153 = vmul.f32 %v2149, %v2117
        %v2154 = vadd.f32 %v2106, %v2150
        %v2155 = vadd.f32 %v2107, %v2151
        %v2156 = vadd.f32 %v2108, %v2152
        %v2157 = vadd.f32 %v2109, %v2153
        %v2158 = vld [vmem:[%s909 + $0x7] sm:$0xff]
        %v2159 = vld [vmem:[%s909 + $0xf] sm:$0xff]
        %v2160 = vld [vmem:[%s909 + $0x17] sm:$0xff]
        %v2161 = vld [vmem:[%s909 + $0x1f] sm:$0xff]
        %2162 = vrot.lane.b32.xlu0 %v2158, 1
        %v2163 = vpop.permute.xlu0 %2162
        %2164 = vrot.lane.b32.xlu0 %v2159, 1
        %v2165 = vpop.permute.xlu0 %2164
        %2166 = vrot.lane.b32.xlu0 %v2160, 1
        %v2167 = vpop.permute.xlu0 %2166
        %2168 = vrot.lane.b32.xlu0 %v2161, 1
        %v2169 = vpop.permute.xlu0 %2168
        %s2170 = sld [smem:[#allocation9 + $0x1b]]
        %v2171 = vstv %s2170
        %v2172 = vmul.f32 %v2171, %v2163
        %v2173 = vmul.f32 %v2171, %v2165
        %v2174 = vmul.f32 %v2171, %v2167
        %v2175 = vmul.f32 %v2171, %v2169
        %v2176 = vadd.f32 %v2124, %v2172
        %v2177 = vadd.f32 %v2125, %v2173
        %v2178 = vadd.f32 %v2126, %v2174
        %v2179 = vadd.f32 %v2127, %v2175
        %s2180 = sld [smem:[#allocation9 + $0x3f]]
        %v2181 = vstv %s2180
        %v2182 = vmul.f32 %v2181, %v2163
        %v2183 = vmul.f32 %v2181, %v2165
        %v2184 = vmul.f32 %v2181, %v2167
        %v2185 = vmul.f32 %v2181, %v2169
        %v2186 = vadd.f32 %v2134, %v2182
        %v2187 = vadd.f32 %v2135, %v2183
        %v2188 = vadd.f32 %v2136, %v2184
        %v2189 = vadd.f32 %v2137, %v2185
        %s2190 = sld [smem:[#allocation9 + $0x63]]
        %v2191 = vstv %s2190
        %v2192 = vmul.f32 %v2191, %v2163
        %v2193 = vmul.f32 %v2191, %v2165
        %v2194 = vmul.f32 %v2191, %v2167
        %v2195 = vmul.f32 %v2191, %v2169
        %v2196 = vadd.f32 %v2144, %v2192
        %v2197 = vadd.f32 %v2145, %v2193
        %v2198 = vadd.f32 %v2146, %v2194
        %v2199 = vadd.f32 %v2147, %v2195
        %s2200 = sld [smem:[#allocation9 + $0x87]]
        %v2201 = vstv %s2200
        %v2202 = vmul.f32 %v2201, %v2163
        %v2203 = vmul.f32 %v2201, %v2165
        %v2204 = vmul.f32 %v2201, %v2167
        %v2205 = vmul.f32 %v2201, %v2169
        %v2206 = vadd.f32 %v2154, %v2202
        %v2207 = vadd.f32 %v2155, %v2203
        %v2208 = vadd.f32 %v2156, %v2204
        %v2209 = vadd.f32 %v2157, %v2205
        %s2210 = sld [smem:[#allocation9 + $0x1c]]
        %v2211 = vstv %s2210
        %v2212 = vmul.f32 %v2211, %v2158
        %v2213 = vmul.f32 %v2211, %v2159
        %v2214 = vmul.f32 %v2211, %v2160
        %v2215 = vmul.f32 %v2211, %v2161
        %v2216 = vadd.f32 %v2176, %v2212
        %v2217 = vadd.f32 %v2177, %v2213
        %v2218 = vadd.f32 %v2178, %v2214
        %v2219 = vadd.f32 %v2179, %v2215
        %s2220 = sld [smem:[#allocation9 + $0x40]]
        %v2221 = vstv %s2220
        %v2222 = vmul.f32 %v2221, %v2158
        %v2223 = vmul.f32 %v2221, %v2159
        %v2224 = vmul.f32 %v2221, %v2160
        %v2225 = vmul.f32 %v2221, %v2161
        %v2226 = vadd.f32 %v2186, %v2222
        %v2227 = vadd.f32 %v2187, %v2223
        %v2228 = vadd.f32 %v2188, %v2224
        %v2229 = vadd.f32 %v2189, %v2225
        %s2230 = sld [smem:[#allocation9 + $0x64]]
        %v2231 = vstv %s2230
        %v2232 = vmul.f32 %v2231, %v2158
        %v2233 = vmul.f32 %v2231, %v2159
        %v2234 = vmul.f32 %v2231, %v2160
        %v2235 = vmul.f32 %v2231, %v2161
        %v2236 = vadd.f32 %v2196, %v2232
        %v2237 = vadd.f32 %v2197, %v2233
        %v2238 = vadd.f32 %v2198, %v2234
        %v2239 = vadd.f32 %v2199, %v2235
        %s2240 = sld [smem:[#allocation9 + $0x88]]
        %v2241 = vstv %s2240
        %v2242 = vmul.f32 %v2241, %v2158
        %v2243 = vmul.f32 %v2241, %v2159
        %v2244 = vmul.f32 %v2241, %v2160
        %v2245 = vmul.f32 %v2241, %v2161
        %v2246 = vadd.f32 %v2206, %v2242
        %v2247 = vadd.f32 %v2207, %v2243
        %v2248 = vadd.f32 %v2208, %v2244
        %v2249 = vadd.f32 %v2209, %v2245
        %2250 = vrot.lane.b32.xlu0 %v2158, 127
        %v2251 = vpop.permute.xlu0 %2250
        %2252 = vrot.lane.b32.xlu0 %v2159, 127
        %v2253 = vpop.permute.xlu0 %2252
        %2254 = vrot.lane.b32.xlu0 %v2160, 127
        %v2255 = vpop.permute.xlu0 %2254
        %2256 = vrot.lane.b32.xlu0 %v2161, 127
        %v2257 = vpop.permute.xlu0 %2256
        %s2258 = sld [smem:[#allocation9 + $0x1d]]
        %v2259 = vstv %s2258
        %v2260 = vmul.f32 %v2259, %v2251
        %v2261 = vmul.f32 %v2259, %v2253
        %v2262 = vmul.f32 %v2259, %v2255
        %v2263 = vmul.f32 %v2259, %v2257
        %v2264 = vadd.f32 %v2216, %v2260
        %v2265 = vadd.f32 %v2217, %v2261
        %v2266 = vadd.f32 %v2218, %v2262
        %v2267 = vadd.f32 %v2219, %v2263
        %s2268 = sld [smem:[#allocation9 + $0x41]]
        %v2269 = vstv %s2268
        %v2270 = vmul.f32 %v2269, %v2251
        %v2271 = vmul.f32 %v2269, %v2253
        %v2272 = vmul.f32 %v2269, %v2255
        %v2273 = vmul.f32 %v2269, %v2257
        %v2274 = vadd.f32 %v2226, %v2270
        %v2275 = vadd.f32 %v2227, %v2271
        %v2276 = vadd.f32 %v2228, %v2272
        %v2277 = vadd.f32 %v2229, %v2273
        %s2278 = sld [smem:[#allocation9 + $0x65]]
        %v2279 = vstv %s2278
        %v2280 = vmul.f32 %v2279, %v2251
        %v2281 = vmul.f32 %v2279, %v2253
        %v2282 = vmul.f32 %v2279, %v2255
        %v2283 = vmul.f32 %v2279, %v2257
        %v2284 = vadd.f32 %v2236, %v2280
        %v2285 = vadd.f32 %v2237, %v2281
        %v2286 = vadd.f32 %v2238, %v2282
        %v2287 = vadd.f32 %v2239, %v2283
        %s2288 = sld [smem:[#allocation9 + $0x89]]
        %v2289 = vstv %s2288
        %v2290 = vmul.f32 %v2289, %v2251
        %v2291 = vmul.f32 %v2289, %v2253
        %v2292 = vmul.f32 %v2289, %v2255
        %v2293 = vmul.f32 %v2289, %v2257
        %v2294 = vadd.f32 %v2246, %v2290
        %v2295 = vadd.f32 %v2247, %v2291
        %v2296 = vadd.f32 %v2248, %v2292
        %v2297 = vadd.f32 %v2249, %v2293
        %v2298 = vld [vmem:[%s909 + $0x8] sm:$0xff]
        %v2299 = vld [vmem:[%s909 + $0x10] sm:$0xff]
        %v2300 = vld [vmem:[%s909 + $0x18] sm:$0xff]
        %v2301 = vld [vmem:[%s909 + $0x20] sm:$0xff]
        %2302 = vrot.lane.b32.xlu0 %v2298, 1
        %v2303 = vpop.permute.xlu0 %2302
        %2304 = vrot.lane.b32.xlu0 %v2299, 1
        %v2305 = vpop.permute.xlu0 %2304
        %2306 = vrot.lane.b32.xlu0 %v2300, 1
        %v2307 = vpop.permute.xlu0 %2306
        %2308 = vrot.lane.b32.xlu0 %v2301, 1
        %v2309 = vpop.permute.xlu0 %2308
        %s2310 = sld [smem:[#allocation9 + $0x1e]]
        %v2311 = vstv %s2310
        %v2312 = vmul.f32 %v2311, %v2303
        %v2313 = vmul.f32 %v2311, %v2305
        %v2314 = vmul.f32 %v2311, %v2307
        %v2315 = vmul.f32 %v2311, %v2309
        %v2316 = vadd.f32 %v2264, %v2312
        %v2317 = vadd.f32 %v2265, %v2313
        %v2318 = vadd.f32 %v2266, %v2314
        %v2319 = vadd.f32 %v2267, %v2315
        %s2320 = sld [smem:[#allocation9 + $0x42]]
        %v2321 = vstv %s2320
        %v2322 = vmul.f32 %v2321, %v2303
        %v2323 = vmul.f32 %v2321, %v2305
        %v2324 = vmul.f32 %v2321, %v2307
        %v2325 = vmul.f32 %v2321, %v2309
        %v2326 = vadd.f32 %v2274, %v2322
        %v2327 = vadd.f32 %v2275, %v2323
        %v2328 = vadd.f32 %v2276, %v2324
        %v2329 = vadd.f32 %v2277, %v2325
        %s2330 = sld [smem:[#allocation9 + $0x66]]
        %v2331 = vstv %s2330
        %v2332 = vmul.f32 %v2331, %v2303
        %v2333 = vmul.f32 %v2331, %v2305
        %v2334 = vmul.f32 %v2331, %v2307
        %v2335 = vmul.f32 %v2331, %v2309
        %v2336 = vadd.f32 %v2284, %v2332
        %v2337 = vadd.f32 %v2285, %v2333
        %v2338 = vadd.f32 %v2286, %v2334
        %v2339 = vadd.f32 %v2287, %v2335
        %s2340 = sld [smem:[#allocation9 + $0x8a]]
        %v2341 = vstv %s2340
        %v2342 = vmul.f32 %v2341, %v2303
        %v2343 = vmul.f32 %v2341, %v2305
        %v2344 = vmul.f32 %v2341, %v2307
        %v2345 = vmul.f32 %v2341, %v2309
        %v2346 = vadd.f32 %v2294, %v2342
        %v2347 = vadd.f32 %v2295, %v2343
        %v2348 = vadd.f32 %v2296, %v2344
        %v2349 = vadd.f32 %v2297, %v2345
        %s2350 = sld [smem:[#allocation9 + $0x1f]]
        %v2351 = vstv %s2350
        %v2352 = vmul.f32 %v2351, %v2298
        %v2353 = vmul.f32 %v2351, %v2299
        %v2354 = vmul.f32 %v2351, %v2300
        %v2355 = vmul.f32 %v2351, %v2301
        %v2356 = vadd.f32 %v2316, %v2352
        %v2357 = vadd.f32 %v2317, %v2353
        %v2358 = vadd.f32 %v2318, %v2354
        %v2359 = vadd.f32 %v2319, %v2355
        %s2360 = sld [smem:[#allocation9 + $0x43]]
        %v2361 = vstv %s2360
        %v2362 = vmul.f32 %v2361, %v2298
        %v2363 = vmul.f32 %v2361, %v2299
        %v2364 = vmul.f32 %v2361, %v2300
        %v2365 = vmul.f32 %v2361, %v2301
        %v2366 = vadd.f32 %v2326, %v2362
        %v2367 = vadd.f32 %v2327, %v2363
        %v2368 = vadd.f32 %v2328, %v2364
        %v2369 = vadd.f32 %v2329, %v2365
        %s2370 = sld [smem:[#allocation9 + $0x67]]
        %v2371 = vstv %s2370
        %v2372 = vmul.f32 %v2371, %v2298
        %v2373 = vmul.f32 %v2371, %v2299
        %v2374 = vmul.f32 %v2371, %v2300
        %v2375 = vmul.f32 %v2371, %v2301
        %v2376 = vadd.f32 %v2336, %v2372
        %v2377 = vadd.f32 %v2337, %v2373
        %v2378 = vadd.f32 %v2338, %v2374
        %v2379 = vadd.f32 %v2339, %v2375
        %s2380 = sld [smem:[#allocation9 + $0x8b]]
        %v2381 = vstv %s2380
        %v2382 = vmul.f32 %v2381, %v2298
        %v2383 = vmul.f32 %v2381, %v2299
        %v2384 = vmul.f32 %v2381, %v2300
        %v2385 = vmul.f32 %v2381, %v2301
        %v2386 = vadd.f32 %v2346, %v2382
        %v2387 = vadd.f32 %v2347, %v2383
        %v2388 = vadd.f32 %v2348, %v2384
        %v2389 = vadd.f32 %v2349, %v2385
        %2390 = vrot.lane.b32.xlu0 %v2298, 127
        %v2391 = vpop.permute.xlu0 %2390
        %2392 = vrot.lane.b32.xlu0 %v2299, 127
        %v2393 = vpop.permute.xlu0 %2392
        %2394 = vrot.lane.b32.xlu0 %v2300, 127
        %v2395 = vpop.permute.xlu0 %2394
        %2396 = vrot.lane.b32.xlu0 %v2301, 127
        %v2397 = vpop.permute.xlu0 %2396
        %s2398 = sld [smem:[#allocation9 + $0x20]]
        %v2399 = vstv %s2398
        %v2400 = vmul.f32 %v2399, %v2391
        %v2401 = vmul.f32 %v2399, %v2393
        %v2402 = vmul.f32 %v2399, %v2395
        %v2403 = vmul.f32 %v2399, %v2397
        %v2404 = vadd.f32 %v2356, %v2400
        %v2405 = vadd.f32 %v2357, %v2401
        %v2406 = vadd.f32 %v2358, %v2402
        %v2407 = vadd.f32 %v2359, %v2403
        %s2408 = sld [smem:[#allocation9 + $0x44]]
        %v2409 = vstv %s2408
        %v2410 = vmul.f32 %v2409, %v2391
        %v2411 = vmul.f32 %v2409, %v2393
        %v2412 = vmul.f32 %v2409, %v2395
        %v2413 = vmul.f32 %v2409, %v2397
        %v2414 = vadd.f32 %v2366, %v2410
        %v2415 = vadd.f32 %v2367, %v2411
        %v2416 = vadd.f32 %v2368, %v2412
        %v2417 = vadd.f32 %v2369, %v2413
        %s2418 = sld [smem:[#allocation9 + $0x68]]
        %v2419 = vstv %s2418
        %v2420 = vmul.f32 %v2419, %v2391
        %v2421 = vmul.f32 %v2419, %v2393
        %v2422 = vmul.f32 %v2419, %v2395
        %v2423 = vmul.f32 %v2419, %v2397
        %v2424 = vadd.f32 %v2376, %v2420
        %v2425 = vadd.f32 %v2377, %v2421
        %v2426 = vadd.f32 %v2378, %v2422
        %v2427 = vadd.f32 %v2379, %v2423
        %s2428 = sld [smem:[#allocation9 + $0x8c]]
        %v2429 = vstv %s2428
        %v2430 = vmul.f32 %v2429, %v2391
        %v2431 = vmul.f32 %v2429, %v2393
        %v2432 = vmul.f32 %v2429, %v2395
        %v2433 = vmul.f32 %v2429, %v2397
        %v2434 = vadd.f32 %v2386, %v2430
        %v2435 = vadd.f32 %v2387, %v2431
        %v2436 = vadd.f32 %v2388, %v2432
        %v2437 = vadd.f32 %v2389, %v2433
        %v2438 = vld [vmem:[%s909 + $0x9] sm:$0xff]
        %v2439 = vld [vmem:[%s909 + $0x11] sm:$0xff]
        %v2440 = vld [vmem:[%s909 + $0x19] sm:$0xff]
        %v2441 = vld [vmem:[%s909 + $0x21] sm:$0xff]
        %2442 = vrot.lane.b32.xlu0 %v2438, 1
        %v2443 = vpop.permute.xlu0 %2442
        %2444 = vrot.lane.b32.xlu0 %v2439, 1
        %v2445 = vpop.permute.xlu0 %2444
        %2446 = vrot.lane.b32.xlu0 %v2440, 1
        %v2447 = vpop.permute.xlu0 %2446
        %2448 = vrot.lane.b32.xlu0 %v2441, 1
        %v2449 = vpop.permute.xlu0 %2448
        %s2450 = sld [smem:[#allocation9 + $0x21]]
        %v2451 = vstv %s2450
        %v2452 = vmul.f32 %v2451, %v2443
        %v2453 = vmul.f32 %v2451, %v2445
        %v2454 = vmul.f32 %v2451, %v2447
        %v2455 = vmul.f32 %v2451, %v2449
        %v2456 = vadd.f32 %v2404, %v2452
        %v2457 = vadd.f32 %v2405, %v2453
        %v2458 = vadd.f32 %v2406, %v2454
        %v2459 = vadd.f32 %v2407, %v2455
        %s2460 = sld [smem:[#allocation9 + $0x45]]
        %v2461 = vstv %s2460
        %v2462 = vmul.f32 %v2461, %v2443
        %v2463 = vmul.f32 %v2461, %v2445
        %v2464 = vmul.f32 %v2461, %v2447
        %v2465 = vmul.f32 %v2461, %v2449
        %v2466 = vadd.f32 %v2414, %v2462
        %v2467 = vadd.f32 %v2415, %v2463
        %v2468 = vadd.f32 %v2416, %v2464
        %v2469 = vadd.f32 %v2417, %v2465
        %s2470 = sld [smem:[#allocation9 + $0x69]]
        %v2471 = vstv %s2470
        %v2472 = vmul.f32 %v2471, %v2443
        %v2473 = vmul.f32 %v2471, %v2445
        %v2474 = vmul.f32 %v2471, %v2447
        %v2475 = vmul.f32 %v2471, %v2449
        %v2476 = vadd.f32 %v2424, %v2472
        %v2477 = vadd.f32 %v2425, %v2473
        %v2478 = vadd.f32 %v2426, %v2474
        %v2479 = vadd.f32 %v2427, %v2475
        %s2480 = sld [smem:[#allocation9 + $0x8d]]
        %v2481 = vstv %s2480
        %v2482 = vmul.f32 %v2481, %v2443
        %v2483 = vmul.f32 %v2481, %v2445
        %v2484 = vmul.f32 %v2481, %v2447
        %v2485 = vmul.f32 %v2481, %v2449
        %v2486 = vadd.f32 %v2434, %v2482
        %v2487 = vadd.f32 %v2435, %v2483
        %v2488 = vadd.f32 %v2436, %v2484
        %v2489 = vadd.f32 %v2437, %v2485
        %s2490 = sld [smem:[#allocation9 + $0x22]]
        %v2491 = vstv %s2490
        %v2492 = vmul.f32 %v2491, %v2438
        %v2493 = vmul.f32 %v2491, %v2439
        %v2494 = vmul.f32 %v2491, %v2440
        %v2495 = vmul.f32 %v2491, %v2441
        %v2496 = vadd.f32 %v2456, %v2492
        %v2497 = vadd.f32 %v2457, %v2493
        %v2498 = vadd.f32 %v2458, %v2494
        %v2499 = vadd.f32 %v2459, %v2495
        %s2500 = sld [smem:[#allocation9 + $0x46]]
        %v2501 = vstv %s2500
        %v2502 = vmul.f32 %v2501, %v2438
        %v2503 = vmul.f32 %v2501, %v2439
        %v2504 = vmul.f32 %v2501, %v2440
        %v2505 = vmul.f32 %v2501, %v2441
        %v2506 = vadd.f32 %v2466, %v2502
        %v2507 = vadd.f32 %v2467, %v2503
        %v2508 = vadd.f32 %v2468, %v2504
        %v2509 = vadd.f32 %v2469, %v2505
        %s2510 = sld [smem:[#allocation9 + $0x6a]]
        %v2511 = vstv %s2510
        %v2512 = vmul.f32 %v2511, %v2438
        %v2513 = vmul.f32 %v2511, %v2439
        %v2514 = vmul.f32 %v2511, %v2440
        %v2515 = vmul.f32 %v2511, %v2441
        %v2516 = vadd.f32 %v2476, %v2512
        %v2517 = vadd.f32 %v2477, %v2513
        %v2518 = vadd.f32 %v2478, %v2514
        %v2519 = vadd.f32 %v2479, %v2515
        %s2520 = sld [smem:[#allocation9 + $0x8e]]
        %v2521 = vstv %s2520
        %v2522 = vmul.f32 %v2521, %v2438
        %v2523 = vmul.f32 %v2521, %v2439
        %v2524 = vmul.f32 %v2521, %v2440
        %v2525 = vmul.f32 %v2521, %v2441
        %v2526 = vadd.f32 %v2486, %v2522
        %v2527 = vadd.f32 %v2487, %v2523
        %v2528 = vadd.f32 %v2488, %v2524
        %v2529 = vadd.f32 %v2489, %v2525
        %2530 = vrot.lane.b32.xlu0 %v2438, 127
        %v2531 = vpop.permute.xlu0 %2530
        %2532 = vrot.lane.b32.xlu0 %v2439, 127
        %v2533 = vpop.permute.xlu0 %2532
        %2534 = vrot.lane.b32.xlu0 %v2440, 127
        %v2535 = vpop.permute.xlu0 %2534
        %2536 = vrot.lane.b32.xlu0 %v2441, 127
        %v2537 = vpop.permute.xlu0 %2536
        %s2538 = sld [smem:[#allocation9 + $0x23]]
        %v2539 = vstv %s2538
        %v2540 = vmul.f32 %v2539, %v2531
        %v2541 = vmul.f32 %v2539, %v2533
        %v2542 = vmul.f32 %v2539, %v2535
        %v2543 = vmul.f32 %v2539, %v2537
        %v2544 = vadd.f32 %v2496, %v2540
        %v2545 = vadd.f32 %v2497, %v2541
        %v2546 = vadd.f32 %v2498, %v2542
        %v2547 = vadd.f32 %v2499, %v2543
        %s2548 = sld [smem:[#allocation9 + $0x47]]
        %v2549 = vstv %s2548
        %v2550 = vmul.f32 %v2549, %v2531
        %v2551 = vmul.f32 %v2549, %v2533
        %v2552 = vmul.f32 %v2549, %v2535
        %v2553 = vmul.f32 %v2549, %v2537
        %v2554 = vadd.f32 %v2506, %v2550
        %v2555 = vadd.f32 %v2507, %v2551
        %v2556 = vadd.f32 %v2508, %v2552
        %v2557 = vadd.f32 %v2509, %v2553
        %s2558 = sld [smem:[#allocation9 + $0x6b]]
        %v2559 = vstv %s2558
        %v2560 = vmul.f32 %v2559, %v2531
        %v2561 = vmul.f32 %v2559, %v2533
        %v2562 = vmul.f32 %v2559, %v2535
        %v2563 = vmul.f32 %v2559, %v2537
        %v2564 = vadd.f32 %v2516, %v2560
        %v2565 = vadd.f32 %v2517, %v2561
        %v2566 = vadd.f32 %v2518, %v2562
        %v2567 = vadd.f32 %v2519, %v2563
        %s2568 = sld [smem:[#allocation9 + $0x8f]]
        %v2569 = vstv %s2568
        %v2570 = vmul.f32 %v2569, %v2531
        %v2571 = vmul.f32 %v2569, %v2533
        %v2572 = vmul.f32 %v2569, %v2535
        %v2573 = vmul.f32 %v2569, %v2537
        %v2574 = vadd.f32 %v2526, %v2570
        %v2575 = vadd.f32 %v2527, %v2571
        %v2576 = vadd.f32 %v2528, %v2572
        %v2577 = vadd.f32 %v2529, %v2573
        %s2578 = sld [smem:[#allocation10]]
        %v2579 = vstv %s2578
        %v2580 = vadd.f32 %v2544, %v2579
        %v2581 = vadd.f32 %v2545, %v2579
        %v2582 = vadd.f32 %v2546, %v2579
        %v2583 = vadd.f32 %v2547, %v2579
        %v2584 = vmax.f32 %v2580, 0.0
        %v2585 = vmax.f32 %v2581, 0.0
        %v2586 = vmax.f32 %v2582, 0.0
        %v2587 = vmax.f32 %v2583, 0.0
        %s2588 = sld [smem:[#allocation10 + $0x1]]
        %v2589 = vstv %s2588
        %v2590 = vadd.f32 %v2554, %v2589
        %v2591 = vadd.f32 %v2555, %v2589
        %v2592 = vadd.f32 %v2556, %v2589
        %v2593 = vadd.f32 %v2557, %v2589
        %v2594 = vmax.f32 %v2590, 0.0
        %v2595 = vmax.f32 %v2591, 0.0
        %v2596 = vmax.f32 %v2592, 0.0
        %v2597 = vmax.f32 %v2593, 0.0
        %s2598 = sld [smem:[#allocation10 + $0x2]]
        %v2599 = vstv %s2598
        %v2600 = vadd.f32 %v2564, %v2599
        %v2601 = vadd.f32 %v2565, %v2599
        %v2602 = vadd.f32 %v2566, %v2599
        %v2603 = vadd.f32 %v2567, %v2599
        %v2604 = vmax.f32 %v2600, 0.0
        %v2605 = vmax.f32 %v2601, 0.0
        %v2606 = vmax.f32 %v2602, 0.0
        %v2607 = vmax.f32 %v2603, 0.0
        %s2608 = sld [smem:[#allocation10 + $0x3]]
        %v2609 = vstv %s2608
        %v2610 = vadd.f32 %v2574, %v2609
        %v2611 = vadd.f32 %v2575, %v2609
        %v2612 = vadd.f32 %v2576, %v2609
        %v2613 = vadd.f32 %v2577, %v2609
        %v2614 = vmax.f32 %v2610, 0.0
        %v2615 = vmax.f32 %v2611, 0.0
        %v2616 = vmax.f32 %v2612, 0.0
        %v2617 = vmax.f32 %v2613, 0.0
        %2618 = vst.msk [vmem:[#allocation2 + $0x8] sm:$0xff] %vm462, %v2584
        %2619 = vst.msk [vmem:[#allocation2 + $0x10] sm:$0xff] %vm462, %v2585
        %2620 = vst.msk [vmem:[#allocation2 + $0x18] sm:$0xff] %vm462, %v2586
        %2621 = vst.msk [vmem:[#allocation2 + $0x20] sm:$0xff] %vm462, %v2587
        %2622 = vst.msk [vmem:[%s899 + $0x8] sm:$0xff] %vm462, %v2594
        %2623 = vst.msk [vmem:[%s899 + $0x10] sm:$0xff] %vm462, %v2595
        %2624 = vst.msk [vmem:[%s899 + $0x18] sm:$0xff] %vm462, %v2596
        %2625 = vst.msk [vmem:[%s899 + $0x20] sm:$0xff] %vm462, %v2597
        %2626 = vst.msk [vmem:[%s904 + $0x8] sm:$0xff] %vm462, %v2604
        %2627 = vst.msk [vmem:[%s904 + $0x10] sm:$0xff] %vm462, %v2605
        %2628 = vst.msk [vmem:[%s904 + $0x18] sm:$0xff] %vm462, %v2606
        %2629 = vst.msk [vmem:[%s904 + $0x20] sm:$0xff] %vm462, %v2607
        %2630 = vst.msk [vmem:[%s909 + $0x8] sm:$0xff] %vm462, %v2614
        %2631 = vst.msk [vmem:[%s909 + $0x10] sm:$0xff] %vm462, %v2615
        %2632 = vst.msk [vmem:[%s909 + $0x18] sm:$0xff] %vm462, %v2616
        %2633 = vst.msk [vmem:[%s909 + $0x20] sm:$0xff] %vm462, %v2617
        %v2634 = vld [vmem:[#allocation2 + $0x7] sm:$0xff]
        %v2635 = vld [vmem:[#allocation2 + $0xf] sm:$0xff]
        %v2636 = vld [vmem:[#allocation2 + $0x17] sm:$0xff]
        %v2637 = vld [vmem:[#allocation2 + $0x1f] sm:$0xff]
        %2638 = vrot.lane.b32.xlu0 %v2634, 1
        %v2639 = vpop.permute.xlu0 %2638
        %2640 = vrot.lane.b32.xlu0 %v2635, 1
        %v2641 = vpop.permute.xlu0 %2640
        %2642 = vrot.lane.b32.xlu0 %v2636, 1
        %v2643 = vpop.permute.xlu0 %2642
        %2644 = vrot.lane.b32.xlu0 %v2637, 1
        %v2645 = vpop.permute.xlu0 %2644
        %s2646 = sld [smem:[#allocation12]]
        %v2647 = vstv %s2646
        %v2648 = vmul.f32 %v2647, %v2639
        %v2649 = vmul.f32 %v2647, %v2641
        %v2650 = vmul.f32 %v2647, %v2643
        %v2651 = vmul.f32 %v2647, %v2645
        %s2652 = sld [smem:[#allocation12 + $0x24]]
        %v2653 = vstv %s2652
        %v2654 = vmul.f32 %v2653, %v2639
        %v2655 = vmul.f32 %v2653, %v2641
        %v2656 = vmul.f32 %v2653, %v2643
        %v2657 = vmul.f32 %v2653, %v2645
        %s2658 = sld [smem:[#allocation12 + $0x48]]
        %v2659 = vstv %s2658
        %v2660 = vmul.f32 %v2659, %v2639
        %v2661 = vmul.f32 %v2659, %v2641
        %v2662 = vmul.f32 %v2659, %v2643
        %v2663 = vmul.f32 %v2659, %v2645
        %s2664 = sld [smem:[#allocation12 + $0x6c]]
        %v2665 = vstv %s2664
        %v2666 = vmul.f32 %v2665, %v2639
        %v2667 = vmul.f32 %v2665, %v2641
        %v2668 = vmul.f32 %v2665, %v2643
        %v2669 = vmul.f32 %v2665, %v2645
        %s2670 = sld [smem:[#allocation12 + $0x1]]
        %v2671 = vstv %s2670
        %v2672 = vmul.f32 %v2671, %v2634
        %v2673 = vmul.f32 %v2671, %v2635
        %v2674 = vmul.f32 %v2671, %v2636
        %v2675 = vmul.f32 %v2671, %v2637
        %v2676 = vadd.f32 %v2648, %v2672
        %v2677 = vadd.f32 %v2649, %v2673
        %v2678 = vadd.f32 %v2650, %v2674
        %v2679 = vadd.f32 %v2651, %v2675
        %s2680 = sld [smem:[#allocation12 + $0x25]]
        %v2681 = vstv %s2680
        %v2682 = vmul.f32 %v2681, %v2634
        %v2683 = vmul.f32 %v2681, %v2635
        %v2684 = vmul.f32 %v2681, %v2636
        %v2685 = vmul.f32 %v2681, %v2637
        %v2686 = vadd.f32 %v2654, %v2682
        %v2687 = vadd.f32 %v2655, %v2683
        %v2688 = vadd.f32 %v2656, %v2684
        %v2689 = vadd.f32 %v2657, %v2685
        %s2690 = sld [smem:[#allocation12 + $0x49]]
        %v2691 = vstv %s2690
        %v2692 = vmul.f32 %v2691, %v2634
        %v2693 = vmul.f32 %v2691, %v2635
        %v2694 = vmul.f32 %v2691, %v2636
        %v2695 = vmul.f32 %v2691, %v2637
        %v2696 = vadd.f32 %v2660, %v2692
        %v2697 = vadd.f32 %v2661, %v2693
        %v2698 = vadd.f32 %v2662, %v2694
        %v2699 = vadd.f32 %v2663, %v2695
        %s2700 = sld [smem:[#allocation12 + $0x6d]]
        %v2701 = vstv %s2700
        %v2702 = vmul.f32 %v2701, %v2634
        %v2703 = vmul.f32 %v2701, %v2635
        %v2704 = vmul.f32 %v2701, %v2636
        %v2705 = vmul.f32 %v2701, %v2637
        %v2706 = vadd.f32 %v2666, %v2702
        %v2707 = vadd.f32 %v2667, %v2703
        %v2708 = vadd.f32 %v2668, %v2704
        %v2709 = vadd.f32 %v2669, %v2705
        %2710 = vrot.lane.b32.xlu0 %v2634, 127
        %v2711 = vpop.permute.xlu0 %2710
        %2712 = vrot.lane.b32.xlu0 %v2635, 127
        %v2713 = vpop.permute.xlu0 %2712
        %2714 = vrot.lane.b32.xlu0 %v2636, 127
        %v2715 = vpop.permute.xlu0 %2714
        %2716 = vrot.lane.b32.xlu0 %v2637, 127
        %v2717 = vpop.permute.xlu0 %2716
        %s2718 = sld [smem:[#allocation12 + $0x2]]
        %v2719 = vstv %s2718
        %v2720 = vmul.f32 %v2719, %v2711
        %v2721 = vmul.f32 %v2719, %v2713
        %v2722 = vmul.f32 %v2719, %v2715
        %v2723 = vmul.f32 %v2719, %v2717
        %v2724 = vadd.f32 %v2676, %v2720
        %v2725 = vadd.f32 %v2677, %v2721
        %v2726 = vadd.f32 %v2678, %v2722
        %v2727 = vadd.f32 %v2679, %v2723
        %s2728 = sld [smem:[#allocation12 + $0x26]]
        %v2729 = vstv %s2728
        %v2730 = vmul.f32 %v2729, %v2711
        %v2731 = vmul.f32 %v2729, %v2713
        %v2732 = vmul.f32 %v2729, %v2715
        %v2733 = vmul.f32 %v2729, %v2717
        %v2734 = vadd.f32 %v2686, %v2730
        %v2735 = vadd.f32 %v2687, %v2731
        %v2736 = vadd.f32 %v2688, %v2732
        %v2737 = vadd.f32 %v2689, %v2733
        %s2738 = sld [smem:[#allocation12 + $0x4a]]
        %v2739 = vstv %s2738
        %v2740 = vmul.f32 %v2739, %v2711
        %v2741 = vmul.f32 %v2739, %v2713
        %v2742 = vmul.f32 %v2739, %v2715
        %v2743 = vmul.f32 %v2739, %v2717
        %v2744 = vadd.f32 %v2696, %v2740
        %v2745 = vadd.f32 %v2697, %v2741
        %v2746 = vadd.f32 %v2698, %v2742
        %v2747 = vadd.f32 %v2699, %v2743
        %s2748 = sld [smem:[#allocation12 + $0x6e]]
        %v2749 = vstv %s2748
        %v2750 = vmul.f32 %v2749, %v2711
        %v2751 = vmul.f32 %v2749, %v2713
        %v2752 = vmul.f32 %v2749, %v2715
        %v2753 = vmul.f32 %v2749, %v2717
        %v2754 = vadd.f32 %v2706, %v2750
        %v2755 = vadd.f32 %v2707, %v2751
        %v2756 = vadd.f32 %v2708, %v2752
        %v2757 = vadd.f32 %v2709, %v2753
        %v2758 = vld [vmem:[#allocation2 + $0x8] sm:$0xff]
        %v2759 = vld [vmem:[#allocation2 + $0x10] sm:$0xff]
        %v2760 = vld [vmem:[#allocation2 + $0x18] sm:$0xff]
        %v2761 = vld [vmem:[#allocation2 + $0x20] sm:$0xff]
        %2762 = vrot.lane.b32.xlu0 %v2758, 1
        %v2763 = vpop.permute.xlu0 %2762
        %2764 = vrot.lane.b32.xlu0 %v2759, 1
        %v2765 = vpop.permute.xlu0 %2764
        %2766 = vrot.lane.b32.xlu0 %v2760, 1
        %v2767 = vpop.permute.xlu0 %2766
        %2768 = vrot.lane.b32.xlu0 %v2761, 1
        %v2769 = vpop.permute.xlu0 %2768
        %s2770 = sld [smem:[#allocation12 + $0x3]]
        %v2771 = vstv %s2770
        %v2772 = vmul.f32 %v2771, %v2763
        %v2773 = vmul.f32 %v2771, %v2765
        %v2774 = vmul.f32 %v2771, %v2767
        %v2775 = vmul.f32 %v2771, %v2769
        %v2776 = vadd.f32 %v2724, %v2772
        %v2777 = vadd.f32 %v2725, %v2773
        %v2778 = vadd.f32 %v2726, %v2774
        %v2779 = vadd.f32 %v2727, %v2775
        %s2780 = sld [smem:[#allocation12 + $0x27]]
        %v2781 = vstv %s2780
        %v2782 = vmul.f32 %v2781, %v2763
        %v2783 = vmul.f32 %v2781, %v2765
        %v2784 = vmul.f32 %v2781, %v2767
        %v2785 = vmul.f32 %v2781, %v2769
        %v2786 = vadd.f32 %v2734, %v2782
        %v2787 = vadd.f32 %v2735, %v2783
        %v2788 = vadd.f32 %v2736, %v2784
        %v2789 = vadd.f32 %v2737, %v2785
        %s2790 = sld [smem:[#allocation12 + $0x4b]]
        %v2791 = vstv %s2790
        %v2792 = vmul.f32 %v2791, %v2763
        %v2793 = vmul.f32 %v2791, %v2765
        %v2794 = vmul.f32 %v2791, %v2767
        %v2795 = vmul.f32 %v2791, %v2769
        %v2796 = vadd.f32 %v2744, %v2792
        %v2797 = vadd.f32 %v2745, %v2793
        %v2798 = vadd.f32 %v2746, %v2794
        %v2799 = vadd.f32 %v2747, %v2795
        %s2800 = sld [smem:[#allocation12 + $0x6f]]
        %v2801 = vstv %s2800
        %v2802 = vmul.f32 %v2801, %v2763
        %v2803 = vmul.f32 %v2801, %v2765
        %v2804 = vmul.f32 %v2801, %v2767
        %v2805 = vmul.f32 %v2801, %v2769
        %v2806 = vadd.f32 %v2754, %v2802
        %v2807 = vadd.f32 %v2755, %v2803
        %v2808 = vadd.f32 %v2756, %v2804
        %v2809 = vadd.f32 %v2757, %v2805
        %s2810 = sld [smem:[#allocation12 + $0x4]]
        %v2811 = vstv %s2810
        %v2812 = vmul.f32 %v2811, %v2758
        %v2813 = vmul.f32 %v2811, %v2759
        %v2814 = vmul.f32 %v2811, %v2760
        %v2815 = vmul.f32 %v2811, %v2761
        %v2816 = vadd.f32 %v2776, %v2812
        %v2817 = vadd.f32 %v2777, %v2813
        %v2818 = vadd.f32 %v2778, %v2814
        %v2819 = vadd.f32 %v2779, %v2815
        %s2820 = sld [smem:[#allocation12 + $0x28]]
        %v2821 = vstv %s2820
        %v2822 = vmul.f32 %v2821, %v2758
        %v2823 = vmul.f32 %v2821, %v2759
        %v2824 = vmul.f32 %v2821, %v2760
        %v2825 = vmul.f32 %v2821, %v2761
        %v2826 = vadd.f32 %v2786, %v2822
        %v2827 = vadd.f32 %v2787, %v2823
        %v2828 = vadd.f32 %v2788, %v2824
        %v2829 = vadd.f32 %v2789, %v2825
        %s2830 = sld [smem:[#allocation12 + $0x4c]]
        %v2831 = vstv %s2830
        %v2832 = vmul.f32 %v2831, %v2758
        %v2833 = vmul.f32 %v2831, %v2759
        %v2834 = vmul.f32 %v2831, %v2760
        %v2835 = vmul.f32 %v2831, %v2761
        %v2836 = vadd.f32 %v2796, %v2832
        %v2837 = vadd.f32 %v2797, %v2833
        %v2838 = vadd.f32 %v2798, %v2834
        %v2839 = vadd.f32 %v2799, %v2835
        %s2840 = sld [smem:[#allocation12 + $0x70]]
        %v2841 = vstv %s2840
        %v2842 = vmul.f32 %v2841, %v2758
        %v2843 = vmul.f32 %v2841, %v2759
        %v2844 = vmul.f32 %v2841, %v2760
        %v2845 = vmul.f32 %v2841, %v2761
        %v2846 = vadd.f32 %v2806, %v2842
        %v2847 = vadd.f32 %v2807, %v2843
        %v2848 = vadd.f32 %v2808, %v2844
        %v2849 = vadd.f32 %v2809, %v2845
        %2850 = vrot.lane.b32.xlu0 %v2758, 127
        %v2851 = vpop.permute.xlu0 %2850
        %2852 = vrot.lane.b32.xlu0 %v2759, 127
        %v2853 = vpop.permute.xlu0 %2852
        %2854 = vrot.lane.b32.xlu0 %v2760, 127
        %v2855 = vpop.permute.xlu0 %2854
        %2856 = vrot.lane.b32.xlu0 %v2761, 127
        %v2857 = vpop.permute.xlu0 %2856
        %s2858 = sld [smem:[#allocation12 + $0x5]]
        %v2859 = vstv %s2858
        %v2860 = vmul.f32 %v2859, %v2851
        %v2861 = vmul.f32 %v2859, %v2853
        %v2862 = vmul.f32 %v2859, %v2855
        %v2863 = vmul.f32 %v2859, %v2857
        %v2864 = vadd.f32 %v2816, %v2860
        %v2865 = vadd.f32 %v2817, %v2861
        %v2866 = vadd.f32 %v2818, %v2862
        %v2867 = vadd.f32 %v2819, %v2863
        %s2868 = sld [smem:[#allocation12 + $0x29]]
        %v2869 = vstv %s2868
        %v2870 = vmul.f32 %v2869, %v2851
        %v2871 = vmul.f32 %v2869, %v2853
        %v2872 = vmul.f32 %v2869, %v2855
        %v2873 = vmul.f32 %v2869, %v2857
        %v2874 = vadd.f32 %v2826, %v2870
        %v2875 = vadd.f32 %v2827, %v2871
        %v2876 = vadd.f32 %v2828, %v2872
        %v2877 = vadd.f32 %v2829, %v2873
        %s2878 = sld [smem:[#allocation12 + $0x4d]]
        %v2879 = vstv %s2878
        %v2880 = vmul.f32 %v2879, %v2851
        %v2881 = vmul.f32 %v2879, %v2853
        %v2882 = vmul.f32 %v2879, %v2855
        %v2883 = vmul.f32 %v2879, %v2857
        %v2884 = vadd.f32 %v2836, %v2880
        %v2885 = vadd.f32 %v2837, %v2881
        %v2886 = vadd.f32 %v2838, %v2882
        %v2887 = vadd.f32 %v2839, %v2883
        %s2888 = sld [smem:[#allocation12 + $0x71]]
        %v2889 = vstv %s2888
        %v2890 = vmul.f32 %v2889, %v2851
        %v2891 = vmul.f32 %v2889, %v2853
        %v2892 = vmul.f32 %v2889, %v2855
        %v2893 = vmul.f32 %v2889, %v2857
        %v2894 = vadd.f32 %v2846, %v2890
        %v2895 = vadd.f32 %v2847, %v2891
        %v2896 = vadd.f32 %v2848, %v2892
        %v2897 = vadd.f32 %v2849, %v2893
        %v2898 = vld [vmem:[#allocation2 + $0x9] sm:$0xff]
        %v2899 = vld [vmem:[#allocation2 + $0x11] sm:$0xff]
        %v2900 = vld [vmem:[#allocation2 + $0x19] sm:$0xff]
        %v2901 = vld [vmem:[#allocation2 + $0x21] sm:$0xff]
        %2902 = vrot.lane.b32.xlu0 %v2898, 1
        %v2903 = vpop.permute.xlu0 %2902
        %2904 = vrot.lane.b32.xlu0 %v2899, 1
        %v2905 = vpop.permute.xlu0 %2904
        %2906 = vrot.lane.b32.xlu0 %v2900, 1
        %v2907 = vpop.permute.xlu0 %2906
        %2908 = vrot.lane.b32.xlu0 %v2901, 1
        %v2909 = vpop.permute.xlu0 %2908
        %s2910 = sld [smem:[#allocation12 + $0x6]]
        %v2911 = vstv %s2910
        %v2912 = vmul.f32 %v2911, %v2903
        %v2913 = vmul.f32 %v2911, %v2905
        %v2914 = vmul.f32 %v2911, %v2907
        %v2915 = vmul.f32 %v2911, %v2909
        %v2916 = vadd.f32 %v2864, %v2912
        %v2917 = vadd.f32 %v2865, %v2913
        %v2918 = vadd.f32 %v2866, %v2914
        %v2919 = vadd.f32 %v2867, %v2915
        %s2920 = sld [smem:[#allocation12 + $0x2a]]
        %v2921 = vstv %s2920
        %v2922 = vmul.f32 %v2921, %v2903
        %v2923 = vmul.f32 %v2921, %v2905
        %v2924 = vmul.f32 %v2921, %v2907
        %v2925 = vmul.f32 %v2921, %v2909
        %v2926 = vadd.f32 %v2874, %v2922
        %v2927 = vadd.f32 %v2875, %v2923
        %v2928 = vadd.f32 %v2876, %v2924
        %v2929 = vadd.f32 %v2877, %v2925
        %s2930 = sld [smem:[#allocation12 + $0x4e]]
        %v2931 = vstv %s2930
        %v2932 = vmul.f32 %v2931, %v2903
        %v2933 = vmul.f32 %v2931, %v2905
        %v2934 = vmul.f32 %v2931, %v2907
        %v2935 = vmul.f32 %v2931, %v2909
        %v2936 = vadd.f32 %v2884, %v2932
        %v2937 = vadd.f32 %v2885, %v2933
        %v2938 = vadd.f32 %v2886, %v2934
        %v2939 = vadd.f32 %v2887, %v2935
        %s2940 = sld [smem:[#allocation12 + $0x72]]
        %v2941 = vstv %s2940
        %v2942 = vmul.f32 %v2941, %v2903
        %v2943 = vmul.f32 %v2941, %v2905
        %v2944 = vmul.f32 %v2941, %v2907
        %v2945 = vmul.f32 %v2941, %v2909
        %v2946 = vadd.f32 %v2894, %v2942
        %v2947 = vadd.f32 %v2895, %v2943
        %v2948 = vadd.f32 %v2896, %v2944
        %v2949 = vadd.f32 %v2897, %v2945
        %s2950 = sld [smem:[#allocation12 + $0x7]]
        %v2951 = vstv %s2950
        %v2952 = vmul.f32 %v2951, %v2898
        %v2953 = vmul.f32 %v2951, %v2899
        %v2954 = vmul.f32 %v2951, %v2900
        %v2955 = vmul.f32 %v2951, %v2901
        %v2956 = vadd.f32 %v2916, %v2952
        %v2957 = vadd.f32 %v2917, %v2953
        %v2958 = vadd.f32 %v2918, %v2954
        %v2959 = vadd.f32 %v2919, %v2955
        %s2960 = sld [smem:[#allocation12 + $0x2b]]
        %v2961 = vstv %s2960
        %v2962 = vmul.f32 %v2961, %v2898
        %v2963 = vmul.f32 %v2961, %v2899
        %v2964 = vmul.f32 %v2961, %v2900
        %v2965 = vmul.f32 %v2961, %v2901
        %v2966 = vadd.f32 %v2926, %v2962
        %v2967 = vadd.f32 %v2927, %v2963
        %v2968 = vadd.f32 %v2928, %v2964
        %v2969 = vadd.f32 %v2929, %v2965
        %s2970 = sld [smem:[#allocation12 + $0x4f]]
        %v2971 = vstv %s2970
        %v2972 = vmul.f32 %v2971, %v2898
        %v2973 = vmul.f32 %v2971, %v2899
        %v2974 = vmul.f32 %v2971, %v2900
        %v2975 = vmul.f32 %v2971, %v2901
        %v2976 = vadd.f32 %v2936, %v2972
        %v2977 = vadd.f32 %v2937, %v2973
        %v2978 = vadd.f32 %v2938, %v2974
        %v2979 = vadd.f32 %v2939, %v2975
        %s2980 = sld [smem:[#allocation12 + $0x73]]
        %v2981 = vstv %s2980
        %v2982 = vmul.f32 %v2981, %v2898
        %v2983 = vmul.f32 %v2981, %v2899
        %v2984 = vmul.f32 %v2981, %v2900
        %v2985 = vmul.f32 %v2981, %v2901
        %v2986 = vadd.f32 %v2946, %v2982
        %v2987 = vadd.f32 %v2947, %v2983
        %v2988 = vadd.f32 %v2948, %v2984
        %v2989 = vadd.f32 %v2949, %v2985
        %2990 = vrot.lane.b32.xlu0 %v2898, 127
        %v2991 = vpop.permute.xlu0 %2990
        %2992 = vrot.lane.b32.xlu0 %v2899, 127
        %v2993 = vpop.permute.xlu0 %2992
        %2994 = vrot.lane.b32.xlu0 %v2900, 127
        %v2995 = vpop.permute.xlu0 %2994
        %2996 = vrot.lane.b32.xlu0 %v2901, 127
        %v2997 = vpop.permute.xlu0 %2996
        %s2998 = sld [smem:[#allocation12 + $0x8]]
        %v2999 = vstv %s2998
        %v3000 = vmul.f32 %v2999, %v2991
        %v3001 = vmul.f32 %v2999, %v2993
        %v3002 = vmul.f32 %v2999, %v2995
        %v3003 = vmul.f32 %v2999, %v2997
        %v3004 = vadd.f32 %v2956, %v3000
        %v3005 = vadd.f32 %v2957, %v3001
        %v3006 = vadd.f32 %v2958, %v3002
        %v3007 = vadd.f32 %v2959, %v3003
        %s3008 = sld [smem:[#allocation12 + $0x2c]]
        %v3009 = vstv %s3008
        %v3010 = vmul.f32 %v3009, %v2991
        %v3011 = vmul.f32 %v3009, %v2993
        %v3012 = vmul.f32 %v3009, %v2995
        %v3013 = vmul.f32 %v3009, %v2997
        %v3014 = vadd.f32 %v2966, %v3010
        %v3015 = vadd.f32 %v2967, %v3011
        %v3016 = vadd.f32 %v2968, %v3012
        %v3017 = vadd.f32 %v2969, %v3013
        %s3018 = sld [smem:[#allocation12 + $0x50]]
        %v3019 = vstv %s3018
        %v3020 = vmul.f32 %v3019, %v2991
        %v3021 = vmul.f32 %v3019, %v2993
        %v3022 = vmul.f32 %v3019, %v2995
        %v3023 = vmul.f32 %v3019, %v2997
        %v3024 = vadd.f32 %v2976, %v3020
        %v3025 = vadd.f32 %v2977, %v3021
        %v3026 = vadd.f32 %v2978, %v3022
        %v3027 = vadd.f32 %v2979, %v3023
        %s3028 = sld [smem:[#allocation12 + $0x74]]
        %v3029 = vstv %s3028
        %v3030 = vmul.f32 %v3029, %v2991
        %v3031 = vmul.f32 %v3029, %v2993
        %v3032 = vmul.f32 %v3029, %v2995
        %v3033 = vmul.f32 %v3029, %v2997
        %v3034 = vadd.f32 %v2986, %v3030
        %v3035 = vadd.f32 %v2987, %v3031
        %v3036 = vadd.f32 %v2988, %v3032
        %v3037 = vadd.f32 %v2989, %v3033
        %v3038 = vld [vmem:[%s899 + $0x7] sm:$0xff]
        %v3039 = vld [vmem:[%s899 + $0xf] sm:$0xff]
        %v3040 = vld [vmem:[%s899 + $0x17] sm:$0xff]
        %v3041 = vld [vmem:[%s899 + $0x1f] sm:$0xff]
        %3042 = vrot.lane.b32.xlu0 %v3038, 1
        %v3043 = vpop.permute.xlu0 %3042
        %3044 = vrot.lane.b32.xlu0 %v3039, 1
        %v3045 = vpop.permute.xlu0 %3044
        %3046 = vrot.lane.b32.xlu0 %v3040, 1
        %v3047 = vpop.permute.xlu0 %3046
        %3048 = vrot.lane.b32.xlu0 %v3041, 1
        %v3049 = vpop.permute.xlu0 %3048
        %s3050 = sld [smem:[#allocation12 + $0x9]]
        %v3051 = vstv %s3050
        %v3052 = vmul.f32 %v3051, %v3043
        %v3053 = vmul.f32 %v3051, %v3045
        %v3054 = vmul.f32 %v3051, %v3047
        %v3055 = vmul.f32 %v3051, %v3049
        %v3056 = vadd.f32 %v3004, %v3052
        %v3057 = vadd.f32 %v3005, %v3053
        %v3058 = vadd.f32 %v3006, %v3054
        %v3059 = vadd.f32 %v3007, %v3055
        %s3060 = sld [smem:[#allocation12 + $0x2d]]
        %v3061 = vstv %s3060
        %v3062 = vmul.f32 %v3061, %v3043
        %v3063 = vmul.f32 %v3061, %v3045
        %v3064 = vmul.f32 %v3061, %v3047
        %v3065 = vmul.f32 %v3061, %v3049
        %v3066 = vadd.f32 %v3014, %v3062
        %v3067 = vadd.f32 %v3015, %v3063
        %v3068 = vadd.f32 %v3016, %v3064
        %v3069 = vadd.f32 %v3017, %v3065
        %s3070 = sld [smem:[#allocation12 + $0x51]]
        %v3071 = vstv %s3070
        %v3072 = vmul.f32 %v3071, %v3043
        %v3073 = vmul.f32 %v3071, %v3045
        %v3074 = vmul.f32 %v3071, %v3047
        %v3075 = vmul.f32 %v3071, %v3049
        %v3076 = vadd.f32 %v3024, %v3072
        %v3077 = vadd.f32 %v3025, %v3073
        %v3078 = vadd.f32 %v3026, %v3074
        %v3079 = vadd.f32 %v3027, %v3075
        %s3080 = sld [smem:[#allocation12 + $0x75]]
        %v3081 = vstv %s3080
        %v3082 = vmul.f32 %v3081, %v3043
        %v3083 = vmul.f32 %v3081, %v3045
        %v3084 = vmul.f32 %v3081, %v3047
        %v3085 = vmul.f32 %v3081, %v3049
        %v3086 = vadd.f32 %v3034, %v3082
        %v3087 = vadd.f32 %v3035, %v3083
        %v3088 = vadd.f32 %v3036, %v3084
        %v3089 = vadd.f32 %v3037, %v3085
        %s3090 = sld [smem:[#allocation12 + $0xa]]
        %v3091 = vstv %s3090
        %v3092 = vmul.f32 %v3091, %v3038
        %v3093 = vmul.f32 %v3091, %v3039
        %v3094 = vmul.f32 %v3091, %v3040
        %v3095 = vmul.f32 %v3091, %v3041
        %v3096 = vadd.f32 %v3056, %v3092
        %v3097 = vadd.f32 %v3057, %v3093
        %v3098 = vadd.f32 %v3058, %v3094
        %v3099 = vadd.f32 %v3059, %v3095
        %s3100 = sld [smem:[#allocation12 + $0x2e]]
        %v3101 = vstv %s3100
        %v3102 = vmul.f32 %v3101, %v3038
        %v3103 = vmul.f32 %v3101, %v3039
        %v3104 = vmul.f32 %v3101, %v3040
        %v3105 = vmul.f32 %v3101, %v3041
        %v3106 = vadd.f32 %v3066, %v3102
        %v3107 = vadd.f32 %v3067, %v3103
        %v3108 = vadd.f32 %v3068, %v3104
        %v3109 = vadd.f32 %v3069, %v3105
        %s3110 = sld [smem:[#allocation12 + $0x52]]
        %v3111 = vstv %s3110
        %v3112 = vmul.f32 %v3111, %v3038
        %v3113 = vmul.f32 %v3111, %v3039
        %v3114 = vmul.f32 %v3111, %v3040
        %v3115 = vmul.f32 %v3111, %v3041
        %v3116 = vadd.f32 %v3076, %v3112
        %v3117 = vadd.f32 %v3077, %v3113
        %v3118 = vadd.f32 %v3078, %v3114
        %v3119 = vadd.f32 %v3079, %v3115
        %s3120 = sld [smem:[#allocation12 + $0x76]]
        %v3121 = vstv %s3120
        %v3122 = vmul.f32 %v3121, %v3038
        %v3123 = vmul.f32 %v3121, %v3039
        %v3124 = vmul.f32 %v3121, %v3040
        %v3125 = vmul.f32 %v3121, %v3041
        %v3126 = vadd.f32 %v3086, %v3122
        %v3127 = vadd.f32 %v3087, %v3123
        %v3128 = vadd.f32 %v3088, %v3124
        %v3129 = vadd.f32 %v3089, %v3125
        %3130 = vrot.lane.b32.xlu0 %v3038, 127
        %v3131 = vpop.permute.xlu0 %3130
        %3132 = vrot.lane.b32.xlu0 %v3039, 127
        %v3133 = vpop.permute.xlu0 %3132
        %3134 = vrot.lane.b32.xlu0 %v3040, 127
        %v3135 = vpop.permute.xlu0 %3134
        %3136 = vrot.lane.b32.xlu0 %v3041, 127
        %v3137 = vpop.permute.xlu0 %3136
        %s3138 = sld [smem:[#allocation12 + $0xb]]
        %v3139 = vstv %s3138
        %v3140 = vmul.f32 %v3139, %v3131
        %v3141 = vmul.f32 %v3139, %v3133
        %v3142 = vmul.f32 %v3139, %v3135
        %v3143 = vmul.f32 %v3139, %v3137
        %v3144 = vadd.f32 %v3096, %v3140
        %v3145 = vadd.f32 %v3097, %v3141
        %v3146 = vadd.f32 %v3098, %v3142
        %v3147 = vadd.f32 %v3099, %v3143
        %s3148 = sld [smem:[#allocation12 + $0x2f]]
        %v3149 = vstv %s3148
        %v3150 = vmul.f32 %v3149, %v3131
        %v3151 = vmul.f32 %v3149, %v3133
        %v3152 = vmul.f32 %v3149, %v3135
        %v3153 = vmul.f32 %v3149, %v3137
        %v3154 = vadd.f32 %v3106, %v3150
        %v3155 = vadd.f32 %v3107, %v3151
        %v3156 = vadd.f32 %v3108, %v3152
        %v3157 = vadd.f32 %v3109, %v3153
        %s3158 = sld [smem:[#allocation12 + $0x53]]
        %v3159 = vstv %s3158
        %v3160 = vmul.f32 %v3159, %v3131
        %v3161 = vmul.f32 %v3159, %v3133
        %v3162 = vmul.f32 %v3159, %v3135
        %v3163 = vmul.f32 %v3159, %v3137
        %v3164 = vadd.f32 %v3116, %v3160
        %v3165 = vadd.f32 %v3117, %v3161
        %v3166 = vadd.f32 %v3118, %v3162
        %v3167 = vadd.f32 %v3119, %v3163
        %s3168 = sld [smem:[#allocation12 + $0x77]]
        %v3169 = vstv %s3168
        %v3170 = vmul.f32 %v3169, %v3131
        %v3171 = vmul.f32 %v3169, %v3133
        %v3172 = vmul.f32 %v3169, %v3135
        %v3173 = vmul.f32 %v3169, %v3137
        %v3174 = vadd.f32 %v3126, %v3170
        %v3175 = vadd.f32 %v3127, %v3171
        %v3176 = vadd.f32 %v3128, %v3172
        %v3177 = vadd.f32 %v3129, %v3173
        %v3178 = vld [vmem:[%s899 + $0x8] sm:$0xff]
        %v3179 = vld [vmem:[%s899 + $0x10] sm:$0xff]
        %v3180 = vld [vmem:[%s899 + $0x18] sm:$0xff]
        %v3181 = vld [vmem:[%s899 + $0x20] sm:$0xff]
        %3182 = vrot.lane.b32.xlu0 %v3178, 1
        %v3183 = vpop.permute.xlu0 %3182
        %3184 = vrot.lane.b32.xlu0 %v3179, 1
        %v3185 = vpop.permute.xlu0 %3184
        %3186 = vrot.lane.b32.xlu0 %v3180, 1
        %v3187 = vpop.permute.xlu0 %3186
        %3188 = vrot.lane.b32.xlu0 %v3181, 1
        %v3189 = vpop.permute.xlu0 %3188
        %s3190 = sld [smem:[#allocation12 + $0xc]]
        %v3191 = vstv %s3190
        %v3192 = vmul.f32 %v3191, %v3183
        %v3193 = vmul.f32 %v3191, %v3185
        %v3194 = vmul.f32 %v3191, %v3187
        %v3195 = vmul.f32 %v3191, %v3189
        %v3196 = vadd.f32 %v3144, %v3192
        %v3197 = vadd.f32 %v3145, %v3193
        %v3198 = vadd.f32 %v3146, %v3194
        %v3199 = vadd.f32 %v3147, %v3195
        %s3200 = sld [smem:[#allocation12 + $0x30]]
        %v3201 = vstv %s3200
        %v3202 = vmul.f32 %v3201, %v3183
        %v3203 = vmul.f32 %v3201, %v3185
        %v3204 = vmul.f32 %v3201, %v3187
        %v3205 = vmul.f32 %v3201, %v3189
        %v3206 = vadd.f32 %v3154, %v3202
        %v3207 = vadd.f32 %v3155, %v3203
        %v3208 = vadd.f32 %v3156, %v3204
        %v3209 = vadd.f32 %v3157, %v3205
        %s3210 = sld [smem:[#allocation12 + $0x54]]
        %v3211 = vstv %s3210
        %v3212 = vmul.f32 %v3211, %v3183
        %v3213 = vmul.f32 %v3211, %v3185
        %v3214 = vmul.f32 %v3211, %v3187
        %v3215 = vmul.f32 %v3211, %v3189
        %v3216 = vadd.f32 %v3164, %v3212
        %v3217 = vadd.f32 %v3165, %v3213
        %v3218 = vadd.f32 %v3166, %v3214
        %v3219 = vadd.f32 %v3167, %v3215
        %s3220 = sld [smem:[#allocation12 + $0x78]]
        %v3221 = vstv %s3220
        %v3222 = vmul.f32 %v3221, %v3183
        %v3223 = vmul.f32 %v3221, %v3185
        %v3224 = vmul.f32 %v3221, %v3187
        %v3225 = vmul.f32 %v3221, %v3189
        %v3226 = vadd.f32 %v3174, %v3222
        %v3227 = vadd.f32 %v3175, %v3223
        %v3228 = vadd.f32 %v3176, %v3224
        %v3229 = vadd.f32 %v3177, %v3225
        %s3230 = sld [smem:[#allocation12 + $0xd]]
        %v3231 = vstv %s3230
        %v3232 = vmul.f32 %v3231, %v3178
        %v3233 = vmul.f32 %v3231, %v3179
        %v3234 = vmul.f32 %v3231, %v3180
        %v3235 = vmul.f32 %v3231, %v3181
        %v3236 = vadd.f32 %v3196, %v3232
        %v3237 = vadd.f32 %v3197, %v3233
        %v3238 = vadd.f32 %v3198, %v3234
        %v3239 = vadd.f32 %v3199, %v3235
        %s3240 = sld [smem:[#allocation12 + $0x31]]
        %v3241 = vstv %s3240
        %v3242 = vmul.f32 %v3241, %v3178
        %v3243 = vmul.f32 %v3241, %v3179
        %v3244 = vmul.f32 %v3241, %v3180
        %v3245 = vmul.f32 %v3241, %v3181
        %v3246 = vadd.f32 %v3206, %v3242
        %v3247 = vadd.f32 %v3207, %v3243
        %v3248 = vadd.f32 %v3208, %v3244
        %v3249 = vadd.f32 %v3209, %v3245
        %s3250 = sld [smem:[#allocation12 + $0x55]]
        %v3251 = vstv %s3250
        %v3252 = vmul.f32 %v3251, %v3178
        %v3253 = vmul.f32 %v3251, %v3179
        %v3254 = vmul.f32 %v3251, %v3180
        %v3255 = vmul.f32 %v3251, %v3181
        %v3256 = vadd.f32 %v3216, %v3252
        %v3257 = vadd.f32 %v3217, %v3253
        %v3258 = vadd.f32 %v3218, %v3254
        %v3259 = vadd.f32 %v3219, %v3255
        %s3260 = sld [smem:[#allocation12 + $0x79]]
        %v3261 = vstv %s3260
        %v3262 = vmul.f32 %v3261, %v3178
        %v3263 = vmul.f32 %v3261, %v3179
        %v3264 = vmul.f32 %v3261, %v3180
        %v3265 = vmul.f32 %v3261, %v3181
        %v3266 = vadd.f32 %v3226, %v3262
        %v3267 = vadd.f32 %v3227, %v3263
        %v3268 = vadd.f32 %v3228, %v3264
        %v3269 = vadd.f32 %v3229, %v3265
        %3270 = vrot.lane.b32.xlu0 %v3178, 127
        %v3271 = vpop.permute.xlu0 %3270
        %3272 = vrot.lane.b32.xlu0 %v3179, 127
        %v3273 = vpop.permute.xlu0 %3272
        %3274 = vrot.lane.b32.xlu0 %v3180, 127
        %v3275 = vpop.permute.xlu0 %3274
        %3276 = vrot.lane.b32.xlu0 %v3181, 127
        %v3277 = vpop.permute.xlu0 %3276
        %s3278 = sld [smem:[#allocation12 + $0xe]]
        %v3279 = vstv %s3278
        %v3280 = vmul.f32 %v3279, %v3271
        %v3281 = vmul.f32 %v3279, %v3273
        %v3282 = vmul.f32 %v3279, %v3275
        %v3283 = vmul.f32 %v3279, %v3277
        %v3284 = vadd.f32 %v3236, %v3280
        %v3285 = vadd.f32 %v3237, %v3281
        %v3286 = vadd.f32 %v3238, %v3282
        %v3287 = vadd.f32 %v3239, %v3283
        %s3288 = sld [smem:[#allocation12 + $0x32]]
        %v3289 = vstv %s3288
        %v3290 = vmul.f32 %v3289, %v3271
        %v3291 = vmul.f32 %v3289, %v3273
        %v3292 = vmul.f32 %v3289, %v3275
        %v3293 = vmul.f32 %v3289, %v3277
        %v3294 = vadd.f32 %v3246, %v3290
        %v3295 = vadd.f32 %v3247, %v3291
        %v3296 = vadd.f32 %v3248, %v3292
        %v3297 = vadd.f32 %v3249, %v3293
        %s3298 = sld [smem:[#allocation12 + $0x56]]
        %v3299 = vstv %s3298
        %v3300 = vmul.f32 %v3299, %v3271
        %v3301 = vmul.f32 %v3299, %v3273
        %v3302 = vmul.f32 %v3299, %v3275
        %v3303 = vmul.f32 %v3299, %v3277
        %v3304 = vadd.f32 %v3256, %v3300
        %v3305 = vadd.f32 %v3257, %v3301
        %v3306 = vadd.f32 %v3258, %v3302
        %v3307 = vadd.f32 %v3259, %v3303
        %s3308 = sld [smem:[#allocation12 + $0x7a]]
        %v3309 = vstv %s3308
        %v3310 = vmul.f32 %v3309, %v3271
        %v3311 = vmul.f32 %v3309, %v3273
        %v3312 = vmul.f32 %v3309, %v3275
        %v3313 = vmul.f32 %v3309, %v3277
        %v3314 = vadd.f32 %v3266, %v3310
        %v3315 = vadd.f32 %v3267, %v3311
        %v3316 = vadd.f32 %v3268, %v3312
        %v3317 = vadd.f32 %v3269, %v3313
        %v3318 = vld [vmem:[%s899 + $0x9] sm:$0xff]
        %v3319 = vld [vmem:[%s899 + $0x11] sm:$0xff]
        %v3320 = vld [vmem:[%s899 + $0x19] sm:$0xff]
        %v3321 = vld [vmem:[%s899 + $0x21] sm:$0xff]
        %3322 = vrot.lane.b32.xlu0 %v3318, 1
        %v3323 = vpop.permute.xlu0 %3322
        %3324 = vrot.lane.b32.xlu0 %v3319, 1
        %v3325 = vpop.permute.xlu0 %3324
        %3326 = vrot.lane.b32.xlu0 %v3320, 1
        %v3327 = vpop.permute.xlu0 %3326
        %3328 = vrot.lane.b32.xlu0 %v3321, 1
        %v3329 = vpop.permute.xlu0 %3328
        %s3330 = sld [smem:[#allocation12 + $0xf]]
        %v3331 = vstv %s3330
        %v3332 = vmul.f32 %v3331, %v3323
        %v3333 = vmul.f32 %v3331, %v3325
        %v3334 = vmul.f32 %v3331, %v3327
        %v3335 = vmul.f32 %v3331, %v3329
        %v3336 = vadd.f32 %v3284, %v3332
        %v3337 = vadd.f32 %v3285, %v3333
        %v3338 = vadd.f32 %v3286, %v3334
        %v3339 = vadd.f32 %v3287, %v3335
        %s3340 = sld [smem:[#allocation12 + $0x33]]
        %v3341 = vstv %s3340
        %v3342 = vmul.f32 %v3341, %v3323
        %v3343 = vmul.f32 %v3341, %v3325
        %v3344 = vmul.f32 %v3341, %v3327
        %v3345 = vmul.f32 %v3341, %v3329
        %v3346 = vadd.f32 %v3294, %v3342
        %v3347 = vadd.f32 %v3295, %v3343
        %v3348 = vadd.f32 %v3296, %v3344
        %v3349 = vadd.f32 %v3297, %v3345
        %s3350 = sld [smem:[#allocation12 + $0x57]]
        %v3351 = vstv %s3350
        %v3352 = vmul.f32 %v3351, %v3323
        %v3353 = vmul.f32 %v3351, %v3325
        %v3354 = vmul.f32 %v3351, %v3327
        %v3355 = vmul.f32 %v3351, %v3329
        %v3356 = vadd.f32 %v3304, %v3352
        %v3357 = vadd.f32 %v3305, %v3353
        %v3358 = vadd.f32 %v3306, %v3354
        %v3359 = vadd.f32 %v3307, %v3355
        %s3360 = sld [smem:[#allocation12 + $0x7b]]
        %v3361 = vstv %s3360
        %v3362 = vmul.f32 %v3361, %v3323
        %v3363 = vmul.f32 %v3361, %v3325
        %v3364 = vmul.f32 %v3361, %v3327
        %v3365 = vmul.f32 %v3361, %v3329
        %v3366 = vadd.f32 %v3314, %v3362
        %v3367 = vadd.f32 %v3315, %v3363
        %v3368 = vadd.f32 %v3316, %v3364
        %v3369 = vadd.f32 %v3317, %v3365
        %s3370 = sld [smem:[#allocation12 + $0x10]]
        %v3371 = vstv %s3370
        %v3372 = vmul.f32 %v3371, %v3318
        %v3373 = vmul.f32 %v3371, %v3319
        %v3374 = vmul.f32 %v3371, %v3320
        %v3375 = vmul.f32 %v3371, %v3321
        %v3376 = vadd.f32 %v3336, %v3372
        %v3377 = vadd.f32 %v3337, %v3373
        %v3378 = vadd.f32 %v3338, %v3374
        %v3379 = vadd.f32 %v3339, %v3375
        %s3380 = sld [smem:[#allocation12 + $0x34]]
        %v3381 = vstv %s3380
        %v3382 = vmul.f32 %v3381, %v3318
        %v3383 = vmul.f32 %v3381, %v3319
        %v3384 = vmul.f32 %v3381, %v3320
        %v3385 = vmul.f32 %v3381, %v3321
        %v3386 = vadd.f32 %v3346, %v3382
        %v3387 = vadd.f32 %v3347, %v3383
        %v3388 = vadd.f32 %v3348, %v3384
        %v3389 = vadd.f32 %v3349, %v3385
        %s3390 = sld [smem:[#allocation12 + $0x58]]
        %v3391 = vstv %s3390
        %v3392 = vmul.f32 %v3391, %v3318
        %v3393 = vmul.f32 %v3391, %v3319
        %v3394 = vmul.f32 %v3391, %v3320
        %v3395 = vmul.f32 %v3391, %v3321
        %v3396 = vadd.f32 %v3356, %v3392
        %v3397 = vadd.f32 %v3357, %v3393
        %v3398 = vadd.f32 %v3358, %v3394
        %v3399 = vadd.f32 %v3359, %v3395
        %s3400 = sld [smem:[#allocation12 + $0x7c]]
        %v3401 = vstv %s3400
        %v3402 = vmul.f32 %v3401, %v3318
        %v3403 = vmul.f32 %v3401, %v3319
        %v3404 = vmul.f32 %v3401, %v3320
        %v3405 = vmul.f32 %v3401, %v3321
        %v3406 = vadd.f32 %v3366, %v3402
        %v3407 = vadd.f32 %v3367, %v3403
        %v3408 = vadd.f32 %v3368, %v3404
        %v3409 = vadd.f32 %v3369, %v3405
        %3410 = vrot.lane.b32.xlu0 %v3318, 127
        %v3411 = vpop.permute.xlu0 %3410
        %3412 = vrot.lane.b32.xlu0 %v3319, 127
        %v3413 = vpop.permute.xlu0 %3412
        %3414 = vrot.lane.b32.xlu0 %v3320, 127
        %v3415 = vpop.permute.xlu0 %3414
        %3416 = vrot.lane.b32.xlu0 %v3321, 127
        %v3417 = vpop.permute.xlu0 %3416
        %s3418 = sld [smem:[#allocation12 + $0x11]]
        %v3419 = vstv %s3418
        %v3420 = vmul.f32 %v3419, %v3411
        %v3421 = vmul.f32 %v3419, %v3413
        %v3422 = vmul.f32 %v3419, %v3415
        %v3423 = vmul.f32 %v3419, %v3417
        %v3424 = vadd.f32 %v3376, %v3420
        %v3425 = vadd.f32 %v3377, %v3421
        %v3426 = vadd.f32 %v3378, %v3422
        %v3427 = vadd.f32 %v3379, %v3423
        %s3428 = sld [smem:[#allocation12 + $0x35]]
        %v3429 = vstv %s3428
        %v3430 = vmul.f32 %v3429, %v3411
        %v3431 = vmul.f32 %v3429, %v3413
        %v3432 = vmul.f32 %v3429, %v3415
        %v3433 = vmul.f32 %v3429, %v3417
        %v3434 = vadd.f32 %v3386, %v3430
        %v3435 = vadd.f32 %v3387, %v3431
        %v3436 = vadd.f32 %v3388, %v3432
        %v3437 = vadd.f32 %v3389, %v3433
        %s3438 = sld [smem:[#allocation12 + $0x59]]
        %v3439 = vstv %s3438
        %v3440 = vmul.f32 %v3439, %v3411
        %v3441 = vmul.f32 %v3439, %v3413
        %v3442 = vmul.f32 %v3439, %v3415
        %v3443 = vmul.f32 %v3439, %v3417
        %v3444 = vadd.f32 %v3396, %v3440
        %v3445 = vadd.f32 %v3397, %v3441
        %v3446 = vadd.f32 %v3398, %v3442
        %v3447 = vadd.f32 %v3399, %v3443
        %s3448 = sld [smem:[#allocation12 + $0x7d]]
        %v3449 = vstv %s3448
        %v3450 = vmul.f32 %v3449, %v3411
        %v3451 = vmul.f32 %v3449, %v3413
        %v3452 = vmul.f32 %v3449, %v3415
        %v3453 = vmul.f32 %v3449, %v3417
        %v3454 = vadd.f32 %v3406, %v3450
        %v3455 = vadd.f32 %v3407, %v3451
        %v3456 = vadd.f32 %v3408, %v3452
        %v3457 = vadd.f32 %v3409, %v3453
        %v3458 = vld [vmem:[%s904 + $0x7] sm:$0xff]
        %v3459 = vld [vmem:[%s904 + $0xf] sm:$0xff]
        %v3460 = vld [vmem:[%s904 + $0x17] sm:$0xff]
        %v3461 = vld [vmem:[%s904 + $0x1f] sm:$0xff]
        %3462 = vrot.lane.b32.xlu0 %v3458, 1
        %v3463 = vpop.permute.xlu0 %3462
        %3464 = vrot.lane.b32.xlu0 %v3459, 1
        %v3465 = vpop.permute.xlu0 %3464
        %3466 = vrot.lane.b32.xlu0 %v3460, 1
        %v3467 = vpop.permute.xlu0 %3466
        %3468 = vrot.lane.b32.xlu0 %v3461, 1
        %v3469 = vpop.permute.xlu0 %3468
        %s3470 = sld [smem:[#allocation12 + $0x12]]
        %v3471 = vstv %s3470
        %v3472 = vmul.f32 %v3471, %v3463
        %v3473 = vmul.f32 %v3471, %v3465
        %v3474 = vmul.f32 %v3471, %v3467
        %v3475 = vmul.f32 %v3471, %v3469
        %v3476 = vadd.f32 %v3424, %v3472
        %v3477 = vadd.f32 %v3425, %v3473
        %v3478 = vadd.f32 %v3426, %v3474
        %v3479 = vadd.f32 %v3427, %v3475
        %s3480 = sld [smem:[#allocation12 + $0x36]]
        %v3481 = vstv %s3480
        %v3482 = vmul.f32 %v3481, %v3463
        %v3483 = vmul.f32 %v3481, %v3465
        %v3484 = vmul.f32 %v3481, %v3467
        %v3485 = vmul.f32 %v3481, %v3469
        %v3486 = vadd.f32 %v3434, %v3482
        %v3487 = vadd.f32 %v3435, %v3483
        %v3488 = vadd.f32 %v3436, %v3484
        %v3489 = vadd.f32 %v3437, %v3485
        %s3490 = sld [smem:[#allocation12 + $0x5a]]
        %v3491 = vstv %s3490
        %v3492 = vmul.f32 %v3491, %v3463
        %v3493 = vmul.f32 %v3491, %v3465
        %v3494 = vmul.f32 %v3491, %v3467
        %v3495 = vmul.f32 %v3491, %v3469
        %v3496 = vadd.f32 %v3444, %v3492
        %v3497 = vadd.f32 %v3445, %v3493
        %v3498 = vadd.f32 %v3446, %v3494
        %v3499 = vadd.f32 %v3447, %v3495
        %s3500 = sld [smem:[#allocation12 + $0x7e]]
        %v3501 = vstv %s3500
        %v3502 = vmul.f32 %v3501, %v3463
        %v3503 = vmul.f32 %v3501, %v3465
        %v3504 = vmul.f32 %v3501, %v3467
        %v3505 = vmul.f32 %v3501, %v3469
        %v3506 = vadd.f32 %v3454, %v3502
        %v3507 = vadd.f32 %v3455, %v3503
        %v3508 = vadd.f32 %v3456, %v3504
        %v3509 = vadd.f32 %v3457, %v3505
        %s3510 = sld [smem:[#allocation12 + $0x13]]
        %v3511 = vstv %s3510
        %v3512 = vmul.f32 %v3511, %v3458
        %v3513 = vmul.f32 %v3511, %v3459
        %v3514 = vmul.f32 %v3511, %v3460
        %v3515 = vmul.f32 %v3511, %v3461
        %v3516 = vadd.f32 %v3476, %v3512
        %v3517 = vadd.f32 %v3477, %v3513
        %v3518 = vadd.f32 %v3478, %v3514
        %v3519 = vadd.f32 %v3479, %v3515
        %s3520 = sld [smem:[#allocation12 + $0x37]]
        %v3521 = vstv %s3520
        %v3522 = vmul.f32 %v3521, %v3458
        %v3523 = vmul.f32 %v3521, %v3459
        %v3524 = vmul.f32 %v3521, %v3460
        %v3525 = vmul.f32 %v3521, %v3461
        %v3526 = vadd.f32 %v3486, %v3522
        %v3527 = vadd.f32 %v3487, %v3523
        %v3528 = vadd.f32 %v3488, %v3524
        %v3529 = vadd.f32 %v3489, %v3525
        %s3530 = sld [smem:[#allocation12 + $0x5b]]
        %v3531 = vstv %s3530
        %v3532 = vmul.f32 %v3531, %v3458
        %v3533 = vmul.f32 %v3531, %v3459
        %v3534 = vmul.f32 %v3531, %v3460
        %v3535 = vmul.f32 %v3531, %v3461
        %v3536 = vadd.f32 %v3496, %v3532
        %v3537 = vadd.f32 %v3497, %v3533
        %v3538 = vadd.f32 %v3498, %v3534
        %v3539 = vadd.f32 %v3499, %v3535
        %s3540 = sld [smem:[#allocation12 + $0x7f]]
        %v3541 = vstv %s3540
        %v3542 = vmul.f32 %v3541, %v3458
        %v3543 = vmul.f32 %v3541, %v3459
        %v3544 = vmul.f32 %v3541, %v3460
        %v3545 = vmul.f32 %v3541, %v3461
        %v3546 = vadd.f32 %v3506, %v3542
        %v3547 = vadd.f32 %v3507, %v3543
        %v3548 = vadd.f32 %v3508, %v3544
        %v3549 = vadd.f32 %v3509, %v3545
        %3550 = vrot.lane.b32.xlu0 %v3458, 127
        %v3551 = vpop.permute.xlu0 %3550
        %3552 = vrot.lane.b32.xlu0 %v3459, 127
        %v3553 = vpop.permute.xlu0 %3552
        %3554 = vrot.lane.b32.xlu0 %v3460, 127
        %v3555 = vpop.permute.xlu0 %3554
        %3556 = vrot.lane.b32.xlu0 %v3461, 127
        %v3557 = vpop.permute.xlu0 %3556
        %s3558 = sld [smem:[#allocation12 + $0x14]]
        %v3559 = vstv %s3558
        %v3560 = vmul.f32 %v3559, %v3551
        %v3561 = vmul.f32 %v3559, %v3553
        %v3562 = vmul.f32 %v3559, %v3555
        %v3563 = vmul.f32 %v3559, %v3557
        %v3564 = vadd.f32 %v3516, %v3560
        %v3565 = vadd.f32 %v3517, %v3561
        %v3566 = vadd.f32 %v3518, %v3562
        %v3567 = vadd.f32 %v3519, %v3563
        %s3568 = sld [smem:[#allocation12 + $0x38]]
        %v3569 = vstv %s3568
        %v3570 = vmul.f32 %v3569, %v3551
        %v3571 = vmul.f32 %v3569, %v3553
        %v3572 = vmul.f32 %v3569, %v3555
        %v3573 = vmul.f32 %v3569, %v3557
        %v3574 = vadd.f32 %v3526, %v3570
        %v3575 = vadd.f32 %v3527, %v3571
        %v3576 = vadd.f32 %v3528, %v3572
        %v3577 = vadd.f32 %v3529, %v3573
        %s3578 = sld [smem:[#allocation12 + $0x5c]]
        %v3579 = vstv %s3578
        %v3580 = vmul.f32 %v3579, %v3551
        %v3581 = vmul.f32 %v3579, %v3553
        %v3582 = vmul.f32 %v3579, %v3555
        %v3583 = vmul.f32 %v3579, %v3557
        %v3584 = vadd.f32 %v3536, %v3580
        %v3585 = vadd.f32 %v3537, %v3581
        %v3586 = vadd.f32 %v3538, %v3582
        %v3587 = vadd.f32 %v3539, %v3583
        %s3588 = sld [smem:[#allocation12 + $0x80]]
        %v3589 = vstv %s3588
        %v3590 = vmul.f32 %v3589, %v3551
        %v3591 = vmul.f32 %v3589, %v3553
        %v3592 = vmul.f32 %v3589, %v3555
        %v3593 = vmul.f32 %v3589, %v3557
        %v3594 = vadd.f32 %v3546, %v3590
        %v3595 = vadd.f32 %v3547, %v3591
        %v3596 = vadd.f32 %v3548, %v3592
        %v3597 = vadd.f32 %v3549, %v3593
        %v3598 = vld [vmem:[%s904 + $0x8] sm:$0xff]
        %v3599 = vld [vmem:[%s904 + $0x10] sm:$0xff]
        %v3600 = vld [vmem:[%s904 + $0x18] sm:$0xff]
        %v3601 = vld [vmem:[%s904 + $0x20] sm:$0xff]
        %3602 = vrot.lane.b32.xlu0 %v3598, 1
        %v3603 = vpop.permute.xlu0 %3602
        %3604 = vrot.lane.b32.xlu0 %v3599, 1
        %v3605 = vpop.permute.xlu0 %3604
        %3606 = vrot.lane.b32.xlu0 %v3600, 1
        %v3607 = vpop.permute.xlu0 %3606
        %3608 = vrot.lane.b32.xlu0 %v3601, 1
        %v3609 = vpop.permute.xlu0 %3608
        %s3610 = sld [smem:[#allocation12 + $0x15]]
        %v3611 = vstv %s3610
        %v3612 = vmul.f32 %v3611, %v3603
        %v3613 = vmul.f32 %v3611, %v3605
        %v3614 = vmul.f32 %v3611, %v3607
        %v3615 = vmul.f32 %v3611, %v3609
        %v3616 = vadd.f32 %v3564, %v3612
        %v3617 = vadd.f32 %v3565, %v3613
        %v3618 = vadd.f32 %v3566, %v3614
        %v3619 = vadd.f32 %v3567, %v3615
        %s3620 = sld [smem:[#allocation12 + $0x39]]
        %v3621 = vstv %s3620
        %v3622 = vmul.f32 %v3621, %v3603
        %v3623 = vmul.f32 %v3621, %v3605
        %v3624 = vmul.f32 %v3621, %v3607
        %v3625 = vmul.f32 %v3621, %v3609
        %v3626 = vadd.f32 %v3574, %v3622
        %v3627 = vadd.f32 %v3575, %v3623
        %v3628 = vadd.f32 %v3576, %v3624
        %v3629 = vadd.f32 %v3577, %v3625
        %s3630 = sld [smem:[#allocation12 + $0x5d]]
        %v3631 = vstv %s3630
        %v3632 = vmul.f32 %v3631, %v3603
        %v3633 = vmul.f32 %v3631, %v3605
        %v3634 = vmul.f32 %v3631, %v3607
        %v3635 = vmul.f32 %v3631, %v3609
        %v3636 = vadd.f32 %v3584, %v3632
        %v3637 = vadd.f32 %v3585, %v3633
        %v3638 = vadd.f32 %v3586, %v3634
        %v3639 = vadd.f32 %v3587, %v3635
        %s3640 = sld [smem:[#allocation12 + $0x81]]
        %v3641 = vstv %s3640
        %v3642 = vmul.f32 %v3641, %v3603
        %v3643 = vmul.f32 %v3641, %v3605
        %v3644 = vmul.f32 %v3641, %v3607
        %v3645 = vmul.f32 %v3641, %v3609
        %v3646 = vadd.f32 %v3594, %v3642
        %v3647 = vadd.f32 %v3595, %v3643
        %v3648 = vadd.f32 %v3596, %v3644
        %v3649 = vadd.f32 %v3597, %v3645
        %s3650 = sld [smem:[#allocation12 + $0x16]]
        %v3651 = vstv %s3650
        %v3652 = vmul.f32 %v3651, %v3598
        %v3653 = vmul.f32 %v3651, %v3599
        %v3654 = vmul.f32 %v3651, %v3600
        %v3655 = vmul.f32 %v3651, %v3601
        %v3656 = vadd.f32 %v3616, %v3652
        %v3657 = vadd.f32 %v3617, %v3653
        %v3658 = vadd.f32 %v3618, %v3654
        %v3659 = vadd.f32 %v3619, %v3655
        %s3660 = sld [smem:[#allocation12 + $0x3a]]
        %v3661 = vstv %s3660
        %v3662 = vmul.f32 %v3661, %v3598
        %v3663 = vmul.f32 %v3661, %v3599
        %v3664 = vmul.f32 %v3661, %v3600
        %v3665 = vmul.f32 %v3661, %v3601
        %v3666 = vadd.f32 %v3626, %v3662
        %v3667 = vadd.f32 %v3627, %v3663
        %v3668 = vadd.f32 %v3628, %v3664
        %v3669 = vadd.f32 %v3629, %v3665
        %s3670 = sld [smem:[#allocation12 + $0x5e]]
        %v3671 = vstv %s3670
        %v3672 = vmul.f32 %v3671, %v3598
        %v3673 = vmul.f32 %v3671, %v3599
        %v3674 = vmul.f32 %v3671, %v3600
        %v3675 = vmul.f32 %v3671, %v3601
        %v3676 = vadd.f32 %v3636, %v3672
        %v3677 = vadd.f32 %v3637, %v3673
        %v3678 = vadd.f32 %v3638, %v3674
        %v3679 = vadd.f32 %v3639, %v3675
        %s3680 = sld [smem:[#allocation12 + $0x82]]
        %v3681 = vstv %s3680
        %v3682 = vmul.f32 %v3681, %v3598
        %v3683 = vmul.f32 %v3681, %v3599
        %v3684 = vmul.f32 %v3681, %v3600
        %v3685 = vmul.f32 %v3681, %v3601
        %v3686 = vadd.f32 %v3646, %v3682
        %v3687 = vadd.f32 %v3647, %v3683
        %v3688 = vadd.f32 %v3648, %v3684
        %v3689 = vadd.f32 %v3649, %v3685
        %3690 = vrot.lane.b32.xlu0 %v3598, 127
        %v3691 = vpop.permute.xlu0 %3690
        %3692 = vrot.lane.b32.xlu0 %v3599, 127
        %v3693 = vpop.permute.xlu0 %3692
        %3694 = vrot.lane.b32.xlu0 %v3600, 127
        %v3695 = vpop.permute.xlu0 %3694
        %3696 = vrot.lane.b32.xlu0 %v3601, 127
        %v3697 = vpop.permute.xlu0 %3696
        %s3698 = sld [smem:[#allocation12 + $0x17]]
        %v3699 = vstv %s3698
        %v3700 = vmul.f32 %v3699, %v3691
        %v3701 = vmul.f32 %v3699, %v3693
        %v3702 = vmul.f32 %v3699, %v3695
        %v3703 = vmul.f32 %v3699, %v3697
        %v3704 = vadd.f32 %v3656, %v3700
        %v3705 = vadd.f32 %v3657, %v3701
        %v3706 = vadd.f32 %v3658, %v3702
        %v3707 = vadd.f32 %v3659, %v3703
        %s3708 = sld [smem:[#allocation12 + $0x3b]]
        %v3709 = vstv %s3708
        %v3710 = vmul.f32 %v3709, %v3691
        %v3711 = vmul.f32 %v3709, %v3693
        %v3712 = vmul.f32 %v3709, %v3695
        %v3713 = vmul.f32 %v3709, %v3697
        %v3714 = vadd.f32 %v3666, %v3710
        %v3715 = vadd.f32 %v3667, %v3711
        %v3716 = vadd.f32 %v3668, %v3712
        %v3717 = vadd.f32 %v3669, %v3713
        %s3718 = sld [smem:[#allocation12 + $0x5f]]
        %v3719 = vstv %s3718
        %v3720 = vmul.f32 %v3719, %v3691
        %v3721 = vmul.f32 %v3719, %v3693
        %v3722 = vmul.f32 %v3719, %v3695
        %v3723 = vmul.f32 %v3719, %v3697
        %v3724 = vadd.f32 %v3676, %v3720
        %v3725 = vadd.f32 %v3677, %v3721
        %v3726 = vadd.f32 %v3678, %v3722
        %v3727 = vadd.f32 %v3679, %v3723
        %s3728 = sld [smem:[#allocation12 + $0x83]]
        %v3729 = vstv %s3728
        %v3730 = vmul.f32 %v3729, %v3691
        %v3731 = vmul.f32 %v3729, %v3693
        %v3732 = vmul.f32 %v3729, %v3695
        %v3733 = vmul.f32 %v3729, %v3697
        %v3734 = vadd.f32 %v3686, %v3730
        %v3735 = vadd.f32 %v3687, %v3731
        %v3736 = vadd.f32 %v3688, %v3732
        %v3737 = vadd.f32 %v3689, %v3733
        %v3738 = vld [vmem:[%s904 + $0x9] sm:$0xff]
        %v3739 = vld [vmem:[%s904 + $0x11] sm:$0xff]
        %v3740 = vld [vmem:[%s904 + $0x19] sm:$0xff]
        %v3741 = vld [vmem:[%s904 + $0x21] sm:$0xff]
        %3742 = vrot.lane.b32.xlu0 %v3738, 1
        %v3743 = vpop.permute.xlu0 %3742
        %3744 = vrot.lane.b32.xlu0 %v3739, 1
        %v3745 = vpop.permute.xlu0 %3744
        %3746 = vrot.lane.b32.xlu0 %v3740, 1
        %v3747 = vpop.permute.xlu0 %3746
        %3748 = vrot.lane.b32.xlu0 %v3741, 1
        %v3749 = vpop.permute.xlu0 %3748
        %s3750 = sld [smem:[#allocation12 + $0x18]]
        %v3751 = vstv %s3750
        %v3752 = vmul.f32 %v3751, %v3743
        %v3753 = vmul.f32 %v3751, %v3745
        %v3754 = vmul.f32 %v3751, %v3747
        %v3755 = vmul.f32 %v3751, %v3749
        %v3756 = vadd.f32 %v3704, %v3752
        %v3757 = vadd.f32 %v3705, %v3753
        %v3758 = vadd.f32 %v3706, %v3754
        %v3759 = vadd.f32 %v3707, %v3755
        %s3760 = sld [smem:[#allocation12 + $0x3c]]
        %v3761 = vstv %s3760
        %v3762 = vmul.f32 %v3761, %v3743
        %v3763 = vmul.f32 %v3761, %v3745
        %v3764 = vmul.f32 %v3761, %v3747
        %v3765 = vmul.f32 %v3761, %v3749
        %v3766 = vadd.f32 %v3714, %v3762
        %v3767 = vadd.f32 %v3715, %v3763
        %v3768 = vadd.f32 %v3716, %v3764
        %v3769 = vadd.f32 %v3717, %v3765
        %s3770 = sld [smem:[#allocation12 + $0x60]]
        %v3771 = vstv %s3770
        %v3772 = vmul.f32 %v3771, %v3743
        %v3773 = vmul.f32 %v3771, %v3745
        %v3774 = vmul.f32 %v3771, %v3747
        %v3775 = vmul.f32 %v3771, %v3749
        %v3776 = vadd.f32 %v3724, %v3772
        %v3777 = vadd.f32 %v3725, %v3773
        %v3778 = vadd.f32 %v3726, %v3774
        %v3779 = vadd.f32 %v3727, %v3775
        %s3780 = sld [smem:[#allocation12 + $0x84]]
        %v3781 = vstv %s3780
        %v3782 = vmul.f32 %v3781, %v3743
        %v3783 = vmul.f32 %v3781, %v3745
        %v3784 = vmul.f32 %v3781, %v3747
        %v3785 = vmul.f32 %v3781, %v3749
        %v3786 = vadd.f32 %v3734, %v3782
        %v3787 = vadd.f32 %v3735, %v3783
        %v3788 = vadd.f32 %v3736, %v3784
        %v3789 = vadd.f32 %v3737, %v3785
        %s3790 = sld [smem:[#allocation12 + $0x19]]
        %v3791 = vstv %s3790
        %v3792 = vmul.f32 %v3791, %v3738
        %v3793 = vmul.f32 %v3791, %v3739
        %v3794 = vmul.f32 %v3791, %v3740
        %v3795 = vmul.f32 %v3791, %v3741
        %v3796 = vadd.f32 %v3756, %v3792
        %v3797 = vadd.f32 %v3757, %v3793
        %v3798 = vadd.f32 %v3758, %v3794
        %v3799 = vadd.f32 %v3759, %v3795
        %s3800 = sld [smem:[#allocation12 + $0x3d]]
        %v3801 = vstv %s3800
        %v3802 = vmul.f32 %v3801, %v3738
        %v3803 = vmul.f32 %v3801, %v3739
        %v3804 = vmul.f32 %v3801, %v3740
        %v3805 = vmul.f32 %v3801, %v3741
        %v3806 = vadd.f32 %v3766, %v3802
        %v3807 = vadd.f32 %v3767, %v3803
        %v3808 = vadd.f32 %v3768, %v3804
        %v3809 = vadd.f32 %v3769, %v3805
        %s3810 = sld [smem:[#allocation12 + $0x61]]
        %v3811 = vstv %s3810
        %v3812 = vmul.f32 %v3811, %v3738
        %v3813 = vmul.f32 %v3811, %v3739
        %v3814 = vmul.f32 %v3811, %v3740
        %v3815 = vmul.f32 %v3811, %v3741
        %v3816 = vadd.f32 %v3776, %v3812
        %v3817 = vadd.f32 %v3777, %v3813
        %v3818 = vadd.f32 %v3778, %v3814
        %v3819 = vadd.f32 %v3779, %v3815
        %s3820 = sld [smem:[#allocation12 + $0x85]]
        %v3821 = vstv %s3820
        %v3822 = vmul.f32 %v3821, %v3738
        %v3823 = vmul.f32 %v3821, %v3739
        %v3824 = vmul.f32 %v3821, %v3740
        %v3825 = vmul.f32 %v3821, %v3741
        %v3826 = vadd.f32 %v3786, %v3822
        %v3827 = vadd.f32 %v3787, %v3823
        %v3828 = vadd.f32 %v3788, %v3824
        %v3829 = vadd.f32 %v3789, %v3825
        %3830 = vrot.lane.b32.xlu0 %v3738, 127
        %v3831 = vpop.permute.xlu0 %3830
        %3832 = vrot.lane.b32.xlu0 %v3739, 127
        %v3833 = vpop.permute.xlu0 %3832
        %3834 = vrot.lane.b32.xlu0 %v3740, 127
        %v3835 = vpop.permute.xlu0 %3834
        %3836 = vrot.lane.b32.xlu0 %v3741, 127
        %v3837 = vpop.permute.xlu0 %3836
        %s3838 = sld [smem:[#allocation12 + $0x1a]]
        %v3839 = vstv %s3838
        %v3840 = vmul.f32 %v3839, %v3831
        %v3841 = vmul.f32 %v3839, %v3833
        %v3842 = vmul.f32 %v3839, %v3835
        %v3843 = vmul.f32 %v3839, %v3837
        %v3844 = vadd.f32 %v3796, %v3840
        %v3845 = vadd.f32 %v3797, %v3841
        %v3846 = vadd.f32 %v3798, %v3842
        %v3847 = vadd.f32 %v3799, %v3843
        %s3848 = sld [smem:[#allocation12 + $0x3e]]
        %v3849 = vstv %s3848
        %v3850 = vmul.f32 %v3849, %v3831
        %v3851 = vmul.f32 %v3849, %v3833
        %v3852 = vmul.f32 %v3849, %v3835
        %v3853 = vmul.f32 %v3849, %v3837
        %v3854 = vadd.f32 %v3806, %v3850
        %v3855 = vadd.f32 %v3807, %v3851
        %v3856 = vadd.f32 %v3808, %v3852
        %v3857 = vadd.f32 %v3809, %v3853
        %s3858 = sld [smem:[#allocation12 + $0x62]]
        %v3859 = vstv %s3858
        %v3860 = vmul.f32 %v3859, %v3831
        %v3861 = vmul.f32 %v3859, %v3833
        %v3862 = vmul.f32 %v3859, %v3835
        %v3863 = vmul.f32 %v3859, %v3837
        %v3864 = vadd.f32 %v3816, %v3860
        %v3865 = vadd.f32 %v3817, %v3861
        %v3866 = vadd.f32 %v3818, %v3862
        %v3867 = vadd.f32 %v3819, %v3863
        %s3868 = sld [smem:[#allocation12 + $0x86]]
        %v3869 = vstv %s3868
        %v3870 = vmul.f32 %v3869, %v3831
        %v3871 = vmul.f32 %v3869, %v3833
        %v3872 = vmul.f32 %v3869, %v3835
        %v3873 = vmul.f32 %v3869, %v3837
        %v3874 = vadd.f32 %v3826, %v3870
        %v3875 = vadd.f32 %v3827, %v3871
        %v3876 = vadd.f32 %v3828, %v3872
        %v3877 = vadd.f32 %v3829, %v3873
        %v3878 = vld [vmem:[%s909 + $0x7] sm:$0xff]
        %v3879 = vld [vmem:[%s909 + $0xf] sm:$0xff]
        %v3880 = vld [vmem:[%s909 + $0x17] sm:$0xff]
        %v3881 = vld [vmem:[%s909 + $0x1f] sm:$0xff]
        %3882 = vrot.lane.b32.xlu0 %v3878, 1
        %v3883 = vpop.permute.xlu0 %3882
        %3884 = vrot.lane.b32.xlu0 %v3879, 1
        %v3885 = vpop.permute.xlu0 %3884
        %3886 = vrot.lane.b32.xlu0 %v3880, 1
        %v3887 = vpop.permute.xlu0 %3886
        %3888 = vrot.lane.b32.xlu0 %v3881, 1
        %v3889 = vpop.permute.xlu0 %3888
        %s3890 = sld [smem:[#allocation12 + $0x1b]]
        %v3891 = vstv %s3890
        %v3892 = vmul.f32 %v3891, %v3883
        %v3893 = vmul.f32 %v3891, %v3885
        %v3894 = vmul.f32 %v3891, %v3887
        %v3895 = vmul.f32 %v3891, %v3889
        %v3896 = vadd.f32 %v3844, %v3892
        %v3897 = vadd.f32 %v3845, %v3893
        %v3898 = vadd.f32 %v3846, %v3894
        %v3899 = vadd.f32 %v3847, %v3895
        %s3900 = sld [smem:[#allocation12 + $0x3f]]
        %v3901 = vstv %s3900
        %v3902 = vmul.f32 %v3901, %v3883
        %v3903 = vmul.f32 %v3901, %v3885
        %v3904 = vmul.f32 %v3901, %v3887
        %v3905 = vmul.f32 %v3901, %v3889
        %v3906 = vadd.f32 %v3854, %v3902
        %v3907 = vadd.f32 %v3855, %v3903
        %v3908 = vadd.f32 %v3856, %v3904
        %v3909 = vadd.f32 %v3857, %v3905
        %s3910 = sld [smem:[#allocation12 + $0x63]]
        %v3911 = vstv %s3910
        %v3912 = vmul.f32 %v3911, %v3883
        %v3913 = vmul.f32 %v3911, %v3885
        %v3914 = vmul.f32 %v3911, %v3887
        %v3915 = vmul.f32 %v3911, %v3889
        %v3916 = vadd.f32 %v3864, %v3912
        %v3917 = vadd.f32 %v3865, %v3913
        %v3918 = vadd.f32 %v3866, %v3914
        %v3919 = vadd.f32 %v3867, %v3915
        %s3920 = sld [smem:[#allocation12 + $0x87]]
        %v3921 = vstv %s3920
        %v3922 = vmul.f32 %v3921, %v3883
        %v3923 = vmul.f32 %v3921, %v3885
        %v3924 = vmul.f32 %v3921, %v3887
        %v3925 = vmul.f32 %v3921, %v3889
        %v3926 = vadd.f32 %v3874, %v3922
        %v3927 = vadd.f32 %v3875, %v3923
        %v3928 = vadd.f32 %v3876, %v3924
        %v3929 = vadd.f32 %v3877, %v3925
        %s3930 = sld [smem:[#allocation12 + $0x1c]]
        %v3931 = vstv %s3930
        %v3932 = vmul.f32 %v3931, %v3878
        %v3933 = vmul.f32 %v3931, %v3879
        %v3934 = vmul.f32 %v3931, %v3880
        %v3935 = vmul.f32 %v3931, %v3881
        %v3936 = vadd.f32 %v3896, %v3932
        %v3937 = vadd.f32 %v3897, %v3933
        %v3938 = vadd.f32 %v3898, %v3934
        %v3939 = vadd.f32 %v3899, %v3935
        %s3940 = sld [smem:[#allocation12 + $0x40]]
        %v3941 = vstv %s3940
        %v3942 = vmul.f32 %v3941, %v3878
        %v3943 = vmul.f32 %v3941, %v3879
        %v3944 = vmul.f32 %v3941, %v3880
        %v3945 = vmul.f32 %v3941, %v3881
        %v3946 = vadd.f32 %v3906, %v3942
        %v3947 = vadd.f32 %v3907, %v3943
        %v3948 = vadd.f32 %v3908, %v3944
        %v3949 = vadd.f32 %v3909, %v3945
        %s3950 = sld [smem:[#allocation12 + $0x64]]
        %v3951 = vstv %s3950
        %v3952 = vmul.f32 %v3951, %v3878
        %v3953 = vmul.f32 %v3951, %v3879
        %v3954 = vmul.f32 %v3951, %v3880
        %v3955 = vmul.f32 %v3951, %v3881
        %v3956 = vadd.f32 %v3916, %v3952
        %v3957 = vadd.f32 %v3917, %v3953
        %v3958 = vadd.f32 %v3918, %v3954
        %v3959 = vadd.f32 %v3919, %v3955
        %s3960 = sld [smem:[#allocation12 + $0x88]]
        %v3961 = vstv %s3960
        %v3962 = vmul.f32 %v3961, %v3878
        %v3963 = vmul.f32 %v3961, %v3879
        %v3964 = vmul.f32 %v3961, %v3880
        %v3965 = vmul.f32 %v3961, %v3881
        %v3966 = vadd.f32 %v3926, %v3962
        %v3967 = vadd.f32 %v3927, %v3963
        %v3968 = vadd.f32 %v3928, %v3964
        %v3969 = vadd.f32 %v3929, %v3965
        %3970 = vrot.lane.b32.xlu0 %v3878, 127
        %v3971 = vpop.permute.xlu0 %3970
        %3972 = vrot.lane.b32.xlu0 %v3879, 127
        %v3973 = vpop.permute.xlu0 %3972
        %3974 = vrot.lane.b32.xlu0 %v3880, 127
        %v3975 = vpop.permute.xlu0 %3974
        %3976 = vrot.lane.b32.xlu0 %v3881, 127
        %v3977 = vpop.permute.xlu0 %3976
        %s3978 = sld [smem:[#allocation12 + $0x1d]]
        %v3979 = vstv %s3978
        %v3980 = vmul.f32 %v3979, %v3971
        %v3981 = vmul.f32 %v3979, %v3973
        %v3982 = vmul.f32 %v3979, %v3975
        %v3983 = vmul.f32 %v3979, %v3977
        %v3984 = vadd.f32 %v3936, %v3980
        %v3985 = vadd.f32 %v3937, %v3981
        %v3986 = vadd.f32 %v3938, %v3982
        %v3987 = vadd.f32 %v3939, %v3983
        %s3988 = sld [smem:[#allocation12 + $0x41]]
        %v3989 = vstv %s3988
        %v3990 = vmul.f32 %v3989, %v3971
        %v3991 = vmul.f32 %v3989, %v3973
        %v3992 = vmul.f32 %v3989, %v3975
        %v3993 = vmul.f32 %v3989, %v3977
        %v3994 = vadd.f32 %v3946, %v3990
        %v3995 = vadd.f32 %v3947, %v3991
        %v3996 = vadd.f32 %v3948, %v3992
        %v3997 = vadd.f32 %v3949, %v3993
        %s3998 = sld [smem:[#allocation12 + $0x65]]
        %v3999 = vstv %s3998
        %v4000 = vmul.f32 %v3999, %v3971
        %v4001 = vmul.f32 %v3999, %v3973
        %v4002 = vmul.f32 %v3999, %v3975
        %v4003 = vmul.f32 %v3999, %v3977
        %v4004 = vadd.f32 %v3956, %v4000
        %v4005 = vadd.f32 %v3957, %v4001
        %v4006 = vadd.f32 %v3958, %v4002
        %v4007 = vadd.f32 %v3959, %v4003
        %s4008 = sld [smem:[#allocation12 + $0x89]]
        %v4009 = vstv %s4008
        %v4010 = vmul.f32 %v4009, %v3971
        %v4011 = vmul.f32 %v4009, %v3973
        %v4012 = vmul.f32 %v4009, %v3975
        %v4013 = vmul.f32 %v4009, %v3977
        %v4014 = vadd.f32 %v3966, %v4010
        %v4015 = vadd.f32 %v3967, %v4011
        %v4016 = vadd.f32 %v3968, %v4012
        %v4017 = vadd.f32 %v3969, %v4013
        %v4018 = vld [vmem:[%s909 + $0x8] sm:$0xff]
        %v4019 = vld [vmem:[%s909 + $0x10] sm:$0xff]
        %v4020 = vld [vmem:[%s909 + $0x18] sm:$0xff]
        %v4021 = vld [vmem:[%s909 + $0x20] sm:$0xff]
        %4022 = vrot.lane.b32.xlu0 %v4018, 1
        %v4023 = vpop.permute.xlu0 %4022
        %4024 = vrot.lane.b32.xlu0 %v4019, 1
        %v4025 = vpop.permute.xlu0 %4024
        %4026 = vrot.lane.b32.xlu0 %v4020, 1
        %v4027 = vpop.permute.xlu0 %4026
        %4028 = vrot.lane.b32.xlu0 %v4021, 1
        %v4029 = vpop.permute.xlu0 %4028
        %s4030 = sld [smem:[#allocation12 + $0x1e]]
        %v4031 = vstv %s4030
        %v4032 = vmul.f32 %v4031, %v4023
        %v4033 = vmul.f32 %v4031, %v4025
        %v4034 = vmul.f32 %v4031, %v4027
        %v4035 = vmul.f32 %v4031, %v4029
        %v4036 = vadd.f32 %v3984, %v4032
        %v4037 = vadd.f32 %v3985, %v4033
        %v4038 = vadd.f32 %v3986, %v4034
        %v4039 = vadd.f32 %v3987, %v4035
        %s4040 = sld [smem:[#allocation12 + $0x42]]
        %v4041 = vstv %s4040
        %v4042 = vmul.f32 %v4041, %v4023
        %v4043 = vmul.f32 %v4041, %v4025
        %v4044 = vmul.f32 %v4041, %v4027
        %v4045 = vmul.f32 %v4041, %v4029
        %v4046 = vadd.f32 %v3994, %v4042
        %v4047 = vadd.f32 %v3995, %v4043
        %v4048 = vadd.f32 %v3996, %v4044
        %v4049 = vadd.f32 %v3997, %v4045
        %s4050 = sld [smem:[#allocation12 + $0x66]]
        %v4051 = vstv %s4050
        %v4052 = vmul.f32 %v4051, %v4023
        %v4053 = vmul.f32 %v4051, %v4025
        %v4054 = vmul.f32 %v4051, %v4027
        %v4055 = vmul.f32 %v4051, %v4029
        %v4056 = vadd.f32 %v4004, %v4052
        %v4057 = vadd.f32 %v4005, %v4053
        %v4058 = vadd.f32 %v4006, %v4054
        %v4059 = vadd.f32 %v4007, %v4055
        %s4060 = sld [smem:[#allocation12 + $0x8a]]
        %v4061 = vstv %s4060
        %v4062 = vmul.f32 %v4061, %v4023
        %v4063 = vmul.f32 %v4061, %v4025
        %v4064 = vmul.f32 %v4061, %v4027
        %v4065 = vmul.f32 %v4061, %v4029
        %v4066 = vadd.f32 %v4014, %v4062
        %v4067 = vadd.f32 %v4015, %v4063
        %v4068 = vadd.f32 %v4016, %v4064
        %v4069 = vadd.f32 %v4017, %v4065
        %s4070 = sld [smem:[#allocation12 + $0x1f]]
        %v4071 = vstv %s4070
        %v4072 = vmul.f32 %v4071, %v4018
        %v4073 = vmul.f32 %v4071, %v4019
        %v4074 = vmul.f32 %v4071, %v4020
        %v4075 = vmul.f32 %v4071, %v4021
        %v4076 = vadd.f32 %v4036, %v4072
        %v4077 = vadd.f32 %v4037, %v4073
        %v4078 = vadd.f32 %v4038, %v4074
        %v4079 = vadd.f32 %v4039, %v4075
        %s4080 = sld [smem:[#allocation12 + $0x43]]
        %v4081 = vstv %s4080
        %v4082 = vmul.f32 %v4081, %v4018
        %v4083 = vmul.f32 %v4081, %v4019
        %v4084 = vmul.f32 %v4081, %v4020
        %v4085 = vmul.f32 %v4081, %v4021
        %v4086 = vadd.f32 %v4046, %v4082
        %v4087 = vadd.f32 %v4047, %v4083
        %v4088 = vadd.f32 %v4048, %v4084
        %v4089 = vadd.f32 %v4049, %v4085
        %s4090 = sld [smem:[#allocation12 + $0x67]]
        %v4091 = vstv %s4090
        %v4092 = vmul.f32 %v4091, %v4018
        %v4093 = vmul.f32 %v4091, %v4019
        %v4094 = vmul.f32 %v4091, %v4020
        %v4095 = vmul.f32 %v4091, %v4021
        %v4096 = vadd.f32 %v4056, %v4092
        %v4097 = vadd.f32 %v4057, %v4093
        %v4098 = vadd.f32 %v4058, %v4094
        %v4099 = vadd.f32 %v4059, %v4095
        %s4100 = sld [smem:[#allocation12 + $0x8b]]
        %v4101 = vstv %s4100
        %v4102 = vmul.f32 %v4101, %v4018
        %v4103 = vmul.f32 %v4101, %v4019
        %v4104 = vmul.f32 %v4101, %v4020
        %v4105 = vmul.f32 %v4101, %v4021
        %v4106 = vadd.f32 %v4066, %v4102
        %v4107 = vadd.f32 %v4067, %v4103
        %v4108 = vadd.f32 %v4068, %v4104
        %v4109 = vadd.f32 %v4069, %v4105
        %4110 = vrot.lane.b32.xlu0 %v4018, 127
        %v4111 = vpop.permute.xlu0 %4110
        %4112 = vrot.lane.b32.xlu0 %v4019, 127
        %v4113 = vpop.permute.xlu0 %4112
        %4114 = vrot.lane.b32.xlu0 %v4020, 127
        %v4115 = vpop.permute.xlu0 %4114
        %4116 = vrot.lane.b32.xlu0 %v4021, 127
        %v4117 = vpop.permute.xlu0 %4116
        %s4118 = sld [smem:[#allocation12 + $0x20]]
        %v4119 = vstv %s4118
        %v4120 = vmul.f32 %v4119, %v4111
        %v4121 = vmul.f32 %v4119, %v4113
        %v4122 = vmul.f32 %v4119, %v4115
        %v4123 = vmul.f32 %v4119, %v4117
        %v4124 = vadd.f32 %v4076, %v4120
        %v4125 = vadd.f32 %v4077, %v4121
        %v4126 = vadd.f32 %v4078, %v4122
        %v4127 = vadd.f32 %v4079, %v4123
        %s4128 = sld [smem:[#allocation12 + $0x44]]
        %v4129 = vstv %s4128
        %v4130 = vmul.f32 %v4129, %v4111
        %v4131 = vmul.f32 %v4129, %v4113
        %v4132 = vmul.f32 %v4129, %v4115
        %v4133 = vmul.f32 %v4129, %v4117
        %v4134 = vadd.f32 %v4086, %v4130
        %v4135 = vadd.f32 %v4087, %v4131
        %v4136 = vadd.f32 %v4088, %v4132
        %v4137 = vadd.f32 %v4089, %v4133
        %s4138 = sld [smem:[#allocation12 + $0x68]]
        %v4139 = vstv %s4138
        %v4140 = vmul.f32 %v4139, %v4111
        %v4141 = vmul.f32 %v4139, %v4113
        %v4142 = vmul.f32 %v4139, %v4115
        %v4143 = vmul.f32 %v4139, %v4117
        %v4144 = vadd.f32 %v4096, %v4140
        %v4145 = vadd.f32 %v4097, %v4141
        %v4146 = vadd.f32 %v4098, %v4142
        %v4147 = vadd.f32 %v4099, %v4143
        %s4148 = sld [smem:[#allocation12 + $0x8c]]
        %v4149 = vstv %s4148
        %v4150 = vmul.f32 %v4149, %v4111
        %v4151 = vmul.f32 %v4149, %v4113
        %v4152 = vmul.f32 %v4149, %v4115
        %v4153 = vmul.f32 %v4149, %v4117
        %v4154 = vadd.f32 %v4106, %v4150
        %v4155 = vadd.f32 %v4107, %v4151
        %v4156 = vadd.f32 %v4108, %v4152
        %v4157 = vadd.f32 %v4109, %v4153
        %v4158 = vld [vmem:[%s909 + $0x9] sm:$0xff]
        %v4159 = vld [vmem:[%s909 + $0x11] sm:$0xff]
        %v4160 = vld [vmem:[%s909 + $0x19] sm:$0xff]
        %v4161 = vld [vmem:[%s909 + $0x21] sm:$0xff]
        %4162 = vrot.lane.b32.xlu0 %v4158, 1
        %v4163 = vpop.permute.xlu0 %4162
        %4164 = vrot.lane.b32.xlu0 %v4159, 1
        %v4165 = vpop.permute.xlu0 %4164
        %4166 = vrot.lane.b32.xlu0 %v4160, 1
        %v4167 = vpop.permute.xlu0 %4166
        %4168 = vrot.lane.b32.xlu0 %v4161, 1
        %v4169 = vpop.permute.xlu0 %4168
        %s4170 = sld [smem:[#allocation12 + $0x21]]
        %v4171 = vstv %s4170
        %v4172 = vmul.f32 %v4171, %v4163
        %v4173 = vmul.f32 %v4171, %v4165
        %v4174 = vmul.f32 %v4171, %v4167
        %v4175 = vmul.f32 %v4171, %v4169
        %v4176 = vadd.f32 %v4124, %v4172
        %v4177 = vadd.f32 %v4125, %v4173
        %v4178 = vadd.f32 %v4126, %v4174
        %v4179 = vadd.f32 %v4127, %v4175
        %s4180 = sld [smem:[#allocation12 + $0x45]]
        %v4181 = vstv %s4180
        %v4182 = vmul.f32 %v4181, %v4163
        %v4183 = vmul.f32 %v4181, %v4165
        %v4184 = vmul.f32 %v4181, %v4167
        %v4185 = vmul.f32 %v4181, %v4169
        %v4186 = vadd.f32 %v4134, %v4182
        %v4187 = vadd.f32 %v4135, %v4183
        %v4188 = vadd.f32 %v4136, %v4184
        %v4189 = vadd.f32 %v4137, %v4185
        %s4190 = sld [smem:[#allocation12 + $0x69]]
        %v4191 = vstv %s4190
        %v4192 = vmul.f32 %v4191, %v4163
        %v4193 = vmul.f32 %v4191, %v4165
        %v4194 = vmul.f32 %v4191, %v4167
        %v4195 = vmul.f32 %v4191, %v4169
        %v4196 = vadd.f32 %v4144, %v4192
        %v4197 = vadd.f32 %v4145, %v4193
        %v4198 = vadd.f32 %v4146, %v4194
        %v4199 = vadd.f32 %v4147, %v4195
        %s4200 = sld [smem:[#allocation12 + $0x8d]]
        %v4201 = vstv %s4200
        %v4202 = vmul.f32 %v4201, %v4163
        %v4203 = vmul.f32 %v4201, %v4165
        %v4204 = vmul.f32 %v4201, %v4167
        %v4205 = vmul.f32 %v4201, %v4169
        %v4206 = vadd.f32 %v4154, %v4202
        %v4207 = vadd.f32 %v4155, %v4203
        %v4208 = vadd.f32 %v4156, %v4204
        %v4209 = vadd.f32 %v4157, %v4205
        %s4210 = sld [smem:[#allocation12 + $0x22]]
        %v4211 = vstv %s4210
        %v4212 = vmul.f32 %v4211, %v4158
        %v4213 = vmul.f32 %v4211, %v4159
        %v4214 = vmul.f32 %v4211, %v4160
        %v4215 = vmul.f32 %v4211, %v4161
        %v4216 = vadd.f32 %v4176, %v4212
        %v4217 = vadd.f32 %v4177, %v4213
        %v4218 = vadd.f32 %v4178, %v4214
        %v4219 = vadd.f32 %v4179, %v4215
        %s4220 = sld [smem:[#allocation12 + $0x46]]
        %v4221 = vstv %s4220
        %v4222 = vmul.f32 %v4221, %v4158
        %v4223 = vmul.f32 %v4221, %v4159
        %v4224 = vmul.f32 %v4221, %v4160
        %v4225 = vmul.f32 %v4221, %v4161
        %v4226 = vadd.f32 %v4186, %v4222
        %v4227 = vadd.f32 %v4187, %v4223
        %v4228 = vadd.f32 %v4188, %v4224
        %v4229 = vadd.f32 %v4189, %v4225
        %s4230 = sld [smem:[#allocation12 + $0x6a]]
        %v4231 = vstv %s4230
        %v4232 = vmul.f32 %v4231, %v4158
        %v4233 = vmul.f32 %v4231, %v4159
        %v4234 = vmul.f32 %v4231, %v4160
        %v4235 = vmul.f32 %v4231, %v4161
        %v4236 = vadd.f32 %v4196, %v4232
        %v4237 = vadd.f32 %v4197, %v4233
        %v4238 = vadd.f32 %v4198, %v4234
        %v4239 = vadd.f32 %v4199, %v4235
        %s4240 = sld [smem:[#allocation12 + $0x8e]]
        %v4241 = vstv %s4240
        %v4242 = vmul.f32 %v4241, %v4158
        %v4243 = vmul.f32 %v4241, %v4159
        %v4244 = vmul.f32 %v4241, %v4160
        %v4245 = vmul.f32 %v4241, %v4161
        %v4246 = vadd.f32 %v4206, %v4242
        %v4247 = vadd.f32 %v4207, %v4243
        %v4248 = vadd.f32 %v4208, %v4244
        %v4249 = vadd.f32 %v4209, %v4245
        %4250 = vrot.lane.b32.xlu0 %v4158, 127
        %v4251 = vpop.permute.xlu0 %4250
        %4252 = vrot.lane.b32.xlu0 %v4159, 127
        %v4253 = vpop.permute.xlu0 %4252
        %4254 = vrot.lane.b32.xlu0 %v4160, 127
        %v4255 = vpop.permute.xlu0 %4254
        %4256 = vrot.lane.b32.xlu0 %v4161, 127
        %v4257 = vpop.permute.xlu0 %4256
        %s4258 = sld [smem:[#allocation12 + $0x23]]
        %v4259 = vstv %s4258
        %v4260 = vmul.f32 %v4259, %v4251
        %v4261 = vmul.f32 %v4259, %v4253
        %v4262 = vmul.f32 %v4259, %v4255
        %v4263 = vmul.f32 %v4259, %v4257
        %v4264 = vadd.f32 %v4216, %v4260
        %v4265 = vadd.f32 %v4217, %v4261
        %v4266 = vadd.f32 %v4218, %v4262
        %v4267 = vadd.f32 %v4219, %v4263
        %s4268 = sld [smem:[#allocation12 + $0x47]]
        %v4269 = vstv %s4268
        %v4270 = vmul.f32 %v4269, %v4251
        %v4271 = vmul.f32 %v4269, %v4253
        %v4272 = vmul.f32 %v4269, %v4255
        %v4273 = vmul.f32 %v4269, %v4257
        %v4274 = vadd.f32 %v4226, %v4270
        %v4275 = vadd.f32 %v4227, %v4271
        %v4276 = vadd.f32 %v4228, %v4272
        %v4277 = vadd.f32 %v4229, %v4273
        %s4278 = sld [smem:[#allocation12 + $0x6b]]
        %v4279 = vstv %s4278
        %v4280 = vmul.f32 %v4279, %v4251
        %v4281 = vmul.f32 %v4279, %v4253
        %v4282 = vmul.f32 %v4279, %v4255
        %v4283 = vmul.f32 %v4279, %v4257
        %v4284 = vadd.f32 %v4236, %v4280
        %v4285 = vadd.f32 %v4237, %v4281
        %v4286 = vadd.f32 %v4238, %v4282
        %v4287 = vadd.f32 %v4239, %v4283
        %s4288 = sld [smem:[#allocation12 + $0x8f]]
        %v4289 = vstv %s4288
        %v4290 = vmul.f32 %v4289, %v4251
        %v4291 = vmul.f32 %v4289, %v4253
        %v4292 = vmul.f32 %v4289, %v4255
        %v4293 = vmul.f32 %v4289, %v4257
        %v4294 = vadd.f32 %v4246, %v4290
        %v4295 = vadd.f32 %v4247, %v4291
        %v4296 = vadd.f32 %v4248, %v4292
        %v4297 = vadd.f32 %v4249, %v4293
        %v4298 = vadd.f32 %v4264, %v873
        %v4299 = vadd.f32 %v4265, %v874
        %v4300 = vadd.f32 %v4266, %v875
        %v4301 = vadd.f32 %v4267, %v876
        %v4302 = vld [vmem:[%s390] sm:$0xff]
        %v4303 = vld [vmem:[%s390 + $0x8] sm:$0xff]
        %v4304 = vld [vmem:[%s390 + $0x10] sm:$0xff]
        %v4305 = vld [vmem:[%s390 + $0x18] sm:$0xff]
        %s4306 = sld [smem:[#allocation13]]
        %v4307 = vstv %s4306
        %v4308 = vadd.f32 %v4302, %v4307
        %v4309 = vadd.f32 %v4303, %v4307
        %v4310 = vadd.f32 %v4304, %v4307
        %v4311 = vadd.f32 %v4305, %v4307
        %v4312 = vadd.f32 %v4298, %v4308
        %v4313 = vadd.f32 %v4299, %v4309
        %v4314 = vadd.f32 %v4300, %v4310
        %v4315 = vadd.f32 %v4301, %v4311
        %4316 = vst.msk [vmem:[%s428] sm:$0xff] %vm462, %v4312
        %4317 = vst.msk [vmem:[%s428 + $0x8] sm:$0xff] %vm462, %v4313
        %4318 = vst.msk [vmem:[%s428 + $0x10] sm:$0xff] %vm462, %v4314
        %4319 = vst.msk [vmem:[%s428 + $0x18] sm:$0xff] %vm462, %v4315
        %v4320 = vadd.f32 %v4274, %v879
        %v4321 = vadd.f32 %v4275, %v880
        %v4322 = vadd.f32 %v4276, %v881
        %v4323 = vadd.f32 %v4277, %v882
        %s4324 = scalar_lea.vmem %s390, 32 [#allocation16]
        %v4325 = vld [vmem:[%s4324] sm:$0xff]
        %v4326 = vld [vmem:[%s4324 + $0x8] sm:$0xff]
        %v4327 = vld [vmem:[%s4324 + $0x10] sm:$0xff]
        %v4328 = vld [vmem:[%s4324 + $0x18] sm:$0xff]
        %s4329 = sld [smem:[#allocation13 + $0x1]]
        %v4330 = vstv %s4329
        %v4331 = vadd.f32 %v4325, %v4330
        %v4332 = vadd.f32 %v4326, %v4330
        %v4333 = vadd.f32 %v4327, %v4330
        %v4334 = vadd.f32 %v4328, %v4330
        %v4335 = vadd.f32 %v4320, %v4331
        %v4336 = vadd.f32 %v4321, %v4332
        %v4337 = vadd.f32 %v4322, %v4333
        %v4338 = vadd.f32 %v4323, %v4334
        %s4339 = scalar_lea.vmem %s428, 32 [#allocation18]
        %4340 = vst.msk [vmem:[%s4339] sm:$0xff] %vm462, %v4335
        %4341 = vst.msk [vmem:[%s4339 + $0x8] sm:$0xff] %vm462, %v4336
        %4342 = vst.msk [vmem:[%s4339 + $0x10] sm:$0xff] %vm462, %v4337
        %4343 = vst.msk [vmem:[%s4339 + $0x18] sm:$0xff] %vm462, %v4338
        %v4344 = vadd.f32 %v4284, %v885
        %v4345 = vadd.f32 %v4285, %v886
        %v4346 = vadd.f32 %v4286, %v887
        %v4347 = vadd.f32 %v4287, %v888
        %s4348 = scalar_lea.vmem %s390, 64 [#allocation16]
        %v4349 = vld [vmem:[%s4348] sm:$0xff]
        %v4350 = vld [vmem:[%s4348 + $0x8] sm:$0xff]
        %v4351 = vld [vmem:[%s4348 + $0x10] sm:$0xff]
        %v4352 = vld [vmem:[%s4348 + $0x18] sm:$0xff]
        %s4353 = sld [smem:[#allocation13 + $0x2]]
        %v4354 = vstv %s4353
        %v4355 = vadd.f32 %v4349, %v4354
        %v4356 = vadd.f32 %v4350, %v4354
        %v4357 = vadd.f32 %v4351, %v4354
        %v4358 = vadd.f32 %v4352, %v4354
        %v4359 = vadd.f32 %v4344, %v4355
        %v4360 = vadd.f32 %v4345, %v4356
        %v4361 = vadd.f32 %v4346, %v4357
        %v4362 = vadd.f32 %v4347, %v4358
        %s4363 = scalar_lea.vmem %s428, 64 [#allocation18]
        %4364 = vst.msk [vmem:[%s4363] sm:$0xff] %vm462, %v4359
        %4365 = vst.msk [vmem:[%s4363 + $0x8] sm:$0xff] %vm462, %v4360
        %4366 = vst.msk [vmem:[%s4363 + $0x10] sm:$0xff] %vm462, %v4361
        %4367 = vst.msk [vmem:[%s4363 + $0x18] sm:$0xff] %vm462, %v4362
        %v4368 = vadd.f32 %v4294, %v891
        %v4369 = vadd.f32 %v4295, %v892
        %v4370 = vadd.f32 %v4296, %v893
        %v4371 = vadd.f32 %v4297, %v894
        %s4372 = scalar_lea.vmem %s390, 96 [#allocation16]
        %v4373 = vld [vmem:[%s4372] sm:$0xff]
        %v4374 = vld [vmem:[%s4372 + $0x8] sm:$0xff]
        %v4375 = vld [vmem:[%s4372 + $0x10] sm:$0xff]
        %v4376 = vld [vmem:[%s4372 + $0x18] sm:$0xff]
        %s4377 = sld [smem:[#allocation13 + $0x3]]
        %v4378 = vstv %s4377
        %v4379 = vadd.f32 %v4373, %v4378
        %v4380 = vadd.f32 %v4374, %v4378
        %v4381 = vadd.f32 %v4375, %v4378
        %v4382 = vadd.f32 %v4376, %v4378
        %v4383 = vadd.f32 %v4368, %v4379
        %v4384 = vadd.f32 %v4369, %v4380
        %v4385 = vadd.f32 %v4370, %v4381
        %v4386 = vadd.f32 %v4371, %v4382
        %s4387 = scalar_lea.vmem %s428, 96 [#allocation18]
        %4388 = vst.msk [vmem:[%s4387] sm:$0xff] %vm462, %v4383
        %4389 = vst.msk [vmem:[%s4387 + $0x8] sm:$0xff] %vm462, %v4384
        %4390 = vst.msk [vmem:[%s4387 + $0x10] sm:$0xff] %vm462, %v4385
        %4391 = vst.msk [vmem:[%s4387 + $0x18] sm:$0xff] %vm462, %v4386
        %s4392 = sand.u32 %s218, 1
        %s4393 = scalar_lea.sflag [#allocation5], %s4392
        %s4394 = sand.u32 %s218, 1
        %s4395 = smul.addr %s4394, 128
        %s4396 = scalar_lea.vmem [#allocation18], %s4395
        // Predicated region
        $region85: #{grad_block_forward.5} parent=51 // pred_check
          %p4397 = pneg %p228
        $region86: #{grad_block_forward.5} parent=51 // pred_check_branch
          %4399 = sbr.rel (%p4397) target = $region88
        $region87: #{grad_block_forward.5} parent=51 // pred_region
          %s4401 = ssub.s32 2048, 2048
          %4402 = vsyncadd %s4393, %s4401
          %s4403 = smul.addr %s32, 16
          %s4404 = smul.addr %s4403, 128
          %s4405 = scalar_lea.hbm %s8, %s4404
          %s4406 = sshll.u32 %s4396, 4
          %s4407 = int_to_ptr.vmem [resolvable:$true] %s4406
          %4412 = dma.vmem_to_hbm [thread:$0]  %s4407, 2048, %s4405, %s4393, 128, 128, 8
        $region88: #{grad_block_forward.5} parent=51 // pred_fallthru
          _
      $region52: #{grad_block_forward.5} parent=5 // pred_fallthru
        _
      %p4413 = scmp.le.s32.totalorder 2, %s27
      // Predicated region
      $region89: #{grad_block_forward.5} parent=5 // pred_check
        %p4414 = pneg %p4413
      $region90: #{grad_block_forward.5} parent=5 // pred_check_branch
        %4416 = sbr.rel (%p4414) target = $region92
      $region91: #{grad_block_forward.5} parent=5 // pred_region
        %s4417 = ssub.s32 %s27, 2
        // Predicated region
        $region93: #{grad_block_forward.5} parent=91 // pred_check
          %p4418 = pneg %p234
        $region94: #{grad_block_forward.5} parent=91 // pred_check_branch
          %4420 = sbr.rel (%p4418) target = $region96
        $region95: #{grad_block_forward.5} parent=91 // pred_region
          %s4421 = sand.u32 %s219, 1
          %s4422 = scalar_lea.sflag [#allocation5], %s4421
          %s4423 = sand.u32 %s219, 1
          %s4424 = smul.addr %s4423, 128
          %s4425 = scalar_lea.vmem [#allocation18], %s4424
          %4426 = dma.done %s4422, 2048
        $region96: #{grad_block_forward.5} parent=91 // pred_fallthru
          _
      $region92: #{grad_block_forward.5} parent=5 // pred_fallthru
        _
    $region6: #{grad_block_forward.5} parent=1 // loop_footer
      %s31 = sadd.s32 1, %s27
    $region7: #{grad_block_forward.5} parent=1 // loop_footer_branch
      %26 = sbr.rel target = $region3
    $region8: #{grad_block_forward.5} parent=1 // loop_exit
      _
    %4427 = vsyncpa [#allocation4], 1
    %s4428 = scalar_lea.sflag [#allocation4], 1
    %4429 = vsyncpa %s4428, 1
    %4430 = vsyncpa [#allocation17], 1
    %s4431 = scalar_lea.sflag [#allocation17], 1
    %4432 = vsyncpa %s4431, 1
    %4433 = vsyncpa [#allocation5], 1
    %s4434 = scalar_lea.sflag [#allocation5], 1
    %4435 = vsyncpa %s4434, 1
    %4436 = vsyncpa [#allocation6], 1
    %s4437 = scalar_lea.sflag [#allocation6], 1
    %4438 = vsyncpa %s4437, 1
    %4439 = vsyncpa [#allocation8], 1
    %4440 = vsyncpa [#allocation11], 1
    %4441 = vsyncpa [#allocation14], 1

</llo_original>
